<compile_context>
chip_gen: v7x
topology: tpu7x:2x2x1
jax: 0.10.0
libtpu: 0.0.40
codegen_flags: <defaults>
</compile_context>

<pallas_src>
import collections
import functools
import math

import jax
import jax.numpy as jnp
import numpy as np
from jax.experimental import pallas as pl
from jax.experimental.pallas import tpu as pltpu

B_TILE = 8      # images per grid step (keeps every row offset a multiple of 8)
LANES = 256     # padded lane width of every conv-output / pooled slab
IN_LANES = 128  # padded lane width of the input slab (36*3 = 108 real lanes)

Dims = collections.namedtuple('Dims', 'n_classes c_in h_img pad b_tile')


def _resident_spec(shape):
    # Whole-array block whose block index never changes -> DMA'd once and kept
    # resident in VMEM across all grid steps.
    return pl.BlockSpec(shape, lambda t, _n=len(shape): (0,) * _n)


# ---------------------------------------------------------------------------
# The fused Pallas kernel (conv1 -> pool+relu -> conv2 -> pool+relu -> conv3
# -> fc1+relu -> fc2) for one tile of B_TILE images.
# ---------------------------------------------------------------------------
def _lenet5_kernel(a0_ref, t1_ref, b1_ref, t2_ref, b2_ref, t3_ref, b3_ref,
                   g1_ref, bfc1_ref, g2_ref, bfc2_ref,
                   out_ref, s1_ref, s2_ref, *, b_tile):
    f32, bf16 = jnp.float32, jnp.bfloat16
    B = b_tile
    kh = t1_ref.shape[0]                          # 5
    h0 = a0_ref.shape[0] // B                     # 36 (padded image height)
    rows1 = (h0 - kh + 1) * B                     # 32*B conv1 output rows
    rows2 = s1_ref.shape[0] - 2 * B * (kh - 1)    # 23*B conv2 output rows

    def conv(src_ref, t_ref, b_ref, rows_out, row_step):
        # 5x5 conv as `kh` MXU matmuls against block-Toeplitz weights; the LHS
        # for kernel-row i is a contiguous, sublane-aligned row slice of the
        # activation slab (row = y*B + n) -> no gather / im2col in-kernel.
        acc = jnp.dot(src_ref[pl.ds(0, rows_out), :], t_ref[0],
                      preferred_element_type=f32)
        for i in range(1, kh):
            acc = acc + jnp.dot(src_ref[pl.ds(i * row_step, rows_out), :],
                                t_ref[i], preferred_element_type=f32)
        return acc + b_ref[...]                   # (1, 256) bias broadcast

    def pool2x2_relu(y, row_step, lane_step):
        # 2x2 maxpool + ReLU.  Rows: aligned value slices (offsets are
        # multiples of 8 -> free).  Lanes: XLU roll keeps the full 256-lane
        # width so the scratch store stays unmasked; pooled values live at the
        # even positions, everything else is masked by zero Toeplitz rows.
        r = y.shape[0]
        v = jnp.maximum(y[0:r - row_step, :], y[row_step:r, :])
        shifted = pltpu.roll(v, LANES - lane_step, axis=1)   # [l] <- v[l+step]
        return jnp.maximum(jnp.maximum(v, shifted), 0.0)

    # conv1 -> pool -> relu             rows: y*B + n, lanes: x*6 + o
    y1 = conv(a0_ref, t1_ref, b1_ref, rows1, B)
    s1_ref[...] = pool2x2_relu(y1, B, 6).astype(bf16)

    # conv2 -> pool -> relu             pooled rows at stride 2*B, lanes at 12
    y2 = conv(s1_ref, t2_ref, b2_ref, rows2, 2 * B)
    s2_ref[...] = pool2x2_relu(y2, 2 * B, 16).astype(bf16)

    # conv3, restricted to the 2 output rows per image that fc1 consumes.  The
    # needed s2 rows are the contiguous aligned blocks [4*k*B, 4*k*B + B).
    taps = [s2_ref[pl.ds(4 * k * B, B), :] for k in range(kh + 1)]  # 6x(B,256)

    def conv3_row(h3):
        acc = jnp.dot(taps[h3], t3_ref[0], preferred_element_type=f32)
        for i in range(1, kh):
            acc = acc + jnp.dot(taps[h3 + i], t3_ref[i],
                                preferred_element_type=f32)
        return (acc + b3_ref[...]).astype(bf16)   # (B, 256), lanes x3*120 + o

    feat0, feat1 = conv3_row(0), conv3_row(1)

    # fc1 (+ReLU) and fc2; torch's NCHW flatten is folded into g1's layout.
    hfc = (jnp.dot(feat0, g1_ref[0], preferred_element_type=f32)
           + jnp.dot(feat1, g1_ref[1], preferred_element_type=f32)
           + bfc1_ref[...])
    hfc = jnp.maximum(hfc, 0.0).astype(bf16)
    out_ref[...] = (jnp.dot(hfc, g2_ref[...], preferred_element_type=f32)
                    + bfc2_ref[...])              # (B, 128) lane-dense


# ---------------------------------------------------------------------------
# One-time parameter packing (plain JAX; im2col folded into the weights,
# all output widths zero-padded to 128-lane multiples).
# ---------------------------------------------------------------------------
def _conv_toeplitz(w_oihw, wo, in_block, k_in, n_out):
    """T[i, (w+j)*in_block + c, w*O + o] = W[o, c, i, j]; zero elsewhere."""
    o_ch, c_in, kh, kw = w_oihw.shape
    i_ix, j_ix, c_ix, o_ix, w_ix = np.meshgrid(
        np.arange(kh), np.arange(kw), np.arange(c_in), np.arange(o_ch),
        np.arange(wo), indexing='ij')
    rows = (w_ix + j_ix) * in_block + c_ix
    cols = w_ix * o_ch + o_ix
    vals = w_oihw.astype(jnp.float32)[o_ix, c_ix, i_ix, j_ix]
    t = jnp.zeros((kh, k_in, n_out), jnp.float32)
    return t.at[i_ix, rows, cols].set(vals).astype(jnp.bfloat16)


def _row_bias(b, reps, width):
    v = jnp.tile(b.astype(jnp.float32), reps)
    return jnp.pad(v, (0, width - v.shape[0])).reshape(1, width)


def prepare_params(params, h_img=32, b_tile=B_TILE):
    f32, bf16 = jnp.float32, jnp.bfloat16
    c_in = params['w1'].shape[1]                        # 3
    pad = 2

    o1 = params['w1'].shape[0]                          # 6
    wo1 = h_img                                         # 32  ('same' conv)
    t1 = _conv_toeplitz(params['w1'], wo1, c_in, IN_LANES, LANES)
    b1 = _row_bias(params['b1'], wo1, LANES)

    o2 = params['w2'].shape[0]                          # 16
    wo2 = wo1 // 2 - 4                                  # 12
    t2 = _conv_toeplitz(params['w2'], wo2, 2 * o1, LANES, LANES)
    b2 = _row_bias(params['b2'], wo2, LANES)

    o3 = params['w3'].shape[0]                          # 120
    wo3 = wo2 // 2 - 4                                  # 2
    t3 = _conv_toeplitz(params['w3'], wo3, 2 * o2, LANES, LANES)
    b3 = _row_bias(params['b3'], wo3, LANES)

    # fc1: fold torch's NCHW flatten (f = o*4 + h*2 + w) and the conv3 slab
    # layout (row = h, lane = w*120 + o) into the weight -> (2, 256, 128).
    n_hid = params['w_fc1'].shape[0]                    # 84
    g1 = (params['w_fc1'].astype(f32).reshape(n_hid, o3, wo3, wo3)
          .transpose(2, 3, 1, 0).reshape(wo3, wo3 * o3, n_hid))
    g1 = jnp.pad(g1, ((0, 0), (0, LANES - wo3 * o3),
                      (0, 128 - n_hid))).astype(bf16)
    bfc1 = jnp.pad(params['b_fc1'].astype(f32), (0, 128 - n_hid)).reshape(1, 128)

    # fc2: zero-padded to a lane-dense (128, 128) weight; logits sliced outside.
    n_classes = params['w_fc2'].shape[0]                # 6
    g2 = jnp.pad(params['w_fc2'].astype(f32).T,
                 ((0, 128 - n_hid), (0, 128 - n_classes))).astype(bf16)
    bfc2 = jnp.pad(params['b_fc2'].astype(f32),
                   (0, 128 - n_classes)).reshape(1, 128)

    buffers = dict(t1=t1, b1=b1, t2=t2, b2=b2, t3=t3, b3=b3,
                   g1=g1, bfc1=bfc1, g2=g2, bfc2=bfc2)
    dims = Dims(n_classes=n_classes, c_in=c_in, h_img=h_img, pad=pad,
                b_tile=b_tile)
    return buffers, dims


# ---------------------------------------------------------------------------
# Forward wrapper (same call convention as the PyTorch module: NCHW input)
# ---------------------------------------------------------------------------
def lenet5_forward(x_nchw, buffers, dims):
    n, c, h, w = x_nchw.shape
    assert (c, h, w) == (dims.c_in, dims.h_img, dims.h_img)
    B, pad = dims.b_tile, dims.pad
    h0 = h + 2 * pad                                    # 36
    kh = buffers['t1'].shape[0]                         # 5
    n_pad = ((n + B - 1) // B) * B
    n_tiles = n_pad // B

    # Boundary layout plumbing, all in bf16: NCHW -> NHWC -> spatial zero-pad
    # -> per-tile y-major / n-minor slab (row = y*B + n, lane = x*3 + c).
    xb = x_nchw.astype(jnp.bfloat16)
    if n_pad != n:
        xb = jnp.pad(xb, ((0, n_pad - n), (0, 0), (0, 0), (0, 0)))
    xb = jnp.transpose(xb, (0, 2, 3, 1))
    xb = jnp.pad(xb, ((0, 0), (pad, pad), (pad, pad), (0, 0)))
    xb = xb.reshape(n_tiles, B, h0, h0 * c).transpose(0, 2, 1, 3)
    xb = jnp.pad(xb, ((0, 0), (0, 0), (0, 0), (0, IN_LANES - h0 * c)))
    a0 = xb.reshape(n_tiles * h0 * B, IN_LANES)

    rows_tile = h0 * B                                  # 288
    s1_rows = (h0 - kh + 1) * B - B                     # 31*B
    s2_rows = s1_rows - 2 * B * (kh - 1) - 2 * B        # 21*B

    weights = (buffers['t1'], buffers['b1'], buffers['t2'], buffers['b2'],
               buffers['t3'], buffers['b3'], buffers['g1'], buffers['bfc1'],
               buffers['g2'], buffers['bfc2'])

    kernel = functools.partial(_lenet5_kernel, b_tile=B)
    out = pl.pallas_call(
        kernel,
        out_shape=jax.ShapeDtypeStruct((n_pad, 128), jnp.float32),
        grid=(n_tiles,),
        in_specs=[pl.BlockSpec((rows_tile, IN_LANES), lambda t: (t, 0))]
                 + [_resident_spec(w.shape) for w in weights],
        out_specs=pl.BlockSpec((B, 128), lambda t: (t, 0)),
        scratch_shapes=[pltpu.VMEM((s1_rows, LANES), jnp.bfloat16),
                        pltpu.VMEM((s2_rows, LANES), jnp.bfloat16)],
        compiler_params=pltpu.CompilerParams(
            dimension_semantics=("parallel",)),
    )(a0, *weights)
    return out[:n, :dims.n_classes]


# ---------------------------------------------------------------------------
# Pure-JAX reference with the same bf16-operand / f32-accumulate numerics
# (correctness check only)
# ---------------------------------------------------------------------------
def _ref_forward(x_nchw, params):
    f32, bf16 = jnp.float32, jnp.bfloat16
    x = jnp.transpose(x_nchw, (0, 2, 3, 1)).astype(f32)

    def conv(x, w, b, pad):
        y = jax.lax.conv_general_dilated(
            x.astype(bf16), jnp.transpose(w, (2, 3, 1, 0)).astype(bf16),
            (1, 1), [(pad, pad), (pad, pad)],
            dimension_numbers=('NHWC', 'HWIO', 'NHWC'),
            preferred_element_type=f32)
        return y + b.astype(f32).reshape(1, 1, 1, -1)

    def pool(x):
        return jax.lax.reduce_window(x, -jnp.inf, jax.lax.max,
                                     (1, 2, 2, 1), (1, 2, 2, 1), 'VALID')

    x = jnp.maximum(pool(conv(x, params['w1'], params['b1'], 2)), 0.0)
    x = jnp.maximum(pool(conv(x, params['w2'], params['b2'], 0)), 0.0)
    x = conv(x, params['w3'], params['b3'], 0)
    n, hf, wf, cf = x.shape
    feat = jnp.transpose(x, (0, 3, 1, 2)).reshape(n, cf * hf * wf)
    h = jnp.maximum(
        jnp.dot(feat.astype(bf16), params['w_fc1'].T.astype(bf16),
                preferred_element_type=f32) + params['b_fc1'], 0.0)
    return (jnp.dot(h.astype(bf16), params['w_fc2'].T.astype(bf16),
                    preferred_element_type=f32) + params['b_fc2'])


if __name__ == "__main__":
    # Deterministic synthetic parameters (PyTorch default-style uniform init).
    key = jax.random.PRNGKey(0)
    ks = jax.random.split(key, 11)

    def u(k, shape, fan_in):
        bound = 1.0 / math.sqrt(fan_in)
        return jax.random.uniform(k, shape, jnp.float32, -bound, bound)

    params = {
        'w1': u(ks[0], (6, 3, 5, 5), 3 * 25),     'b1': u(ks[1], (6,), 3 * 25),
        'w2': u(ks[2], (16, 6, 5, 5), 6 * 25),    'b2': u(ks[3], (16,), 6 * 25),
        'w3': u(ks[4], (120, 16, 5, 5), 16 * 25), 'b3': u(ks[5], (120,), 16 * 25),
        'w_fc1': u(ks[6], (84, 480), 480),        'b_fc1': u(ks[7], (84,), 480),
        'w_fc2': u(ks[8], (6, 84), 84),           'b_fc2': u(ks[9], (6,), 84),
    }

    # Batch 10 (padded to 2 grid steps of 8), NCHW like PyTorch, 32x32 input so
    # feature_channels = 120*2*2.
    batch = 10
    x = jax.random.normal(ks[10], (batch, 3, 32, 32), jnp.float32)

    buffers, dims = prepare_params(params)        # one-time weight packing
    fwd = jax.jit(lenet5_forward, static_argnums=2)

    out = jax.block_until_ready(fwd(x, buffers, dims))
    ref = jax.block_until_ready(_ref_forward(x, params))

    assert out.shape == (batch, 6), out.shape
    assert jnp.allclose(out, ref, atol=1e-2, rtol=1e-2), (
        "max abs diff = %f" % float(jnp.max(jnp.abs(out - ref))))
    print("KERNEL_OK")
</pallas_src>

<mosaic_0001>
module attributes {stable_mosaic.version = 11 : i64} {
  func.func @_lenet5_kernel(%arg0: i32, %arg1: memref<288x128xbf16, #tpu.memory_space<vmem>>, %arg2: memref<5x128x256xbf16, #tpu.memory_space<vmem>>, %arg3: memref<1x256xf32, #tpu.memory_space<vmem>>, %arg4: memref<5x256x256xbf16, #tpu.memory_space<vmem>>, %arg5: memref<1x256xf32, #tpu.memory_space<vmem>>, %arg6: memref<5x256x256xbf16, #tpu.memory_space<vmem>>, %arg7: memref<1x256xf32, #tpu.memory_space<vmem>>, %arg8: memref<2x256x128xbf16, #tpu.memory_space<vmem>>, %arg9: memref<1x128xf32, #tpu.memory_space<vmem>>, %arg10: memref<128x128xbf16, #tpu.memory_space<vmem>>, %arg11: memref<1x128xf32, #tpu.memory_space<vmem>>, %arg12: memref<8x128xf32, #tpu.memory_space<vmem>>, %arg13: memref<248x256xbf16, #tpu.memory_space<vmem>>, %arg14: memref<168x256xbf16, #tpu.memory_space<vmem>>) attributes {dimension_semantics = [#tpu.dimension_semantics<parallel>], iteration_bounds = array<i64: 2>, scalar_prefetch = 0 : i64, scratch_operands = 2 : i64, tpu.core_type = #tpu.core_type<tc>, window_params = [{transform_indices = @transform_0, window_bounds = array<i64: 288, 128>}, {pipeline_mode = #tpu.pipeline_mode<synchronous>, transform_indices = @transform_1, window_bounds = array<i64: 5, 128, 256>}, {pipeline_mode = #tpu.pipeline_mode<synchronous>, transform_indices = @transform_2, window_bounds = array<i64: 1, 256>}, {pipeline_mode = #tpu.pipeline_mode<synchronous>, transform_indices = @transform_3, window_bounds = array<i64: 5, 256, 256>}, {pipeline_mode = #tpu.pipeline_mode<synchronous>, transform_indices = @transform_4, window_bounds = array<i64: 1, 256>}, {pipeline_mode = #tpu.pipeline_mode<synchronous>, transform_indices = @transform_5, window_bounds = array<i64: 5, 256, 256>}, {pipeline_mode = #tpu.pipeline_mode<synchronous>, transform_indices = @transform_6, window_bounds = array<i64: 1, 256>}, {pipeline_mode = #tpu.pipeline_mode<synchronous>, transform_indices = @transform_7, window_bounds = array<i64: 2, 256, 128>}, {pipeline_mode = #tpu.pipeline_mode<synchronous>, transform_indices = @transform_8, window_bounds = array<i64: 1, 128>}, {pipeline_mode = #tpu.pipeline_mode<synchronous>, transform_indices = @transform_9, window_bounds = array<i64: 128, 128>}, {pipeline_mode = #tpu.pipeline_mode<synchronous>, transform_indices = @transform_10, window_bounds = array<i64: 1, 128>}, {transform_indices = @transform_11, window_bounds = array<i64: 8, 128>}]} {
    %c0 = arith.constant 0 : index
    %c0_0 = arith.constant 0 : index
    %0 = vector.load %arg1[%c0, %c0_0] : memref<288x128xbf16, #tpu.memory_space<vmem>>, vector<256x128xbf16>
    %c0_1 = arith.constant 0 : index
    %c0_2 = arith.constant 0 : index
    %c0_3 = arith.constant 0 : index
    %1 = vector.load %arg2[%c0_1, %c0_2, %c0_3] : memref<5x128x256xbf16, #tpu.memory_space<vmem>>, vector<1x128x256xbf16>
    %2 = vector.shape_cast %1 : vector<1x128x256xbf16> to vector<128x256xbf16>
    %cst = arith.constant dense<0.000000e+00> : vector<256x256xf32>
    %3 = tpu.matmul %0, %2, %cst {dimension_numbers = #tpu.dot_dimension_numbers<[1], [0], [0], [1], [0, 0, 1, 1], [], []>} : vector<256x128xbf16>, vector<128x256xbf16>, vector<256x256xf32> -> vector<256x256xf32>
    %c8 = arith.constant 8 : index
    %c0_4 = arith.constant 0 : index
    %4 = vector.load %arg1[%c8, %c0_4] : memref<288x128xbf16, #tpu.memory_space<vmem>>, vector<256x128xbf16>
    %c1 = arith.constant 1 : index
    %c0_5 = arith.constant 0 : index
    %c0_6 = arith.constant 0 : index
    %5 = vector.load %arg2[%c1, %c0_5, %c0_6] : memref<5x128x256xbf16, #tpu.memory_space<vmem>>, vector<1x128x256xbf16>
    %6 = vector.shape_cast %5 : vector<1x128x256xbf16> to vector<128x256xbf16>
    %cst_7 = arith.constant dense<0.000000e+00> : vector<256x256xf32>
    %7 = tpu.matmul %4, %6, %cst_7 {dimension_numbers = #tpu.dot_dimension_numbers<[1], [0], [0], [1], [0, 0, 1, 1], [], []>} : vector<256x128xbf16>, vector<128x256xbf16>, vector<256x256xf32> -> vector<256x256xf32>
    %8 = arith.addf %3, %7 : vector<256x256xf32>
    %c16 = arith.constant 16 : index
    %c0_8 = arith.constant 0 : index
    %9 = vector.load %arg1[%c16, %c0_8] : memref<288x128xbf16, #tpu.memory_space<vmem>>, vector<256x128xbf16>
    %c2 = arith.constant 2 : index
    %c0_9 = arith.constant 0 : index
    %c0_10 = arith.constant 0 : index
    %10 = vector.load %arg2[%c2, %c0_9, %c0_10] : memref<5x128x256xbf16, #tpu.memory_space<vmem>>, vector<1x128x256xbf16>
    %11 = vector.shape_cast %10 : vector<1x128x256xbf16> to vector<128x256xbf16>
    %cst_11 = arith.constant dense<0.000000e+00> : vector<256x256xf32>
    %12 = tpu.matmul %9, %11, %cst_11 {dimension_numbers = #tpu.dot_dimension_numbers<[1], [0], [0], [1], [0, 0, 1, 1], [], []>} : vector<256x128xbf16>, vector<128x256xbf16>, vector<256x256xf32> -> vector<256x256xf32>
    %13 = arith.addf %8, %12 : vector<256x256xf32>
    %c24 = arith.constant 24 : index
    %c0_12 = arith.constant 0 : index
    %14 = vector.load %arg1[%c24, %c0_12] : memref<288x128xbf16, #tpu.memory_space<vmem>>, vector<256x128xbf16>
    %c3 = arith.constant 3 : index
    %c0_13 = arith.constant 0 : index
    %c0_14 = arith.constant 0 : index
    %15 = vector.load %arg2[%c3, %c0_13, %c0_14] : memref<5x128x256xbf16, #tpu.memory_space<vmem>>, vector<1x128x256xbf16>
    %16 = vector.shape_cast %15 : vector<1x128x256xbf16> to vector<128x256xbf16>
    %cst_15 = arith.constant dense<0.000000e+00> : vector<256x256xf32>
    %17 = tpu.matmul %14, %16, %cst_15 {dimension_numbers = #tpu.dot_dimension_numbers<[1], [0], [0], [1], [0, 0, 1, 1], [], []>} : vector<256x128xbf16>, vector<128x256xbf16>, vector<256x256xf32> -> vector<256x256xf32>
    %18 = arith.addf %13, %17 : vector<256x256xf32>
    %c32 = arith.constant 32 : index
    %c0_16 = arith.constant 0 : index
    %19 = vector.load %arg1[%c32, %c0_16] : memref<288x128xbf16, #tpu.memory_space<vmem>>, vector<256x128xbf16>
    %c4 = arith.constant 4 : index
    %c0_17 = arith.constant 0 : index
    %c0_18 = arith.constant 0 : index
    %20 = vector.load %arg2[%c4, %c0_17, %c0_18] : memref<5x128x256xbf16, #tpu.memory_space<vmem>>, vector<1x128x256xbf16>
    %21 = vector.shape_cast %20 : vector<1x128x256xbf16> to vector<128x256xbf16>
    %cst_19 = arith.constant dense<0.000000e+00> : vector<256x256xf32>
    %22 = tpu.matmul %19, %21, %cst_19 {dimension_numbers = #tpu.dot_dimension_numbers<[1], [0], [0], [1], [0, 0, 1, 1], [], []>} : vector<256x128xbf16>, vector<128x256xbf16>, vector<256x256xf32> -> vector<256x256xf32>
    %23 = arith.addf %18, %22 : vector<256x256xf32>
    %c0_20 = arith.constant 0 : index
    %c0_21 = arith.constant 0 : index
    %24 = vector.load %arg3[%c0_20, %c0_21] : memref<1x256xf32, #tpu.memory_space<vmem>>, vector<1x256xf32>
    %25 = vector.broadcast %24 : vector<1x256xf32> to vector<256x256xf32>
    %26 = arith.addf %23, %25 : vector<256x256xf32>
    %27 = vector.extract_strided_slice %26 {offsets = [0, 0], sizes = [248, 256], strides = [1, 1]} : vector<256x256xf32> to vector<248x256xf32>
    %28 = vector.extract_strided_slice %26 {offsets = [8, 0], sizes = [248, 256], strides = [1, 1]} : vector<256x256xf32> to vector<248x256xf32>
    %29 = arith.maximumf %27, %28 : vector<248x256xf32>
    %c250_i32 = arith.constant 250 : i32
    %30 = tpu.dynamic_rotate %29 by %c250_i32 dim 1 : vector<248x256xf32>, i32 -> vector<248x256xf32>
    %31 = arith.maximumf %29, %30 : vector<248x256xf32>
    %cst_22 = arith.constant 0.000000e+00 : f32
    %32 = vector.broadcast %cst_22 : f32 to vector<248x256xf32>
    %33 = arith.maximumf %31, %32 : vector<248x256xf32>
    %34 = arith.truncf %33 : vector<248x256xf32> to vector<248x256xbf16>
    %c0_23 = arith.constant 0 : index
    %c0_24 = arith.constant 0 : index
    %35 = vector.load %arg13[%c0_23, %c0_24] : memref<248x256xbf16, #tpu.memory_space<vmem>>, vector<248x256xbf16>
    tpu.vector_store %arg13[%c0_23, %c0_24], %34 {strides = array<i32>} : memref<248x256xbf16, #tpu.memory_space<vmem>>, vector<248x256xbf16>,
    %c0_25 = arith.constant 0 : index
    %c0_26 = arith.constant 0 : index
    %36 = vector.load %arg13[%c0_25, %c0_26] : memref<248x256xbf16, #tpu.memory_space<vmem>>, vector<184x256xbf16>
    %c0_27 = arith.constant 0 : index
    %c0_28 = arith.constant 0 : index
    %c0_29 = arith.constant 0 : index
    %37 = vector.load %arg4[%c0_27, %c0_28, %c0_29] : memref<5x256x256xbf16, #tpu.memory_space<vmem>>, vector<1x256x256xbf16>
    %38 = vector.shape_cast %37 : vector<1x256x256xbf16> to vector<256x256xbf16>
    %cst_30 = arith.constant dense<0.000000e+00> : vector<184x256xf32>
    %39 = tpu.matmul %36, %38, %cst_30 {dimension_numbers = #tpu.dot_dimension_numbers<[1], [0], [0], [1], [0, 0, 1, 1], [], []>} : vector<184x256xbf16>, vector<256x256xbf16>, vector<184x256xf32> -> vector<184x256xf32>
    %c16_31 = arith.constant 16 : index
    %c0_32 = arith.constant 0 : index
    %40 = vector.load %arg13[%c16_31, %c0_32] : memref<248x256xbf16, #tpu.memory_space<vmem>>, vector<184x256xbf16>
    %c1_33 = arith.constant 1 : index
    %c0_34 = arith.constant 0 : index
    %c0_35 = arith.constant 0 : index
    %41 = vector.load %arg4[%c1_33, %c0_34, %c0_35] : memref<5x256x256xbf16, #tpu.memory_space<vmem>>, vector<1x256x256xbf16>
    %42 = vector.shape_cast %41 : vector<1x256x256xbf16> to vector<256x256xbf16>
    %cst_36 = arith.constant dense<0.000000e+00> : vector<184x256xf32>
    %43 = tpu.matmul %40, %42, %cst_36 {dimension_numbers = #tpu.dot_dimension_numbers<[1], [0], [0], [1], [0, 0, 1, 1], [], []>} : vector<184x256xbf16>, vector<256x256xbf16>, vector<184x256xf32> -> vector<184x256xf32>
    %44 = arith.addf %39, %43 : vector<184x256xf32>
    %c32_37 = arith.constant 32 : index
    %c0_38 = arith.constant 0 : index
    %45 = vector.load %arg13[%c32_37, %c0_38] : memref<248x256xbf16, #tpu.memory_space<vmem>>, vector<184x256xbf16>
    %c2_39 = arith.constant 2 : index
    %c0_40 = arith.constant 0 : index
    %c0_41 = arith.constant 0 : index
    %46 = vector.load %arg4[%c2_39, %c0_40, %c0_41] : memref<5x256x256xbf16, #tpu.memory_space<vmem>>, vector<1x256x256xbf16>
    %47 = vector.shape_cast %46 : vector<1x256x256xbf16> to vector<256x256xbf16>
    %cst_42 = arith.constant dense<0.000000e+00> : vector<184x256xf32>
    %48 = tpu.matmul %45, %47, %cst_42 {dimension_numbers = #tpu.dot_dimension_numbers<[1], [0], [0], [1], [0, 0, 1, 1], [], []>} : vector<184x256xbf16>, vector<256x256xbf16>, vector<184x256xf32> -> vector<184x256xf32>
    %49 = arith.addf %44, %48 : vector<184x256xf32>
    %c48 = arith.constant 48 : index
    %c0_43 = arith.constant 0 : index
    %50 = vector.load %arg13[%c48, %c0_43] : memref<248x256xbf16, #tpu.memory_space<vmem>>, vector<184x256xbf16>
    %c3_44 = arith.constant 3 : index
    %c0_45 = arith.constant 0 : index
    %c0_46 = arith.constant 0 : index
    %51 = vector.load %arg4[%c3_44, %c0_45, %c0_46] : memref<5x256x256xbf16, #tpu.memory_space<vmem>>, vector<1x256x256xbf16>
    %52 = vector.shape_cast %51 : vector<1x256x256xbf16> to vector<256x256xbf16>
    %cst_47 = arith.constant dense<0.000000e+00> : vector<184x256xf32>
    %53 = tpu.matmul %50, %52, %cst_47 {dimension_numbers = #tpu.dot_dimension_numbers<[1], [0], [0], [1], [0, 0, 1, 1], [], []>} : vector<184x256xbf16>, vector<256x256xbf16>, vector<184x256xf32> -> vector<184x256xf32>
    %54 = arith.addf %49, %53 : vector<184x256xf32>
    %c64 = arith.constant 64 : index
    %c0_48 = arith.constant 0 : index
    %55 = vector.load %arg13[%c64, %c0_48] : memref<248x256xbf16, #tpu.memory_space<vmem>>, vector<184x256xbf16>
    %c4_49 = arith.constant 4 : index
    %c0_50 = arith.constant 0 : index
    %c0_51 = arith.constant 0 : index
    %56 = vector.load %arg4[%c4_49, %c0_50, %c0_51] : memref<5x256x256xbf16, #tpu.memory_space<vmem>>, vector<1x256x256xbf16>
    %57 = vector.shape_cast %56 : vector<1x256x256xbf16> to vector<256x256xbf16>
    %cst_52 = arith.constant dense<0.000000e+00> : vector<184x256xf32>
    %58 = tpu.matmul %55, %57, %cst_52 {dimension_numbers = #tpu.dot_dimension_numbers<[1], [0], [0], [1], [0, 0, 1, 1], [], []>} : vector<184x256xbf16>, vector<256x256xbf16>, vector<184x256xf32> -> vector<184x256xf32>
    %59 = arith.addf %54, %58 : vector<184x256xf32>
    %c0_53 = arith.constant 0 : index
    %c0_54 = arith.constant 0 : index
    %60 = vector.load %arg5[%c0_53, %c0_54] : memref<1x256xf32, #tpu.memory_space<vmem>>, vector<1x256xf32>
    %61 = vector.broadcast %60 : vector<1x256xf32> to vector<184x256xf32>
    %62 = arith.addf %59, %61 : vector<184x256xf32>
    %63 = vector.extract_strided_slice %62 {offsets = [0, 0], sizes = [168, 256], strides = [1, 1]} : vector<184x256xf32> to vector<168x256xf32>
    %64 = vector.extract_strided_slice %62 {offsets = [16, 0], sizes = [168, 256], strides = [1, 1]} : vector<184x256xf32> to vector<168x256xf32>
    %65 = arith.maximumf %63, %64 : vector<168x256xf32>
    %c240_i32 = arith.constant 240 : i32
    %66 = tpu.dynamic_rotate %65 by %c240_i32 dim 1 : vector<168x256xf32>, i32 -> vector<168x256xf32>
    %67 = arith.maximumf %65, %66 : vector<168x256xf32>
    %cst_55 = arith.constant 0.000000e+00 : f32
    %68 = vector.broadcast %cst_55 : f32 to vector<168x256xf32>
    %69 = arith.maximumf %67, %68 : vector<168x256xf32>
    %70 = arith.truncf %69 : vector<168x256xf32> to vector<168x256xbf16>
    %c0_56 = arith.constant 0 : index
    %c0_57 = arith.constant 0 : index
    %71 = vector.load %arg14[%c0_56, %c0_57] : memref<168x256xbf16, #tpu.memory_space<vmem>>, vector<168x256xbf16>
    tpu.vector_store %arg14[%c0_56, %c0_57], %70 {strides = array<i32>} : memref<168x256xbf16, #tpu.memory_space<vmem>>, vector<168x256xbf16>,
    %c0_58 = arith.constant 0 : index
    %c0_59 = arith.constant 0 : index
    %72 = vector.load %arg14[%c0_58, %c0_59] : memref<168x256xbf16, #tpu.memory_space<vmem>>, vector<8x256xbf16>
    %c32_60 = arith.constant 32 : index
    %c0_61 = arith.constant 0 : index
    %73 = vector.load %arg14[%c32_60, %c0_61] : memref<168x256xbf16, #tpu.memory_space<vmem>>, vector<8x256xbf16>
    %c64_62 = arith.constant 64 : index
    %c0_63 = arith.constant 0 : index
    %74 = vector.load %arg14[%c64_62, %c0_63] : memref<168x256xbf16, #tpu.memory_space<vmem>>, vector<8x256xbf16>
    %c96 = arith.constant 96 : index
    %c0_64 = arith.constant 0 : index
    %75 = vector.load %arg14[%c96, %c0_64] : memref<168x256xbf16, #tpu.memory_space<vmem>>, vector<8x256xbf16>
    %c128 = arith.constant 128 : index
    %c0_65 = arith.constant 0 : index
    %76 = vector.load %arg14[%c128, %c0_65] : memref<168x256xbf16, #tpu.memory_space<vmem>>, vector<8x256xbf16>
    %c160 = arith.constant 160 : index
    %c0_66 = arith.constant 0 : index
    %77 = vector.load %arg14[%c160, %c0_66] : memref<168x256xbf16, #tpu.memory_space<vmem>>, vector<8x256xbf16>
    %c0_67 = arith.constant 0 : index
    %c0_68 = arith.constant 0 : index
    %c0_69 = arith.constant 0 : index
    %78 = vector.load %arg6[%c0_67, %c0_68, %c0_69] : memref<5x256x256xbf16, #tpu.memory_space<vmem>>, vector<1x256x256xbf16>
    %79 = vector.shape_cast %78 : vector<1x256x256xbf16> to vector<256x256xbf16>
    %cst_70 = arith.constant dense<0.000000e+00> : vector<8x256xf32>
    %80 = tpu.matmul %72, %79, %cst_70 {dimension_numbers = #tpu.dot_dimension_numbers<[1], [0], [0], [1], [0, 0, 1, 1], [], []>} : vector<8x256xbf16>, vector<256x256xbf16>, vector<8x256xf32> -> vector<8x256xf32>
    %c1_71 = arith.constant 1 : index
    %c0_72 = arith.constant 0 : index
    %c0_73 = arith.constant 0 : index
    %81 = vector.load %arg6[%c1_71, %c0_72, %c0_73] : memref<5x256x256xbf16, #tpu.memory_space<vmem>>, vector<1x256x256xbf16>
    %82 = vector.shape_cast %81 : vector<1x256x256xbf16> to vector<256x256xbf16>
    %cst_74 = arith.constant dense<0.000000e+00> : vector<8x256xf32>
    %83 = tpu.matmul %73, %82, %cst_74 {dimension_numbers = #tpu.dot_dimension_numbers<[1], [0], [0], [1], [0, 0, 1, 1], [], []>} : vector<8x256xbf16>, vector<256x256xbf16>, vector<8x256xf32> -> vector<8x256xf32>
    %84 = arith.addf %80, %83 : vector<8x256xf32>
    %c2_75 = arith.constant 2 : index
    %c0_76 = arith.constant 0 : index
    %c0_77 = arith.constant 0 : index
    %85 = vector.load %arg6[%c2_75, %c0_76, %c0_77] : memref<5x256x256xbf16, #tpu.memory_space<vmem>>, vector<1x256x256xbf16>
    %86 = vector.shape_cast %85 : vector<1x256x256xbf16> to vector<256x256xbf16>
    %cst_78 = arith.constant dense<0.000000e+00> : vector<8x256xf32>
    %87 = tpu.matmul %74, %86, %cst_78 {dimension_numbers = #tpu.dot_dimension_numbers<[1], [0], [0], [1], [0, 0, 1, 1], [], []>} : vector<8x256xbf16>, vector<256x256xbf16>, vector<8x256xf32> -> vector<8x256xf32>
    %88 = arith.addf %84, %87 : vector<8x256xf32>
    %c3_79 = arith.constant 3 : index
    %c0_80 = arith.constant 0 : index
    %c0_81 = arith.constant 0 : index
    %89 = vector.load %arg6[%c3_79, %c0_80, %c0_81] : memref<5x256x256xbf16, #tpu.memory_space<vmem>>, vector<1x256x256xbf16>
    %90 = vector.shape_cast %89 : vector<1x256x256xbf16> to vector<256x256xbf16>
    %cst_82 = arith.constant dense<0.000000e+00> : vector<8x256xf32>
    %91 = tpu.matmul %75, %90, %cst_82 {dimension_numbers = #tpu.dot_dimension_numbers<[1], [0], [0], [1], [0, 0, 1, 1], [], []>} : vector<8x256xbf16>, vector<256x256xbf16>, vector<8x256xf32> -> vector<8x256xf32>
    %92 = arith.addf %88, %91 : vector<8x256xf32>
    %c4_83 = arith.constant 4 : index
    %c0_84 = arith.constant 0 : index
    %c0_85 = arith.constant 0 : index
    %93 = vector.load %arg6[%c4_83, %c0_84, %c0_85] : memref<5x256x256xbf16, #tpu.memory_space<vmem>>, vector<1x256x256xbf16>
    %94 = vector.shape_cast %93 : vector<1x256x256xbf16> to vector<256x256xbf16>
    %cst_86 = arith.constant dense<0.000000e+00> : vector<8x256xf32>
    %95 = tpu.matmul %76, %94, %cst_86 {dimension_numbers = #tpu.dot_dimension_numbers<[1], [0], [0], [1], [0, 0, 1, 1], [], []>} : vector<8x256xbf16>, vector<256x256xbf16>, vector<8x256xf32> -> vector<8x256xf32>
    %96 = arith.addf %92, %95 : vector<8x256xf32>
    %c0_87 = arith.constant 0 : index
    %c0_88 = arith.constant 0 : index
    %97 = vector.load %arg7[%c0_87, %c0_88] : memref<1x256xf32, #tpu.memory_space<vmem>>, vector<1x256xf32>
    %98 = vector.broadcast %97 : vector<1x256xf32> to vector<8x256xf32>
    %99 = arith.addf %96, %98 : vector<8x256xf32>
    %100 = arith.truncf %99 : vector<8x256xf32> to vector<8x256xbf16>
    %c0_89 = arith.constant 0 : index
    %c0_90 = arith.constant 0 : index
    %c0_91 = arith.constant 0 : index
    %101 = vector.load %arg6[%c0_89, %c0_90, %c0_91] : memref<5x256x256xbf16, #tpu.memory_space<vmem>>, vector<1x256x256xbf16>
    %102 = vector.shape_cast %101 : vector<1x256x256xbf16> to vector<256x256xbf16>
    %cst_92 = arith.constant dense<0.000000e+00> : vector<8x256xf32>
    %103 = tpu.matmul %73, %102, %cst_92 {dimension_numbers = #tpu.dot_dimension_numbers<[1], [0], [0], [1], [0, 0, 1, 1], [], []>} : vector<8x256xbf16>, vector<256x256xbf16>, vector<8x256xf32> -> vector<8x256xf32>
    %c1_93 = arith.constant 1 : index
    %c0_94 = arith.constant 0 : index
    %c0_95 = arith.constant 0 : index
    %104 = vector.load %arg6[%c1_93, %c0_94, %c0_95] : memref<5x256x256xbf16, #tpu.memory_space<vmem>>, vector<1x256x256xbf16>
    %105 = vector.shape_cast %104 : vector<1x256x256xbf16> to vector<256x256xbf16>
    %cst_96 = arith.constant dense<0.000000e+00> : vector<8x256xf32>
    %106 = tpu.matmul %74, %105, %cst_96 {dimension_numbers = #tpu.dot_dimension_numbers<[1], [0], [0], [1], [0, 0, 1, 1], [], []>} : vector<8x256xbf16>, vector<256x256xbf16>, vector<8x256xf32> -> vector<8x256xf32>
    %107 = arith.addf %103, %106 : vector<8x256xf32>
    %c2_97 = arith.constant 2 : index
    %c0_98 = arith.constant 0 : index
    %c0_99 = arith.constant 0 : index
    %108 = vector.load %arg6[%c2_97, %c0_98, %c0_99] : memref<5x256x256xbf16, #tpu.memory_space<vmem>>, vector<1x256x256xbf16>
    %109 = vector.shape_cast %108 : vector<1x256x256xbf16> to vector<256x256xbf16>
    %cst_100 = arith.constant dense<0.000000e+00> : vector<8x256xf32>
    %110 = tpu.matmul %75, %109, %cst_100 {dimension_numbers = #tpu.dot_dimension_numbers<[1], [0], [0], [1], [0, 0, 1, 1], [], []>} : vector<8x256xbf16>, vector<256x256xbf16>, vector<8x256xf32> -> vector<8x256xf32>
    %111 = arith.addf %107, %110 : vector<8x256xf32>
    %c3_101 = arith.constant 3 : index
    %c0_102 = arith.constant 0 : index
    %c0_103 = arith.constant 0 : index
    %112 = vector.load %arg6[%c3_101, %c0_102, %c0_103] : memref<5x256x256xbf16, #tpu.memory_space<vmem>>, vector<1x256x256xbf16>
    %113 = vector.shape_cast %112 : vector<1x256x256xbf16> to vector<256x256xbf16>
    %cst_104 = arith.constant dense<0.000000e+00> : vector<8x256xf32>
    %114 = tpu.matmul %76, %113, %cst_104 {dimension_numbers = #tpu.dot_dimension_numbers<[1], [0], [0], [1], [0, 0, 1, 1], [], []>} : vector<8x256xbf16>, vector<256x256xbf16>, vector<8x256xf32> -> vector<8x256xf32>
    %115 = arith.addf %111, %114 : vector<8x256xf32>
    %c4_105 = arith.constant 4 : index
    %c0_106 = arith.constant 0 : index
    %c0_107 = arith.constant 0 : index
    %116 = vector.load %arg6[%c4_105, %c0_106, %c0_107] : memref<5x256x256xbf16, #tpu.memory_space<vmem>>, vector<1x256x256xbf16>
    %117 = vector.shape_cast %116 : vector<1x256x256xbf16> to vector<256x256xbf16>
    %cst_108 = arith.constant dense<0.000000e+00> : vector<8x256xf32>
    %118 = tpu.matmul %77, %117, %cst_108 {dimension_numbers = #tpu.dot_dimension_numbers<[1], [0], [0], [1], [0, 0, 1, 1], [], []>} : vector<8x256xbf16>, vector<256x256xbf16>, vector<8x256xf32> -> vector<8x256xf32>
    %119 = arith.addf %115, %118 : vector<8x256xf32>
    %c0_109 = arith.constant 0 : index
    %c0_110 = arith.constant 0 : index
    %120 = vector.load %arg7[%c0_109, %c0_110] : memref<1x256xf32, #tpu.memory_space<vmem>>, vector<1x256xf32>
    %121 = vector.broadcast %120 : vector<1x256xf32> to vector<8x256xf32>
    %122 = arith.addf %119, %121 : vector<8x256xf32>
    %123 = arith.truncf %122 : vector<8x256xf32> to vector<8x256xbf16>
    %c0_111 = arith.constant 0 : index
    %c0_112 = arith.constant 0 : index
    %c0_113 = arith.constant 0 : index
    %124 = vector.load %arg8[%c0_111, %c0_112, %c0_113] : memref<2x256x128xbf16, #tpu.memory_space<vmem>>, vector<1x256x128xbf16>
    %125 = vector.shape_cast %124 : vector<1x256x128xbf16> to vector<256x128xbf16>
    %cst_114 = arith.constant dense<0.000000e+00> : vector<8x128xf32>
    %126 = tpu.matmul %100, %125, %cst_114 {dimension_numbers = #tpu.dot_dimension_numbers<[1], [0], [0], [1], [0, 0, 1, 1], [], []>} : vector<8x256xbf16>, vector<256x128xbf16>, vector<8x128xf32> -> vector<8x128xf32>
    %c1_115 = arith.constant 1 : index
    %c0_116 = arith.constant 0 : index
    %c0_117 = arith.constant 0 : index
    %127 = vector.load %arg8[%c1_115, %c0_116, %c0_117] : memref<2x256x128xbf16, #tpu.memory_space<vmem>>, vector<1x256x128xbf16>
    %128 = vector.shape_cast %127 : vector<1x256x128xbf16> to vector<256x128xbf16>
    %cst_118 = arith.constant dense<0.000000e+00> : vector<8x128xf32>
    %129 = tpu.matmul %123, %128, %cst_118 {dimension_numbers = #tpu.dot_dimension_numbers<[1], [0], [0], [1], [0, 0, 1, 1], [], []>} : vector<8x256xbf16>, vector<256x128xbf16>, vector<8x128xf32> -> vector<8x128xf32>
    %130 = arith.addf %126, %129 : vector<8x128xf32>
    %c0_119 = arith.constant 0 : index
    %c0_120 = arith.constant 0 : index
    %131 = vector.load %arg9[%c0_119, %c0_120] : memref<1x128xf32, #tpu.memory_space<vmem>>, vector<1x128xf32>
    %132 = vector.broadcast %131 : vector<1x128xf32> to vector<8x128xf32>
    %133 = arith.addf %130, %132 : vector<8x128xf32>
    %cst_121 = arith.constant 0.000000e+00 : f32
    %134 = vector.broadcast %cst_121 : f32 to vector<8x128xf32>
    %135 = arith.maximumf %133, %134 : vector<8x128xf32>
    %136 = arith.truncf %135 : vector<8x128xf32> to vector<8x128xbf16>
    %c0_122 = arith.constant 0 : index
    %c0_123 = arith.constant 0 : index
    %137 = vector.load %arg10[%c0_122, %c0_123] : memref<128x128xbf16, #tpu.memory_space<vmem>>, vector<128x128xbf16>
    %cst_124 = arith.constant dense<0.000000e+00> : vector<8x128xf32>
    %138 = tpu.matmul %136, %137, %cst_124 {dimension_numbers = #tpu.dot_dimension_numbers<[1], [0], [0], [1], [0, 0, 1, 1], [], []>} : vector<8x128xbf16>, vector<128x128xbf16>, vector<8x128xf32> -> vector<8x128xf32>
    %c0_125 = arith.constant 0 : index
    %c0_126 = arith.constant 0 : index
    %139 = vector.load %arg11[%c0_125, %c0_126] : memref<1x128xf32, #tpu.memory_space<vmem>>, vector<1x128xf32>
    %140 = vector.broadcast %139 : vector<1x128xf32> to vector<8x128xf32>
    %141 = arith.addf %138, %140 : vector<8x128xf32>
    %c0_127 = arith.constant 0 : index
    %c0_128 = arith.constant 0 : index
    %142 = vector.load %arg12[%c0_127, %c0_128] : memref<8x128xf32, #tpu.memory_space<vmem>>, vector<8x128xf32>
    tpu.vector_store %arg12[%c0_127, %c0_128], %141 {strides = array<i32>} : memref<8x128xf32, #tpu.memory_space<vmem>>, vector<8x128xf32>,
    return
  }
  func.func @transform_0(%arg0: i32) -> (i32, i32) {
    %c0_i32 = arith.constant 0 : i32
    %c0_i32_0 = arith.constant 0 : i32
    return %arg0, %c0_i32 : i32, i32
  }
  func.func @transform_1(%arg0: i32) -> (i32, i32, i32) {
    %c0_i32 = arith.constant 0 : i32
    %c0_i32_0 = arith.constant 0 : i32
    %c0_i32_1 = arith.constant 0 : i32
    %c0_i32_2 = arith.constant 0 : i32
    return %c0_i32, %c0_i32_0, %c0_i32_1 : i32, i32, i32
  }
  func.func @transform_2(%arg0: i32) -> (i32, i32) {
    %c0_i32 = arith.constant 0 : i32
    %c0_i32_0 = arith.constant 0 : i32
    %c0_i32_1 = arith.constant 0 : i32
    return %c0_i32, %c0_i32_0 : i32, i32
  }
  func.func @transform_3(%arg0: i32) -> (i32, i32, i32) {
    %c0_i32 = arith.constant 0 : i32
    %c0_i32_0 = arith.constant 0 : i32
    %c0_i32_1 = arith.constant 0 : i32
    %c0_i32_2 = arith.constant 0 : i32
    return %c0_i32, %c0_i32_0, %c0_i32_1 : i32, i32, i32
  }
  func.func @transform_4(%arg0: i32) -> (i32, i32) {
    %c0_i32 = arith.constant 0 : i32
    %c0_i32_0 = arith.constant 0 : i32
    %c0_i32_1 = arith.constant 0 : i32
    return %c0_i32, %c0_i32_0 : i32, i32
  }
  func.func @transform_5(%arg0: i32) -> (i32, i32, i32) {
    %c0_i32 = arith.constant 0 : i32
    %c0_i32_0 = arith.constant 0 : i32
    %c0_i32_1 = arith.constant 0 : i32
    %c0_i32_2 = arith.constant 0 : i32
    return %c0_i32, %c0_i32_0, %c0_i32_1 : i32, i32, i32
  }
  func.func @transform_6(%arg0: i32) -> (i32, i32) {
    %c0_i32 = arith.constant 0 : i32
    %c0_i32_0 = arith.constant 0 : i32
    %c0_i32_1 = arith.constant 0 : i32
    return %c0_i32, %c0_i32_0 : i32, i32
  }
  func.func @transform_7(%arg0: i32) -> (i32, i32, i32) {
    %c0_i32 = arith.constant 0 : i32
    %c0_i32_0 = arith.constant 0 : i32
    %c0_i32_1 = arith.constant 0 : i32
    %c0_i32_2 = arith.constant 0 : i32
    return %c0_i32, %c0_i32_0, %c0_i32_1 : i32, i32, i32
  }
  func.func @transform_8(%arg0: i32) -> (i32, i32) {
    %c0_i32 = arith.constant 0 : i32
    %c0_i32_0 = arith.constant 0 : i32
    %c0_i32_1 = arith.constant 0 : i32
    return %c0_i32, %c0_i32_0 : i32, i32
  }
  func.func @transform_9(%arg0: i32) -> (i32, i32) {
    %c0_i32 = arith.constant 0 : i32
    %c0_i32_0 = arith.constant 0 : i32
    %c0_i32_1 = arith.constant 0 : i32
    return %c0_i32, %c0_i32_0 : i32, i32
  }
  func.func @transform_10(%arg0: i32) -> (i32, i32) {
    %c0_i32 = arith.constant 0 : i32
    %c0_i32_0 = arith.constant 0 : i32
    %c0_i32_1 = arith.constant 0 : i32
    return %c0_i32, %c0_i32_0 : i32, i32
  }
  func.func @transform_11(%arg0: i32) -> (i32, i32) {
    %c0_i32 = arith.constant 0 : i32
    %c0_i32_0 = arith.constant 0 : i32
    return %arg0, %c0_i32 : i32, i32
  }
}

</mosaic_0001>

<llo_original>
// kernel: lenet5_forward.1
$region0: #{lenet5_forward.1}
  #allocation0 [shape = 'u32[]', space=smem, size = 0x4, offset = 0x4, fixed_abs, tag = 'smem constant byte address 0x4 - core index']
  #allocation1 [shape = 'u32[144,128]{1,0:T(1,128)}', space=vmem, size = 0x12000, scoped, tag = 'internal scratch']
  #allocation2 [shape = 'bf16[248,256]{1,0:T(8,128)(2,1)}', space=vmem, size = 0x1f000, scoped, tag = 'scratch operand']
  #allocation3 [shape = 'bf16[168,256]{1,0:T(8,128)(2,1)}', space=vmem, size = 0x15000, scoped, tag = 'scratch operand']
  %s0 = inlined_call_operand.vmem [shape: bf16[576,128], index: 0, kind: input, shape index: {}]
  %s1 = inlined_call_operand.vmem [shape: bf16[5,128,256], index: 1, kind: input, shape index: {}]
  %s2 = inlined_call_operand.vmem [shape: f32[1,256], index: 2, kind: input, shape index: {}]
  %s3 = inlined_call_operand.vmem [shape: bf16[5,256,256], index: 3, kind: input, shape index: {}]
  %s4 = inlined_call_operand.vmem [shape: f32[1,256], index: 4, kind: input, shape index: {}]
  %s5 = inlined_call_operand.vmem [shape: bf16[5,256,256], index: 5, kind: input, shape index: {}]
  %s6 = inlined_call_operand.vmem [shape: f32[1,256], index: 6, kind: input, shape index: {}]
  %s7 = inlined_call_operand.vmem [shape: bf16[2,256,128], index: 7, kind: input, shape index: {}]
  %s8 = inlined_call_operand.vmem [shape: f32[1,128], index: 8, kind: input, shape index: {}]
  %s9 = inlined_call_operand.vmem [shape: bf16[128,128], index: 9, kind: input, shape index: {}]
  %s10 = inlined_call_operand.vmem [shape: f32[1,128], index: 10, kind: input, shape index: {}]
  %s11 = inlined_call_operand.vmem [shape: f32[16,128], index: 11, kind: output, shape index: {}]
  %s12 = sld [smem:[#allocation0]]
  $region77: #{lenet5_forward.1} parent=0
    _
  %s14 = ssub.s32 1, %s12
  %s15 = scalar_select 0, %s14, %s12
  loop: start=0, step=1, limit=4
  $region2: #{lenet5_forward.1} parent=0 // loop_pre_header
    _
  $region3: #{lenet5_forward.1} parent=0 // loop_header
    %s17 = sphi 0, %s21
    %p18 = scmp.ge.s32.totalorder %s17, 4
    %s27 = sphi 0, %s29
    %s30 = sphi 0, %s27
    %s31 = sphi 0, %s30
    %s47 = sphi 0, %s31
    %s51 = sphi 0, %s51
    %s53 = sphi 0, %s51
    %s54 = sphi 0, %s53
    %s68 = sphi 0, %s54
    %s72 = sphi 0, %s72
    %s74 = sphi 0, %s72
    %s75 = sphi 0, %s74
    %s89 = sphi 0, %s75
    %s93 = sphi 0, %s93
    %s95 = sphi 0, %s93
    %s96 = sphi 0, %s95
    %s110 = sphi 0, %s96
    %s114 = sphi 0, %s114
    %s116 = sphi 0, %s114
    %s117 = sphi 0, %s116
    %s131 = sphi 0, %s117
    %s135 = sphi 0, %s135
    %s137 = sphi 0, %s135
    %s138 = sphi 0, %s137
    %s152 = sphi 0, %s138
    %s156 = sphi 0, %s156
    %s158 = sphi 0, %s156
    %s159 = sphi 0, %s158
    %s173 = sphi 0, %s159
    %s177 = sphi 0, %s177
    %s179 = sphi 0, %s177
    %s180 = sphi 0, %s179
    %s194 = sphi 0, %s180
    %s198 = sphi 0, %s198
    %s200 = sphi 0, %s198
    %s201 = sphi 0, %s200
    %s215 = sphi 0, %s201
    %s219 = sphi 0, %s219
    %s221 = sphi 0, %s219
    %s222 = sphi 0, %s221
    %s236 = sphi 0, %s222
    %s240 = sphi 0, %s240
    %s242 = sphi 0, %s240
    %s243 = sphi 0, %s242
    %s257 = sphi 0, %s243
    %s263 = sphi 0, %s265
    %s266 = sphi 0, %s263
    %s267 = sphi 0, %s266
    %s283 = sphi 0, %s267
  $region4: #{lenet5_forward.1} parent=0 // loop_header_branch
    %20 = sbr.rel (%p18) target = $region8
  $region5: #{lenet5_forward.1} parent=0 // loop_body
    %s22 = ssub.s32 %s17, 1
    %s23 = ssub.s32 %s17, 2
    %s24 = sadd.s32 %s17, 1
    %s25 = ssub.s32 %s17, %s24
    %p26 = scmp.eq.s32.totalorder %s25, 0
    %s28 = sadd.s32 %s27, 1
    %s29 = scalar_select %p26, %s27, %s28
    %p32 = pneg %p26
    %p33 = scmp.eq.s32.totalorder %s17, 1
    %p34 = por %p32, %p33
    %p35 = scmp.ne.s32.totalorder %s27, %s30
    %p36 = scmp.eq.s32.totalorder %s17, 0
    %p37 = por %p35, %p36
    %p38 = scmp.ne.s32.totalorder %s27, %s30
    %p39 = scmp.eq.s32.totalorder %s22, 1
    %p40 = por %p38, %p39
    %p41 = scmp.ne.s32.totalorder %s30, %s31
    %p42 = scmp.eq.s32.totalorder %s22, 0
    %p43 = por %p41, %p42
    %p44 = scmp.ne.s32.totalorder %s30, %s31
    %p45 = scmp.eq.s32.totalorder %s23, 1
    %p46 = por %p44, %p45
    %p48 = scmp.ne.s32.totalorder %s31, %s47
    %p49 = scmp.eq.s32.totalorder %s23, 0
    %p50 = por %p48, %p49
    %s52 = sadd.s32 %s51, 1
    %p55 = scmp.eq.s32.totalorder %s17, 1
    %p56 = scmp.ne.s32.totalorder %s51, %s53
    %p57 = scmp.eq.s32.totalorder %s17, 0
    %p58 = por %p56, %p57
    %p59 = scmp.ne.s32.totalorder %s51, %s53
    %p60 = scmp.eq.s32.totalorder %s22, 1
    %p61 = por %p59, %p60
    %p62 = scmp.ne.s32.totalorder %s53, %s54
    %p63 = scmp.eq.s32.totalorder %s22, 0
    %p64 = por %p62, %p63
    %p65 = scmp.ne.s32.totalorder %s53, %s54
    %p66 = scmp.eq.s32.totalorder %s23, 1
    %p67 = por %p65, %p66
    %p69 = scmp.ne.s32.totalorder %s54, %s68
    %p70 = scmp.eq.s32.totalorder %s23, 0
    %p71 = por %p69, %p70
    %s73 = sadd.s32 %s72, 1
    %p76 = scmp.eq.s32.totalorder %s17, 1
    %p77 = scmp.ne.s32.totalorder %s72, %s74
    %p78 = scmp.eq.s32.totalorder %s17, 0
    %p79 = por %p77, %p78
    %p80 = scmp.ne.s32.totalorder %s72, %s74
    %p81 = scmp.eq.s32.totalorder %s22, 1
    %p82 = por %p80, %p81
    %p83 = scmp.ne.s32.totalorder %s74, %s75
    %p84 = scmp.eq.s32.totalorder %s22, 0
    %p85 = por %p83, %p84
    %p86 = scmp.ne.s32.totalorder %s74, %s75
    %p87 = scmp.eq.s32.totalorder %s23, 1
    %p88 = por %p86, %p87
    %p90 = scmp.ne.s32.totalorder %s75, %s89
    %p91 = scmp.eq.s32.totalorder %s23, 0
    %p92 = por %p90, %p91
    %s94 = sadd.s32 %s93, 1
    %p97 = scmp.eq.s32.totalorder %s17, 1
    %p98 = scmp.ne.s32.totalorder %s93, %s95
    %p99 = scmp.eq.s32.totalorder %s17, 0
    %p100 = por %p98, %p99
    %p101 = scmp.ne.s32.totalorder %s93, %s95
    %p102 = scmp.eq.s32.totalorder %s22, 1
    %p103 = por %p101, %p102
    %p104 = scmp.ne.s32.totalorder %s95, %s96
    %p105 = scmp.eq.s32.totalorder %s22, 0
    %p106 = por %p104, %p105
    %p107 = scmp.ne.s32.totalorder %s95, %s96
    %p108 = scmp.eq.s32.totalorder %s23, 1
    %p109 = por %p107, %p108
    %p111 = scmp.ne.s32.totalorder %s96, %s110
    %p112 = scmp.eq.s32.totalorder %s23, 0
    %p113 = por %p111, %p112
    %s115 = sadd.s32 %s114, 1
    %p118 = scmp.eq.s32.totalorder %s17, 1
    %p119 = scmp.ne.s32.totalorder %s114, %s116
    %p120 = scmp.eq.s32.totalorder %s17, 0
    %p121 = por %p119, %p120
    %p122 = scmp.ne.s32.totalorder %s114, %s116
    %p123 = scmp.eq.s32.totalorder %s22, 1
    %p124 = por %p122, %p123
    %p125 = scmp.ne.s32.totalorder %s116, %s117
    %p126 = scmp.eq.s32.totalorder %s22, 0
    %p127 = por %p125, %p126
    %p128 = scmp.ne.s32.totalorder %s116, %s117
    %p129 = scmp.eq.s32.totalorder %s23, 1
    %p130 = por %p128, %p129
    %p132 = scmp.ne.s32.totalorder %s117, %s131
    %p133 = scmp.eq.s32.totalorder %s23, 0
    %p134 = por %p132, %p133
    %s136 = sadd.s32 %s135, 1
    %p139 = scmp.eq.s32.totalorder %s17, 1
    %p140 = scmp.ne.s32.totalorder %s135, %s137
    %p141 = scmp.eq.s32.totalorder %s17, 0
    %p142 = por %p140, %p141
    %p143 = scmp.ne.s32.totalorder %s135, %s137
    %p144 = scmp.eq.s32.totalorder %s22, 1
    %p145 = por %p143, %p144
    %p146 = scmp.ne.s32.totalorder %s137, %s138
    %p147 = scmp.eq.s32.totalorder %s22, 0
    %p148 = por %p146, %p147
    %p149 = scmp.ne.s32.totalorder %s137, %s138
    %p150 = scmp.eq.s32.totalorder %s23, 1
    %p151 = por %p149, %p150
    %p153 = scmp.ne.s32.totalorder %s138, %s152
    %p154 = scmp.eq.s32.totalorder %s23, 0
    %p155 = por %p153, %p154
    %s157 = sadd.s32 %s156, 1
    %p160 = scmp.eq.s32.totalorder %s17, 1
    %p161 = scmp.ne.s32.totalorder %s156, %s158
    %p162 = scmp.eq.s32.totalorder %s17, 0
    %p163 = por %p161, %p162
    %p164 = scmp.ne.s32.totalorder %s156, %s158
    %p165 = scmp.eq.s32.totalorder %s22, 1
    %p166 = por %p164, %p165
    %p167 = scmp.ne.s32.totalorder %s158, %s159
    %p168 = scmp.eq.s32.totalorder %s22, 0
    %p169 = por %p167, %p168
    %p170 = scmp.ne.s32.totalorder %s158, %s159
    %p171 = scmp.eq.s32.totalorder %s23, 1
    %p172 = por %p170, %p171
    %p174 = scmp.ne.s32.totalorder %s159, %s173
    %p175 = scmp.eq.s32.totalorder %s23, 0
    %p176 = por %p174, %p175
    %s178 = sadd.s32 %s177, 1
    %p181 = scmp.eq.s32.totalorder %s17, 1
    %p182 = scmp.ne.s32.totalorder %s177, %s179
    %p183 = scmp.eq.s32.totalorder %s17, 0
    %p184 = por %p182, %p183
    %p185 = scmp.ne.s32.totalorder %s177, %s179
    %p186 = scmp.eq.s32.totalorder %s22, 1
    %p187 = por %p185, %p186
    %p188 = scmp.ne.s32.totalorder %s179, %s180
    %p189 = scmp.eq.s32.totalorder %s22, 0
    %p190 = por %p188, %p189
    %p191 = scmp.ne.s32.totalorder %s179, %s180
    %p192 = scmp.eq.s32.totalorder %s23, 1
    %p193 = por %p191, %p192
    %p195 = scmp.ne.s32.totalorder %s180, %s194
    %p196 = scmp.eq.s32.totalorder %s23, 0
    %p197 = por %p195, %p196
    %s199 = sadd.s32 %s198, 1
    %p202 = scmp.eq.s32.totalorder %s17, 1
    %p203 = scmp.ne.s32.totalorder %s198, %s200
    %p204 = scmp.eq.s32.totalorder %s17, 0
    %p205 = por %p203, %p204
    %p206 = scmp.ne.s32.totalorder %s198, %s200
    %p207 = scmp.eq.s32.totalorder %s22, 1
    %p208 = por %p206, %p207
    %p209 = scmp.ne.s32.totalorder %s200, %s201
    %p210 = scmp.eq.s32.totalorder %s22, 0
    %p211 = por %p209, %p210
    %p212 = scmp.ne.s32.totalorder %s200, %s201
    %p213 = scmp.eq.s32.totalorder %s23, 1
    %p214 = por %p212, %p213
    %p216 = scmp.ne.s32.totalorder %s201, %s215
    %p217 = scmp.eq.s32.totalorder %s23, 0
    %p218 = por %p216, %p217
    %s220 = sadd.s32 %s219, 1
    %p223 = scmp.eq.s32.totalorder %s17, 1
    %p224 = scmp.ne.s32.totalorder %s219, %s221
    %p225 = scmp.eq.s32.totalorder %s17, 0
    %p226 = por %p224, %p225
    %p227 = scmp.ne.s32.totalorder %s219, %s221
    %p228 = scmp.eq.s32.totalorder %s22, 1
    %p229 = por %p227, %p228
    %p230 = scmp.ne.s32.totalorder %s221, %s222
    %p231 = scmp.eq.s32.totalorder %s22, 0
    %p232 = por %p230, %p231
    %p233 = scmp.ne.s32.totalorder %s221, %s222
    %p234 = scmp.eq.s32.totalorder %s23, 1
    %p235 = por %p233, %p234
    %p237 = scmp.ne.s32.totalorder %s222, %s236
    %p238 = scmp.eq.s32.totalorder %s23, 0
    %p239 = por %p237, %p238
    %s241 = sadd.s32 %s240, 1
    %p244 = scmp.eq.s32.totalorder %s17, 1
    %p245 = scmp.ne.s32.totalorder %s240, %s242
    %p246 = scmp.eq.s32.totalorder %s17, 0
    %p247 = por %p245, %p246
    %p248 = scmp.ne.s32.totalorder %s240, %s242
    %p249 = scmp.eq.s32.totalorder %s22, 1
    %p250 = por %p248, %p249
    %p251 = scmp.ne.s32.totalorder %s242, %s243
    %p252 = scmp.eq.s32.totalorder %s22, 0
    %p253 = por %p251, %p252
    %p254 = scmp.ne.s32.totalorder %s242, %s243
    %p255 = scmp.eq.s32.totalorder %s23, 1
    %p256 = por %p254, %p255
    %p258 = scmp.ne.s32.totalorder %s243, %s257
    %p259 = scmp.eq.s32.totalorder %s23, 0
    %p260 = por %p258, %p259
    %s261 = ssub.s32 %s17, %s24
    %p262 = scmp.eq.s32.totalorder %s261, 0
    %s264 = sadd.s32 %s263, 1
    %s265 = scalar_select %p262, %s263, %s264
    %p268 = pneg %p262
    %p269 = scmp.eq.s32.totalorder %s17, 1
    %p270 = por %p268, %p269
    %p271 = scmp.ne.s32.totalorder %s263, %s266
    %p272 = scmp.eq.s32.totalorder %s17, 0
    %p273 = por %p271, %p272
    %p274 = scmp.ne.s32.totalorder %s263, %s266
    %p275 = scmp.eq.s32.totalorder %s22, 1
    %p276 = por %p274, %p275
    %p277 = scmp.ne.s32.totalorder %s266, %s267
    %p278 = scmp.eq.s32.totalorder %s22, 0
    %p279 = por %p277, %p278
    %p280 = scmp.ne.s32.totalorder %s266, %s267
    %p281 = scmp.eq.s32.totalorder %s23, 1
    %p282 = por %p280, %p281
    %p284 = scmp.ne.s32.totalorder %s267, %s283
    %p285 = scmp.eq.s32.totalorder %s23, 0
    %p286 = por %p284, %p285
    %p287 = scmp.le.s32.totalorder 1, %s17
    %p288 = scmp.lt.s32.totalorder %s17, 3
    %p289 = pnand %p287, %p288
    %p290 = pneg %p289
    // Predicated region
    $region9: #{lenet5_forward.1} parent=5 // pred_check
      _
    $region10: #{lenet5_forward.1} parent=5 // pred_check_branch
      %292 = sbr.rel (%p289) target = $region12
    $region11: #{lenet5_forward.1} parent=5 // pred_region
      %s293 = ssub.s32 %s17, 1
      // Predicated region
      $region13: #{lenet5_forward.1} parent=11 // pred_check
        %p294 = pneg %p64
      $region14: #{lenet5_forward.1} parent=11 // pred_check_branch
        %296 = sbr.rel (%p294) target = $region16
      $region15: #{lenet5_forward.1} parent=11 // pred_region
        _
      $region16: #{lenet5_forward.1} parent=11 // pred_fallthru
        _
      // Predicated region
      $region17: #{lenet5_forward.1} parent=11 // pred_check
        %p297 = pneg %p85
      $region18: #{lenet5_forward.1} parent=11 // pred_check_branch
        %299 = sbr.rel (%p297) target = $region20
      $region19: #{lenet5_forward.1} parent=11 // pred_region
        _
      $region20: #{lenet5_forward.1} parent=11 // pred_fallthru
        _
      // Predicated region
      $region21: #{lenet5_forward.1} parent=11 // pred_check
        %p300 = pneg %p106
      $region22: #{lenet5_forward.1} parent=11 // pred_check_branch
        %302 = sbr.rel (%p300) target = $region24
      $region23: #{lenet5_forward.1} parent=11 // pred_region
        _
      $region24: #{lenet5_forward.1} parent=11 // pred_fallthru
        _
      // Predicated region
      $region25: #{lenet5_forward.1} parent=11 // pred_check
        %p303 = pneg %p127
      $region26: #{lenet5_forward.1} parent=11 // pred_check_branch
        %305 = sbr.rel (%p303) target = $region28
      $region27: #{lenet5_forward.1} parent=11 // pred_region
        _
      $region28: #{lenet5_forward.1} parent=11 // pred_fallthru
        _
      // Predicated region
      $region29: #{lenet5_forward.1} parent=11 // pred_check
        %p306 = pneg %p148
      $region30: #{lenet5_forward.1} parent=11 // pred_check_branch
        %308 = sbr.rel (%p306) target = $region32
      $region31: #{lenet5_forward.1} parent=11 // pred_region
        _
      $region32: #{lenet5_forward.1} parent=11 // pred_fallthru
        _
      // Predicated region
      $region33: #{lenet5_forward.1} parent=11 // pred_check
        %p309 = pneg %p169
      $region34: #{lenet5_forward.1} parent=11 // pred_check_branch
        %311 = sbr.rel (%p309) target = $region36
      $region35: #{lenet5_forward.1} parent=11 // pred_region
        _
      $region36: #{lenet5_forward.1} parent=11 // pred_fallthru
        _
      // Predicated region
      $region37: #{lenet5_forward.1} parent=11 // pred_check
        %p312 = pneg %p190
      $region38: #{lenet5_forward.1} parent=11 // pred_check_branch
        %314 = sbr.rel (%p312) target = $region40
      $region39: #{lenet5_forward.1} parent=11 // pred_region
        _
      $region40: #{lenet5_forward.1} parent=11 // pred_fallthru
        _
      // Predicated region
      $region41: #{lenet5_forward.1} parent=11 // pred_check
        %p315 = pneg %p211
      $region42: #{lenet5_forward.1} parent=11 // pred_check_branch
        %317 = sbr.rel (%p315) target = $region44
      $region43: #{lenet5_forward.1} parent=11 // pred_region
        _
      $region44: #{lenet5_forward.1} parent=11 // pred_fallthru
        _
      // Predicated region
      $region45: #{lenet5_forward.1} parent=11 // pred_check
        %p318 = pneg %p232
      $region46: #{lenet5_forward.1} parent=11 // pred_check_branch
        %320 = sbr.rel (%p318) target = $region48
      $region47: #{lenet5_forward.1} parent=11 // pred_region
        _
      $region48: #{lenet5_forward.1} parent=11 // pred_fallthru
        _
      // Predicated region
      $region49: #{lenet5_forward.1} parent=11 // pred_check
        %p321 = pneg %p253
      $region50: #{lenet5_forward.1} parent=11 // pred_check_branch
        %323 = sbr.rel (%p321) target = $region52
      $region51: #{lenet5_forward.1} parent=11 // pred_region
        _
      $region52: #{lenet5_forward.1} parent=11 // pred_fallthru
        _
    $region12: #{lenet5_forward.1} parent=5 // pred_fallthru
      _
    %p324 = scmp.lt.s32.totalorder %s17, 2
    // Predicated region
    $region53: #{lenet5_forward.1} parent=5 // pred_check
      %p325 = pneg %p324
    $region54: #{lenet5_forward.1} parent=5 // pred_check_branch
      %327 = sbr.rel (%p325) target = $region56
    $region55: #{lenet5_forward.1} parent=5 // pred_region
      // Predicated region
      $region57: #{lenet5_forward.1} parent=55 // pred_check
        %p328 = pneg %p37
      $region58: #{lenet5_forward.1} parent=55 // pred_check_branch
        %330 = sbr.rel (%p328) target = $region60
      $region59: #{lenet5_forward.1} parent=55 // pred_region
        %s331 = smul.u32 36, %s17
        %p332 = scmp.lt.s32.totalorder %s331, 71
        %s333 = scalar_select %p332, %s331, 71
        %s334 = smul.addr %s333, 4
        %s335 = scalar_lea.vmem %s0, %s334
        %s336 = smul.u32 36, %s17
      $region60: #{lenet5_forward.1} parent=55 // pred_fallthru
        _
    $region56: #{lenet5_forward.1} parent=5 // pred_fallthru
      _
    %p337 = scmp.le.s32.totalorder 1, %s17
    %p338 = scmp.lt.s32.totalorder %s17, 3
    %p339 = pnand %p337, %p338
    %p340 = pneg %p339
    // Predicated region
    $region61: #{lenet5_forward.1} parent=5 // pred_check
      _
    $region62: #{lenet5_forward.1} parent=5 // pred_check_branch
      %342 = sbr.rel (%p339) target = $region64
    $region63: #{lenet5_forward.1} parent=5 // pred_region
      %s343 = ssub.s32 %s17, 1
      %s344 = smul.u32 36, %s22
      %p345 = scmp.lt.s32.totalorder %s344, 71
      %s346 = scalar_select %p345, %s344, 71
      %s347 = smul.addr %s346, 4
      %s348 = scalar_lea.vmem %s0, %s347
      %p349 = pneg %p43
      %p350 = pneg %p40
      %p351 = pneg %p64
      %p352 = pneg %p61
      %p353 = pneg %p85
      %p354 = pneg %p82
      %p355 = pneg %p106
      %p356 = pneg %p103
      %p357 = pneg %p127
      %p358 = pneg %p124
      %p359 = pneg %p148
      %p360 = pneg %p145
      %p361 = pneg %p169
      %p362 = pneg %p166
      %p363 = pneg %p190
      %p364 = pneg %p187
      %p365 = pneg %p211
      %p366 = pneg %p208
      %p367 = pneg %p232
      %p368 = pneg %p229
      %p369 = pneg %p253
      %p370 = pneg %p250
      %p371 = pneg %p279
      %p372 = pneg %p276
      %p373 = scmp.lt.s32.totalorder %s22, 1
      %s374 = scalar_select %p373, %s22, 1
      %s375 = smul.addr %s374, 8
      %s376 = scalar_lea.vmem %s11, %s375
      %s377 = smul.u32 36, %s22
      %p378 = scmp.lt.s32.totalorder %s377, 71
      %s379 = scalar_select %p378, %s377, 71
      %s380 = smul.addr %s379, 4
      %s381 = scalar_lea.vmem %s0, %s380
      %s382 = smul.u32 36, %s22
      %p383 = scmp.lt.s32.totalorder %s22, 1
      %s384 = scalar_select %p383, %s22, 1
      %s385 = smul.addr %s384, 8
      %s386 = scalar_lea.vmem %s11, %s385
      %v388 = vld [vmem:[%s381] sm:$0xf]
      %v389 = vld [vmem:[%s381 + $0x4] sm:$0xf]
      %v390 = vld [vmem:[%s381 + $0x8] sm:$0xf]
      %v391 = vld [vmem:[%s381 + $0xc] sm:$0xf]
      %v392 = vld [vmem:[%s381 + $0x10] sm:$0xf]
      %v393 = vld [vmem:[%s381 + $0x14] sm:$0xf]
      %v394 = vld [vmem:[%s381 + $0x18] sm:$0xf]
      %v395 = vld [vmem:[%s381 + $0x1c] sm:$0xf]
      %v396 = vld [vmem:[%s381 + $0x20] sm:$0xf]
      %v397 = vld [vmem:[%s381 + $0x24] sm:$0xf]
      %v398 = vld [vmem:[%s381 + $0x28] sm:$0xf]
      %v399 = vld [vmem:[%s381 + $0x2c] sm:$0xf]
      %v400 = vld [vmem:[%s381 + $0x30] sm:$0xf]
      %v401 = vld [vmem:[%s381 + $0x34] sm:$0xf]
      %v402 = vld [vmem:[%s381 + $0x38] sm:$0xf]
      %v403 = vld [vmem:[%s381 + $0x3c] sm:$0xf]
      %v404 = vld [vmem:[%s381 + $0x40] sm:$0xf]
      %v405 = vld [vmem:[%s381 + $0x44] sm:$0xf]
      %v406 = vld [vmem:[%s381 + $0x48] sm:$0xf]
      %v407 = vld [vmem:[%s381 + $0x4c] sm:$0xf]
      %v408 = vld [vmem:[%s381 + $0x50] sm:$0xf]
      %v409 = vld [vmem:[%s381 + $0x54] sm:$0xf]
      %v410 = vld [vmem:[%s381 + $0x58] sm:$0xf]
      %v411 = vld [vmem:[%s381 + $0x5c] sm:$0xf]
      %v412 = vld [vmem:[%s381 + $0x60] sm:$0xf]
      %v413 = vld [vmem:[%s381 + $0x64] sm:$0xf]
      %v414 = vld [vmem:[%s381 + $0x68] sm:$0xf]
      %v415 = vld [vmem:[%s381 + $0x6c] sm:$0xf]
      %v416 = vld [vmem:[%s381 + $0x70] sm:$0xf]
      %v417 = vld [vmem:[%s381 + $0x74] sm:$0xf]
      %v418 = vld [vmem:[%s381 + $0x78] sm:$0xf]
      %v419 = vld [vmem:[%s381 + $0x7c] sm:$0xf]
      %v420 = vld [vmem:[%s1] sm:$0xff]
      %v421 = vld [vmem:[%s1 + $0x8] sm:$0xff]
      %v422 = vld [vmem:[%s1 + $0x10] sm:$0xff]
      %v423 = vld [vmem:[%s1 + $0x18] sm:$0xff]
      %v424 = vld [vmem:[%s1 + $0x20] sm:$0xff]
      %v425 = vld [vmem:[%s1 + $0x28] sm:$0xff]
      %v426 = vld [vmem:[%s1 + $0x30] sm:$0xff]
      %v427 = vld [vmem:[%s1 + $0x38] sm:$0xff]
      %v428 = vld [vmem:[%s1 + $0x40] sm:$0xff]
      %v429 = vld [vmem:[%s1 + $0x48] sm:$0xff]
      %v430 = vld [vmem:[%s1 + $0x50] sm:$0xff]
      %v431 = vld [vmem:[%s1 + $0x58] sm:$0xff]
      %v432 = vld [vmem:[%s1 + $0x60] sm:$0xff]
      %v433 = vld [vmem:[%s1 + $0x68] sm:$0xff]
      %v434 = vld [vmem:[%s1 + $0x70] sm:$0xff]
      %v435 = vld [vmem:[%s1 + $0x78] sm:$0xff]
      %v436 = vld [vmem:[%s381 + $0x80] sm:$0xf]
      %s437 = scalar_lea.vmem %s1, 128
      %v438 = vld [vmem:[%s437] sm:$0xff]
      %v439 = vld [vmem:[%s437 + $0x8] sm:$0xff]
      %v440 = vld [vmem:[%s437 + $0x10] sm:$0xff]
      %v441 = vld [vmem:[%s437 + $0x18] sm:$0xff]
      %v442 = vld [vmem:[%s437 + $0x20] sm:$0xff]
      %v443 = vld [vmem:[%s437 + $0x28] sm:$0xff]
      %v444 = vld [vmem:[%s437 + $0x30] sm:$0xff]
      %v445 = vld [vmem:[%s437 + $0x38] sm:$0xff]
      %v446 = vld [vmem:[%s437 + $0x40] sm:$0xff]
      %v447 = vld [vmem:[%s437 + $0x48] sm:$0xff]
      %v448 = vld [vmem:[%s437 + $0x50] sm:$0xff]
      %v449 = vld [vmem:[%s437 + $0x58] sm:$0xff]
      %v450 = vld [vmem:[%s437 + $0x60] sm:$0xff]
      %v451 = vld [vmem:[%s437 + $0x68] sm:$0xff]
      %v452 = vld [vmem:[%s437 + $0x70] sm:$0xff]
      %v453 = vld [vmem:[%s437 + $0x78] sm:$0xff]
      %v486 = vunpack.c.l.b16 %v389
      %v487 = vunpack.c.l.b16 %v390
      %v488 = vunpack.c.l.b16 %v391
      %v489 = vunpack.c.l.b16 %v392
      %v490 = vunpack.c.l.b16 %v393
      %v491 = vunpack.c.l.b16 %v394
      %v492 = vunpack.c.l.b16 %v395
      %v493 = vunpack.c.l.b16 %v396
      %v494 = vunpack.c.l.b16 %v397
      %v495 = vunpack.c.l.b16 %v398
      %v496 = vunpack.c.l.b16 %v399
      %v497 = vunpack.c.l.b16 %v400
      %v498 = vunpack.c.l.b16 %v401
      %v499 = vunpack.c.l.b16 %v402
      %v500 = vunpack.c.l.b16 %v403
      %v501 = vunpack.c.l.b16 %v404
      %v502 = vunpack.c.l.b16 %v405
      %v503 = vunpack.c.l.b16 %v406
      %v504 = vunpack.c.l.b16 %v407
      %v505 = vunpack.c.l.b16 %v408
      %v506 = vunpack.c.l.b16 %v409
      %v507 = vunpack.c.l.b16 %v410
      %v508 = vunpack.c.l.b16 %v411
      %v509 = vunpack.c.l.b16 %v412
      %v510 = vunpack.c.l.b16 %v413
      %v511 = vunpack.c.l.b16 %v414
      %v512 = vunpack.c.l.b16 %v415
      %v513 = vunpack.c.l.b16 %v416
      %v514 = vunpack.c.l.b16 %v417
      %v515 = vunpack.c.l.b16 %v418
      %v516 = vunpack.c.l.b16 %v419
      %v517 = vunpack.c.l.b16 %v436
      %v518 = vpack.c.b16 %v487, %v486
      %v519 = vpack.c.b16 %v489, %v488
      %v520 = vpack.c.b16 %v491, %v490
      %v521 = vpack.c.b16 %v493, %v492
      %v522 = vpack.c.b16 %v495, %v494
      %v523 = vpack.c.b16 %v497, %v496
      %v524 = vpack.c.b16 %v499, %v498
      %v525 = vpack.c.b16 %v501, %v500
      %v526 = vpack.c.b16 %v503, %v502
      %v527 = vpack.c.b16 %v505, %v504
      %v528 = vpack.c.b16 %v507, %v506
      %v529 = vpack.c.b16 %v509, %v508
      %v530 = vpack.c.b16 %v511, %v510
      %v531 = vpack.c.b16 %v513, %v512
      %v532 = vpack.c.b16 %v515, %v514
      %v533 = vpack.c.b16 %v517, %v516
      %v566 = vunpack.c.l.b16 %v438
      %v567 = vunpack.c.h.b16 %v438
      %v568 = vunpack.c.l.b16 %v439
      %v569 = vunpack.c.h.b16 %v439
      %v570 = vunpack.c.l.b16 %v440
      %v571 = vunpack.c.h.b16 %v440
      %v572 = vunpack.c.l.b16 %v441
      %v573 = vunpack.c.h.b16 %v441
      %v574 = vunpack.c.l.b16 %v442
      %v575 = vunpack.c.h.b16 %v442
      %v576 = vunpack.c.l.b16 %v443
      %v577 = vunpack.c.h.b16 %v443
      %v578 = vunpack.c.l.b16 %v444
      %v579 = vunpack.c.h.b16 %v444
      %v580 = vunpack.c.l.b16 %v445
      %v581 = vunpack.c.h.b16 %v445
      %v582 = vunpack.c.l.b16 %v446
      %v583 = vunpack.c.h.b16 %v446
      %v584 = vunpack.c.l.b16 %v447
      %v585 = vunpack.c.h.b16 %v447
      %v586 = vunpack.c.l.b16 %v448
      %v587 = vunpack.c.h.b16 %v448
      %v588 = vunpack.c.l.b16 %v449
      %v589 = vunpack.c.h.b16 %v449
      %v590 = vunpack.c.l.b16 %v450
      %v591 = vunpack.c.h.b16 %v450
      %v592 = vunpack.c.l.b16 %v451
      %v593 = vunpack.c.h.b16 %v451
      %v594 = vunpack.c.l.b16 %v452
      %v595 = vunpack.c.h.b16 %v452
      %v596 = vunpack.c.l.b16 %v453
      %v597 = vunpack.c.h.b16 %v453
      %v598 = vpack.c.b16 %v568, %v566
      %v599 = vpack.c.b16 %v569, %v567
      %v600 = vpack.c.b16 %v572, %v570
      %v601 = vpack.c.b16 %v573, %v571
      %v602 = vpack.c.b16 %v576, %v574
      %v603 = vpack.c.b16 %v577, %v575
      %v604 = vpack.c.b16 %v580, %v578
      %v605 = vpack.c.b16 %v581, %v579
      %v606 = vpack.c.b16 %v584, %v582
      %v607 = vpack.c.b16 %v585, %v583
      %v608 = vpack.c.b16 %v588, %v586
      %v609 = vpack.c.b16 %v589, %v587
      %v610 = vpack.c.b16 %v592, %v590
      %v611 = vpack.c.b16 %v593, %v591
      %v612 = vpack.c.b16 %v596, %v594
      %v613 = vpack.c.b16 %v597, %v595
      %630 = vmatprep.subr.bf16.mxu0 %v599
      %631 = vmatpush1.bf16.msra.mxu0 %v598
      %632 = vmatprep.subr.bf16.mxu0 %v601
      %633 = vmatpush1.bf16.msra.mxu0 %v600
      %634 = vmatprep.subr.bf16.mxu0 %v603
      %635 = vmatpush1.bf16.msra.mxu0 %v602
      %636 = vmatprep.subr.bf16.mxu0 %v605
      %637 = vmatpush1.bf16.msra.mxu0 %v604
      %638 = vmatprep.subr.bf16.mxu0 %v607
      %639 = vmatpush1.bf16.msra.mxu0 %v606
      %640 = vmatprep.subr.bf16.mxu0 %v609
      %641 = vmatpush1.bf16.msra.mxu0 %v608
      %642 = vmatprep.subr.bf16.mxu0 %v611
      %643 = vmatpush1.bf16.msra.mxu0 %v610
      %644 = vmatprep.subr.bf16.mxu0 %v613
      %645 = vmatpush1.bf16.msra.mxu0 %v612
      %646 = vmatprep.subr.bf16.mxu0 0
      %647 = vmatpush1.bf16.msra.mxu0 0
      %648 = vmatprep.subr.bf16.mxu0 0
      %649 = vmatpush1.bf16.msra.mxu0 0
      %650 = vmatprep.subr.bf16.mxu0 0
      %651 = vmatpush1.bf16.msra.mxu0 0
      %652 = vmatprep.subr.bf16.mxu0 0
      %653 = vmatpush1.bf16.msra.mxu0 0
      %654 = vmatprep.subr.bf16.mxu0 0
      %655 = vmatpush1.bf16.msra.mxu0 0
      %656 = vmatprep.subr.bf16.mxu0 0
      %657 = vmatpush1.bf16.msra.mxu0 0
      %658 = vmatprep.subr.bf16.mxu0 0
      %659 = vmatpush1.bf16.msra.mxu0 0
      %660 = vmatprep.subr.bf16.mxu0 0
      %661 = vmatpush1.bf16.msra.mxu0 0
      %662 = vmatprep.mubr.bf16.mxu0 0
      %663 = vmatmul.mubr.bf16.gmra.mrb[0].mxu0 %v518
      %v664 = vpop.f32.mrb[0].mxu0
      %v665 = vadd.f32 0.0, %v664
      %v666 = vpop.f32.mrb[0].mxu0
      %v667 = vadd.f32 0.0, %v666
      %v668 = vpop.f32.mrb[0].mxu0
      %v669 = vadd.f32 0.0, %v668
      %v670 = vpop.f32.mrb[0].mxu0
      %v671 = vadd.f32 0.0, %v670
      %672 = vmatprep.mubr.bf16.mxu0 0
      %673 = vmatmul.mubr.bf16.gmra.mrb[0].mxu0 %v519
      %v674 = vpop.f32.mrb[0].mxu0
      %v675 = vadd.f32 0.0, %v674
      %v676 = vpop.f32.mrb[0].mxu0
      %v677 = vadd.f32 0.0, %v676
      %v678 = vpop.f32.mrb[0].mxu0
      %v679 = vadd.f32 0.0, %v678
      %v680 = vpop.f32.mrb[0].mxu0
      %v681 = vadd.f32 0.0, %v680
      %682 = vmatprep.mubr.bf16.mxu0 0
      %683 = vmatmul.mubr.bf16.gmra.mrb[0].mxu0 %v520
      %v684 = vpop.f32.mrb[0].mxu0
      %v685 = vadd.f32 0.0, %v684
      %v686 = vpop.f32.mrb[0].mxu0
      %v687 = vadd.f32 0.0, %v686
      %v688 = vpop.f32.mrb[0].mxu0
      %v689 = vadd.f32 0.0, %v688
      %v690 = vpop.f32.mrb[0].mxu0
      %v691 = vadd.f32 0.0, %v690
      %692 = vmatprep.mubr.bf16.mxu0 0
      %693 = vmatmul.mubr.bf16.gmra.mrb[0].mxu0 %v521
      %v694 = vpop.f32.mrb[0].mxu0
      %v695 = vadd.f32 0.0, %v694
      %v696 = vpop.f32.mrb[0].mxu0
      %v697 = vadd.f32 0.0, %v696
      %v698 = vpop.f32.mrb[0].mxu0
      %v699 = vadd.f32 0.0, %v698
      %v700 = vpop.f32.mrb[0].mxu0
      %v701 = vadd.f32 0.0, %v700
      %702 = vmatprep.mubr.bf16.mxu0 0
      %703 = vmatmul.mubr.bf16.gmra.mrb[0].mxu0 %v522
      %v704 = vpop.f32.mrb[0].mxu0
      %v705 = vadd.f32 0.0, %v704
      %v706 = vpop.f32.mrb[0].mxu0
      %v707 = vadd.f32 0.0, %v706
      %v708 = vpop.f32.mrb[0].mxu0
      %v709 = vadd.f32 0.0, %v708
      %v710 = vpop.f32.mrb[0].mxu0
      %v711 = vadd.f32 0.0, %v710
      %712 = vmatprep.mubr.bf16.mxu0 0
      %713 = vmatmul.mubr.bf16.gmra.mrb[0].mxu0 %v523
      %v714 = vpop.f32.mrb[0].mxu0
      %v715 = vadd.f32 0.0, %v714
      %v716 = vpop.f32.mrb[0].mxu0
      %v717 = vadd.f32 0.0, %v716
      %v718 = vpop.f32.mrb[0].mxu0
      %v719 = vadd.f32 0.0, %v718
      %v720 = vpop.f32.mrb[0].mxu0
      %v721 = vadd.f32 0.0, %v720
      %722 = vmatprep.mubr.bf16.mxu0 0
      %723 = vmatmul.mubr.bf16.gmra.mrb[0].mxu0 %v524
      %v724 = vpop.f32.mrb[0].mxu0
      %v725 = vadd.f32 0.0, %v724
      %v726 = vpop.f32.mrb[0].mxu0
      %v727 = vadd.f32 0.0, %v726
      %v728 = vpop.f32.mrb[0].mxu0
      %v729 = vadd.f32 0.0, %v728
      %v730 = vpop.f32.mrb[0].mxu0
      %v731 = vadd.f32 0.0, %v730
      %732 = vmatprep.mubr.bf16.mxu0 0
      %733 = vmatmul.mubr.bf16.gmra.mrb[0].mxu0 %v525
      %v734 = vpop.f32.mrb[0].mxu0
      %v735 = vadd.f32 0.0, %v734
      %v736 = vpop.f32.mrb[0].mxu0
      %v737 = vadd.f32 0.0, %v736
      %v738 = vpop.f32.mrb[0].mxu0
      %v739 = vadd.f32 0.0, %v738
      %v740 = vpop.f32.mrb[0].mxu0
      %v741 = vadd.f32 0.0, %v740
      %742 = vmatprep.mubr.bf16.mxu0 0
      %743 = vmatmul.mubr.bf16.gmra.mrb[0].mxu0 %v526
      %v744 = vpop.f32.mrb[0].mxu0
      %v745 = vadd.f32 0.0, %v744
      %v746 = vpop.f32.mrb[0].mxu0
      %v747 = vadd.f32 0.0, %v746
      %v748 = vpop.f32.mrb[0].mxu0
      %v749 = vadd.f32 0.0, %v748
      %v750 = vpop.f32.mrb[0].mxu0
      %v751 = vadd.f32 0.0, %v750
      %752 = vmatprep.mubr.bf16.mxu0 0
      %753 = vmatmul.mubr.bf16.gmra.mrb[0].mxu0 %v527
      %v754 = vpop.f32.mrb[0].mxu0
      %v755 = vadd.f32 0.0, %v754
      %v756 = vpop.f32.mrb[0].mxu0
      %v757 = vadd.f32 0.0, %v756
      %v758 = vpop.f32.mrb[0].mxu0
      %v759 = vadd.f32 0.0, %v758
      %v760 = vpop.f32.mrb[0].mxu0
      %v761 = vadd.f32 0.0, %v760
      %762 = vmatprep.mubr.bf16.mxu0 0
      %763 = vmatmul.mubr.bf16.gmra.mrb[0].mxu0 %v528
      %v764 = vpop.f32.mrb[0].mxu0
      %v765 = vadd.f32 0.0, %v764
      %v766 = vpop.f32.mrb[0].mxu0
      %v767 = vadd.f32 0.0, %v766
      %v768 = vpop.f32.mrb[0].mxu0
      %v769 = vadd.f32 0.0, %v768
      %v770 = vpop.f32.mrb[0].mxu0
      %v771 = vadd.f32 0.0, %v770
      %772 = vmatprep.mubr.bf16.mxu0 0
      %773 = vmatmul.mubr.bf16.gmra.mrb[0].mxu0 %v529
      %v774 = vpop.f32.mrb[0].mxu0
      %v775 = vadd.f32 0.0, %v774
      %v776 = vpop.f32.mrb[0].mxu0
      %v777 = vadd.f32 0.0, %v776
      %v778 = vpop.f32.mrb[0].mxu0
      %v779 = vadd.f32 0.0, %v778
      %v780 = vpop.f32.mrb[0].mxu0
      %v781 = vadd.f32 0.0, %v780
      %782 = vmatprep.mubr.bf16.mxu0 0
      %783 = vmatmul.mubr.bf16.gmra.mrb[0].mxu0 %v530
      %v784 = vpop.f32.mrb[0].mxu0
      %v785 = vadd.f32 0.0, %v784
      %v786 = vpop.f32.mrb[0].mxu0
      %v787 = vadd.f32 0.0, %v786
      %v788 = vpop.f32.mrb[0].mxu0
      %v789 = vadd.f32 0.0, %v788
      %v790 = vpop.f32.mrb[0].mxu0
      %v791 = vadd.f32 0.0, %v790
      %792 = vmatprep.mubr.bf16.mxu0 0
      %793 = vmatmul.mubr.bf16.gmra.mrb[0].mxu0 %v531
      %v794 = vpop.f32.mrb[0].mxu0
      %v795 = vadd.f32 0.0, %v794
      %v796 = vpop.f32.mrb[0].mxu0
      %v797 = vadd.f32 0.0, %v796
      %v798 = vpop.f32.mrb[0].mxu0
      %v799 = vadd.f32 0.0, %v798
      %v800 = vpop.f32.mrb[0].mxu0
      %v801 = vadd.f32 0.0, %v800
      %802 = vmatprep.mubr.bf16.mxu0 0
      %803 = vmatmul.mubr.bf16.gmra.mrb[0].mxu0 %v532
      %v804 = vpop.f32.mrb[0].mxu0
      %v805 = vadd.f32 0.0, %v804
      %v806 = vpop.f32.mrb[0].mxu0
      %v807 = vadd.f32 0.0, %v806
      %v808 = vpop.f32.mrb[0].mxu0
      %v809 = vadd.f32 0.0, %v808
      %v810 = vpop.f32.mrb[0].mxu0
      %v811 = vadd.f32 0.0, %v810
      %812 = vmatprep.mubr.bf16.mxu0 0
      %813 = vmatmul.mubr.bf16.gmra.mrb[0].mxu0 %v533
      %v814 = vpop.f32.mrb[0].mxu0
      %v815 = vadd.f32 0.0, %v814
      %v816 = vpop.f32.mrb[0].mxu0
      %v817 = vadd.f32 0.0, %v816
      %v818 = vpop.f32.mrb[0].mxu0
      %v819 = vadd.f32 0.0, %v818
      %v820 = vpop.f32.mrb[0].mxu0
      %v821 = vadd.f32 0.0, %v820
      %822 = vdwg.mxu0
      %v824 = vunpack.c.l.b16 %v388
      %v825 = vpack.c.b16 %v486, %v824
      %v826 = vpack.c.b16 %v488, %v487
      %v827 = vpack.c.b16 %v490, %v489
      %v828 = vpack.c.b16 %v492, %v491
      %v829 = vpack.c.b16 %v494, %v493
      %v830 = vpack.c.b16 %v496, %v495
      %v831 = vpack.c.b16 %v498, %v497
      %v832 = vpack.c.b16 %v500, %v499
      %v833 = vpack.c.b16 %v502, %v501
      %v834 = vpack.c.b16 %v504, %v503
      %v835 = vpack.c.b16 %v506, %v505
      %v836 = vpack.c.b16 %v508, %v507
      %v837 = vpack.c.b16 %v510, %v509
      %v838 = vpack.c.b16 %v512, %v511
      %v839 = vpack.c.b16 %v514, %v513
      %v840 = vpack.c.b16 %v516, %v515
      %v873 = vunpack.c.l.b16 %v420
      %v874 = vunpack.c.h.b16 %v420
      %v875 = vunpack.c.l.b16 %v421
      %v876 = vunpack.c.h.b16 %v421
      %v877 = vunpack.c.l.b16 %v422
      %v878 = vunpack.c.h.b16 %v422
      %v879 = vunpack.c.l.b16 %v423
      %v880 = vunpack.c.h.b16 %v423
      %v881 = vunpack.c.l.b16 %v424
      %v882 = vunpack.c.h.b16 %v424
      %v883 = vunpack.c.l.b16 %v425
      %v884 = vunpack.c.h.b16 %v425
      %v885 = vunpack.c.l.b16 %v426
      %v886 = vunpack.c.h.b16 %v426
      %v887 = vunpack.c.l.b16 %v427
      %v888 = vunpack.c.h.b16 %v427
      %v889 = vunpack.c.l.b16 %v428
      %v890 = vunpack.c.h.b16 %v428
      %v891 = vunpack.c.l.b16 %v429
      %v892 = vunpack.c.h.b16 %v429
      %v893 = vunpack.c.l.b16 %v430
      %v894 = vunpack.c.h.b16 %v430
      %v895 = vunpack.c.l.b16 %v431
      %v896 = vunpack.c.h.b16 %v431
      %v897 = vunpack.c.l.b16 %v432
      %v898 = vunpack.c.h.b16 %v432
      %v899 = vunpack.c.l.b16 %v433
      %v900 = vunpack.c.h.b16 %v433
      %v901 = vunpack.c.l.b16 %v434
      %v902 = vunpack.c.h.b16 %v434
      %v903 = vunpack.c.l.b16 %v435
      %v904 = vunpack.c.h.b16 %v435
      %v905 = vpack.c.b16 %v875, %v873
      %v906 = vpack.c.b16 %v876, %v874
      %v907 = vpack.c.b16 %v879, %v877
      %v908 = vpack.c.b16 %v880, %v878
      %v909 = vpack.c.b16 %v883, %v881
      %v910 = vpack.c.b16 %v884, %v882
      %v911 = vpack.c.b16 %v887, %v885
      %v912 = vpack.c.b16 %v888, %v886
      %v913 = vpack.c.b16 %v891, %v889
      %v914 = vpack.c.b16 %v892, %v890
      %v915 = vpack.c.b16 %v895, %v893
      %v916 = vpack.c.b16 %v896, %v894
      %v917 = vpack.c.b16 %v899, %v897
      %v918 = vpack.c.b16 %v900, %v898
      %v919 = vpack.c.b16 %v903, %v901
      %v920 = vpack.c.b16 %v904, %v902
      %937 = vmatprep.subr.bf16.mxu0 %v906
      %938 = vmatpush1.bf16.msra.mxu0 %v905
      %939 = vmatprep.subr.bf16.mxu0 %v908
      %940 = vmatpush1.bf16.msra.mxu0 %v907
      %941 = vmatprep.subr.bf16.mxu0 %v910
      %942 = vmatpush1.bf16.msra.mxu0 %v909
      %943 = vmatprep.subr.bf16.mxu0 %v912
      %944 = vmatpush1.bf16.msra.mxu0 %v911
      %945 = vmatprep.subr.bf16.mxu0 %v914
      %946 = vmatpush1.bf16.msra.mxu0 %v913
      %947 = vmatprep.subr.bf16.mxu0 %v916
      %948 = vmatpush1.bf16.msra.mxu0 %v915
      %949 = vmatprep.subr.bf16.mxu0 %v918
      %950 = vmatpush1.bf16.msra.mxu0 %v917
      %951 = vmatprep.subr.bf16.mxu0 %v920
      %952 = vmatpush1.bf16.msra.mxu0 %v919
      %953 = vmatprep.subr.bf16.mxu0 0
      %954 = vmatpush1.bf16.msra.mxu0 0
      %955 = vmatprep.subr.bf16.mxu0 0
      %956 = vmatpush1.bf16.msra.mxu0 0
      %957 = vmatprep.subr.bf16.mxu0 0
      %958 = vmatpush1.bf16.msra.mxu0 0
      %959 = vmatprep.subr.bf16.mxu0 0
      %960 = vmatpush1.bf16.msra.mxu0 0
      %961 = vmatprep.subr.bf16.mxu0 0
      %962 = vmatpush1.bf16.msra.mxu0 0
      %963 = vmatprep.subr.bf16.mxu0 0
      %964 = vmatpush1.bf16.msra.mxu0 0
      %965 = vmatprep.subr.bf16.mxu0 0
      %966 = vmatpush1.bf16.msra.mxu0 0
      %967 = vmatprep.subr.bf16.mxu0 0
      %968 = vmatpush1.bf16.msra.mxu0 0
      %969 = vmatprep.mubr.bf16.mxu0 0
      %970 = vmatmul.mubr.bf16.gmra.mrb[0].mxu0 %v825
      %v971 = vpop.f32.mrb[0].mxu0
      %v972 = vadd.f32 %v665, %v971
      %v973 = vpop.f32.mrb[0].mxu0
      %v974 = vadd.f32 %v667, %v973
      %v975 = vpop.f32.mrb[0].mxu0
      %v976 = vadd.f32 %v669, %v975
      %v977 = vpop.f32.mrb[0].mxu0
      %v978 = vadd.f32 %v671, %v977
      %979 = vmatprep.mubr.bf16.mxu0 0
      %980 = vmatmul.mubr.bf16.gmra.mrb[0].mxu0 %v826
      %v981 = vpop.f32.mrb[0].mxu0
      %v982 = vadd.f32 %v675, %v981
      %v983 = vpop.f32.mrb[0].mxu0
      %v984 = vadd.f32 %v677, %v983
      %v985 = vpop.f32.mrb[0].mxu0
      %v986 = vadd.f32 %v679, %v985
      %v987 = vpop.f32.mrb[0].mxu0
      %v988 = vadd.f32 %v681, %v987
      %989 = vmatprep.mubr.bf16.mxu0 0
      %990 = vmatmul.mubr.bf16.gmra.mrb[0].mxu0 %v827
      %v991 = vpop.f32.mrb[0].mxu0
      %v992 = vadd.f32 %v685, %v991
      %v993 = vpop.f32.mrb[0].mxu0
      %v994 = vadd.f32 %v687, %v993
      %v995 = vpop.f32.mrb[0].mxu0
      %v996 = vadd.f32 %v689, %v995
      %v997 = vpop.f32.mrb[0].mxu0
      %v998 = vadd.f32 %v691, %v997
      %999 = vmatprep.mubr.bf16.mxu0 0
      %1000 = vmatmul.mubr.bf16.gmra.mrb[0].mxu0 %v828
      %v1001 = vpop.f32.mrb[0].mxu0
      %v1002 = vadd.f32 %v695, %v1001
      %v1003 = vpop.f32.mrb[0].mxu0
      %v1004 = vadd.f32 %v697, %v1003
      %v1005 = vpop.f32.mrb[0].mxu0
      %v1006 = vadd.f32 %v699, %v1005
      %v1007 = vpop.f32.mrb[0].mxu0
      %v1008 = vadd.f32 %v701, %v1007
      %1009 = vmatprep.mubr.bf16.mxu0 0
      %1010 = vmatmul.mubr.bf16.gmra.mrb[0].mxu0 %v829
      %v1011 = vpop.f32.mrb[0].mxu0
      %v1012 = vadd.f32 %v705, %v1011
      %v1013 = vpop.f32.mrb[0].mxu0
      %v1014 = vadd.f32 %v707, %v1013
      %v1015 = vpop.f32.mrb[0].mxu0
      %v1016 = vadd.f32 %v709, %v1015
      %v1017 = vpop.f32.mrb[0].mxu0
      %v1018 = vadd.f32 %v711, %v1017
      %1019 = vmatprep.mubr.bf16.mxu0 0
      %1020 = vmatmul.mubr.bf16.gmra.mrb[0].mxu0 %v830
      %v1021 = vpop.f32.mrb[0].mxu0
      %v1022 = vadd.f32 %v715, %v1021
      %v1023 = vpop.f32.mrb[0].mxu0
      %v1024 = vadd.f32 %v717, %v1023
      %v1025 = vpop.f32.mrb[0].mxu0
      %v1026 = vadd.f32 %v719, %v1025
      %v1027 = vpop.f32.mrb[0].mxu0
      %v1028 = vadd.f32 %v721, %v1027
      %1029 = vmatprep.mubr.bf16.mxu0 0
      %1030 = vmatmul.mubr.bf16.gmra.mrb[0].mxu0 %v831
      %v1031 = vpop.f32.mrb[0].mxu0
      %v1032 = vadd.f32 %v725, %v1031
      %v1033 = vpop.f32.mrb[0].mxu0
      %v1034 = vadd.f32 %v727, %v1033
      %v1035 = vpop.f32.mrb[0].mxu0
      %v1036 = vadd.f32 %v729, %v1035
      %v1037 = vpop.f32.mrb[0].mxu0
      %v1038 = vadd.f32 %v731, %v1037
      %1039 = vmatprep.mubr.bf16.mxu0 0
      %1040 = vmatmul.mubr.bf16.gmra.mrb[0].mxu0 %v832
      %v1041 = vpop.f32.mrb[0].mxu0
      %v1042 = vadd.f32 %v735, %v1041
      %v1043 = vpop.f32.mrb[0].mxu0
      %v1044 = vadd.f32 %v737, %v1043
      %v1045 = vpop.f32.mrb[0].mxu0
      %v1046 = vadd.f32 %v739, %v1045
      %v1047 = vpop.f32.mrb[0].mxu0
      %v1048 = vadd.f32 %v741, %v1047
      %1049 = vmatprep.mubr.bf16.mxu0 0
      %1050 = vmatmul.mubr.bf16.gmra.mrb[0].mxu0 %v833
      %v1051 = vpop.f32.mrb[0].mxu0
      %v1052 = vadd.f32 %v745, %v1051
      %v1053 = vpop.f32.mrb[0].mxu0
      %v1054 = vadd.f32 %v747, %v1053
      %v1055 = vpop.f32.mrb[0].mxu0
      %v1056 = vadd.f32 %v749, %v1055
      %v1057 = vpop.f32.mrb[0].mxu0
      %v1058 = vadd.f32 %v751, %v1057
      %1059 = vmatprep.mubr.bf16.mxu0 0
      %1060 = vmatmul.mubr.bf16.gmra.mrb[0].mxu0 %v834
      %v1061 = vpop.f32.mrb[0].mxu0
      %v1062 = vadd.f32 %v755, %v1061
      %v1063 = vpop.f32.mrb[0].mxu0
      %v1064 = vadd.f32 %v757, %v1063
      %v1065 = vpop.f32.mrb[0].mxu0
      %v1066 = vadd.f32 %v759, %v1065
      %v1067 = vpop.f32.mrb[0].mxu0
      %v1068 = vadd.f32 %v761, %v1067
      %1069 = vmatprep.mubr.bf16.mxu0 0
      %1070 = vmatmul.mubr.bf16.gmra.mrb[0].mxu0 %v835
      %v1071 = vpop.f32.mrb[0].mxu0
      %v1072 = vadd.f32 %v765, %v1071
      %v1073 = vpop.f32.mrb[0].mxu0
      %v1074 = vadd.f32 %v767, %v1073
      %v1075 = vpop.f32.mrb[0].mxu0
      %v1076 = vadd.f32 %v769, %v1075
      %v1077 = vpop.f32.mrb[0].mxu0
      %v1078 = vadd.f32 %v771, %v1077
      %1079 = vmatprep.mubr.bf16.mxu0 0
      %1080 = vmatmul.mubr.bf16.gmra.mrb[0].mxu0 %v836
      %v1081 = vpop.f32.mrb[0].mxu0
      %v1082 = vadd.f32 %v775, %v1081
      %v1083 = vpop.f32.mrb[0].mxu0
      %v1084 = vadd.f32 %v777, %v1083
      %v1085 = vpop.f32.mrb[0].mxu0
      %v1086 = vadd.f32 %v779, %v1085
      %v1087 = vpop.f32.mrb[0].mxu0
      %v1088 = vadd.f32 %v781, %v1087
      %1089 = vmatprep.mubr.bf16.mxu0 0
      %1090 = vmatmul.mubr.bf16.gmra.mrb[0].mxu0 %v837
      %v1091 = vpop.f32.mrb[0].mxu0
      %v1092 = vadd.f32 %v785, %v1091
      %v1093 = vpop.f32.mrb[0].mxu0
      %v1094 = vadd.f32 %v787, %v1093
      %v1095 = vpop.f32.mrb[0].mxu0
      %v1096 = vadd.f32 %v789, %v1095
      %v1097 = vpop.f32.mrb[0].mxu0
      %v1098 = vadd.f32 %v791, %v1097
      %1099 = vmatprep.mubr.bf16.mxu0 0
      %1100 = vmatmul.mubr.bf16.gmra.mrb[0].mxu0 %v838
      %v1101 = vpop.f32.mrb[0].mxu0
      %v1102 = vadd.f32 %v795, %v1101
      %v1103 = vpop.f32.mrb[0].mxu0
      %v1104 = vadd.f32 %v797, %v1103
      %v1105 = vpop.f32.mrb[0].mxu0
      %v1106 = vadd.f32 %v799, %v1105
      %v1107 = vpop.f32.mrb[0].mxu0
      %v1108 = vadd.f32 %v801, %v1107
      %1109 = vmatprep.mubr.bf16.mxu0 0
      %1110 = vmatmul.mubr.bf16.gmra.mrb[0].mxu0 %v839
      %v1111 = vpop.f32.mrb[0].mxu0
      %v1112 = vadd.f32 %v805, %v1111
      %v1113 = vpop.f32.mrb[0].mxu0
      %v1114 = vadd.f32 %v807, %v1113
      %v1115 = vpop.f32.mrb[0].mxu0
      %v1116 = vadd.f32 %v809, %v1115
      %v1117 = vpop.f32.mrb[0].mxu0
      %v1118 = vadd.f32 %v811, %v1117
      %1119 = vmatprep.mubr.bf16.mxu0 0
      %1120 = vmatmul.mubr.bf16.gmra.mrb[0].mxu0 %v840
      %v1121 = vpop.f32.mrb[0].mxu0
      %v1122 = vadd.f32 %v815, %v1121
      %v1123 = vpop.f32.mrb[0].mxu0
      %v1124 = vadd.f32 %v817, %v1123
      %v1125 = vpop.f32.mrb[0].mxu0
      %v1126 = vadd.f32 %v819, %v1125
      %v1127 = vpop.f32.mrb[0].mxu0
      %v1128 = vadd.f32 %v821, %v1127
      %1129 = vdwg.mxu0
      %v1130 = vld [vmem:[%s381 + $0x8] sm:$0xf]
      %v1131 = vld [vmem:[%s381 + $0xc] sm:$0xf]
      %v1132 = vld [vmem:[%s381 + $0x10] sm:$0xf]
      %v1133 = vld [vmem:[%s381 + $0x14] sm:$0xf]
      %v1134 = vld [vmem:[%s381 + $0x18] sm:$0xf]
      %v1135 = vld [vmem:[%s381 + $0x1c] sm:$0xf]
      %v1136 = vld [vmem:[%s381 + $0x20] sm:$0xf]
      %v1137 = vld [vmem:[%s381 + $0x24] sm:$0xf]
      %v1138 = vld [vmem:[%s381 + $0x28] sm:$0xf]
      %v1139 = vld [vmem:[%s381 + $0x2c] sm:$0xf]
      %v1140 = vld [vmem:[%s381 + $0x30] sm:$0xf]
      %v1141 = vld [vmem:[%s381 + $0x34] sm:$0xf]
      %v1142 = vld [vmem:[%s381 + $0x38] sm:$0xf]
      %v1143 = vld [vmem:[%s381 + $0x3c] sm:$0xf]
      %v1144 = vld [vmem:[%s381 + $0x40] sm:$0xf]
      %v1145 = vld [vmem:[%s381 + $0x44] sm:$0xf]
      %v1146 = vld [vmem:[%s381 + $0x48] sm:$0xf]
      %v1147 = vld [vmem:[%s381 + $0x4c] sm:$0xf]
      %v1148 = vld [vmem:[%s381 + $0x50] sm:$0xf]
      %v1149 = vld [vmem:[%s381 + $0x54] sm:$0xf]
      %v1150 = vld [vmem:[%s381 + $0x58] sm:$0xf]
      %v1151 = vld [vmem:[%s381 + $0x5c] sm:$0xf]
      %v1152 = vld [vmem:[%s381 + $0x60] sm:$0xf]
      %v1153 = vld [vmem:[%s381 + $0x64] sm:$0xf]
      %v1154 = vld [vmem:[%s381 + $0x68] sm:$0xf]
      %v1155 = vld [vmem:[%s381 + $0x6c] sm:$0xf]
      %v1156 = vld [vmem:[%s381 + $0x70] sm:$0xf]
      %v1157 = vld [vmem:[%s381 + $0x74] sm:$0xf]
      %v1158 = vld [vmem:[%s381 + $0x78] sm:$0xf]
      %v1159 = vld [vmem:[%s381 + $0x7c] sm:$0xf]
      %v1160 = vld [vmem:[%s381 + $0x80] sm:$0xf]
      %v1161 = vld [vmem:[%s381 + $0x84] sm:$0xf]
      %s1162 = scalar_lea.vmem %s1, 256
      %v1163 = vld [vmem:[%s1162] sm:$0xff]
      %v1164 = vld [vmem:[%s1162 + $0x8] sm:$0xff]
      %v1165 = vld [vmem:[%s1162 + $0x10] sm:$0xff]
      %v1166 = vld [vmem:[%s1162 + $0x18] sm:$0xff]
      %v1167 = vld [vmem:[%s1162 + $0x20] sm:$0xff]
      %v1168 = vld [vmem:[%s1162 + $0x28] sm:$0xff]
      %v1169 = vld [vmem:[%s1162 + $0x30] sm:$0xff]
      %v1170 = vld [vmem:[%s1162 + $0x38] sm:$0xff]
      %v1171 = vld [vmem:[%s1162 + $0x40] sm:$0xff]
      %v1172 = vld [vmem:[%s1162 + $0x48] sm:$0xff]
      %v1173 = vld [vmem:[%s1162 + $0x50] sm:$0xff]
      %v1174 = vld [vmem:[%s1162 + $0x58] sm:$0xff]
      %v1175 = vld [vmem:[%s1162 + $0x60] sm:$0xff]
      %v1176 = vld [vmem:[%s1162 + $0x68] sm:$0xff]
      %v1177 = vld [vmem:[%s1162 + $0x70] sm:$0xff]
      %v1178 = vld [vmem:[%s1162 + $0x78] sm:$0xff]
      %v1211 = vunpack.c.l.b16 %v1130
      %v1212 = vunpack.c.l.b16 %v1131
      %v1213 = vunpack.c.l.b16 %v1132
      %v1214 = vunpack.c.l.b16 %v1133
      %v1215 = vunpack.c.l.b16 %v1134
      %v1216 = vunpack.c.l.b16 %v1135
      %v1217 = vunpack.c.l.b16 %v1136
      %v1218 = vunpack.c.l.b16 %v1137
      %v1219 = vunpack.c.l.b16 %v1138
      %v1220 = vunpack.c.l.b16 %v1139
      %v1221 = vunpack.c.l.b16 %v1140
      %v1222 = vunpack.c.l.b16 %v1141
      %v1223 = vunpack.c.l.b16 %v1142
      %v1224 = vunpack.c.l.b16 %v1143
      %v1225 = vunpack.c.l.b16 %v1144
      %v1226 = vunpack.c.l.b16 %v1145
      %v1227 = vunpack.c.l.b16 %v1146
      %v1228 = vunpack.c.l.b16 %v1147
      %v1229 = vunpack.c.l.b16 %v1148
      %v1230 = vunpack.c.l.b16 %v1149
      %v1231 = vunpack.c.l.b16 %v1150
      %v1232 = vunpack.c.l.b16 %v1151
      %v1233 = vunpack.c.l.b16 %v1152
      %v1234 = vunpack.c.l.b16 %v1153
      %v1235 = vunpack.c.l.b16 %v1154
      %v1236 = vunpack.c.l.b16 %v1155
      %v1237 = vunpack.c.l.b16 %v1156
      %v1238 = vunpack.c.l.b16 %v1157
      %v1239 = vunpack.c.l.b16 %v1158
      %v1240 = vunpack.c.l.b16 %v1159
      %v1241 = vunpack.c.l.b16 %v1160
      %v1242 = vunpack.c.l.b16 %v1161
      %v1243 = vpack.c.b16 %v1212, %v1211
      %v1244 = vpack.c.b16 %v1214, %v1213
      %v1245 = vpack.c.b16 %v1216, %v1215
      %v1246 = vpack.c.b16 %v1218, %v1217
      %v1247 = vpack.c.b16 %v1220, %v1219
      %v1248 = vpack.c.b16 %v1222, %v1221
      %v1249 = vpack.c.b16 %v1224, %v1223
      %v1250 = vpack.c.b16 %v1226, %v1225
      %v1251 = vpack.c.b16 %v1228, %v1227
      %v1252 = vpack.c.b16 %v1230, %v1229
      %v1253 = vpack.c.b16 %v1232, %v1231
      %v1254 = vpack.c.b16 %v1234, %v1233
      %v1255 = vpack.c.b16 %v1236, %v1235
      %v1256 = vpack.c.b16 %v1238, %v1237
      %v1257 = vpack.c.b16 %v1240, %v1239
      %v1258 = vpack.c.b16 %v1242, %v1241
      %v1291 = vunpack.c.l.b16 %v1163
      %v1292 = vunpack.c.h.b16 %v1163
      %v1293 = vunpack.c.l.b16 %v1164
      %v1294 = vunpack.c.h.b16 %v1164
      %v1295 = vunpack.c.l.b16 %v1165
      %v1296 = vunpack.c.h.b16 %v1165
      %v1297 = vunpack.c.l.b16 %v1166
      %v1298 = vunpack.c.h.b16 %v1166
      %v1299 = vunpack.c.l.b16 %v1167
      %v1300 = vunpack.c.h.b16 %v1167
      %v1301 = vunpack.c.l.b16 %v1168
      %v1302 = vunpack.c.h.b16 %v1168
      %v1303 = vunpack.c.l.b16 %v1169
      %v1304 = vunpack.c.h.b16 %v1169
      %v1305 = vunpack.c.l.b16 %v1170
      %v1306 = vunpack.c.h.b16 %v1170
      %v1307 = vunpack.c.l.b16 %v1171
      %v1308 = vunpack.c.h.b16 %v1171
      %v1309 = vunpack.c.l.b16 %v1172
      %v1310 = vunpack.c.h.b16 %v1172
      %v1311 = vunpack.c.l.b16 %v1173
      %v1312 = vunpack.c.h.b16 %v1173
      %v1313 = vunpack.c.l.b16 %v1174
      %v1314 = vunpack.c.h.b16 %v1174
      %v1315 = vunpack.c.l.b16 %v1175
      %v1316 = vunpack.c.h.b16 %v1175
      %v1317 = vunpack.c.l.b16 %v1176
      %v1318 = vunpack.c.h.b16 %v1176
      %v1319 = vunpack.c.l.b16 %v1177
      %v1320 = vunpack.c.h.b16 %v1177
      %v1321 = vunpack.c.l.b16 %v1178
      %v1322 = vunpack.c.h.b16 %v1178
      %v1323 = vpack.c.b16 %v1293, %v1291
      %v1324 = vpack.c.b16 %v1294, %v1292
      %v1325 = vpack.c.b16 %v1297, %v1295
      %v1326 = vpack.c.b16 %v1298, %v1296
      %v1327 = vpack.c.b16 %v1301, %v1299
      %v1328 = vpack.c.b16 %v1302, %v1300
      %v1329 = vpack.c.b16 %v1305, %v1303
      %v1330 = vpack.c.b16 %v1306, %v1304
      %v1331 = vpack.c.b16 %v1309, %v1307
      %v1332 = vpack.c.b16 %v1310, %v1308
      %v1333 = vpack.c.b16 %v1313, %v1311
      %v1334 = vpack.c.b16 %v1314, %v1312
      %v1335 = vpack.c.b16 %v1317, %v1315
      %v1336 = vpack.c.b16 %v1318, %v1316
      %v1337 = vpack.c.b16 %v1321, %v1319
      %v1338 = vpack.c.b16 %v1322, %v1320
      %1355 = vmatprep.subr.bf16.mxu0 %v1324
      %1356 = vmatpush1.bf16.msra.mxu0 %v1323
      %1357 = vmatprep.subr.bf16.mxu0 %v1326
      %1358 = vmatpush1.bf16.msra.mxu0 %v1325
      %1359 = vmatprep.subr.bf16.mxu0 %v1328
      %1360 = vmatpush1.bf16.msra.mxu0 %v1327
      %1361 = vmatprep.subr.bf16.mxu0 %v1330
      %1362 = vmatpush1.bf16.msra.mxu0 %v1329
      %1363 = vmatprep.subr.bf16.mxu0 %v1332
      %1364 = vmatpush1.bf16.msra.mxu0 %v1331
      %1365 = vmatprep.subr.bf16.mxu0 %v1334
      %1366 = vmatpush1.bf16.msra.mxu0 %v1333
      %1367 = vmatprep.subr.bf16.mxu0 %v1336
      %1368 = vmatpush1.bf16.msra.mxu0 %v1335
      %1369 = vmatprep.subr.bf16.mxu0 %v1338
      %1370 = vmatpush1.bf16.msra.mxu0 %v1337
      %1371 = vmatprep.subr.bf16.mxu0 0
      %1372 = vmatpush1.bf16.msra.mxu0 0
      %1373 = vmatprep.subr.bf16.mxu0 0
      %1374 = vmatpush1.bf16.msra.mxu0 0
      %1375 = vmatprep.subr.bf16.mxu0 0
      %1376 = vmatpush1.bf16.msra.mxu0 0
      %1377 = vmatprep.subr.bf16.mxu0 0
      %1378 = vmatpush1.bf16.msra.mxu0 0
      %1379 = vmatprep.subr.bf16.mxu0 0
      %1380 = vmatpush1.bf16.msra.mxu0 0
      %1381 = vmatprep.subr.bf16.mxu0 0
      %1382 = vmatpush1.bf16.msra.mxu0 0
      %1383 = vmatprep.subr.bf16.mxu0 0
      %1384 = vmatpush1.bf16.msra.mxu0 0
      %1385 = vmatprep.subr.bf16.mxu0 0
      %1386 = vmatpush1.bf16.msra.mxu0 0
      %1387 = vmatprep.mubr.bf16.mxu0 0
      %1388 = vmatmul.mubr.bf16.gmra.mrb[0].mxu0 %v1243
      %v1389 = vpop.f32.mrb[0].mxu0
      %v1390 = vadd.f32 0.0, %v1389
      %v1391 = vpop.f32.mrb[0].mxu0
      %v1392 = vadd.f32 0.0, %v1391
      %v1393 = vpop.f32.mrb[0].mxu0
      %v1394 = vadd.f32 0.0, %v1393
      %v1395 = vpop.f32.mrb[0].mxu0
      %v1396 = vadd.f32 0.0, %v1395
      %1397 = vmatprep.mubr.bf16.mxu0 0
      %1398 = vmatmul.mubr.bf16.gmra.mrb[0].mxu0 %v1244
      %v1399 = vpop.f32.mrb[0].mxu0
      %v1400 = vadd.f32 0.0, %v1399
      %v1401 = vpop.f32.mrb[0].mxu0
      %v1402 = vadd.f32 0.0, %v1401
      %v1403 = vpop.f32.mrb[0].mxu0
      %v1404 = vadd.f32 0.0, %v1403
      %v1405 = vpop.f32.mrb[0].mxu0
      %v1406 = vadd.f32 0.0, %v1405
      %1407 = vmatprep.mubr.bf16.mxu0 0
      %1408 = vmatmul.mubr.bf16.gmra.mrb[0].mxu0 %v1245
      %v1409 = vpop.f32.mrb[0].mxu0
      %v1410 = vadd.f32 0.0, %v1409
      %v1411 = vpop.f32.mrb[0].mxu0
      %v1412 = vadd.f32 0.0, %v1411
      %v1413 = vpop.f32.mrb[0].mxu0
      %v1414 = vadd.f32 0.0, %v1413
      %v1415 = vpop.f32.mrb[0].mxu0
      %v1416 = vadd.f32 0.0, %v1415
      %1417 = vmatprep.mubr.bf16.mxu0 0
      %1418 = vmatmul.mubr.bf16.gmra.mrb[0].mxu0 %v1246
      %v1419 = vpop.f32.mrb[0].mxu0
      %v1420 = vadd.f32 0.0, %v1419
      %v1421 = vpop.f32.mrb[0].mxu0
      %v1422 = vadd.f32 0.0, %v1421
      %v1423 = vpop.f32.mrb[0].mxu0
      %v1424 = vadd.f32 0.0, %v1423
      %v1425 = vpop.f32.mrb[0].mxu0
      %v1426 = vadd.f32 0.0, %v1425
      %1427 = vmatprep.mubr.bf16.mxu0 0
      %1428 = vmatmul.mubr.bf16.gmra.mrb[0].mxu0 %v1247
      %v1429 = vpop.f32.mrb[0].mxu0
      %v1430 = vadd.f32 0.0, %v1429
      %v1431 = vpop.f32.mrb[0].mxu0
      %v1432 = vadd.f32 0.0, %v1431
      %v1433 = vpop.f32.mrb[0].mxu0
      %v1434 = vadd.f32 0.0, %v1433
      %v1435 = vpop.f32.mrb[0].mxu0
      %v1436 = vadd.f32 0.0, %v1435
      %1437 = vmatprep.mubr.bf16.mxu0 0
      %1438 = vmatmul.mubr.bf16.gmra.mrb[0].mxu0 %v1248
      %v1439 = vpop.f32.mrb[0].mxu0
      %v1440 = vadd.f32 0.0, %v1439
      %v1441 = vpop.f32.mrb[0].mxu0
      %v1442 = vadd.f32 0.0, %v1441
      %v1443 = vpop.f32.mrb[0].mxu0
      %v1444 = vadd.f32 0.0, %v1443
      %v1445 = vpop.f32.mrb[0].mxu0
      %v1446 = vadd.f32 0.0, %v1445
      %1447 = vmatprep.mubr.bf16.mxu0 0
      %1448 = vmatmul.mubr.bf16.gmra.mrb[0].mxu0 %v1249
      %v1449 = vpop.f32.mrb[0].mxu0
      %v1450 = vadd.f32 0.0, %v1449
      %v1451 = vpop.f32.mrb[0].mxu0
      %v1452 = vadd.f32 0.0, %v1451
      %v1453 = vpop.f32.mrb[0].mxu0
      %v1454 = vadd.f32 0.0, %v1453
      %v1455 = vpop.f32.mrb[0].mxu0
      %v1456 = vadd.f32 0.0, %v1455
      %1457 = vmatprep.mubr.bf16.mxu0 0
      %1458 = vmatmul.mubr.bf16.gmra.mrb[0].mxu0 %v1250
      %v1459 = vpop.f32.mrb[0].mxu0
      %v1460 = vadd.f32 0.0, %v1459
      %v1461 = vpop.f32.mrb[0].mxu0
      %v1462 = vadd.f32 0.0, %v1461
      %v1463 = vpop.f32.mrb[0].mxu0
      %v1464 = vadd.f32 0.0, %v1463
      %v1465 = vpop.f32.mrb[0].mxu0
      %v1466 = vadd.f32 0.0, %v1465
      %1467 = vmatprep.mubr.bf16.mxu0 0
      %1468 = vmatmul.mubr.bf16.gmra.mrb[0].mxu0 %v1251
      %v1469 = vpop.f32.mrb[0].mxu0
      %v1470 = vadd.f32 0.0, %v1469
      %v1471 = vpop.f32.mrb[0].mxu0
      %v1472 = vadd.f32 0.0, %v1471
      %v1473 = vpop.f32.mrb[0].mxu0
      %v1474 = vadd.f32 0.0, %v1473
      %v1475 = vpop.f32.mrb[0].mxu0
      %v1476 = vadd.f32 0.0, %v1475
      %1477 = vmatprep.mubr.bf16.mxu0 0
      %1478 = vmatmul.mubr.bf16.gmra.mrb[0].mxu0 %v1252
      %v1479 = vpop.f32.mrb[0].mxu0
      %v1480 = vadd.f32 0.0, %v1479
      %v1481 = vpop.f32.mrb[0].mxu0
      %v1482 = vadd.f32 0.0, %v1481
      %v1483 = vpop.f32.mrb[0].mxu0
      %v1484 = vadd.f32 0.0, %v1483
      %v1485 = vpop.f32.mrb[0].mxu0
      %v1486 = vadd.f32 0.0, %v1485
      %1487 = vmatprep.mubr.bf16.mxu0 0
      %1488 = vmatmul.mubr.bf16.gmra.mrb[0].mxu0 %v1253
      %v1489 = vpop.f32.mrb[0].mxu0
      %v1490 = vadd.f32 0.0, %v1489
      %v1491 = vpop.f32.mrb[0].mxu0
      %v1492 = vadd.f32 0.0, %v1491
      %v1493 = vpop.f32.mrb[0].mxu0
      %v1494 = vadd.f32 0.0, %v1493
      %v1495 = vpop.f32.mrb[0].mxu0
      %v1496 = vadd.f32 0.0, %v1495
      %1497 = vmatprep.mubr.bf16.mxu0 0
      %1498 = vmatmul.mubr.bf16.gmra.mrb[0].mxu0 %v1254
      %v1499 = vpop.f32.mrb[0].mxu0
      %v1500 = vadd.f32 0.0, %v1499
      %v1501 = vpop.f32.mrb[0].mxu0
      %v1502 = vadd.f32 0.0, %v1501
      %v1503 = vpop.f32.mrb[0].mxu0
      %v1504 = vadd.f32 0.0, %v1503
      %v1505 = vpop.f32.mrb[0].mxu0
      %v1506 = vadd.f32 0.0, %v1505
      %1507 = vmatprep.mubr.bf16.mxu0 0
      %1508 = vmatmul.mubr.bf16.gmra.mrb[0].mxu0 %v1255
      %v1509 = vpop.f32.mrb[0].mxu0
      %v1510 = vadd.f32 0.0, %v1509
      %v1511 = vpop.f32.mrb[0].mxu0
      %v1512 = vadd.f32 0.0, %v1511
      %v1513 = vpop.f32.mrb[0].mxu0
      %v1514 = vadd.f32 0.0, %v1513
      %v1515 = vpop.f32.mrb[0].mxu0
      %v1516 = vadd.f32 0.0, %v1515
      %1517 = vmatprep.mubr.bf16.mxu0 0
      %1518 = vmatmul.mubr.bf16.gmra.mrb[0].mxu0 %v1256
      %v1519 = vpop.f32.mrb[0].mxu0
      %v1520 = vadd.f32 0.0, %v1519
      %v1521 = vpop.f32.mrb[0].mxu0
      %v1522 = vadd.f32 0.0, %v1521
      %v1523 = vpop.f32.mrb[0].mxu0
      %v1524 = vadd.f32 0.0, %v1523
      %v1525 = vpop.f32.mrb[0].mxu0
      %v1526 = vadd.f32 0.0, %v1525
      %1527 = vmatprep.mubr.bf16.mxu0 0
      %1528 = vmatmul.mubr.bf16.gmra.mrb[0].mxu0 %v1257
      %v1529 = vpop.f32.mrb[0].mxu0
      %v1530 = vadd.f32 0.0, %v1529
      %v1531 = vpop.f32.mrb[0].mxu0
      %v1532 = vadd.f32 0.0, %v1531
      %v1533 = vpop.f32.mrb[0].mxu0
      %v1534 = vadd.f32 0.0, %v1533
      %v1535 = vpop.f32.mrb[0].mxu0
      %v1536 = vadd.f32 0.0, %v1535
      %1537 = vmatprep.mubr.bf16.mxu0 0
      %1538 = vmatmul.mubr.bf16.gmra.mrb[0].mxu0 %v1258
      %v1539 = vpop.f32.mrb[0].mxu0
      %v1540 = vadd.f32 0.0, %v1539
      %v1541 = vpop.f32.mrb[0].mxu0
      %v1542 = vadd.f32 0.0, %v1541
      %v1543 = vpop.f32.mrb[0].mxu0
      %v1544 = vadd.f32 0.0, %v1543
      %v1545 = vpop.f32.mrb[0].mxu0
      %v1546 = vadd.f32 0.0, %v1545
      %1547 = vdwg.mxu0
      %v1548 = vadd.f32 %v972, %v1390
      %v1549 = vadd.f32 %v974, %v1392
      %v1550 = vadd.f32 %v976, %v1394
      %v1551 = vadd.f32 %v978, %v1396
      %v1552 = vadd.f32 %v982, %v1400
      %v1553 = vadd.f32 %v984, %v1402
      %v1554 = vadd.f32 %v986, %v1404
      %v1555 = vadd.f32 %v988, %v1406
      %v1556 = vadd.f32 %v992, %v1410
      %v1557 = vadd.f32 %v994, %v1412
      %v1558 = vadd.f32 %v996, %v1414
      %v1559 = vadd.f32 %v998, %v1416
      %v1560 = vadd.f32 %v1002, %v1420
      %v1561 = vadd.f32 %v1004, %v1422
      %v1562 = vadd.f32 %v1006, %v1424
      %v1563 = vadd.f32 %v1008, %v1426
      %v1564 = vadd.f32 %v1012, %v1430
      %v1565 = vadd.f32 %v1014, %v1432
      %v1566 = vadd.f32 %v1016, %v1434
      %v1567 = vadd.f32 %v1018, %v1436
      %v1568 = vadd.f32 %v1022, %v1440
      %v1569 = vadd.f32 %v1024, %v1442
      %v1570 = vadd.f32 %v1026, %v1444
      %v1571 = vadd.f32 %v1028, %v1446
      %v1572 = vadd.f32 %v1032, %v1450
      %v1573 = vadd.f32 %v1034, %v1452
      %v1574 = vadd.f32 %v1036, %v1454
      %v1575 = vadd.f32 %v1038, %v1456
      %v1576 = vadd.f32 %v1042, %v1460
      %v1577 = vadd.f32 %v1044, %v1462
      %v1578 = vadd.f32 %v1046, %v1464
      %v1579 = vadd.f32 %v1048, %v1466
      %v1580 = vadd.f32 %v1052, %v1470
      %v1581 = vadd.f32 %v1054, %v1472
      %v1582 = vadd.f32 %v1056, %v1474
      %v1583 = vadd.f32 %v1058, %v1476
      %v1584 = vadd.f32 %v1062, %v1480
      %v1585 = vadd.f32 %v1064, %v1482
      %v1586 = vadd.f32 %v1066, %v1484
      %v1587 = vadd.f32 %v1068, %v1486
      %v1588 = vadd.f32 %v1072, %v1490
      %v1589 = vadd.f32 %v1074, %v1492
      %v1590 = vadd.f32 %v1076, %v1494
      %v1591 = vadd.f32 %v1078, %v1496
      %v1592 = vadd.f32 %v1082, %v1500
      %v1593 = vadd.f32 %v1084, %v1502
      %v1594 = vadd.f32 %v1086, %v1504
      %v1595 = vadd.f32 %v1088, %v1506
      %v1596 = vadd.f32 %v1092, %v1510
      %v1597 = vadd.f32 %v1094, %v1512
      %v1598 = vadd.f32 %v1096, %v1514
      %v1599 = vadd.f32 %v1098, %v1516
      %v1600 = vadd.f32 %v1102, %v1520
      %v1601 = vadd.f32 %v1104, %v1522
      %v1602 = vadd.f32 %v1106, %v1524
      %v1603 = vadd.f32 %v1108, %v1526
      %v1604 = vadd.f32 %v1112, %v1530
      %v1605 = vadd.f32 %v1114, %v1532
      %v1606 = vadd.f32 %v1116, %v1534
      %v1607 = vadd.f32 %v1118, %v1536
      %v1608 = vadd.f32 %v1122, %v1540
      %v1609 = vadd.f32 %v1124, %v1542
      %v1610 = vadd.f32 %v1126, %v1544
      %v1611 = vadd.f32 %v1128, %v1546
      %v1612 = vld [vmem:[%s381 + $0xc] sm:$0xf]
      %v1613 = vld [vmem:[%s381 + $0x10] sm:$0xf]
      %v1614 = vld [vmem:[%s381 + $0x14] sm:$0xf]
      %v1615 = vld [vmem:[%s381 + $0x18] sm:$0xf]
      %v1616 = vld [vmem:[%s381 + $0x1c] sm:$0xf]
      %v1617 = vld [vmem:[%s381 + $0x20] sm:$0xf]
      %v1618 = vld [vmem:[%s381 + $0x24] sm:$0xf]
      %v1619 = vld [vmem:[%s381 + $0x28] sm:$0xf]
      %v1620 = vld [vmem:[%s381 + $0x2c] sm:$0xf]
      %v1621 = vld [vmem:[%s381 + $0x30] sm:$0xf]
      %v1622 = vld [vmem:[%s381 + $0x34] sm:$0xf]
      %v1623 = vld [vmem:[%s381 + $0x38] sm:$0xf]
      %v1624 = vld [vmem:[%s381 + $0x3c] sm:$0xf]
      %v1625 = vld [vmem:[%s381 + $0x40] sm:$0xf]
      %v1626 = vld [vmem:[%s381 + $0x44] sm:$0xf]
      %v1627 = vld [vmem:[%s381 + $0x48] sm:$0xf]
      %v1628 = vld [vmem:[%s381 + $0x4c] sm:$0xf]
      %v1629 = vld [vmem:[%s381 + $0x50] sm:$0xf]
      %v1630 = vld [vmem:[%s381 + $0x54] sm:$0xf]
      %v1631 = vld [vmem:[%s381 + $0x58] sm:$0xf]
      %v1632 = vld [vmem:[%s381 + $0x5c] sm:$0xf]
      %v1633 = vld [vmem:[%s381 + $0x60] sm:$0xf]
      %v1634 = vld [vmem:[%s381 + $0x64] sm:$0xf]
      %v1635 = vld [vmem:[%s381 + $0x68] sm:$0xf]
      %v1636 = vld [vmem:[%s381 + $0x6c] sm:$0xf]
      %v1637 = vld [vmem:[%s381 + $0x70] sm:$0xf]
      %v1638 = vld [vmem:[%s381 + $0x74] sm:$0xf]
      %v1639 = vld [vmem:[%s381 + $0x78] sm:$0xf]
      %v1640 = vld [vmem:[%s381 + $0x7c] sm:$0xf]
      %v1641 = vld [vmem:[%s381 + $0x80] sm:$0xf]
      %v1642 = vld [vmem:[%s381 + $0x84] sm:$0xf]
      %v1643 = vld [vmem:[%s381 + $0x88] sm:$0xf]
      %s1644 = scalar_lea.vmem %s1, 384
      %v1645 = vld [vmem:[%s1644] sm:$0xff]
      %v1646 = vld [vmem:[%s1644 + $0x8] sm:$0xff]
      %v1647 = vld [vmem:[%s1644 + $0x10] sm:$0xff]
      %v1648 = vld [vmem:[%s1644 + $0x18] sm:$0xff]
      %v1649 = vld [vmem:[%s1644 + $0x20] sm:$0xff]
      %v1650 = vld [vmem:[%s1644 + $0x28] sm:$0xff]
      %v1651 = vld [vmem:[%s1644 + $0x30] sm:$0xff]
      %v1652 = vld [vmem:[%s1644 + $0x38] sm:$0xff]
      %v1653 = vld [vmem:[%s1644 + $0x40] sm:$0xff]
      %v1654 = vld [vmem:[%s1644 + $0x48] sm:$0xff]
      %v1655 = vld [vmem:[%s1644 + $0x50] sm:$0xff]
      %v1656 = vld [vmem:[%s1644 + $0x58] sm:$0xff]
      %v1657 = vld [vmem:[%s1644 + $0x60] sm:$0xff]
      %v1658 = vld [vmem:[%s1644 + $0x68] sm:$0xff]
      %v1659 = vld [vmem:[%s1644 + $0x70] sm:$0xff]
      %v1660 = vld [vmem:[%s1644 + $0x78] sm:$0xff]
      %v1693 = vunpack.c.l.b16 %v1612
      %v1694 = vunpack.c.l.b16 %v1613
      %v1695 = vunpack.c.l.b16 %v1614
      %v1696 = vunpack.c.l.b16 %v1615
      %v1697 = vunpack.c.l.b16 %v1616
      %v1698 = vunpack.c.l.b16 %v1617
      %v1699 = vunpack.c.l.b16 %v1618
      %v1700 = vunpack.c.l.b16 %v1619
      %v1701 = vunpack.c.l.b16 %v1620
      %v1702 = vunpack.c.l.b16 %v1621
      %v1703 = vunpack.c.l.b16 %v1622
      %v1704 = vunpack.c.l.b16 %v1623
      %v1705 = vunpack.c.l.b16 %v1624
      %v1706 = vunpack.c.l.b16 %v1625
      %v1707 = vunpack.c.l.b16 %v1626
      %v1708 = vunpack.c.l.b16 %v1627
      %v1709 = vunpack.c.l.b16 %v1628
      %v1710 = vunpack.c.l.b16 %v1629
      %v1711 = vunpack.c.l.b16 %v1630
      %v1712 = vunpack.c.l.b16 %v1631
      %v1713 = vunpack.c.l.b16 %v1632
      %v1714 = vunpack.c.l.b16 %v1633
      %v1715 = vunpack.c.l.b16 %v1634
      %v1716 = vunpack.c.l.b16 %v1635
      %v1717 = vunpack.c.l.b16 %v1636
      %v1718 = vunpack.c.l.b16 %v1637
      %v1719 = vunpack.c.l.b16 %v1638
      %v1720 = vunpack.c.l.b16 %v1639
      %v1721 = vunpack.c.l.b16 %v1640
      %v1722 = vunpack.c.l.b16 %v1641
      %v1723 = vunpack.c.l.b16 %v1642
      %v1724 = vunpack.c.l.b16 %v1643
      %v1725 = vpack.c.b16 %v1694, %v1693
      %v1726 = vpack.c.b16 %v1696, %v1695
      %v1727 = vpack.c.b16 %v1698, %v1697
      %v1728 = vpack.c.b16 %v1700, %v1699
      %v1729 = vpack.c.b16 %v1702, %v1701
      %v1730 = vpack.c.b16 %v1704, %v1703
      %v1731 = vpack.c.b16 %v1706, %v1705
      %v1732 = vpack.c.b16 %v1708, %v1707
      %v1733 = vpack.c.b16 %v1710, %v1709
      %v1734 = vpack.c.b16 %v1712, %v1711
      %v1735 = vpack.c.b16 %v1714, %v1713
      %v1736 = vpack.c.b16 %v1716, %v1715
      %v1737 = vpack.c.b16 %v1718, %v1717
      %v1738 = vpack.c.b16 %v1720, %v1719
      %v1739 = vpack.c.b16 %v1722, %v1721
      %v1740 = vpack.c.b16 %v1724, %v1723
      %v1773 = vunpack.c.l.b16 %v1645
      %v1774 = vunpack.c.h.b16 %v1645
      %v1775 = vunpack.c.l.b16 %v1646
      %v1776 = vunpack.c.h.b16 %v1646
      %v1777 = vunpack.c.l.b16 %v1647
      %v1778 = vunpack.c.h.b16 %v1647
      %v1779 = vunpack.c.l.b16 %v1648
      %v1780 = vunpack.c.h.b16 %v1648
      %v1781 = vunpack.c.l.b16 %v1649
      %v1782 = vunpack.c.h.b16 %v1649
      %v1783 = vunpack.c.l.b16 %v1650
      %v1784 = vunpack.c.h.b16 %v1650
      %v1785 = vunpack.c.l.b16 %v1651
      %v1786 = vunpack.c.h.b16 %v1651
      %v1787 = vunpack.c.l.b16 %v1652
      %v1788 = vunpack.c.h.b16 %v1652
      %v1789 = vunpack.c.l.b16 %v1653
      %v1790 = vunpack.c.h.b16 %v1653
      %v1791 = vunpack.c.l.b16 %v1654
      %v1792 = vunpack.c.h.b16 %v1654
      %v1793 = vunpack.c.l.b16 %v1655
      %v1794 = vunpack.c.h.b16 %v1655
      %v1795 = vunpack.c.l.b16 %v1656
      %v1796 = vunpack.c.h.b16 %v1656
      %v1797 = vunpack.c.l.b16 %v1657
      %v1798 = vunpack.c.h.b16 %v1657
      %v1799 = vunpack.c.l.b16 %v1658
      %v1800 = vunpack.c.h.b16 %v1658
      %v1801 = vunpack.c.l.b16 %v1659
      %v1802 = vunpack.c.h.b16 %v1659
      %v1803 = vunpack.c.l.b16 %v1660
      %v1804 = vunpack.c.h.b16 %v1660
      %v1805 = vpack.c.b16 %v1775, %v1773
      %v1806 = vpack.c.b16 %v1776, %v1774
      %v1807 = vpack.c.b16 %v1779, %v1777
      %v1808 = vpack.c.b16 %v1780, %v1778
      %v1809 = vpack.c.b16 %v1783, %v1781
      %v1810 = vpack.c.b16 %v1784, %v1782
      %v1811 = vpack.c.b16 %v1787, %v1785
      %v1812 = vpack.c.b16 %v1788, %v1786
      %v1813 = vpack.c.b16 %v1791, %v1789
      %v1814 = vpack.c.b16 %v1792, %v1790
      %v1815 = vpack.c.b16 %v1795, %v1793
      %v1816 = vpack.c.b16 %v1796, %v1794
      %v1817 = vpack.c.b16 %v1799, %v1797
      %v1818 = vpack.c.b16 %v1800, %v1798
      %v1819 = vpack.c.b16 %v1803, %v1801
      %v1820 = vpack.c.b16 %v1804, %v1802
      %1837 = vmatprep.subr.bf16.mxu0 %v1806
      %1838 = vmatpush1.bf16.msra.mxu0 %v1805
      %1839 = vmatprep.subr.bf16.mxu0 %v1808
      %1840 = vmatpush1.bf16.msra.mxu0 %v1807
      %1841 = vmatprep.subr.bf16.mxu0 %v1810
      %1842 = vmatpush1.bf16.msra.mxu0 %v1809
      %1843 = vmatprep.subr.bf16.mxu0 %v1812
      %1844 = vmatpush1.bf16.msra.mxu0 %v1811
      %1845 = vmatprep.subr.bf16.mxu0 %v1814
      %1846 = vmatpush1.bf16.msra.mxu0 %v1813
      %1847 = vmatprep.subr.bf16.mxu0 %v1816
      %1848 = vmatpush1.bf16.msra.mxu0 %v1815
      %1849 = vmatprep.subr.bf16.mxu0 %v1818
      %1850 = vmatpush1.bf16.msra.mxu0 %v1817
      %1851 = vmatprep.subr.bf16.mxu0 %v1820
      %1852 = vmatpush1.bf16.msra.mxu0 %v1819
      %1853 = vmatprep.subr.bf16.mxu0 0
      %1854 = vmatpush1.bf16.msra.mxu0 0
      %1855 = vmatprep.subr.bf16.mxu0 0
      %1856 = vmatpush1.bf16.msra.mxu0 0
      %1857 = vmatprep.subr.bf16.mxu0 0
      %1858 = vmatpush1.bf16.msra.mxu0 0
      %1859 = vmatprep.subr.bf16.mxu0 0
      %1860 = vmatpush1.bf16.msra.mxu0 0
      %1861 = vmatprep.subr.bf16.mxu0 0
      %1862 = vmatpush1.bf16.msra.mxu0 0
      %1863 = vmatprep.subr.bf16.mxu0 0
      %1864 = vmatpush1.bf16.msra.mxu0 0
      %1865 = vmatprep.subr.bf16.mxu0 0
      %1866 = vmatpush1.bf16.msra.mxu0 0
      %1867 = vmatprep.subr.bf16.mxu0 0
      %1868 = vmatpush1.bf16.msra.mxu0 0
      %1869 = vmatprep.mubr.bf16.mxu0 0
      %1870 = vmatmul.mubr.bf16.gmra.mrb[0].mxu0 %v1725
      %v1871 = vpop.f32.mrb[0].mxu0
      %v1872 = vadd.f32 0.0, %v1871
      %v1873 = vpop.f32.mrb[0].mxu0
      %v1874 = vadd.f32 0.0, %v1873
      %v1875 = vpop.f32.mrb[0].mxu0
      %v1876 = vadd.f32 0.0, %v1875
      %v1877 = vpop.f32.mrb[0].mxu0
      %v1878 = vadd.f32 0.0, %v1877
      %1879 = vmatprep.mubr.bf16.mxu0 0
      %1880 = vmatmul.mubr.bf16.gmra.mrb[0].mxu0 %v1726
      %v1881 = vpop.f32.mrb[0].mxu0
      %v1882 = vadd.f32 0.0, %v1881
      %v1883 = vpop.f32.mrb[0].mxu0
      %v1884 = vadd.f32 0.0, %v1883
      %v1885 = vpop.f32.mrb[0].mxu0
      %v1886 = vadd.f32 0.0, %v1885
      %v1887 = vpop.f32.mrb[0].mxu0
      %v1888 = vadd.f32 0.0, %v1887
      %1889 = vmatprep.mubr.bf16.mxu0 0
      %1890 = vmatmul.mubr.bf16.gmra.mrb[0].mxu0 %v1727
      %v1891 = vpop.f32.mrb[0].mxu0
      %v1892 = vadd.f32 0.0, %v1891
      %v1893 = vpop.f32.mrb[0].mxu0
      %v1894 = vadd.f32 0.0, %v1893
      %v1895 = vpop.f32.mrb[0].mxu0
      %v1896 = vadd.f32 0.0, %v1895
      %v1897 = vpop.f32.mrb[0].mxu0
      %v1898 = vadd.f32 0.0, %v1897
      %1899 = vmatprep.mubr.bf16.mxu0 0
      %1900 = vmatmul.mubr.bf16.gmra.mrb[0].mxu0 %v1728
      %v1901 = vpop.f32.mrb[0].mxu0
      %v1902 = vadd.f32 0.0, %v1901
      %v1903 = vpop.f32.mrb[0].mxu0
      %v1904 = vadd.f32 0.0, %v1903
      %v1905 = vpop.f32.mrb[0].mxu0
      %v1906 = vadd.f32 0.0, %v1905
      %v1907 = vpop.f32.mrb[0].mxu0
      %v1908 = vadd.f32 0.0, %v1907
      %1909 = vmatprep.mubr.bf16.mxu0 0
      %1910 = vmatmul.mubr.bf16.gmra.mrb[0].mxu0 %v1729
      %v1911 = vpop.f32.mrb[0].mxu0
      %v1912 = vadd.f32 0.0, %v1911
      %v1913 = vpop.f32.mrb[0].mxu0
      %v1914 = vadd.f32 0.0, %v1913
      %v1915 = vpop.f32.mrb[0].mxu0
      %v1916 = vadd.f32 0.0, %v1915
      %v1917 = vpop.f32.mrb[0].mxu0
      %v1918 = vadd.f32 0.0, %v1917
      %1919 = vmatprep.mubr.bf16.mxu0 0
      %1920 = vmatmul.mubr.bf16.gmra.mrb[0].mxu0 %v1730
      %v1921 = vpop.f32.mrb[0].mxu0
      %v1922 = vadd.f32 0.0, %v1921
      %v1923 = vpop.f32.mrb[0].mxu0
      %v1924 = vadd.f32 0.0, %v1923
      %v1925 = vpop.f32.mrb[0].mxu0
      %v1926 = vadd.f32 0.0, %v1925
      %v1927 = vpop.f32.mrb[0].mxu0
      %v1928 = vadd.f32 0.0, %v1927
      %1929 = vmatprep.mubr.bf16.mxu0 0
      %1930 = vmatmul.mubr.bf16.gmra.mrb[0].mxu0 %v1731
      %v1931 = vpop.f32.mrb[0].mxu0
      %v1932 = vadd.f32 0.0, %v1931
      %v1933 = vpop.f32.mrb[0].mxu0
      %v1934 = vadd.f32 0.0, %v1933
      %v1935 = vpop.f32.mrb[0].mxu0
      %v1936 = vadd.f32 0.0, %v1935
      %v1937 = vpop.f32.mrb[0].mxu0
      %v1938 = vadd.f32 0.0, %v1937
      %1939 = vmatprep.mubr.bf16.mxu0 0
      %1940 = vmatmul.mubr.bf16.gmra.mrb[0].mxu0 %v1732
      %v1941 = vpop.f32.mrb[0].mxu0
      %v1942 = vadd.f32 0.0, %v1941
      %v1943 = vpop.f32.mrb[0].mxu0
      %v1944 = vadd.f32 0.0, %v1943
      %v1945 = vpop.f32.mrb[0].mxu0
      %v1946 = vadd.f32 0.0, %v1945
      %v1947 = vpop.f32.mrb[0].mxu0
      %v1948 = vadd.f32 0.0, %v1947
      %1949 = vmatprep.mubr.bf16.mxu0 0
      %1950 = vmatmul.mubr.bf16.gmra.mrb[0].mxu0 %v1733
      %v1951 = vpop.f32.mrb[0].mxu0
      %v1952 = vadd.f32 0.0, %v1951
      %v1953 = vpop.f32.mrb[0].mxu0
      %v1954 = vadd.f32 0.0, %v1953
      %v1955 = vpop.f32.mrb[0].mxu0
      %v1956 = vadd.f32 0.0, %v1955
      %v1957 = vpop.f32.mrb[0].mxu0
      %v1958 = vadd.f32 0.0, %v1957
      %1959 = vmatprep.mubr.bf16.mxu0 0
      %1960 = vmatmul.mubr.bf16.gmra.mrb[0].mxu0 %v1734
      %v1961 = vpop.f32.mrb[0].mxu0
      %v1962 = vadd.f32 0.0, %v1961
      %v1963 = vpop.f32.mrb[0].mxu0
      %v1964 = vadd.f32 0.0, %v1963
      %v1965 = vpop.f32.mrb[0].mxu0
      %v1966 = vadd.f32 0.0, %v1965
      %v1967 = vpop.f32.mrb[0].mxu0
      %v1968 = vadd.f32 0.0, %v1967
      %1969 = vmatprep.mubr.bf16.mxu0 0
      %1970 = vmatmul.mubr.bf16.gmra.mrb[0].mxu0 %v1735
      %v1971 = vpop.f32.mrb[0].mxu0
      %v1972 = vadd.f32 0.0, %v1971
      %v1973 = vpop.f32.mrb[0].mxu0
      %v1974 = vadd.f32 0.0, %v1973
      %v1975 = vpop.f32.mrb[0].mxu0
      %v1976 = vadd.f32 0.0, %v1975
      %v1977 = vpop.f32.mrb[0].mxu0
      %v1978 = vadd.f32 0.0, %v1977
      %1979 = vmatprep.mubr.bf16.mxu0 0
      %1980 = vmatmul.mubr.bf16.gmra.mrb[0].mxu0 %v1736
      %v1981 = vpop.f32.mrb[0].mxu0
      %v1982 = vadd.f32 0.0, %v1981
      %v1983 = vpop.f32.mrb[0].mxu0
      %v1984 = vadd.f32 0.0, %v1983
      %v1985 = vpop.f32.mrb[0].mxu0
      %v1986 = vadd.f32 0.0, %v1985
      %v1987 = vpop.f32.mrb[0].mxu0
      %v1988 = vadd.f32 0.0, %v1987
      %1989 = vmatprep.mubr.bf16.mxu0 0
      %1990 = vmatmul.mubr.bf16.gmra.mrb[0].mxu0 %v1737
      %v1991 = vpop.f32.mrb[0].mxu0
      %v1992 = vadd.f32 0.0, %v1991
      %v1993 = vpop.f32.mrb[0].mxu0
      %v1994 = vadd.f32 0.0, %v1993
      %v1995 = vpop.f32.mrb[0].mxu0
      %v1996 = vadd.f32 0.0, %v1995
      %v1997 = vpop.f32.mrb[0].mxu0
      %v1998 = vadd.f32 0.0, %v1997
      %1999 = vmatprep.mubr.bf16.mxu0 0
      %2000 = vmatmul.mubr.bf16.gmra.mrb[0].mxu0 %v1738
      %v2001 = vpop.f32.mrb[0].mxu0
      %v2002 = vadd.f32 0.0, %v2001
      %v2003 = vpop.f32.mrb[0].mxu0
      %v2004 = vadd.f32 0.0, %v2003
      %v2005 = vpop.f32.mrb[0].mxu0
      %v2006 = vadd.f32 0.0, %v2005
      %v2007 = vpop.f32.mrb[0].mxu0
      %v2008 = vadd.f32 0.0, %v2007
      %2009 = vmatprep.mubr.bf16.mxu0 0
      %2010 = vmatmul.mubr.bf16.gmra.mrb[0].mxu0 %v1739
      %v2011 = vpop.f32.mrb[0].mxu0
      %v2012 = vadd.f32 0.0, %v2011
      %v2013 = vpop.f32.mrb[0].mxu0
      %v2014 = vadd.f32 0.0, %v2013
      %v2015 = vpop.f32.mrb[0].mxu0
      %v2016 = vadd.f32 0.0, %v2015
      %v2017 = vpop.f32.mrb[0].mxu0
      %v2018 = vadd.f32 0.0, %v2017
      %2019 = vmatprep.mubr.bf16.mxu0 0
      %2020 = vmatmul.mubr.bf16.gmra.mrb[0].mxu0 %v1740
      %v2021 = vpop.f32.mrb[0].mxu0
      %v2022 = vadd.f32 0.0, %v2021
      %v2023 = vpop.f32.mrb[0].mxu0
      %v2024 = vadd.f32 0.0, %v2023
      %v2025 = vpop.f32.mrb[0].mxu0
      %v2026 = vadd.f32 0.0, %v2025
      %v2027 = vpop.f32.mrb[0].mxu0
      %v2028 = vadd.f32 0.0, %v2027
      %2029 = vdwg.mxu0
      %v2030 = vadd.f32 %v1548, %v1872
      %v2031 = vadd.f32 %v1549, %v1874
      %v2032 = vadd.f32 %v1550, %v1876
      %v2033 = vadd.f32 %v1551, %v1878
      %v2034 = vadd.f32 %v1552, %v1882
      %v2035 = vadd.f32 %v1553, %v1884
      %v2036 = vadd.f32 %v1554, %v1886
      %v2037 = vadd.f32 %v1555, %v1888
      %v2038 = vadd.f32 %v1556, %v1892
      %v2039 = vadd.f32 %v1557, %v1894
      %v2040 = vadd.f32 %v1558, %v1896
      %v2041 = vadd.f32 %v1559, %v1898
      %v2042 = vadd.f32 %v1560, %v1902
      %v2043 = vadd.f32 %v1561, %v1904
      %v2044 = vadd.f32 %v1562, %v1906
      %v2045 = vadd.f32 %v1563, %v1908
      %v2046 = vadd.f32 %v1564, %v1912
      %v2047 = vadd.f32 %v1565, %v1914
      %v2048 = vadd.f32 %v1566, %v1916
      %v2049 = vadd.f32 %v1567, %v1918
      %v2050 = vadd.f32 %v1568, %v1922
      %v2051 = vadd.f32 %v1569, %v1924
      %v2052 = vadd.f32 %v1570, %v1926
      %v2053 = vadd.f32 %v1571, %v1928
      %v2054 = vadd.f32 %v1572, %v1932
      %v2055 = vadd.f32 %v1573, %v1934
      %v2056 = vadd.f32 %v1574, %v1936
      %v2057 = vadd.f32 %v1575, %v1938
      %v2058 = vadd.f32 %v1576, %v1942
      %v2059 = vadd.f32 %v1577, %v1944
      %v2060 = vadd.f32 %v1578, %v1946
      %v2061 = vadd.f32 %v1579, %v1948
      %v2062 = vadd.f32 %v1580, %v1952
      %v2063 = vadd.f32 %v1581, %v1954
      %v2064 = vadd.f32 %v1582, %v1956
      %v2065 = vadd.f32 %v1583, %v1958
      %v2066 = vadd.f32 %v1584, %v1962
      %v2067 = vadd.f32 %v1585, %v1964
      %v2068 = vadd.f32 %v1586, %v1966
      %v2069 = vadd.f32 %v1587, %v1968
      %v2070 = vadd.f32 %v1588, %v1972
      %v2071 = vadd.f32 %v1589, %v1974
      %v2072 = vadd.f32 %v1590, %v1976
      %v2073 = vadd.f32 %v1591, %v1978
      %v2074 = vadd.f32 %v1592, %v1982
      %v2075 = vadd.f32 %v1593, %v1984
      %v2076 = vadd.f32 %v1594, %v1986
      %v2077 = vadd.f32 %v1595, %v1988
      %v2078 = vadd.f32 %v1596, %v1992
      %v2079 = vadd.f32 %v1597, %v1994
      %v2080 = vadd.f32 %v1598, %v1996
      %v2081 = vadd.f32 %v1599, %v1998
      %v2082 = vadd.f32 %v1600, %v2002
      %v2083 = vadd.f32 %v1601, %v2004
      %v2084 = vadd.f32 %v1602, %v2006
      %v2085 = vadd.f32 %v1603, %v2008
      %v2086 = vadd.f32 %v1604, %v2012
      %v2087 = vadd.f32 %v1605, %v2014
      %v2088 = vadd.f32 %v1606, %v2016
      %v2089 = vadd.f32 %v1607, %v2018
      %v2090 = vadd.f32 %v1608, %v2022
      %v2091 = vadd.f32 %v1609, %v2024
      %v2092 = vadd.f32 %v1610, %v2026
      %v2093 = vadd.f32 %v1611, %v2028
      %v2094 = vld [vmem:[%s381 + $0x10] sm:$0xf]
      %v2095 = vld [vmem:[%s381 + $0x14] sm:$0xf]
      %v2096 = vld [vmem:[%s381 + $0x18] sm:$0xf]
      %v2097 = vld [vmem:[%s381 + $0x1c] sm:$0xf]
      %v2098 = vld [vmem:[%s381 + $0x20] sm:$0xf]
      %v2099 = vld [vmem:[%s381 + $0x24] sm:$0xf]
      %v2100 = vld [vmem:[%s381 + $0x28] sm:$0xf]
      %v2101 = vld [vmem:[%s381 + $0x2c] sm:$0xf]
      %v2102 = vld [vmem:[%s381 + $0x30] sm:$0xf]
      %v2103 = vld [vmem:[%s381 + $0x34] sm:$0xf]
      %v2104 = vld [vmem:[%s381 + $0x38] sm:$0xf]
      %v2105 = vld [vmem:[%s381 + $0x3c] sm:$0xf]
      %v2106 = vld [vmem:[%s381 + $0x40] sm:$0xf]
      %v2107 = vld [vmem:[%s381 + $0x44] sm:$0xf]
      %v2108 = vld [vmem:[%s381 + $0x48] sm:$0xf]
      %v2109 = vld [vmem:[%s381 + $0x4c] sm:$0xf]
      %v2110 = vld [vmem:[%s381 + $0x50] sm:$0xf]
      %v2111 = vld [vmem:[%s381 + $0x54] sm:$0xf]
      %v2112 = vld [vmem:[%s381 + $0x58] sm:$0xf]
      %v2113 = vld [vmem:[%s381 + $0x5c] sm:$0xf]
      %v2114 = vld [vmem:[%s381 + $0x60] sm:$0xf]
      %v2115 = vld [vmem:[%s381 + $0x64] sm:$0xf]
      %v2116 = vld [vmem:[%s381 + $0x68] sm:$0xf]
      %v2117 = vld [vmem:[%s381 + $0x6c] sm:$0xf]
      %v2118 = vld [vmem:[%s381 + $0x70] sm:$0xf]
      %v2119 = vld [vmem:[%s381 + $0x74] sm:$0xf]
      %v2120 = vld [vmem:[%s381 + $0x78] sm:$0xf]
      %v2121 = vld [vmem:[%s381 + $0x7c] sm:$0xf]
      %v2122 = vld [vmem:[%s381 + $0x80] sm:$0xf]
      %v2123 = vld [vmem:[%s381 + $0x84] sm:$0xf]
      %v2124 = vld [vmem:[%s381 + $0x88] sm:$0xf]
      %v2125 = vld [vmem:[%s381 + $0x8c] sm:$0xf]
      %s2126 = scalar_lea.vmem %s1, 512
      %v2127 = vld [vmem:[%s2126] sm:$0xff]
      %v2128 = vld [vmem:[%s2126 + $0x8] sm:$0xff]
      %v2129 = vld [vmem:[%s2126 + $0x10] sm:$0xff]
      %v2130 = vld [vmem:[%s2126 + $0x18] sm:$0xff]
      %v2131 = vld [vmem:[%s2126 + $0x20] sm:$0xff]
      %v2132 = vld [vmem:[%s2126 + $0x28] sm:$0xff]
      %v2133 = vld [vmem:[%s2126 + $0x30] sm:$0xff]
      %v2134 = vld [vmem:[%s2126 + $0x38] sm:$0xff]
      %v2135 = vld [vmem:[%s2126 + $0x40] sm:$0xff]
      %v2136 = vld [vmem:[%s2126 + $0x48] sm:$0xff]
      %v2137 = vld [vmem:[%s2126 + $0x50] sm:$0xff]
      %v2138 = vld [vmem:[%s2126 + $0x58] sm:$0xff]
      %v2139 = vld [vmem:[%s2126 + $0x60] sm:$0xff]
      %v2140 = vld [vmem:[%s2126 + $0x68] sm:$0xff]
      %v2141 = vld [vmem:[%s2126 + $0x70] sm:$0xff]
      %v2142 = vld [vmem:[%s2126 + $0x78] sm:$0xff]
      %v2175 = vunpack.c.l.b16 %v2094
      %v2176 = vunpack.c.l.b16 %v2095
      %v2177 = vunpack.c.l.b16 %v2096
      %v2178 = vunpack.c.l.b16 %v2097
      %v2179 = vunpack.c.l.b16 %v2098
      %v2180 = vunpack.c.l.b16 %v2099
      %v2181 = vunpack.c.l.b16 %v2100
      %v2182 = vunpack.c.l.b16 %v2101
      %v2183 = vunpack.c.l.b16 %v2102
      %v2184 = vunpack.c.l.b16 %v2103
      %v2185 = vunpack.c.l.b16 %v2104
      %v2186 = vunpack.c.l.b16 %v2105
      %v2187 = vunpack.c.l.b16 %v2106
      %v2188 = vunpack.c.l.b16 %v2107
      %v2189 = vunpack.c.l.b16 %v2108
      %v2190 = vunpack.c.l.b16 %v2109
      %v2191 = vunpack.c.l.b16 %v2110
      %v2192 = vunpack.c.l.b16 %v2111
      %v2193 = vunpack.c.l.b16 %v2112
      %v2194 = vunpack.c.l.b16 %v2113
      %v2195 = vunpack.c.l.b16 %v2114
      %v2196 = vunpack.c.l.b16 %v2115
      %v2197 = vunpack.c.l.b16 %v2116
      %v2198 = vunpack.c.l.b16 %v2117
      %v2199 = vunpack.c.l.b16 %v2118
      %v2200 = vunpack.c.l.b16 %v2119
      %v2201 = vunpack.c.l.b16 %v2120
      %v2202 = vunpack.c.l.b16 %v2121
      %v2203 = vunpack.c.l.b16 %v2122
      %v2204 = vunpack.c.l.b16 %v2123
      %v2205 = vunpack.c.l.b16 %v2124
      %v2206 = vunpack.c.l.b16 %v2125
      %v2207 = vpack.c.b16 %v2176, %v2175
      %v2208 = vpack.c.b16 %v2178, %v2177
      %v2209 = vpack.c.b16 %v2180, %v2179
      %v2210 = vpack.c.b16 %v2182, %v2181
      %v2211 = vpack.c.b16 %v2184, %v2183
      %v2212 = vpack.c.b16 %v2186, %v2185
      %v2213 = vpack.c.b16 %v2188, %v2187
      %v2214 = vpack.c.b16 %v2190, %v2189
      %v2215 = vpack.c.b16 %v2192, %v2191
      %v2216 = vpack.c.b16 %v2194, %v2193
      %v2217 = vpack.c.b16 %v2196, %v2195
      %v2218 = vpack.c.b16 %v2198, %v2197
      %v2219 = vpack.c.b16 %v2200, %v2199
      %v2220 = vpack.c.b16 %v2202, %v2201
      %v2221 = vpack.c.b16 %v2204, %v2203
      %v2222 = vpack.c.b16 %v2206, %v2205
      %v2255 = vunpack.c.l.b16 %v2127
      %v2256 = vunpack.c.h.b16 %v2127
      %v2257 = vunpack.c.l.b16 %v2128
      %v2258 = vunpack.c.h.b16 %v2128
      %v2259 = vunpack.c.l.b16 %v2129
      %v2260 = vunpack.c.h.b16 %v2129
      %v2261 = vunpack.c.l.b16 %v2130
      %v2262 = vunpack.c.h.b16 %v2130
      %v2263 = vunpack.c.l.b16 %v2131
      %v2264 = vunpack.c.h.b16 %v2131
      %v2265 = vunpack.c.l.b16 %v2132
      %v2266 = vunpack.c.h.b16 %v2132
      %v2267 = vunpack.c.l.b16 %v2133
      %v2268 = vunpack.c.h.b16 %v2133
      %v2269 = vunpack.c.l.b16 %v2134
      %v2270 = vunpack.c.h.b16 %v2134
      %v2271 = vunpack.c.l.b16 %v2135
      %v2272 = vunpack.c.h.b16 %v2135
      %v2273 = vunpack.c.l.b16 %v2136
      %v2274 = vunpack.c.h.b16 %v2136
      %v2275 = vunpack.c.l.b16 %v2137
      %v2276 = vunpack.c.h.b16 %v2137
      %v2277 = vunpack.c.l.b16 %v2138
      %v2278 = vunpack.c.h.b16 %v2138
      %v2279 = vunpack.c.l.b16 %v2139
      %v2280 = vunpack.c.h.b16 %v2139
      %v2281 = vunpack.c.l.b16 %v2140
      %v2282 = vunpack.c.h.b16 %v2140
      %v2283 = vunpack.c.l.b16 %v2141
      %v2284 = vunpack.c.h.b16 %v2141
      %v2285 = vunpack.c.l.b16 %v2142
      %v2286 = vunpack.c.h.b16 %v2142
      %v2287 = vpack.c.b16 %v2257, %v2255
      %v2288 = vpack.c.b16 %v2258, %v2256
      %v2289 = vpack.c.b16 %v2261, %v2259
      %v2290 = vpack.c.b16 %v2262, %v2260
      %v2291 = vpack.c.b16 %v2265, %v2263
      %v2292 = vpack.c.b16 %v2266, %v2264
      %v2293 = vpack.c.b16 %v2269, %v2267
      %v2294 = vpack.c.b16 %v2270, %v2268
      %v2295 = vpack.c.b16 %v2273, %v2271
      %v2296 = vpack.c.b16 %v2274, %v2272
      %v2297 = vpack.c.b16 %v2277, %v2275
      %v2298 = vpack.c.b16 %v2278, %v2276
      %v2299 = vpack.c.b16 %v2281, %v2279
      %v2300 = vpack.c.b16 %v2282, %v2280
      %v2301 = vpack.c.b16 %v2285, %v2283
      %v2302 = vpack.c.b16 %v2286, %v2284
      %2319 = vmatprep.subr.bf16.mxu0 %v2288
      %2320 = vmatpush1.bf16.msra.mxu0 %v2287
      %2321 = vmatprep.subr.bf16.mxu0 %v2290
      %2322 = vmatpush1.bf16.msra.mxu0 %v2289
      %2323 = vmatprep.subr.bf16.mxu0 %v2292
      %2324 = vmatpush1.bf16.msra.mxu0 %v2291
      %2325 = vmatprep.subr.bf16.mxu0 %v2294
      %2326 = vmatpush1.bf16.msra.mxu0 %v2293
      %2327 = vmatprep.subr.bf16.mxu0 %v2296
      %2328 = vmatpush1.bf16.msra.mxu0 %v2295
      %2329 = vmatprep.subr.bf16.mxu0 %v2298
      %2330 = vmatpush1.bf16.msra.mxu0 %v2297
      %2331 = vmatprep.subr.bf16.mxu0 %v2300
      %2332 = vmatpush1.bf16.msra.mxu0 %v2299
      %2333 = vmatprep.subr.bf16.mxu0 %v2302
      %2334 = vmatpush1.bf16.msra.mxu0 %v2301
      %2335 = vmatprep.subr.bf16.mxu0 0
      %2336 = vmatpush1.bf16.msra.mxu0 0
      %2337 = vmatprep.subr.bf16.mxu0 0
      %2338 = vmatpush1.bf16.msra.mxu0 0
      %2339 = vmatprep.subr.bf16.mxu0 0
      %2340 = vmatpush1.bf16.msra.mxu0 0
      %2341 = vmatprep.subr.bf16.mxu0 0
      %2342 = vmatpush1.bf16.msra.mxu0 0
      %2343 = vmatprep.subr.bf16.mxu0 0
      %2344 = vmatpush1.bf16.msra.mxu0 0
      %2345 = vmatprep.subr.bf16.mxu0 0
      %2346 = vmatpush1.bf16.msra.mxu0 0
      %2347 = vmatprep.subr.bf16.mxu0 0
      %2348 = vmatpush1.bf16.msra.mxu0 0
      %2349 = vmatprep.subr.bf16.mxu0 0
      %2350 = vmatpush1.bf16.msra.mxu0 0
      %2351 = vmatprep.mubr.bf16.mxu0 0
      %2352 = vmatmul.mubr.bf16.gmra.mrb[0].mxu0 %v2207
      %v2353 = vpop.f32.mrb[0].mxu0
      %v2354 = vadd.f32 0.0, %v2353
      %v2355 = vpop.f32.mrb[0].mxu0
      %v2356 = vadd.f32 0.0, %v2355
      %v2357 = vpop.f32.mrb[0].mxu0
      %v2358 = vadd.f32 0.0, %v2357
      %v2359 = vpop.f32.mrb[0].mxu0
      %v2360 = vadd.f32 0.0, %v2359
      %2361 = vmatprep.mubr.bf16.mxu0 0
      %2362 = vmatmul.mubr.bf16.gmra.mrb[0].mxu0 %v2208
      %v2363 = vpop.f32.mrb[0].mxu0
      %v2364 = vadd.f32 0.0, %v2363
      %v2365 = vpop.f32.mrb[0].mxu0
      %v2366 = vadd.f32 0.0, %v2365
      %v2367 = vpop.f32.mrb[0].mxu0
      %v2368 = vadd.f32 0.0, %v2367
      %v2369 = vpop.f32.mrb[0].mxu0
      %v2370 = vadd.f32 0.0, %v2369
      %2371 = vmatprep.mubr.bf16.mxu0 0
      %2372 = vmatmul.mubr.bf16.gmra.mrb[0].mxu0 %v2209
      %v2373 = vpop.f32.mrb[0].mxu0
      %v2374 = vadd.f32 0.0, %v2373
      %v2375 = vpop.f32.mrb[0].mxu0
      %v2376 = vadd.f32 0.0, %v2375
      %v2377 = vpop.f32.mrb[0].mxu0
      %v2378 = vadd.f32 0.0, %v2377
      %v2379 = vpop.f32.mrb[0].mxu0
      %v2380 = vadd.f32 0.0, %v2379
      %2381 = vmatprep.mubr.bf16.mxu0 0
      %2382 = vmatmul.mubr.bf16.gmra.mrb[0].mxu0 %v2210
      %v2383 = vpop.f32.mrb[0].mxu0
      %v2384 = vadd.f32 0.0, %v2383
      %v2385 = vpop.f32.mrb[0].mxu0
      %v2386 = vadd.f32 0.0, %v2385
      %v2387 = vpop.f32.mrb[0].mxu0
      %v2388 = vadd.f32 0.0, %v2387
      %v2389 = vpop.f32.mrb[0].mxu0
      %v2390 = vadd.f32 0.0, %v2389
      %2391 = vmatprep.mubr.bf16.mxu0 0
      %2392 = vmatmul.mubr.bf16.gmra.mrb[0].mxu0 %v2211
      %v2393 = vpop.f32.mrb[0].mxu0
      %v2394 = vadd.f32 0.0, %v2393
      %v2395 = vpop.f32.mrb[0].mxu0
      %v2396 = vadd.f32 0.0, %v2395
      %v2397 = vpop.f32.mrb[0].mxu0
      %v2398 = vadd.f32 0.0, %v2397
      %v2399 = vpop.f32.mrb[0].mxu0
      %v2400 = vadd.f32 0.0, %v2399
      %2401 = vmatprep.mubr.bf16.mxu0 0
      %2402 = vmatmul.mubr.bf16.gmra.mrb[0].mxu0 %v2212
      %v2403 = vpop.f32.mrb[0].mxu0
      %v2404 = vadd.f32 0.0, %v2403
      %v2405 = vpop.f32.mrb[0].mxu0
      %v2406 = vadd.f32 0.0, %v2405
      %v2407 = vpop.f32.mrb[0].mxu0
      %v2408 = vadd.f32 0.0, %v2407
      %v2409 = vpop.f32.mrb[0].mxu0
      %v2410 = vadd.f32 0.0, %v2409
      %2411 = vmatprep.mubr.bf16.mxu0 0
      %2412 = vmatmul.mubr.bf16.gmra.mrb[0].mxu0 %v2213
      %v2413 = vpop.f32.mrb[0].mxu0
      %v2414 = vadd.f32 0.0, %v2413
      %v2415 = vpop.f32.mrb[0].mxu0
      %v2416 = vadd.f32 0.0, %v2415
      %v2417 = vpop.f32.mrb[0].mxu0
      %v2418 = vadd.f32 0.0, %v2417
      %v2419 = vpop.f32.mrb[0].mxu0
      %v2420 = vadd.f32 0.0, %v2419
      %2421 = vmatprep.mubr.bf16.mxu0 0
      %2422 = vmatmul.mubr.bf16.gmra.mrb[0].mxu0 %v2214
      %v2423 = vpop.f32.mrb[0].mxu0
      %v2424 = vadd.f32 0.0, %v2423
      %v2425 = vpop.f32.mrb[0].mxu0
      %v2426 = vadd.f32 0.0, %v2425
      %v2427 = vpop.f32.mrb[0].mxu0
      %v2428 = vadd.f32 0.0, %v2427
      %v2429 = vpop.f32.mrb[0].mxu0
      %v2430 = vadd.f32 0.0, %v2429
      %2431 = vmatprep.mubr.bf16.mxu0 0
      %2432 = vmatmul.mubr.bf16.gmra.mrb[0].mxu0 %v2215
      %v2433 = vpop.f32.mrb[0].mxu0
      %v2434 = vadd.f32 0.0, %v2433
      %v2435 = vpop.f32.mrb[0].mxu0
      %v2436 = vadd.f32 0.0, %v2435
      %v2437 = vpop.f32.mrb[0].mxu0
      %v2438 = vadd.f32 0.0, %v2437
      %v2439 = vpop.f32.mrb[0].mxu0
      %v2440 = vadd.f32 0.0, %v2439
      %2441 = vmatprep.mubr.bf16.mxu0 0
      %2442 = vmatmul.mubr.bf16.gmra.mrb[0].mxu0 %v2216
      %v2443 = vpop.f32.mrb[0].mxu0
      %v2444 = vadd.f32 0.0, %v2443
      %v2445 = vpop.f32.mrb[0].mxu0
      %v2446 = vadd.f32 0.0, %v2445
      %v2447 = vpop.f32.mrb[0].mxu0
      %v2448 = vadd.f32 0.0, %v2447
      %v2449 = vpop.f32.mrb[0].mxu0
      %v2450 = vadd.f32 0.0, %v2449
      %2451 = vmatprep.mubr.bf16.mxu0 0
      %2452 = vmatmul.mubr.bf16.gmra.mrb[0].mxu0 %v2217
      %v2453 = vpop.f32.mrb[0].mxu0
      %v2454 = vadd.f32 0.0, %v2453
      %v2455 = vpop.f32.mrb[0].mxu0
      %v2456 = vadd.f32 0.0, %v2455
      %v2457 = vpop.f32.mrb[0].mxu0
      %v2458 = vadd.f32 0.0, %v2457
      %v2459 = vpop.f32.mrb[0].mxu0
      %v2460 = vadd.f32 0.0, %v2459
      %2461 = vmatprep.mubr.bf16.mxu0 0
      %2462 = vmatmul.mubr.bf16.gmra.mrb[0].mxu0 %v2218
      %v2463 = vpop.f32.mrb[0].mxu0
      %v2464 = vadd.f32 0.0, %v2463
      %v2465 = vpop.f32.mrb[0].mxu0
      %v2466 = vadd.f32 0.0, %v2465
      %v2467 = vpop.f32.mrb[0].mxu0
      %v2468 = vadd.f32 0.0, %v2467
      %v2469 = vpop.f32.mrb[0].mxu0
      %v2470 = vadd.f32 0.0, %v2469
      %2471 = vmatprep.mubr.bf16.mxu0 0
      %2472 = vmatmul.mubr.bf16.gmra.mrb[0].mxu0 %v2219
      %v2473 = vpop.f32.mrb[0].mxu0
      %v2474 = vadd.f32 0.0, %v2473
      %v2475 = vpop.f32.mrb[0].mxu0
      %v2476 = vadd.f32 0.0, %v2475
      %v2477 = vpop.f32.mrb[0].mxu0
      %v2478 = vadd.f32 0.0, %v2477
      %v2479 = vpop.f32.mrb[0].mxu0
      %v2480 = vadd.f32 0.0, %v2479
      %2481 = vmatprep.mubr.bf16.mxu0 0
      %2482 = vmatmul.mubr.bf16.gmra.mrb[0].mxu0 %v2220
      %v2483 = vpop.f32.mrb[0].mxu0
      %v2484 = vadd.f32 0.0, %v2483
      %v2485 = vpop.f32.mrb[0].mxu0
      %v2486 = vadd.f32 0.0, %v2485
      %v2487 = vpop.f32.mrb[0].mxu0
      %v2488 = vadd.f32 0.0, %v2487
      %v2489 = vpop.f32.mrb[0].mxu0
      %v2490 = vadd.f32 0.0, %v2489
      %2491 = vmatprep.mubr.bf16.mxu0 0
      %2492 = vmatmul.mubr.bf16.gmra.mrb[0].mxu0 %v2221
      %v2493 = vpop.f32.mrb[0].mxu0
      %v2494 = vadd.f32 0.0, %v2493
      %v2495 = vpop.f32.mrb[0].mxu0
      %v2496 = vadd.f32 0.0, %v2495
      %v2497 = vpop.f32.mrb[0].mxu0
      %v2498 = vadd.f32 0.0, %v2497
      %v2499 = vpop.f32.mrb[0].mxu0
      %v2500 = vadd.f32 0.0, %v2499
      %2501 = vmatprep.mubr.bf16.mxu0 0
      %2502 = vmatmul.mubr.bf16.gmra.mrb[0].mxu0 %v2222
      %v2503 = vpop.f32.mrb[0].mxu0
      %v2504 = vadd.f32 0.0, %v2503
      %v2505 = vpop.f32.mrb[0].mxu0
      %v2506 = vadd.f32 0.0, %v2505
      %v2507 = vpop.f32.mrb[0].mxu0
      %v2508 = vadd.f32 0.0, %v2507
      %v2509 = vpop.f32.mrb[0].mxu0
      %v2510 = vadd.f32 0.0, %v2509
      %2511 = vdwg.mxu0
      %v2512 = vadd.f32 %v2030, %v2354
      %v2513 = vadd.f32 %v2031, %v2356
      %v2514 = vadd.f32 %v2032, %v2358
      %v2515 = vadd.f32 %v2033, %v2360
      %v2516 = vadd.f32 %v2034, %v2364
      %v2517 = vadd.f32 %v2035, %v2366
      %v2518 = vadd.f32 %v2036, %v2368
      %v2519 = vadd.f32 %v2037, %v2370
      %v2520 = vadd.f32 %v2038, %v2374
      %v2521 = vadd.f32 %v2039, %v2376
      %v2522 = vadd.f32 %v2040, %v2378
      %v2523 = vadd.f32 %v2041, %v2380
      %v2524 = vadd.f32 %v2042, %v2384
      %v2525 = vadd.f32 %v2043, %v2386
      %v2526 = vadd.f32 %v2044, %v2388
      %v2527 = vadd.f32 %v2045, %v2390
      %v2528 = vadd.f32 %v2046, %v2394
      %v2529 = vadd.f32 %v2047, %v2396
      %v2530 = vadd.f32 %v2048, %v2398
      %v2531 = vadd.f32 %v2049, %v2400
      %v2532 = vadd.f32 %v2050, %v2404
      %v2533 = vadd.f32 %v2051, %v2406
      %v2534 = vadd.f32 %v2052, %v2408
      %v2535 = vadd.f32 %v2053, %v2410
      %v2536 = vadd.f32 %v2054, %v2414
      %v2537 = vadd.f32 %v2055, %v2416
      %v2538 = vadd.f32 %v2056, %v2418
      %v2539 = vadd.f32 %v2057, %v2420
      %v2540 = vadd.f32 %v2058, %v2424
      %v2541 = vadd.f32 %v2059, %v2426
      %v2542 = vadd.f32 %v2060, %v2428
      %v2543 = vadd.f32 %v2061, %v2430
      %v2544 = vadd.f32 %v2062, %v2434
      %v2545 = vadd.f32 %v2063, %v2436
      %v2546 = vadd.f32 %v2064, %v2438
      %v2547 = vadd.f32 %v2065, %v2440
      %v2548 = vadd.f32 %v2066, %v2444
      %v2549 = vadd.f32 %v2067, %v2446
      %v2550 = vadd.f32 %v2068, %v2448
      %v2551 = vadd.f32 %v2069, %v2450
      %v2552 = vadd.f32 %v2070, %v2454
      %v2553 = vadd.f32 %v2071, %v2456
      %v2554 = vadd.f32 %v2072, %v2458
      %v2555 = vadd.f32 %v2073, %v2460
      %v2556 = vadd.f32 %v2074, %v2464
      %v2557 = vadd.f32 %v2075, %v2466
      %v2558 = vadd.f32 %v2076, %v2468
      %v2559 = vadd.f32 %v2077, %v2470
      %v2560 = vadd.f32 %v2078, %v2474
      %v2561 = vadd.f32 %v2079, %v2476
      %v2562 = vadd.f32 %v2080, %v2478
      %v2563 = vadd.f32 %v2081, %v2480
      %v2564 = vadd.f32 %v2082, %v2484
      %v2565 = vadd.f32 %v2083, %v2486
      %v2566 = vadd.f32 %v2084, %v2488
      %v2567 = vadd.f32 %v2085, %v2490
      %v2568 = vadd.f32 %v2086, %v2494
      %v2569 = vadd.f32 %v2087, %v2496
      %v2570 = vadd.f32 %v2088, %v2498
      %v2571 = vadd.f32 %v2089, %v2500
      %v2572 = vadd.f32 %v2090, %v2504
      %v2573 = vadd.f32 %v2091, %v2506
      %v2574 = vadd.f32 %v2092, %v2508
      %v2575 = vadd.f32 %v2093, %v2510
      %v2576 = vld [vmem:[%s2] sm:$0x3]
      %v2578 = vlaneseq
      %v2579 = vshrl.u32 %v2578, 7
      %v2580 = vsub.s32 0, %v2579
      %v2581 = vrot.slane %v2576, %v2580
      %v2582 = vlaneseq
      %v2583 = vshrl.u32 %v2582, 7
      %v2584 = vsub.s32 1, %v2583
      %v2585 = vrot.slane %v2576, %v2584
      %v2588 = vadd.f32 %v2512, %v2581
      %v2589 = vadd.f32 %v2513, %v2585
      %v2590 = vadd.f32 %v2514, %v2581
      %v2591 = vadd.f32 %v2515, %v2585
      %v2592 = vadd.f32 %v2516, %v2581
      %v2593 = vadd.f32 %v2517, %v2585
      %v2594 = vadd.f32 %v2518, %v2581
      %v2595 = vadd.f32 %v2519, %v2585
      %v2596 = vadd.f32 %v2520, %v2581
      %v2597 = vadd.f32 %v2521, %v2585
      %v2598 = vadd.f32 %v2522, %v2581
      %v2599 = vadd.f32 %v2523, %v2585
      %v2600 = vadd.f32 %v2524, %v2581
      %v2601 = vadd.f32 %v2525, %v2585
      %v2602 = vadd.f32 %v2526, %v2581
      %v2603 = vadd.f32 %v2527, %v2585
      %v2604 = vadd.f32 %v2528, %v2581
      %v2605 = vadd.f32 %v2529, %v2585
      %v2606 = vadd.f32 %v2530, %v2581
      %v2607 = vadd.f32 %v2531, %v2585
      %v2608 = vadd.f32 %v2532, %v2581
      %v2609 = vadd.f32 %v2533, %v2585
      %v2610 = vadd.f32 %v2534, %v2581
      %v2611 = vadd.f32 %v2535, %v2585
      %v2612 = vadd.f32 %v2536, %v2581
      %v2613 = vadd.f32 %v2537, %v2585
      %v2614 = vadd.f32 %v2538, %v2581
      %v2615 = vadd.f32 %v2539, %v2585
      %v2616 = vadd.f32 %v2540, %v2581
      %v2617 = vadd.f32 %v2541, %v2585
      %v2618 = vadd.f32 %v2542, %v2581
      %v2619 = vadd.f32 %v2543, %v2585
      %v2620 = vadd.f32 %v2544, %v2581
      %v2621 = vadd.f32 %v2545, %v2585
      %v2622 = vadd.f32 %v2546, %v2581
      %v2623 = vadd.f32 %v2547, %v2585
      %v2624 = vadd.f32 %v2548, %v2581
      %v2625 = vadd.f32 %v2549, %v2585
      %v2626 = vadd.f32 %v2550, %v2581
      %v2627 = vadd.f32 %v2551, %v2585
      %v2628 = vadd.f32 %v2552, %v2581
      %v2629 = vadd.f32 %v2553, %v2585
      %v2630 = vadd.f32 %v2554, %v2581
      %v2631 = vadd.f32 %v2555, %v2585
      %v2632 = vadd.f32 %v2556, %v2581
      %v2633 = vadd.f32 %v2557, %v2585
      %v2634 = vadd.f32 %v2558, %v2581
      %v2635 = vadd.f32 %v2559, %v2585
      %v2636 = vadd.f32 %v2560, %v2581
      %v2637 = vadd.f32 %v2561, %v2585
      %v2638 = vadd.f32 %v2562, %v2581
      %v2639 = vadd.f32 %v2563, %v2585
      %v2640 = vadd.f32 %v2564, %v2581
      %v2641 = vadd.f32 %v2565, %v2585
      %v2642 = vadd.f32 %v2566, %v2581
      %v2643 = vadd.f32 %v2567, %v2585
      %v2644 = vadd.f32 %v2568, %v2581
      %v2645 = vadd.f32 %v2569, %v2585
      %v2646 = vadd.f32 %v2570, %v2581
      %v2647 = vadd.f32 %v2571, %v2585
      %v2648 = vadd.f32 %v2572, %v2581
      %v2649 = vadd.f32 %v2573, %v2585
      %v2650 = vadd.f32 %v2574, %v2581
      %v2651 = vadd.f32 %v2575, %v2585
      %v2652 = vmax.f32 %v2588, %v2590
      %v2653 = vmax.f32 %v2589, %v2591
      %v2654 = vmax.f32 %v2590, %v2592
      %v2655 = vmax.f32 %v2591, %v2593
      %v2656 = vmax.f32 %v2592, %v2594
      %v2657 = vmax.f32 %v2593, %v2595
      %v2658 = vmax.f32 %v2594, %v2596
      %v2659 = vmax.f32 %v2595, %v2597
      %v2660 = vmax.f32 %v2596, %v2598
      %v2661 = vmax.f32 %v2597, %v2599
      %v2662 = vmax.f32 %v2598, %v2600
      %v2663 = vmax.f32 %v2599, %v2601
      %v2664 = vmax.f32 %v2600, %v2602
      %v2665 = vmax.f32 %v2601, %v2603
      %v2666 = vmax.f32 %v2602, %v2604
      %v2667 = vmax.f32 %v2603, %v2605
      %v2668 = vmax.f32 %v2604, %v2606
      %v2669 = vmax.f32 %v2605, %v2607
      %v2670 = vmax.f32 %v2606, %v2608
      %v2671 = vmax.f32 %v2607, %v2609
      %v2672 = vmax.f32 %v2608, %v2610
      %v2673 = vmax.f32 %v2609, %v2611
      %v2674 = vmax.f32 %v2610, %v2612
      %v2675 = vmax.f32 %v2611, %v2613
      %v2676 = vmax.f32 %v2612, %v2614
      %v2677 = vmax.f32 %v2613, %v2615
      %v2678 = vmax.f32 %v2614, %v2616
      %v2679 = vmax.f32 %v2615, %v2617
      %v2680 = vmax.f32 %v2616, %v2618
      %v2681 = vmax.f32 %v2617, %v2619
      %v2682 = vmax.f32 %v2618, %v2620
      %v2683 = vmax.f32 %v2619, %v2621
      %v2684 = vmax.f32 %v2620, %v2622
      %v2685 = vmax.f32 %v2621, %v2623
      %v2686 = vmax.f32 %v2622, %v2624
      %v2687 = vmax.f32 %v2623, %v2625
      %v2688 = vmax.f32 %v2624, %v2626
      %v2689 = vmax.f32 %v2625, %v2627
      %v2690 = vmax.f32 %v2626, %v2628
      %v2691 = vmax.f32 %v2627, %v2629
      %v2692 = vmax.f32 %v2628, %v2630
      %v2693 = vmax.f32 %v2629, %v2631
      %v2694 = vmax.f32 %v2630, %v2632
      %v2695 = vmax.f32 %v2631, %v2633
      %v2696 = vmax.f32 %v2632, %v2634
      %v2697 = vmax.f32 %v2633, %v2635
      %v2698 = vmax.f32 %v2634, %v2636
      %v2699 = vmax.f32 %v2635, %v2637
      %v2700 = vmax.f32 %v2636, %v2638
      %v2701 = vmax.f32 %v2637, %v2639
      %v2702 = vmax.f32 %v2638, %v2640
      %v2703 = vmax.f32 %v2639, %v2641
      %v2704 = vmax.f32 %v2640, %v2642
      %v2705 = vmax.f32 %v2641, %v2643
      %v2706 = vmax.f32 %v2642, %v2644
      %v2707 = vmax.f32 %v2643, %v2645
      %v2708 = vmax.f32 %v2644, %v2646
      %v2709 = vmax.f32 %v2645, %v2647
      %v2710 = vmax.f32 %v2646, %v2648
      %v2711 = vmax.f32 %v2647, %v2649
      %v2712 = vmax.f32 %v2648, %v2650
      %v2713 = vmax.f32 %v2649, %v2651
      %2714 = vrot.lane.b32.xlu0 %v2652, 122
      %v2715 = vpop.permute.xlu0 %2714
      %2716 = vrot.lane.b32.xlu0 %v2654, 122
      %v2717 = vpop.permute.xlu0 %2716
      %2718 = vrot.lane.b32.xlu0 %v2656, 122
      %v2719 = vpop.permute.xlu0 %2718
      %2720 = vrot.lane.b32.xlu0 %v2658, 122
      %v2721 = vpop.permute.xlu0 %2720
      %2722 = vrot.lane.b32.xlu0 %v2660, 122
      %v2723 = vpop.permute.xlu0 %2722
      %2724 = vrot.lane.b32.xlu0 %v2662, 122
      %v2725 = vpop.permute.xlu0 %2724
      %2726 = vrot.lane.b32.xlu0 %v2664, 122
      %v2727 = vpop.permute.xlu0 %2726
      %2728 = vrot.lane.b32.xlu0 %v2666, 122
      %v2729 = vpop.permute.xlu0 %2728
      %2730 = vrot.lane.b32.xlu0 %v2668, 122
      %v2731 = vpop.permute.xlu0 %2730
      %2732 = vrot.lane.b32.xlu0 %v2670, 122
      %v2733 = vpop.permute.xlu0 %2732
      %2734 = vrot.lane.b32.xlu0 %v2672, 122
      %v2735 = vpop.permute.xlu0 %2734
      %2736 = vrot.lane.b32.xlu0 %v2674, 122
      %v2737 = vpop.permute.xlu0 %2736
      %2738 = vrot.lane.b32.xlu0 %v2676, 122
      %v2739 = vpop.permute.xlu0 %2738
      %2740 = vrot.lane.b32.xlu0 %v2678, 122
      %v2741 = vpop.permute.xlu0 %2740
      %2742 = vrot.lane.b32.xlu0 %v2680, 122
      %v2743 = vpop.permute.xlu0 %2742
      %2744 = vrot.lane.b32.xlu0 %v2682, 122
      %v2745 = vpop.permute.xlu0 %2744
      %2746 = vrot.lane.b32.xlu0 %v2684, 122
      %v2747 = vpop.permute.xlu0 %2746
      %2748 = vrot.lane.b32.xlu0 %v2686, 122
      %v2749 = vpop.permute.xlu0 %2748
      %2750 = vrot.lane.b32.xlu0 %v2688, 122
      %v2751 = vpop.permute.xlu0 %2750
      %2752 = vrot.lane.b32.xlu0 %v2690, 122
      %v2753 = vpop.permute.xlu0 %2752
      %2754 = vrot.lane.b32.xlu0 %v2692, 122
      %v2755 = vpop.permute.xlu0 %2754
      %2756 = vrot.lane.b32.xlu0 %v2694, 122
      %v2757 = vpop.permute.xlu0 %2756
      %2758 = vrot.lane.b32.xlu0 %v2696, 122
      %v2759 = vpop.permute.xlu0 %2758
      %2760 = vrot.lane.b32.xlu0 %v2698, 122
      %v2761 = vpop.permute.xlu0 %2760
      %2762 = vrot.lane.b32.xlu0 %v2700, 122
      %v2763 = vpop.permute.xlu0 %2762
      %2764 = vrot.lane.b32.xlu0 %v2702, 122
      %v2765 = vpop.permute.xlu0 %2764
      %2766 = vrot.lane.b32.xlu0 %v2704, 122
      %v2767 = vpop.permute.xlu0 %2766
      %2768 = vrot.lane.b32.xlu0 %v2706, 122
      %v2769 = vpop.permute.xlu0 %2768
      %2770 = vrot.lane.b32.xlu0 %v2708, 122
      %v2771 = vpop.permute.xlu0 %2770
      %2772 = vrot.lane.b32.xlu0 %v2710, 122
      %v2773 = vpop.permute.xlu0 %2772
      %2774 = vrot.lane.b32.xlu0 %v2712, 122
      %v2775 = vpop.permute.xlu0 %2774
      %2776 = vrot.lane.b32.xlu0 %v2653, 122
      %v2777 = vpop.permute.xlu0 %2776
      %2778 = vrot.lane.b32.xlu0 %v2655, 122
      %v2779 = vpop.permute.xlu0 %2778
      %2780 = vrot.lane.b32.xlu0 %v2657, 122
      %v2781 = vpop.permute.xlu0 %2780
      %2782 = vrot.lane.b32.xlu0 %v2659, 122
      %v2783 = vpop.permute.xlu0 %2782
      %2784 = vrot.lane.b32.xlu0 %v2661, 122
      %v2785 = vpop.permute.xlu0 %2784
      %2786 = vrot.lane.b32.xlu0 %v2663, 122
      %v2787 = vpop.permute.xlu0 %2786
      %2788 = vrot.lane.b32.xlu0 %v2665, 122
      %v2789 = vpop.permute.xlu0 %2788
      %2790 = vrot.lane.b32.xlu0 %v2667, 122
      %v2791 = vpop.permute.xlu0 %2790
      %2792 = vrot.lane.b32.xlu0 %v2669, 122
      %v2793 = vpop.permute.xlu0 %2792
      %2794 = vrot.lane.b32.xlu0 %v2671, 122
      %v2795 = vpop.permute.xlu0 %2794
      %2796 = vrot.lane.b32.xlu0 %v2673, 122
      %v2797 = vpop.permute.xlu0 %2796
      %2798 = vrot.lane.b32.xlu0 %v2675, 122
      %v2799 = vpop.permute.xlu0 %2798
      %2800 = vrot.lane.b32.xlu0 %v2677, 122
      %v2801 = vpop.permute.xlu0 %2800
      %2802 = vrot.lane.b32.xlu0 %v2679, 122
      %v2803 = vpop.permute.xlu0 %2802
      %2804 = vrot.lane.b32.xlu0 %v2681, 122
      %v2805 = vpop.permute.xlu0 %2804
      %2806 = vrot.lane.b32.xlu0 %v2683, 122
      %v2807 = vpop.permute.xlu0 %2806
      %2808 = vrot.lane.b32.xlu0 %v2685, 122
      %v2809 = vpop.permute.xlu0 %2808
      %2810 = vrot.lane.b32.xlu0 %v2687, 122
      %v2811 = vpop.permute.xlu0 %2810
      %2812 = vrot.lane.b32.xlu0 %v2689, 122
      %v2813 = vpop.permute.xlu0 %2812
      %2814 = vrot.lane.b32.xlu0 %v2691, 122
      %v2815 = vpop.permute.xlu0 %2814
      %2816 = vrot.lane.b32.xlu0 %v2693, 122
      %v2817 = vpop.permute.xlu0 %2816
      %2818 = vrot.lane.b32.xlu0 %v2695, 122
      %v2819 = vpop.permute.xlu0 %2818
      %2820 = vrot.lane.b32.xlu0 %v2697, 122
      %v2821 = vpop.permute.xlu0 %2820
      %2822 = vrot.lane.b32.xlu0 %v2699, 122
      %v2823 = vpop.permute.xlu0 %2822
      %2824 = vrot.lane.b32.xlu0 %v2701, 122
      %v2825 = vpop.permute.xlu0 %2824
      %2826 = vrot.lane.b32.xlu0 %v2703, 122
      %v2827 = vpop.permute.xlu0 %2826
      %2828 = vrot.lane.b32.xlu0 %v2705, 122
      %v2829 = vpop.permute.xlu0 %2828
      %2830 = vrot.lane.b32.xlu0 %v2707, 122
      %v2831 = vpop.permute.xlu0 %2830
      %2832 = vrot.lane.b32.xlu0 %v2709, 122
      %v2833 = vpop.permute.xlu0 %2832
      %2834 = vrot.lane.b32.xlu0 %v2711, 122
      %v2835 = vpop.permute.xlu0 %2834
      %2836 = vrot.lane.b32.xlu0 %v2713, 122
      %v2837 = vpop.permute.xlu0 %2836
      %v2838 = vlaneseq
      %v2839 = vand.u32 %v2838, 127
      %vm2840 = vcmp.lt.s32.totalorder %v2839, 122
      %v2841 = vsel %vm2840, %v2715, %v2777
      %v2842 = vsel %vm2840, %v2717, %v2779
      %v2843 = vsel %vm2840, %v2719, %v2781
      %v2844 = vsel %vm2840, %v2721, %v2783
      %v2845 = vsel %vm2840, %v2723, %v2785
      %v2846 = vsel %vm2840, %v2725, %v2787
      %v2847 = vsel %vm2840, %v2727, %v2789
      %v2848 = vsel %vm2840, %v2729, %v2791
      %v2849 = vsel %vm2840, %v2731, %v2793
      %v2850 = vsel %vm2840, %v2733, %v2795
      %v2851 = vsel %vm2840, %v2735, %v2797
      %v2852 = vsel %vm2840, %v2737, %v2799
      %v2853 = vsel %vm2840, %v2739, %v2801
      %v2854 = vsel %vm2840, %v2741, %v2803
      %v2855 = vsel %vm2840, %v2743, %v2805
      %v2856 = vsel %vm2840, %v2745, %v2807
      %v2857 = vsel %vm2840, %v2747, %v2809
      %v2858 = vsel %vm2840, %v2749, %v2811
      %v2859 = vsel %vm2840, %v2751, %v2813
      %v2860 = vsel %vm2840, %v2753, %v2815
      %v2861 = vsel %vm2840, %v2755, %v2817
      %v2862 = vsel %vm2840, %v2757, %v2819
      %v2863 = vsel %vm2840, %v2759, %v2821
      %v2864 = vsel %vm2840, %v2761, %v2823
      %v2865 = vsel %vm2840, %v2763, %v2825
      %v2866 = vsel %vm2840, %v2765, %v2827
      %v2867 = vsel %vm2840, %v2767, %v2829
      %v2868 = vsel %vm2840, %v2769, %v2831
      %v2869 = vsel %vm2840, %v2771, %v2833
      %v2870 = vsel %vm2840, %v2773, %v2835
      %v2871 = vsel %vm2840, %v2775, %v2837
      %v2872 = vsel %vm2840, %v2777, %v2715
      %v2873 = vsel %vm2840, %v2779, %v2717
      %v2874 = vsel %vm2840, %v2781, %v2719
      %v2875 = vsel %vm2840, %v2783, %v2721
      %v2876 = vsel %vm2840, %v2785, %v2723
      %v2877 = vsel %vm2840, %v2787, %v2725
      %v2878 = vsel %vm2840, %v2789, %v2727
      %v2879 = vsel %vm2840, %v2791, %v2729
      %v2880 = vsel %vm2840, %v2793, %v2731
      %v2881 = vsel %vm2840, %v2795, %v2733
      %v2882 = vsel %vm2840, %v2797, %v2735
      %v2883 = vsel %vm2840, %v2799, %v2737
      %v2884 = vsel %vm2840, %v2801, %v2739
      %v2885 = vsel %vm2840, %v2803, %v2741
      %v2886 = vsel %vm2840, %v2805, %v2743
      %v2887 = vsel %vm2840, %v2807, %v2745
      %v2888 = vsel %vm2840, %v2809, %v2747
      %v2889 = vsel %vm2840, %v2811, %v2749
      %v2890 = vsel %vm2840, %v2813, %v2751
      %v2891 = vsel %vm2840, %v2815, %v2753
      %v2892 = vsel %vm2840, %v2817, %v2755
      %v2893 = vsel %vm2840, %v2819, %v2757
      %v2894 = vsel %vm2840, %v2821, %v2759
      %v2895 = vsel %vm2840, %v2823, %v2761
      %v2896 = vsel %vm2840, %v2825, %v2763
      %v2897 = vsel %vm2840, %v2827, %v2765
      %v2898 = vsel %vm2840, %v2829, %v2767
      %v2899 = vsel %vm2840, %v2831, %v2769
      %v2900 = vsel %vm2840, %v2833, %v2771
      %v2901 = vsel %vm2840, %v2835, %v2773
      %v2902 = vsel %vm2840, %v2837, %v2775
      %v2903 = vmax.f32 %v2652, %v2841
      %v2904 = vmax.f32 %v2653, %v2872
      %v2905 = vmax.f32 %v2654, %v2842
      %v2906 = vmax.f32 %v2655, %v2873
      %v2907 = vmax.f32 %v2656, %v2843
      %v2908 = vmax.f32 %v2657, %v2874
      %v2909 = vmax.f32 %v2658, %v2844
      %v2910 = vmax.f32 %v2659, %v2875
      %v2911 = vmax.f32 %v2660, %v2845
      %v2912 = vmax.f32 %v2661, %v2876
      %v2913 = vmax.f32 %v2662, %v2846
      %v2914 = vmax.f32 %v2663, %v2877
      %v2915 = vmax.f32 %v2664, %v2847
      %v2916 = vmax.f32 %v2665, %v2878
      %v2917 = vmax.f32 %v2666, %v2848
      %v2918 = vmax.f32 %v2667, %v2879
      %v2919 = vmax.f32 %v2668, %v2849
      %v2920 = vmax.f32 %v2669, %v2880
      %v2921 = vmax.f32 %v2670, %v2850
      %v2922 = vmax.f32 %v2671, %v2881
      %v2923 = vmax.f32 %v2672, %v2851
      %v2924 = vmax.f32 %v2673, %v2882
      %v2925 = vmax.f32 %v2674, %v2852
      %v2926 = vmax.f32 %v2675, %v2883
      %v2927 = vmax.f32 %v2676, %v2853
      %v2928 = vmax.f32 %v2677, %v2884
      %v2929 = vmax.f32 %v2678, %v2854
      %v2930 = vmax.f32 %v2679, %v2885
      %v2931 = vmax.f32 %v2680, %v2855
      %v2932 = vmax.f32 %v2681, %v2886
      %v2933 = vmax.f32 %v2682, %v2856
      %v2934 = vmax.f32 %v2683, %v2887
      %v2935 = vmax.f32 %v2684, %v2857
      %v2936 = vmax.f32 %v2685, %v2888
      %v2937 = vmax.f32 %v2686, %v2858
      %v2938 = vmax.f32 %v2687, %v2889
      %v2939 = vmax.f32 %v2688, %v2859
      %v2940 = vmax.f32 %v2689, %v2890
      %v2941 = vmax.f32 %v2690, %v2860
      %v2942 = vmax.f32 %v2691, %v2891
      %v2943 = vmax.f32 %v2692, %v2861
      %v2944 = vmax.f32 %v2693, %v2892
      %v2945 = vmax.f32 %v2694, %v2862
      %v2946 = vmax.f32 %v2695, %v2893
      %v2947 = vmax.f32 %v2696, %v2863
      %v2948 = vmax.f32 %v2697, %v2894
      %v2949 = vmax.f32 %v2698, %v2864
      %v2950 = vmax.f32 %v2699, %v2895
      %v2951 = vmax.f32 %v2700, %v2865
      %v2952 = vmax.f32 %v2701, %v2896
      %v2953 = vmax.f32 %v2702, %v2866
      %v2954 = vmax.f32 %v2703, %v2897
      %v2955 = vmax.f32 %v2704, %v2867
      %v2956 = vmax.f32 %v2705, %v2898
      %v2957 = vmax.f32 %v2706, %v2868
      %v2958 = vmax.f32 %v2707, %v2899
      %v2959 = vmax.f32 %v2708, %v2869
      %v2960 = vmax.f32 %v2709, %v2900
      %v2961 = vmax.f32 %v2710, %v2870
      %v2962 = vmax.f32 %v2711, %v2901
      %v2963 = vmax.f32 %v2712, %v2871
      %v2964 = vmax.f32 %v2713, %v2902
      %v2965 = vmax.f32 %v2903, 0.0
      %v2966 = vmax.f32 %v2904, 0.0
      %v2967 = vmax.f32 %v2905, 0.0
      %v2968 = vmax.f32 %v2906, 0.0
      %v2969 = vmax.f32 %v2907, 0.0
      %v2970 = vmax.f32 %v2908, 0.0
      %v2971 = vmax.f32 %v2909, 0.0
      %v2972 = vmax.f32 %v2910, 0.0
      %v2973 = vmax.f32 %v2911, 0.0
      %v2974 = vmax.f32 %v2912, 0.0
      %v2975 = vmax.f32 %v2913, 0.0
      %v2976 = vmax.f32 %v2914, 0.0
      %v2977 = vmax.f32 %v2915, 0.0
      %v2978 = vmax.f32 %v2916, 0.0
      %v2979 = vmax.f32 %v2917, 0.0
      %v2980 = vmax.f32 %v2918, 0.0
      %v2981 = vmax.f32 %v2919, 0.0
      %v2982 = vmax.f32 %v2920, 0.0
      %v2983 = vmax.f32 %v2921, 0.0
      %v2984 = vmax.f32 %v2922, 0.0
      %v2985 = vmax.f32 %v2923, 0.0
      %v2986 = vmax.f32 %v2924, 0.0
      %v2987 = vmax.f32 %v2925, 0.0
      %v2988 = vmax.f32 %v2926, 0.0
      %v2989 = vmax.f32 %v2927, 0.0
      %v2990 = vmax.f32 %v2928, 0.0
      %v2991 = vmax.f32 %v2929, 0.0
      %v2992 = vmax.f32 %v2930, 0.0
      %v2993 = vmax.f32 %v2931, 0.0
      %v2994 = vmax.f32 %v2932, 0.0
      %v2995 = vmax.f32 %v2933, 0.0
      %v2996 = vmax.f32 %v2934, 0.0
      %v2997 = vmax.f32 %v2935, 0.0
      %v2998 = vmax.f32 %v2936, 0.0
      %v2999 = vmax.f32 %v2937, 0.0
      %v3000 = vmax.f32 %v2938, 0.0
      %v3001 = vmax.f32 %v2939, 0.0
      %v3002 = vmax.f32 %v2940, 0.0
      %v3003 = vmax.f32 %v2941, 0.0
      %v3004 = vmax.f32 %v2942, 0.0
      %v3005 = vmax.f32 %v2943, 0.0
      %v3006 = vmax.f32 %v2944, 0.0
      %v3007 = vmax.f32 %v2945, 0.0
      %v3008 = vmax.f32 %v2946, 0.0
      %v3009 = vmax.f32 %v2947, 0.0
      %v3010 = vmax.f32 %v2948, 0.0
      %v3011 = vmax.f32 %v2949, 0.0
      %v3012 = vmax.f32 %v2950, 0.0
      %v3013 = vmax.f32 %v2951, 0.0
      %v3014 = vmax.f32 %v2952, 0.0
      %v3015 = vmax.f32 %v2953, 0.0
      %v3016 = vmax.f32 %v2954, 0.0
      %v3017 = vmax.f32 %v2955, 0.0
      %v3018 = vmax.f32 %v2956, 0.0
      %v3019 = vmax.f32 %v2957, 0.0
      %v3020 = vmax.f32 %v2958, 0.0
      %v3021 = vmax.f32 %v2959, 0.0
      %v3022 = vmax.f32 %v2960, 0.0
      %v3023 = vmax.f32 %v2961, 0.0
      %v3024 = vmax.f32 %v2962, 0.0
      %v3025 = vmax.f32 %v2963, 0.0
      %v3026 = vmax.f32 %v2964, 0.0
      %v3027 = vpack.c.bf16 %v2967, %v2965
      %v3028 = vpack.c.bf16 %v2968, %v2966
      %v3029 = vpack.c.bf16 %v2971, %v2969
      %v3030 = vpack.c.bf16 %v2972, %v2970
      %v3031 = vpack.c.bf16 %v2975, %v2973
      %v3032 = vpack.c.bf16 %v2976, %v2974
      %v3033 = vpack.c.bf16 %v2979, %v2977
      %v3034 = vpack.c.bf16 %v2980, %v2978
      %v3035 = vpack.c.bf16 %v2983, %v2981
      %v3036 = vpack.c.bf16 %v2984, %v2982
      %v3037 = vpack.c.bf16 %v2987, %v2985
      %v3038 = vpack.c.bf16 %v2988, %v2986
      %v3039 = vpack.c.bf16 %v2991, %v2989
      %v3040 = vpack.c.bf16 %v2992, %v2990
      %v3041 = vpack.c.bf16 %v2995, %v2993
      %v3042 = vpack.c.bf16 %v2996, %v2994
      %v3043 = vpack.c.bf16 %v2999, %v2997
      %v3044 = vpack.c.bf16 %v3000, %v2998
      %v3045 = vpack.c.bf16 %v3003, %v3001
      %v3046 = vpack.c.bf16 %v3004, %v3002
      %v3047 = vpack.c.bf16 %v3007, %v3005
      %v3048 = vpack.c.bf16 %v3008, %v3006
      %v3049 = vpack.c.bf16 %v3011, %v3009
      %v3050 = vpack.c.bf16 %v3012, %v3010
      %v3051 = vpack.c.bf16 %v3015, %v3013
      %v3052 = vpack.c.bf16 %v3016, %v3014
      %v3053 = vpack.c.bf16 %v3019, %v3017
      %v3054 = vpack.c.bf16 %v3020, %v3018
      %v3055 = vpack.c.bf16 %v3023, %v3021
      %v3056 = vpack.c.bf16 %v3024, %v3022
      %v3057 = vpack.c.bf16 %v3025, %v3025
      %v3058 = vpack.c.bf16 %v3026, %v3026
      %v3091 = vunpack.c.l.b16 %v3027
      %v3092 = vunpack.c.l.b16 %v3028
      %v3093 = vunpack.c.h.b16 %v3027
      %v3094 = vunpack.c.h.b16 %v3028
      %v3095 = vunpack.c.l.b16 %v3029
      %v3096 = vunpack.c.l.b16 %v3030
      %v3097 = vunpack.c.h.b16 %v3029
      %v3098 = vunpack.c.h.b16 %v3030
      %v3099 = vunpack.c.l.b16 %v3031
      %v3100 = vunpack.c.l.b16 %v3032
      %v3101 = vunpack.c.h.b16 %v3031
      %v3102 = vunpack.c.h.b16 %v3032
      %v3103 = vunpack.c.l.b16 %v3033
      %v3104 = vunpack.c.l.b16 %v3034
      %v3105 = vunpack.c.h.b16 %v3033
      %v3106 = vunpack.c.h.b16 %v3034
      %v3107 = vunpack.c.l.b16 %v3035
      %v3108 = vunpack.c.l.b16 %v3036
      %v3109 = vunpack.c.h.b16 %v3035
      %v3110 = vunpack.c.h.b16 %v3036
      %v3111 = vunpack.c.l.b16 %v3037
      %v3112 = vunpack.c.l.b16 %v3038
      %v3113 = vunpack.c.h.b16 %v3037
      %v3114 = vunpack.c.h.b16 %v3038
      %v3115 = vunpack.c.l.b16 %v3039
      %v3116 = vunpack.c.l.b16 %v3040
      %v3117 = vunpack.c.h.b16 %v3039
      %v3118 = vunpack.c.h.b16 %v3040
      %v3119 = vunpack.c.l.b16 %v3041
      %v3120 = vunpack.c.l.b16 %v3042
      %v3121 = vunpack.c.h.b16 %v3041
      %v3122 = vunpack.c.h.b16 %v3042
      %v3123 = vunpack.c.l.b16 %v3043
      %v3124 = vunpack.c.l.b16 %v3044
      %v3125 = vunpack.c.h.b16 %v3043
      %v3126 = vunpack.c.h.b16 %v3044
      %v3127 = vunpack.c.l.b16 %v3045
      %v3128 = vunpack.c.l.b16 %v3046
      %v3129 = vunpack.c.h.b16 %v3045
      %v3130 = vunpack.c.h.b16 %v3046
      %v3131 = vunpack.c.l.b16 %v3047
      %v3132 = vunpack.c.l.b16 %v3048
      %v3133 = vunpack.c.h.b16 %v3047
      %v3134 = vunpack.c.h.b16 %v3048
      %v3135 = vunpack.c.l.b16 %v3049
      %v3136 = vunpack.c.l.b16 %v3050
      %v3137 = vunpack.c.h.b16 %v3049
      %v3138 = vunpack.c.h.b16 %v3050
      %v3139 = vunpack.c.l.b16 %v3051
      %v3140 = vunpack.c.l.b16 %v3052
      %v3141 = vunpack.c.h.b16 %v3051
      %v3142 = vunpack.c.h.b16 %v3052
      %v3143 = vunpack.c.l.b16 %v3053
      %v3144 = vunpack.c.l.b16 %v3054
      %v3145 = vunpack.c.h.b16 %v3053
      %v3146 = vunpack.c.h.b16 %v3054
      %v3147 = vunpack.c.l.b16 %v3055
      %v3148 = vunpack.c.l.b16 %v3056
      %v3149 = vunpack.c.h.b16 %v3055
      %v3150 = vunpack.c.h.b16 %v3056
      %v3151 = vunpack.c.l.b16 %v3057
      %v3152 = vunpack.c.l.b16 %v3058
      %v3153 = vpack.c.b16 %v3092, %v3091
      %v3154 = vpack.c.b16 %v3094, %v3093
      %v3155 = vpack.c.b16 %v3096, %v3095
      %v3156 = vpack.c.b16 %v3098, %v3097
      %v3157 = vpack.c.b16 %v3100, %v3099
      %v3158 = vpack.c.b16 %v3102, %v3101
      %v3159 = vpack.c.b16 %v3104, %v3103
      %v3160 = vpack.c.b16 %v3106, %v3105
      %v3161 = vpack.c.b16 %v3108, %v3107
      %v3162 = vpack.c.b16 %v3110, %v3109
      %v3163 = vpack.c.b16 %v3112, %v3111
      %v3164 = vpack.c.b16 %v3114, %v3113
      %v3165 = vpack.c.b16 %v3116, %v3115
      %v3166 = vpack.c.b16 %v3118, %v3117
      %v3167 = vpack.c.b16 %v3120, %v3119
      %v3168 = vpack.c.b16 %v3122, %v3121
      %v3169 = vpack.c.b16 %v3124, %v3123
      %v3170 = vpack.c.b16 %v3126, %v3125
      %v3171 = vpack.c.b16 %v3128, %v3127
      %v3172 = vpack.c.b16 %v3130, %v3129
      %v3173 = vpack.c.b16 %v3132, %v3131
      %v3174 = vpack.c.b16 %v3134, %v3133
      %v3175 = vpack.c.b16 %v3136, %v3135
      %v3176 = vpack.c.b16 %v3138, %v3137
      %v3177 = vpack.c.b16 %v3140, %v3139
      %v3178 = vpack.c.b16 %v3142, %v3141
      %v3179 = vpack.c.b16 %v3144, %v3143
      %v3180 = vpack.c.b16 %v3146, %v3145
      %v3181 = vpack.c.b16 %v3148, %v3147
      %v3182 = vpack.c.b16 %v3150, %v3149
      %v3183 = vpack.c.b16 %v3152, %v3151
      %3215 = vst [vmem:[#allocation2] sm:$0xff] %v3153
      %3216 = vst [vmem:[#allocation2 + $0x8] sm:$0xff] %v3154
      %3217 = vst [vmem:[#allocation2 + $0x10] sm:$0xff] %v3155
      %3218 = vst [vmem:[#allocation2 + $0x18] sm:$0xff] %v3156
      %3219 = vst [vmem:[#allocation2 + $0x20] sm:$0xff] %v3157
      %3220 = vst [vmem:[#allocation2 + $0x28] sm:$0xff] %v3158
      %3221 = vst [vmem:[#allocation2 + $0x30] sm:$0xff] %v3159
      %3222 = vst [vmem:[#allocation2 + $0x38] sm:$0xff] %v3160
      %3223 = vst [vmem:[#allocation2 + $0x40] sm:$0xff] %v3161
      %3224 = vst [vmem:[#allocation2 + $0x48] sm:$0xff] %v3162
      %3225 = vst [vmem:[#allocation2 + $0x50] sm:$0xff] %v3163
      %3226 = vst [vmem:[#allocation2 + $0x58] sm:$0xff] %v3164
      %3227 = vst [vmem:[#allocation2 + $0x60] sm:$0xff] %v3165
      %3228 = vst [vmem:[#allocation2 + $0x68] sm:$0xff] %v3166
      %3229 = vst [vmem:[#allocation2 + $0x70] sm:$0xff] %v3167
      %3230 = vst [vmem:[#allocation2 + $0x78] sm:$0xff] %v3168
      %3231 = vst [vmem:[#allocation2 + $0x80] sm:$0xff] %v3169
      %3232 = vst [vmem:[#allocation2 + $0x88] sm:$0xff] %v3170
      %3233 = vst [vmem:[#allocation2 + $0x90] sm:$0xff] %v3171
      %3234 = vst [vmem:[#allocation2 + $0x98] sm:$0xff] %v3172
      %3235 = vst [vmem:[#allocation2 + $0xa0] sm:$0xff] %v3173
      %3236 = vst [vmem:[#allocation2 + $0xa8] sm:$0xff] %v3174
      %3237 = vst [vmem:[#allocation2 + $0xb0] sm:$0xff] %v3175
      %3238 = vst [vmem:[#allocation2 + $0xb8] sm:$0xff] %v3176
      %3239 = vst [vmem:[#allocation2 + $0xc0] sm:$0xff] %v3177
      %3240 = vst [vmem:[#allocation2 + $0xc8] sm:$0xff] %v3178
      %3241 = vst [vmem:[#allocation2 + $0xd0] sm:$0xff] %v3179
      %3242 = vst [vmem:[#allocation2 + $0xd8] sm:$0xff] %v3180
      %3243 = vst [vmem:[#allocation2 + $0xe0] sm:$0xff] %v3181
      %3244 = vst [vmem:[#allocation2 + $0xe8] sm:$0xff] %v3182
      %3245 = vst [vmem:[#allocation2 + $0xf0] sm:$0xff] %v3183
      %v3246 = vld [vmem:[#allocation2] sm:$0xff]
      %v3247 = vld [vmem:[#allocation2 + $0x8] sm:$0xff]
      %v3248 = vld [vmem:[#allocation2 + $0x10] sm:$0xff]
      %v3249 = vld [vmem:[#allocation2 + $0x18] sm:$0xff]
      %v3250 = vld [vmem:[#allocation2 + $0x20] sm:$0xff]
      %v3251 = vld [vmem:[#allocation2 + $0x28] sm:$0xff]
      %v3252 = vld [vmem:[#allocation2 + $0x30] sm:$0xff]
      %v3253 = vld [vmem:[#allocation2 + $0x38] sm:$0xff]
      %v3254 = vld [vmem:[#allocation2 + $0x40] sm:$0xff]
      %v3255 = vld [vmem:[#allocation2 + $0x48] sm:$0xff]
      %v3256 = vld [vmem:[#allocation2 + $0x50] sm:$0xff]
      %v3257 = vld [vmem:[#allocation2 + $0x58] sm:$0xff]
      %v3258 = vld [vmem:[#allocation2 + $0x60] sm:$0xff]
      %v3259 = vld [vmem:[#allocation2 + $0x68] sm:$0xff]
      %v3260 = vld [vmem:[#allocation2 + $0x70] sm:$0xff]
      %v3261 = vld [vmem:[#allocation2 + $0x78] sm:$0xff]
      %v3262 = vld [vmem:[#allocation2 + $0x80] sm:$0xff]
      %v3263 = vld [vmem:[#allocation2 + $0x88] sm:$0xff]
      %v3264 = vld [vmem:[#allocation2 + $0x90] sm:$0xff]
      %v3265 = vld [vmem:[#allocation2 + $0x98] sm:$0xff]
      %v3266 = vld [vmem:[#allocation2 + $0xa0] sm:$0xff]
      %v3267 = vld [vmem:[#allocation2 + $0xa8] sm:$0xff]
      %v3268 = vld [vmem:[#allocation2 + $0xb0] sm:$0xff]
      %v3269 = vld [vmem:[%s3] sm:$0xff]
      %v3270 = vld [vmem:[%s3 + $0x8] sm:$0xff]
      %v3271 = vld [vmem:[%s3 + $0x10] sm:$0xff]
      %v3272 = vld [vmem:[%s3 + $0x18] sm:$0xff]
      %v3273 = vld [vmem:[%s3 + $0x20] sm:$0xff]
      %v3274 = vld [vmem:[%s3 + $0x28] sm:$0xff]
      %v3275 = vld [vmem:[%s3 + $0x30] sm:$0xff]
      %v3276 = vld [vmem:[%s3 + $0x38] sm:$0xff]
      %v3277 = vld [vmem:[%s3 + $0x40] sm:$0xff]
      %v3278 = vld [vmem:[%s3 + $0x48] sm:$0xff]
      %v3279 = vld [vmem:[%s3 + $0x50] sm:$0xff]
      %v3280 = vld [vmem:[%s3 + $0x58] sm:$0xff]
      %v3281 = vld [vmem:[%s3 + $0x60] sm:$0xff]
      %v3282 = vld [vmem:[%s3 + $0x68] sm:$0xff]
      %v3283 = vld [vmem:[%s3 + $0x70] sm:$0xff]
      %v3284 = vld [vmem:[%s3 + $0x78] sm:$0xff]
      %v3285 = vld [vmem:[%s3 + $0x80] sm:$0xff]
      %v3286 = vld [vmem:[%s3 + $0x88] sm:$0xff]
      %v3287 = vld [vmem:[%s3 + $0x90] sm:$0xff]
      %v3288 = vld [vmem:[%s3 + $0x98] sm:$0xff]
      %v3289 = vld [vmem:[%s3 + $0xa0] sm:$0xff]
      %v3290 = vld [vmem:[%s3 + $0xa8] sm:$0xff]
      %v3291 = vld [vmem:[%s3 + $0xb0] sm:$0xff]
      %v3292 = vld [vmem:[%s3 + $0xb8] sm:$0xff]
      %v3293 = vld [vmem:[%s3 + $0xc0] sm:$0xff]
      %v3294 = vld [vmem:[%s3 + $0xc8] sm:$0xff]
      %v3295 = vld [vmem:[%s3 + $0xd0] sm:$0xff]
      %v3296 = vld [vmem:[%s3 + $0xd8] sm:$0xff]
      %v3297 = vld [vmem:[%s3 + $0xe0] sm:$0xff]
      %v3298 = vld [vmem:[%s3 + $0xe8] sm:$0xff]
      %v3299 = vld [vmem:[%s3 + $0xf0] sm:$0xff]
      %v3300 = vld [vmem:[%s3 + $0xf8] sm:$0xff]
      %v3301 = vld [vmem:[#allocation2 + $0xb8] sm:$0xff]
      %v3302 = vld [vmem:[#allocation2 + $0xc0] sm:$0xff]
      %s3303 = scalar_lea.vmem %s3, 256
      %v3304 = vld [vmem:[%s3303] sm:$0xff]
      %v3305 = vld [vmem:[%s3303 + $0x8] sm:$0xff]
      %v3306 = vld [vmem:[%s3303 + $0x10] sm:$0xff]
      %v3307 = vld [vmem:[%s3303 + $0x18] sm:$0xff]
      %v3308 = vld [vmem:[%s3303 + $0x20] sm:$0xff]
      %v3309 = vld [vmem:[%s3303 + $0x28] sm:$0xff]
      %v3310 = vld [vmem:[%s3303 + $0x30] sm:$0xff]
      %v3311 = vld [vmem:[%s3303 + $0x38] sm:$0xff]
      %v3312 = vld [vmem:[%s3303 + $0x40] sm:$0xff]
      %v3313 = vld [vmem:[%s3303 + $0x48] sm:$0xff]
      %v3314 = vld [vmem:[%s3303 + $0x50] sm:$0xff]
      %v3315 = vld [vmem:[%s3303 + $0x58] sm:$0xff]
      %v3316 = vld [vmem:[%s3303 + $0x60] sm:$0xff]
      %v3317 = vld [vmem:[%s3303 + $0x68] sm:$0xff]
      %v3318 = vld [vmem:[%s3303 + $0x70] sm:$0xff]
      %v3319 = vld [vmem:[%s3303 + $0x78] sm:$0xff]
      %v3320 = vld [vmem:[%s3303 + $0x80] sm:$0xff]
      %v3321 = vld [vmem:[%s3303 + $0x88] sm:$0xff]
      %v3322 = vld [vmem:[%s3303 + $0x90] sm:$0xff]
      %v3323 = vld [vmem:[%s3303 + $0x98] sm:$0xff]
      %v3324 = vld [vmem:[%s3303 + $0xa0] sm:$0xff]
      %v3325 = vld [vmem:[%s3303 + $0xa8] sm:$0xff]
      %v3326 = vld [vmem:[%s3303 + $0xb0] sm:$0xff]
      %v3327 = vld [vmem:[%s3303 + $0xb8] sm:$0xff]
      %v3328 = vld [vmem:[%s3303 + $0xc0] sm:$0xff]
      %v3329 = vld [vmem:[%s3303 + $0xc8] sm:$0xff]
      %v3330 = vld [vmem:[%s3303 + $0xd0] sm:$0xff]
      %v3331 = vld [vmem:[%s3303 + $0xd8] sm:$0xff]
      %v3332 = vld [vmem:[%s3303 + $0xe0] sm:$0xff]
      %v3333 = vld [vmem:[%s3303 + $0xe8] sm:$0xff]
      %v3334 = vld [vmem:[%s3303 + $0xf0] sm:$0xff]
      %v3335 = vld [vmem:[%s3303 + $0xf8] sm:$0xff]
      %v3359 = vunpack.c.l.b16 %v3248
      %v3360 = vunpack.c.h.b16 %v3248
      %v3361 = vunpack.c.l.b16 %v3249
      %v3362 = vunpack.c.h.b16 %v3249
      %v3363 = vunpack.c.l.b16 %v3250
      %v3364 = vunpack.c.h.b16 %v3250
      %v3365 = vunpack.c.l.b16 %v3251
      %v3366 = vunpack.c.h.b16 %v3251
      %v3367 = vunpack.c.l.b16 %v3252
      %v3368 = vunpack.c.h.b16 %v3252
      %v3369 = vunpack.c.l.b16 %v3253
      %v3370 = vunpack.c.h.b16 %v3253
      %v3371 = vunpack.c.l.b16 %v3254
      %v3372 = vunpack.c.h.b16 %v3254
      %v3373 = vunpack.c.l.b16 %v3255
      %v3374 = vunpack.c.h.b16 %v3255
      %v3375 = vunpack.c.l.b16 %v3256
      %v3376 = vunpack.c.h.b16 %v3256
      %v3377 = vunpack.c.l.b16 %v3257
      %v3378 = vunpack.c.h.b16 %v3257
      %v3379 = vunpack.c.l.b16 %v3258
      %v3380 = vunpack.c.h.b16 %v3258
      %v3381 = vunpack.c.l.b16 %v3259
      %v3382 = vunpack.c.h.b16 %v3259
      %v3383 = vunpack.c.l.b16 %v3260
      %v3384 = vunpack.c.h.b16 %v3260
      %v3385 = vunpack.c.l.b16 %v3261
      %v3386 = vunpack.c.h.b16 %v3261
      %v3387 = vunpack.c.l.b16 %v3262
      %v3388 = vunpack.c.h.b16 %v3262
      %v3389 = vunpack.c.l.b16 %v3263
      %v3390 = vunpack.c.h.b16 %v3263
      %v3391 = vunpack.c.l.b16 %v3264
      %v3392 = vunpack.c.h.b16 %v3264
      %v3393 = vunpack.c.l.b16 %v3265
      %v3394 = vunpack.c.h.b16 %v3265
      %v3395 = vunpack.c.l.b16 %v3266
      %v3396 = vunpack.c.h.b16 %v3266
      %v3397 = vunpack.c.l.b16 %v3267
      %v3398 = vunpack.c.h.b16 %v3267
      %v3399 = vunpack.c.l.b16 %v3268
      %v3400 = vunpack.c.h.b16 %v3268
      %v3401 = vunpack.c.l.b16 %v3301
      %v3402 = vunpack.c.h.b16 %v3301
      %v3403 = vunpack.c.l.b16 %v3302
      %v3404 = vunpack.c.h.b16 %v3302
      %v3405 = vpack.c.b16 %v3361, %v3359
      %v3406 = vpack.c.b16 %v3362, %v3360
      %v3407 = vpack.c.b16 %v3365, %v3363
      %v3408 = vpack.c.b16 %v3366, %v3364
      %v3409 = vpack.c.b16 %v3369, %v3367
      %v3410 = vpack.c.b16 %v3370, %v3368
      %v3411 = vpack.c.b16 %v3373, %v3371
      %v3412 = vpack.c.b16 %v3374, %v3372
      %v3413 = vpack.c.b16 %v3377, %v3375
      %v3414 = vpack.c.b16 %v3378, %v3376
      %v3415 = vpack.c.b16 %v3381, %v3379
      %v3416 = vpack.c.b16 %v3382, %v3380
      %v3417 = vpack.c.b16 %v3385, %v3383
      %v3418 = vpack.c.b16 %v3386, %v3384
      %v3419 = vpack.c.b16 %v3389, %v3387
      %v3420 = vpack.c.b16 %v3390, %v3388
      %v3421 = vpack.c.b16 %v3393, %v3391
      %v3422 = vpack.c.b16 %v3394, %v3392
      %v3423 = vpack.c.b16 %v3397, %v3395
      %v3424 = vpack.c.b16 %v3398, %v3396
      %v3425 = vpack.c.b16 %v3401, %v3399
      %v3426 = vpack.c.b16 %v3402, %v3400
      %v3427 = vpack.c.b16 %v3403, %v3403
      %v3428 = vpack.c.b16 %v3404, %v3404
      %v3485 = vunpack.c.l.b16 %v3304
      %v3486 = vunpack.c.h.b16 %v3304
      %v3487 = vunpack.c.l.b16 %v3305
      %v3488 = vunpack.c.h.b16 %v3305
      %v3489 = vunpack.c.l.b16 %v3306
      %v3490 = vunpack.c.h.b16 %v3306
      %v3491 = vunpack.c.l.b16 %v3307
      %v3492 = vunpack.c.h.b16 %v3307
      %v3493 = vunpack.c.l.b16 %v3308
      %v3494 = vunpack.c.h.b16 %v3308
      %v3495 = vunpack.c.l.b16 %v3309
      %v3496 = vunpack.c.h.b16 %v3309
      %v3497 = vunpack.c.l.b16 %v3310
      %v3498 = vunpack.c.h.b16 %v3310
      %v3499 = vunpack.c.l.b16 %v3311
      %v3500 = vunpack.c.h.b16 %v3311
      %v3501 = vunpack.c.l.b16 %v3312
      %v3502 = vunpack.c.h.b16 %v3312
      %v3503 = vunpack.c.l.b16 %v3313
      %v3504 = vunpack.c.h.b16 %v3313
      %v3505 = vunpack.c.l.b16 %v3314
      %v3506 = vunpack.c.h.b16 %v3314
      %v3507 = vunpack.c.l.b16 %v3315
      %v3508 = vunpack.c.h.b16 %v3315
      %v3509 = vunpack.c.l.b16 %v3316
      %v3510 = vunpack.c.h.b16 %v3316
      %v3511 = vunpack.c.l.b16 %v3317
      %v3512 = vunpack.c.h.b16 %v3317
      %v3513 = vunpack.c.l.b16 %v3318
      %v3514 = vunpack.c.h.b16 %v3318
      %v3515 = vunpack.c.l.b16 %v3319
      %v3516 = vunpack.c.h.b16 %v3319
      %v3517 = vunpack.c.l.b16 %v3320
      %v3518 = vunpack.c.h.b16 %v3320
      %v3519 = vunpack.c.l.b16 %v3321
      %v3520 = vunpack.c.h.b16 %v3321
      %v3521 = vunpack.c.l.b16 %v3322
      %v3522 = vunpack.c.h.b16 %v3322
      %v3523 = vunpack.c.l.b16 %v3323
      %v3524 = vunpack.c.h.b16 %v3323
      %v3525 = vunpack.c.l.b16 %v3324
      %v3526 = vunpack.c.h.b16 %v3324
      %v3527 = vunpack.c.l.b16 %v3325
      %v3528 = vunpack.c.h.b16 %v3325
      %v3529 = vunpack.c.l.b16 %v3326
      %v3530 = vunpack.c.h.b16 %v3326
      %v3531 = vunpack.c.l.b16 %v3327
      %v3532 = vunpack.c.h.b16 %v3327
      %v3533 = vunpack.c.l.b16 %v3328
      %v3534 = vunpack.c.h.b16 %v3328
      %v3535 = vunpack.c.l.b16 %v3329
      %v3536 = vunpack.c.h.b16 %v3329
      %v3537 = vunpack.c.l.b16 %v3330
      %v3538 = vunpack.c.h.b16 %v3330
      %v3539 = vunpack.c.l.b16 %v3331
      %v3540 = vunpack.c.h.b16 %v3331
      %v3541 = vunpack.c.l.b16 %v3332
      %v3542 = vunpack.c.h.b16 %v3332
      %v3543 = vunpack.c.l.b16 %v3333
      %v3544 = vunpack.c.h.b16 %v3333
      %v3545 = vunpack.c.l.b16 %v3334
      %v3546 = vunpack.c.h.b16 %v3334
      %v3547 = vunpack.c.l.b16 %v3335
      %v3548 = vunpack.c.h.b16 %v3335
      %v3549 = vpack.c.b16 %v3487, %v3485
      %v3550 = vpack.c.b16 %v3488, %v3486
      %v3551 = vpack.c.b16 %v3491, %v3489
      %v3552 = vpack.c.b16 %v3492, %v3490
      %v3553 = vpack.c.b16 %v3495, %v3493
      %v3554 = vpack.c.b16 %v3496, %v3494
      %v3555 = vpack.c.b16 %v3499, %v3497
      %v3556 = vpack.c.b16 %v3500, %v3498
      %v3557 = vpack.c.b16 %v3503, %v3501
      %v3558 = vpack.c.b16 %v3504, %v3502
      %v3559 = vpack.c.b16 %v3507, %v3505
      %v3560 = vpack.c.b16 %v3508, %v3506
      %v3561 = vpack.c.b16 %v3511, %v3509
      %v3562 = vpack.c.b16 %v3512, %v3510
      %v3563 = vpack.c.b16 %v3515, %v3513
      %v3564 = vpack.c.b16 %v3516, %v3514
      %v3565 = vpack.c.b16 %v3519, %v3517
      %v3566 = vpack.c.b16 %v3520, %v3518
      %v3567 = vpack.c.b16 %v3523, %v3521
      %v3568 = vpack.c.b16 %v3524, %v3522
      %v3569 = vpack.c.b16 %v3527, %v3525
      %v3570 = vpack.c.b16 %v3528, %v3526
      %v3571 = vpack.c.b16 %v3531, %v3529
      %v3572 = vpack.c.b16 %v3532, %v3530
      %v3573 = vpack.c.b16 %v3535, %v3533
      %v3574 = vpack.c.b16 %v3536, %v3534
      %v3575 = vpack.c.b16 %v3539, %v3537
      %v3576 = vpack.c.b16 %v3540, %v3538
      %v3577 = vpack.c.b16 %v3543, %v3541
      %v3578 = vpack.c.b16 %v3544, %v3542
      %v3579 = vpack.c.b16 %v3547, %v3545
      %v3580 = vpack.c.b16 %v3548, %v3546
      %3613 = vmatprep.subr.bf16.mxu0 %v3550
      %3614 = vmatpush1.bf16.msra.mxu0 %v3549
      %3615 = vmatprep.subr.bf16.mxu0 %v3552
      %3616 = vmatpush1.bf16.msra.mxu0 %v3551
      %3617 = vmatprep.subr.bf16.mxu0 %v3554
      %3618 = vmatpush1.bf16.msra.mxu0 %v3553
      %3619 = vmatprep.subr.bf16.mxu0 %v3556
      %3620 = vmatpush1.bf16.msra.mxu0 %v3555
      %3621 = vmatprep.subr.bf16.mxu0 %v3558
      %3622 = vmatpush1.bf16.msra.mxu0 %v3557
      %3623 = vmatprep.subr.bf16.mxu0 %v3560
      %3624 = vmatpush1.bf16.msra.mxu0 %v3559
      %3625 = vmatprep.subr.bf16.mxu0 %v3562
      %3626 = vmatpush1.bf16.msra.mxu0 %v3561
      %3627 = vmatprep.subr.bf16.mxu0 %v3564
      %3628 = vmatpush1.bf16.msra.mxu0 %v3563
      %3629 = vmatprep.subr.bf16.mxu0 %v3566
      %3630 = vmatpush1.bf16.msra.mxu0 %v3565
      %3631 = vmatprep.subr.bf16.mxu0 %v3568
      %3632 = vmatpush1.bf16.msra.mxu0 %v3567
      %3633 = vmatprep.subr.bf16.mxu0 %v3570
      %3634 = vmatpush1.bf16.msra.mxu0 %v3569
      %3635 = vmatprep.subr.bf16.mxu0 %v3572
      %3636 = vmatpush1.bf16.msra.mxu0 %v3571
      %3637 = vmatprep.subr.bf16.mxu0 %v3574
      %3638 = vmatpush1.bf16.msra.mxu0 %v3573
      %3639 = vmatprep.subr.bf16.mxu0 %v3576
      %3640 = vmatpush1.bf16.msra.mxu0 %v3575
      %3641 = vmatprep.subr.bf16.mxu0 %v3578
      %3642 = vmatpush1.bf16.msra.mxu0 %v3577
      %3643 = vmatprep.subr.bf16.mxu0 %v3580
      %3644 = vmatpush1.bf16.msra.mxu0 %v3579
      %3645 = vmatprep.mubr.bf16.mxu0 %v3406
      %3646 = vmatmul.mubr.bf16.gmra.mrb[0].mxu0 %v3405
      %v3647 = vpop.f32.mrb[0].mxu0
      %v3648 = vadd.f32 0.0, %v3647
      %v3649 = vpop.f32.mrb[0].mxu0
      %v3650 = vadd.f32 0.0, %v3649
      %v3651 = vpop.f32.mrb[0].mxu0
      %v3652 = vadd.f32 0.0, %v3651
      %v3653 = vpop.f32.mrb[0].mxu0
      %v3654 = vadd.f32 0.0, %v3653
      %3655 = vmatprep.mubr.bf16.mxu0 %v3408
      %3656 = vmatmul.mubr.bf16.gmra.mrb[0].mxu0 %v3407
      %v3657 = vpop.f32.mrb[0].mxu0
      %v3658 = vadd.f32 0.0, %v3657
      %v3659 = vpop.f32.mrb[0].mxu0
      %v3660 = vadd.f32 0.0, %v3659
      %v3661 = vpop.f32.mrb[0].mxu0
      %v3662 = vadd.f32 0.0, %v3661
      %v3663 = vpop.f32.mrb[0].mxu0
      %v3664 = vadd.f32 0.0, %v3663
      %3665 = vmatprep.mubr.bf16.mxu0 %v3410
      %3666 = vmatmul.mubr.bf16.gmra.mrb[0].mxu0 %v3409
      %v3667 = vpop.f32.mrb[0].mxu0
      %v3668 = vadd.f32 0.0, %v3667
      %v3669 = vpop.f32.mrb[0].mxu0
      %v3670 = vadd.f32 0.0, %v3669
      %v3671 = vpop.f32.mrb[0].mxu0
      %v3672 = vadd.f32 0.0, %v3671
      %v3673 = vpop.f32.mrb[0].mxu0
      %v3674 = vadd.f32 0.0, %v3673
      %3675 = vmatprep.mubr.bf16.mxu0 %v3412
      %3676 = vmatmul.mubr.bf16.gmra.mrb[0].mxu0 %v3411
      %v3677 = vpop.f32.mrb[0].mxu0
      %v3678 = vadd.f32 0.0, %v3677
      %v3679 = vpop.f32.mrb[0].mxu0
      %v3680 = vadd.f32 0.0, %v3679
      %v3681 = vpop.f32.mrb[0].mxu0
      %v3682 = vadd.f32 0.0, %v3681
      %v3683 = vpop.f32.mrb[0].mxu0
      %v3684 = vadd.f32 0.0, %v3683
      %3685 = vmatprep.mubr.bf16.mxu0 %v3414
      %3686 = vmatmul.mubr.bf16.gmra.mrb[0].mxu0 %v3413
      %v3687 = vpop.f32.mrb[0].mxu0
      %v3688 = vadd.f32 0.0, %v3687
      %v3689 = vpop.f32.mrb[0].mxu0
      %v3690 = vadd.f32 0.0, %v3689
      %v3691 = vpop.f32.mrb[0].mxu0
      %v3692 = vadd.f32 0.0, %v3691
      %v3693 = vpop.f32.mrb[0].mxu0
      %v3694 = vadd.f32 0.0, %v3693
      %3695 = vmatprep.mubr.bf16.mxu0 %v3416
      %3696 = vmatmul.mubr.bf16.gmra.mrb[0].mxu0 %v3415
      %v3697 = vpop.f32.mrb[0].mxu0
      %v3698 = vadd.f32 0.0, %v3697
      %v3699 = vpop.f32.mrb[0].mxu0
      %v3700 = vadd.f32 0.0, %v3699
      %v3701 = vpop.f32.mrb[0].mxu0
      %v3702 = vadd.f32 0.0, %v3701
      %v3703 = vpop.f32.mrb[0].mxu0
      %v3704 = vadd.f32 0.0, %v3703
      %3705 = vmatprep.mubr.bf16.mxu0 %v3418
      %3706 = vmatmul.mubr.bf16.gmra.mrb[0].mxu0 %v3417
      %v3707 = vpop.f32.mrb[0].mxu0
      %v3708 = vadd.f32 0.0, %v3707
      %v3709 = vpop.f32.mrb[0].mxu0
      %v3710 = vadd.f32 0.0, %v3709
      %v3711 = vpop.f32.mrb[0].mxu0
      %v3712 = vadd.f32 0.0, %v3711
      %v3713 = vpop.f32.mrb[0].mxu0
      %v3714 = vadd.f32 0.0, %v3713
      %3715 = vmatprep.mubr.bf16.mxu0 %v3420
      %3716 = vmatmul.mubr.bf16.gmra.mrb[0].mxu0 %v3419
      %v3717 = vpop.f32.mrb[0].mxu0
      %v3718 = vadd.f32 0.0, %v3717
      %v3719 = vpop.f32.mrb[0].mxu0
      %v3720 = vadd.f32 0.0, %v3719
      %v3721 = vpop.f32.mrb[0].mxu0
      %v3722 = vadd.f32 0.0, %v3721
      %v3723 = vpop.f32.mrb[0].mxu0
      %v3724 = vadd.f32 0.0, %v3723
      %3725 = vmatprep.mubr.bf16.mxu0 %v3422
      %3726 = vmatmul.mubr.bf16.gmra.mrb[0].mxu0 %v3421
      %v3727 = vpop.f32.mrb[0].mxu0
      %v3728 = vadd.f32 0.0, %v3727
      %v3729 = vpop.f32.mrb[0].mxu0
      %v3730 = vadd.f32 0.0, %v3729
      %v3731 = vpop.f32.mrb[0].mxu0
      %v3732 = vadd.f32 0.0, %v3731
      %v3733 = vpop.f32.mrb[0].mxu0
      %v3734 = vadd.f32 0.0, %v3733
      %3735 = vmatprep.mubr.bf16.mxu0 %v3424
      %3736 = vmatmul.mubr.bf16.gmra.mrb[0].mxu0 %v3423
      %v3737 = vpop.f32.mrb[0].mxu0
      %v3738 = vadd.f32 0.0, %v3737
      %v3739 = vpop.f32.mrb[0].mxu0
      %v3740 = vadd.f32 0.0, %v3739
      %v3741 = vpop.f32.mrb[0].mxu0
      %v3742 = vadd.f32 0.0, %v3741
      %v3743 = vpop.f32.mrb[0].mxu0
      %v3744 = vadd.f32 0.0, %v3743
      %3745 = vmatprep.mubr.bf16.mxu0 %v3426
      %3746 = vmatmul.mubr.bf16.gmra.mrb[0].mxu0 %v3425
      %v3747 = vpop.f32.mrb[0].mxu0
      %v3748 = vadd.f32 0.0, %v3747
      %v3749 = vpop.f32.mrb[0].mxu0
      %v3750 = vadd.f32 0.0, %v3749
      %v3751 = vpop.f32.mrb[0].mxu0
      %v3752 = vadd.f32 0.0, %v3751
      %v3753 = vpop.f32.mrb[0].mxu0
      %v3754 = vadd.f32 0.0, %v3753
      %3755 = vmatprep.mubr.bf16.mxu0 %v3428
      %3756 = vmatmul.mubr.bf16.gmra.mrb[0].mxu0 %v3427
      %v3757 = vpop.f32.mrb[0].mxu0
      %v3758 = vadd.f32 0.0, %v3757
      %v3759 = vpop.f32.mrb[0].mxu0
      %v3760 = vadd.f32 0.0, %v3759
      %v3761 = vpop.f32.mrb[0].mxu0
      %v3762 = vpop.f32.mrb[0].mxu0
      %3763 = vdwg.mxu0
      %v3766 = vunpack.c.l.b16 %v3246
      %v3767 = vunpack.c.h.b16 %v3246
      %v3768 = vunpack.c.l.b16 %v3247
      %v3769 = vunpack.c.h.b16 %v3247
      %v3770 = vpack.c.b16 %v3768, %v3766
      %v3771 = vpack.c.b16 %v3769, %v3767
      %v3772 = vpack.c.b16 %v3399, %v3399
      %v3773 = vpack.c.b16 %v3400, %v3400
      %v3810 = vunpack.c.l.b16 %v3269
      %v3811 = vunpack.c.h.b16 %v3269
      %v3812 = vunpack.c.l.b16 %v3270
      %v3813 = vunpack.c.h.b16 %v3270
      %v3814 = vunpack.c.l.b16 %v3271
      %v3815 = vunpack.c.h.b16 %v3271
      %v3816 = vunpack.c.l.b16 %v3272
      %v3817 = vunpack.c.h.b16 %v3272
      %v3818 = vunpack.c.l.b16 %v3273
      %v3819 = vunpack.c.h.b16 %v3273
      %v3820 = vunpack.c.l.b16 %v3274
      %v3821 = vunpack.c.h.b16 %v3274
      %v3822 = vunpack.c.l.b16 %v3275
      %v3823 = vunpack.c.h.b16 %v3275
      %v3824 = vunpack.c.l.b16 %v3276
      %v3825 = vunpack.c.h.b16 %v3276
      %v3826 = vunpack.c.l.b16 %v3277
      %v3827 = vunpack.c.h.b16 %v3277
      %v3828 = vunpack.c.l.b16 %v3278
      %v3829 = vunpack.c.h.b16 %v3278
      %v3830 = vunpack.c.l.b16 %v3279
      %v3831 = vunpack.c.h.b16 %v3279
      %v3832 = vunpack.c.l.b16 %v3280
      %v3833 = vunpack.c.h.b16 %v3280
      %v3834 = vunpack.c.l.b16 %v3281
      %v3835 = vunpack.c.h.b16 %v3281
      %v3836 = vunpack.c.l.b16 %v3282
      %v3837 = vunpack.c.h.b16 %v3282
      %v3838 = vunpack.c.l.b16 %v3283
      %v3839 = vunpack.c.h.b16 %v3283
      %v3840 = vunpack.c.l.b16 %v3284
      %v3841 = vunpack.c.h.b16 %v3284
      %v3842 = vunpack.c.l.b16 %v3285
      %v3843 = vunpack.c.h.b16 %v3285
      %v3844 = vunpack.c.l.b16 %v3286
      %v3845 = vunpack.c.h.b16 %v3286
      %v3846 = vunpack.c.l.b16 %v3287
      %v3847 = vunpack.c.h.b16 %v3287
      %v3848 = vunpack.c.l.b16 %v3288
      %v3849 = vunpack.c.h.b16 %v3288
      %v3850 = vunpack.c.l.b16 %v3289
      %v3851 = vunpack.c.h.b16 %v3289
      %v3852 = vunpack.c.l.b16 %v3290
      %v3853 = vunpack.c.h.b16 %v3290
      %v3854 = vunpack.c.l.b16 %v3291
      %v3855 = vunpack.c.h.b16 %v3291
      %v3856 = vunpack.c.l.b16 %v3292
      %v3857 = vunpack.c.h.b16 %v3292
      %v3858 = vunpack.c.l.b16 %v3293
      %v3859 = vunpack.c.h.b16 %v3293
      %v3860 = vunpack.c.l.b16 %v3294
      %v3861 = vunpack.c.h.b16 %v3294
      %v3862 = vunpack.c.l.b16 %v3295
      %v3863 = vunpack.c.h.b16 %v3295
      %v3864 = vunpack.c.l.b16 %v3296
      %v3865 = vunpack.c.h.b16 %v3296
      %v3866 = vunpack.c.l.b16 %v3297
      %v3867 = vunpack.c.h.b16 %v3297
      %v3868 = vunpack.c.l.b16 %v3298
      %v3869 = vunpack.c.h.b16 %v3298
      %v3870 = vunpack.c.l.b16 %v3299
      %v3871 = vunpack.c.h.b16 %v3299
      %v3872 = vunpack.c.l.b16 %v3300
      %v3873 = vunpack.c.h.b16 %v3300
      %v3874 = vpack.c.b16 %v3812, %v3810
      %v3875 = vpack.c.b16 %v3813, %v3811
      %v3876 = vpack.c.b16 %v3816, %v3814
      %v3877 = vpack.c.b16 %v3817, %v3815
      %v3878 = vpack.c.b16 %v3820, %v3818
      %v3879 = vpack.c.b16 %v3821, %v3819
      %v3880 = vpack.c.b16 %v3824, %v3822
      %v3881 = vpack.c.b16 %v3825, %v3823
      %v3882 = vpack.c.b16 %v3828, %v3826
      %v3883 = vpack.c.b16 %v3829, %v3827
      %v3884 = vpack.c.b16 %v3832, %v3830
      %v3885 = vpack.c.b16 %v3833, %v3831
      %v3886 = vpack.c.b16 %v3836, %v3834
      %v3887 = vpack.c.b16 %v3837, %v3835
      %v3888 = vpack.c.b16 %v3840, %v3838
      %v3889 = vpack.c.b16 %v3841, %v3839
      %v3890 = vpack.c.b16 %v3844, %v3842
      %v3891 = vpack.c.b16 %v3845, %v3843
      %v3892 = vpack.c.b16 %v3848, %v3846
      %v3893 = vpack.c.b16 %v3849, %v3847
      %v3894 = vpack.c.b16 %v3852, %v3850
      %v3895 = vpack.c.b16 %v3853, %v3851
      %v3896 = vpack.c.b16 %v3856, %v3854
      %v3897 = vpack.c.b16 %v3857, %v3855
      %v3898 = vpack.c.b16 %v3860, %v3858
      %v3899 = vpack.c.b16 %v3861, %v3859
      %v3900 = vpack.c.b16 %v3864, %v3862
      %v3901 = vpack.c.b16 %v3865, %v3863
      %v3902 = vpack.c.b16 %v3868, %v3866
      %v3903 = vpack.c.b16 %v3869, %v3867
      %v3904 = vpack.c.b16 %v3872, %v3870
      %v3905 = vpack.c.b16 %v3873, %v3871
      %3938 = vmatprep.subr.bf16.mxu0 %v3875
      %3939 = vmatpush1.bf16.msra.mxu0 %v3874
      %3940 = vmatprep.subr.bf16.mxu0 %v3877
      %3941 = vmatpush1.bf16.msra.mxu0 %v3876
      %3942 = vmatprep.subr.bf16.mxu0 %v3879
      %3943 = vmatpush1.bf16.msra.mxu0 %v3878
      %3944 = vmatprep.subr.bf16.mxu0 %v3881
      %3945 = vmatpush1.bf16.msra.mxu0 %v3880
      %3946 = vmatprep.subr.bf16.mxu0 %v3883
      %3947 = vmatpush1.bf16.msra.mxu0 %v3882
      %3948 = vmatprep.subr.bf16.mxu0 %v3885
      %3949 = vmatpush1.bf16.msra.mxu0 %v3884
      %3950 = vmatprep.subr.bf16.mxu0 %v3887
      %3951 = vmatpush1.bf16.msra.mxu0 %v3886
      %3952 = vmatprep.subr.bf16.mxu0 %v3889
      %3953 = vmatpush1.bf16.msra.mxu0 %v3888
      %3954 = vmatprep.subr.bf16.mxu0 %v3891
      %3955 = vmatpush1.bf16.msra.mxu0 %v3890
      %3956 = vmatprep.subr.bf16.mxu0 %v3893
      %3957 = vmatpush1.bf16.msra.mxu0 %v3892
      %3958 = vmatprep.subr.bf16.mxu0 %v3895
      %3959 = vmatpush1.bf16.msra.mxu0 %v3894
      %3960 = vmatprep.subr.bf16.mxu0 %v3897
      %3961 = vmatpush1.bf16.msra.mxu0 %v3896
      %3962 = vmatprep.subr.bf16.mxu0 %v3899
      %3963 = vmatpush1.bf16.msra.mxu0 %v3898
      %3964 = vmatprep.subr.bf16.mxu0 %v3901
      %3965 = vmatpush1.bf16.msra.mxu0 %v3900
      %3966 = vmatprep.subr.bf16.mxu0 %v3903
      %3967 = vmatpush1.bf16.msra.mxu0 %v3902
      %3968 = vmatprep.subr.bf16.mxu0 %v3905
      %3969 = vmatpush1.bf16.msra.mxu0 %v3904
      %3970 = vmatprep.mubr.bf16.mxu0 %v3771
      %3971 = vmatmul.mubr.bf16.gmra.mrb[0].mxu0 %v3770
      %v3972 = vpop.f32.mrb[0].mxu0
      %v3973 = vadd.f32 %v3648, %v3972
      %v3974 = vpop.f32.mrb[0].mxu0
      %v3975 = vadd.f32 %v3650, %v3974
      %v3976 = vpop.f32.mrb[0].mxu0
      %v3977 = vadd.f32 %v3652, %v3976
      %v3978 = vpop.f32.mrb[0].mxu0
      %v3979 = vadd.f32 %v3654, %v3978
      %3980 = vmatprep.mubr.bf16.mxu0 %v3406
      %3981 = vmatmul.mubr.bf16.gmra.mrb[0].mxu0 %v3405
      %v3982 = vpop.f32.mrb[0].mxu0
      %v3983 = vadd.f32 %v3658, %v3982
      %v3984 = vpop.f32.mrb[0].mxu0
      %v3985 = vadd.f32 %v3660, %v3984
      %v3986 = vpop.f32.mrb[0].mxu0
      %v3987 = vadd.f32 %v3662, %v3986
      %v3988 = vpop.f32.mrb[0].mxu0
      %v3989 = vadd.f32 %v3664, %v3988
      %3990 = vmatprep.mubr.bf16.mxu0 %v3408
      %3991 = vmatmul.mubr.bf16.gmra.mrb[0].mxu0 %v3407
      %v3992 = vpop.f32.mrb[0].mxu0
      %v3993 = vadd.f32 %v3668, %v3992
      %v3994 = vpop.f32.mrb[0].mxu0
      %v3995 = vadd.f32 %v3670, %v3994
      %v3996 = vpop.f32.mrb[0].mxu0
      %v3997 = vadd.f32 %v3672, %v3996
      %v3998 = vpop.f32.mrb[0].mxu0
      %v3999 = vadd.f32 %v3674, %v3998
      %4000 = vmatprep.mubr.bf16.mxu0 %v3410
      %4001 = vmatmul.mubr.bf16.gmra.mrb[0].mxu0 %v3409
      %v4002 = vpop.f32.mrb[0].mxu0
      %v4003 = vadd.f32 %v3678, %v4002
      %v4004 = vpop.f32.mrb[0].mxu0
      %v4005 = vadd.f32 %v3680, %v4004
      %v4006 = vpop.f32.mrb[0].mxu0
      %v4007 = vadd.f32 %v3682, %v4006
      %v4008 = vpop.f32.mrb[0].mxu0
      %v4009 = vadd.f32 %v3684, %v4008
      %4010 = vmatprep.mubr.bf16.mxu0 %v3412
      %4011 = vmatmul.mubr.bf16.gmra.mrb[0].mxu0 %v3411
      %v4012 = vpop.f32.mrb[0].mxu0
      %v4013 = vadd.f32 %v3688, %v4012
      %v4014 = vpop.f32.mrb[0].mxu0
      %v4015 = vadd.f32 %v3690, %v4014
      %v4016 = vpop.f32.mrb[0].mxu0
      %v4017 = vadd.f32 %v3692, %v4016
      %v4018 = vpop.f32.mrb[0].mxu0
      %v4019 = vadd.f32 %v3694, %v4018
      %4020 = vmatprep.mubr.bf16.mxu0 %v3414
      %4021 = vmatmul.mubr.bf16.gmra.mrb[0].mxu0 %v3413
      %v4022 = vpop.f32.mrb[0].mxu0
      %v4023 = vadd.f32 %v3698, %v4022
      %v4024 = vpop.f32.mrb[0].mxu0
      %v4025 = vadd.f32 %v3700, %v4024
      %v4026 = vpop.f32.mrb[0].mxu0
      %v4027 = vadd.f32 %v3702, %v4026
      %v4028 = vpop.f32.mrb[0].mxu0
      %v4029 = vadd.f32 %v3704, %v4028
      %4030 = vmatprep.mubr.bf16.mxu0 %v3416
      %4031 = vmatmul.mubr.bf16.gmra.mrb[0].mxu0 %v3415
      %v4032 = vpop.f32.mrb[0].mxu0
      %v4033 = vadd.f32 %v3708, %v4032
      %v4034 = vpop.f32.mrb[0].mxu0
      %v4035 = vadd.f32 %v3710, %v4034
      %v4036 = vpop.f32.mrb[0].mxu0
      %v4037 = vadd.f32 %v3712, %v4036
      %v4038 = vpop.f32.mrb[0].mxu0
      %v4039 = vadd.f32 %v3714, %v4038
      %4040 = vmatprep.mubr.bf16.mxu0 %v3418
      %4041 = vmatmul.mubr.bf16.gmra.mrb[0].mxu0 %v3417
      %v4042 = vpop.f32.mrb[0].mxu0
      %v4043 = vadd.f32 %v3718, %v4042
      %v4044 = vpop.f32.mrb[0].mxu0
      %v4045 = vadd.f32 %v3720, %v4044
      %v4046 = vpop.f32.mrb[0].mxu0
      %v4047 = vadd.f32 %v3722, %v4046
      %v4048 = vpop.f32.mrb[0].mxu0
      %v4049 = vadd.f32 %v3724, %v4048
      %4050 = vmatprep.mubr.bf16.mxu0 %v3420
      %4051 = vmatmul.mubr.bf16.gmra.mrb[0].mxu0 %v3419
      %v4052 = vpop.f32.mrb[0].mxu0
      %v4053 = vadd.f32 %v3728, %v4052
      %v4054 = vpop.f32.mrb[0].mxu0
      %v4055 = vadd.f32 %v3730, %v4054
      %v4056 = vpop.f32.mrb[0].mxu0
      %v4057 = vadd.f32 %v3732, %v4056
      %v4058 = vpop.f32.mrb[0].mxu0
      %v4059 = vadd.f32 %v3734, %v4058
      %4060 = vmatprep.mubr.bf16.mxu0 %v3422
      %4061 = vmatmul.mubr.bf16.gmra.mrb[0].mxu0 %v3421
      %v4062 = vpop.f32.mrb[0].mxu0
      %v4063 = vadd.f32 %v3738, %v4062
      %v4064 = vpop.f32.mrb[0].mxu0
      %v4065 = vadd.f32 %v3740, %v4064
      %v4066 = vpop.f32.mrb[0].mxu0
      %v4067 = vadd.f32 %v3742, %v4066
      %v4068 = vpop.f32.mrb[0].mxu0
      %v4069 = vadd.f32 %v3744, %v4068
      %4070 = vmatprep.mubr.bf16.mxu0 %v3424
      %4071 = vmatmul.mubr.bf16.gmra.mrb[0].mxu0 %v3423
      %v4072 = vpop.f32.mrb[0].mxu0
      %v4073 = vadd.f32 %v3748, %v4072
      %v4074 = vpop.f32.mrb[0].mxu0
      %v4075 = vadd.f32 %v3750, %v4074
      %v4076 = vpop.f32.mrb[0].mxu0
      %v4077 = vadd.f32 %v3752, %v4076
      %v4078 = vpop.f32.mrb[0].mxu0
      %v4079 = vadd.f32 %v3754, %v4078
      %4080 = vmatprep.mubr.bf16.mxu0 %v3773
      %4081 = vmatmul.mubr.bf16.gmra.mrb[0].mxu0 %v3772
      %v4082 = vpop.f32.mrb[0].mxu0
      %v4083 = vadd.f32 %v3758, %v4082
      %v4084 = vpop.f32.mrb[0].mxu0
      %v4085 = vadd.f32 %v3760, %v4084
      %v4086 = vpop.f32.mrb[0].mxu0
      %v4087 = vpop.f32.mrb[0].mxu0
      %4088 = vdwg.mxu0
      %v4089 = vld [vmem:[#allocation2 + $0x20] sm:$0xff]
      %v4090 = vld [vmem:[#allocation2 + $0x28] sm:$0xff]
      %v4091 = vld [vmem:[#allocation2 + $0x30] sm:$0xff]
      %v4092 = vld [vmem:[#allocation2 + $0x38] sm:$0xff]
      %v4093 = vld [vmem:[#allocation2 + $0x40] sm:$0xff]
      %v4094 = vld [vmem:[#allocation2 + $0x48] sm:$0xff]
      %v4095 = vld [vmem:[#allocation2 + $0x50] sm:$0xff]
      %v4096 = vld [vmem:[#allocation2 + $0x58] sm:$0xff]
      %v4097 = vld [vmem:[#allocation2 + $0x60] sm:$0xff]
      %v4098 = vld [vmem:[#allocation2 + $0x68] sm:$0xff]
      %v4099 = vld [vmem:[#allocation2 + $0x70] sm:$0xff]
      %v4100 = vld [vmem:[#allocation2 + $0x78] sm:$0xff]
      %v4101 = vld [vmem:[#allocation2 + $0x80] sm:$0xff]
      %v4102 = vld [vmem:[#allocation2 + $0x88] sm:$0xff]
      %v4103 = vld [vmem:[#allocation2 + $0x90] sm:$0xff]
      %v4104 = vld [vmem:[#allocation2 + $0x98] sm:$0xff]
      %v4105 = vld [vmem:[#allocation2 + $0xa0] sm:$0xff]
      %v4106 = vld [vmem:[#allocation2 + $0xa8] sm:$0xff]
      %v4107 = vld [vmem:[#allocation2 + $0xb0] sm:$0xff]
      %v4108 = vld [vmem:[#allocation2 + $0xb8] sm:$0xff]
      %v4109 = vld [vmem:[#allocation2 + $0xc0] sm:$0xff]
      %v4110 = vld [vmem:[#allocation2 + $0xc8] sm:$0xff]
      %v4111 = vld [vmem:[#allocation2 + $0xd0] sm:$0xff]
      %s4112 = scalar_lea.vmem %s3, 512
      %v4113 = vld [vmem:[%s4112] sm:$0xff]
      %v4114 = vld [vmem:[%s4112 + $0x8] sm:$0xff]
      %v4115 = vld [vmem:[%s4112 + $0x10] sm:$0xff]
      %v4116 = vld [vmem:[%s4112 + $0x18] sm:$0xff]
      %v4117 = vld [vmem:[%s4112 + $0x20] sm:$0xff]
      %v4118 = vld [vmem:[%s4112 + $0x28] sm:$0xff]
      %v4119 = vld [vmem:[%s4112 + $0x30] sm:$0xff]
      %v4120 = vld [vmem:[%s4112 + $0x38] sm:$0xff]
      %v4121 = vld [vmem:[%s4112 + $0x40] sm:$0xff]
      %v4122 = vld [vmem:[%s4112 + $0x48] sm:$0xff]
      %v4123 = vld [vmem:[%s4112 + $0x50] sm:$0xff]
      %v4124 = vld [vmem:[%s4112 + $0x58] sm:$0xff]
      %v4125 = vld [vmem:[%s4112 + $0x60] sm:$0xff]
      %v4126 = vld [vmem:[%s4112 + $0x68] sm:$0xff]
      %v4127 = vld [vmem:[%s4112 + $0x70] sm:$0xff]
      %v4128 = vld [vmem:[%s4112 + $0x78] sm:$0xff]
      %v4129 = vld [vmem:[%s4112 + $0x80] sm:$0xff]
      %v4130 = vld [vmem:[%s4112 + $0x88] sm:$0xff]
      %v4131 = vld [vmem:[%s4112 + $0x90] sm:$0xff]
      %v4132 = vld [vmem:[%s4112 + $0x98] sm:$0xff]
      %v4133 = vld [vmem:[%s4112 + $0xa0] sm:$0xff]
      %v4134 = vld [vmem:[%s4112 + $0xa8] sm:$0xff]
      %v4135 = vld [vmem:[%s4112 + $0xb0] sm:$0xff]
      %v4136 = vld [vmem:[%s4112 + $0xb8] sm:$0xff]
      %v4137 = vld [vmem:[%s4112 + $0xc0] sm:$0xff]
      %v4138 = vld [vmem:[%s4112 + $0xc8] sm:$0xff]
      %v4139 = vld [vmem:[%s4112 + $0xd0] sm:$0xff]
      %v4140 = vld [vmem:[%s4112 + $0xd8] sm:$0xff]
      %v4141 = vld [vmem:[%s4112 + $0xe0] sm:$0xff]
      %v4142 = vld [vmem:[%s4112 + $0xe8] sm:$0xff]
      %v4143 = vld [vmem:[%s4112 + $0xf0] sm:$0xff]
      %v4144 = vld [vmem:[%s4112 + $0xf8] sm:$0xff]
      %v4168 = vunpack.c.l.b16 %v4089
      %v4169 = vunpack.c.h.b16 %v4089
      %v4170 = vunpack.c.l.b16 %v4090
      %v4171 = vunpack.c.h.b16 %v4090
      %v4172 = vunpack.c.l.b16 %v4091
      %v4173 = vunpack.c.h.b16 %v4091
      %v4174 = vunpack.c.l.b16 %v4092
      %v4175 = vunpack.c.h.b16 %v4092
      %v4176 = vunpack.c.l.b16 %v4093
      %v4177 = vunpack.c.h.b16 %v4093
      %v4178 = vunpack.c.l.b16 %v4094
      %v4179 = vunpack.c.h.b16 %v4094
      %v4180 = vunpack.c.l.b16 %v4095
      %v4181 = vunpack.c.h.b16 %v4095
      %v4182 = vunpack.c.l.b16 %v4096
      %v4183 = vunpack.c.h.b16 %v4096
      %v4184 = vunpack.c.l.b16 %v4097
      %v4185 = vunpack.c.h.b16 %v4097
      %v4186 = vunpack.c.l.b16 %v4098
      %v4187 = vunpack.c.h.b16 %v4098
      %v4188 = vunpack.c.l.b16 %v4099
      %v4189 = vunpack.c.h.b16 %v4099
      %v4190 = vunpack.c.l.b16 %v4100
      %v4191 = vunpack.c.h.b16 %v4100
      %v4192 = vunpack.c.l.b16 %v4101
      %v4193 = vunpack.c.h.b16 %v4101
      %v4194 = vunpack.c.l.b16 %v4102
      %v4195 = vunpack.c.h.b16 %v4102
      %v4196 = vunpack.c.l.b16 %v4103
      %v4197 = vunpack.c.h.b16 %v4103
      %v4198 = vunpack.c.l.b16 %v4104
      %v4199 = vunpack.c.h.b16 %v4104
      %v4200 = vunpack.c.l.b16 %v4105
      %v4201 = vunpack.c.h.b16 %v4105
      %v4202 = vunpack.c.l.b16 %v4106
      %v4203 = vunpack.c.h.b16 %v4106
      %v4204 = vunpack.c.l.b16 %v4107
      %v4205 = vunpack.c.h.b16 %v4107
      %v4206 = vunpack.c.l.b16 %v4108
      %v4207 = vunpack.c.h.b16 %v4108
      %v4208 = vunpack.c.l.b16 %v4109
      %v4209 = vunpack.c.h.b16 %v4109
      %v4210 = vunpack.c.l.b16 %v4110
      %v4211 = vunpack.c.h.b16 %v4110
      %v4212 = vunpack.c.l.b16 %v4111
      %v4213 = vunpack.c.h.b16 %v4111
      %v4214 = vpack.c.b16 %v4170, %v4168
      %v4215 = vpack.c.b16 %v4171, %v4169
      %v4216 = vpack.c.b16 %v4174, %v4172
      %v4217 = vpack.c.b16 %v4175, %v4173
      %v4218 = vpack.c.b16 %v4178, %v4176
      %v4219 = vpack.c.b16 %v4179, %v4177
      %v4220 = vpack.c.b16 %v4182, %v4180
      %v4221 = vpack.c.b16 %v4183, %v4181
      %v4222 = vpack.c.b16 %v4186, %v4184
      %v4223 = vpack.c.b16 %v4187, %v4185
      %v4224 = vpack.c.b16 %v4190, %v4188
      %v4225 = vpack.c.b16 %v4191, %v4189
      %v4226 = vpack.c.b16 %v4194, %v4192
      %v4227 = vpack.c.b16 %v4195, %v4193
      %v4228 = vpack.c.b16 %v4198, %v4196
      %v4229 = vpack.c.b16 %v4199, %v4197
      %v4230 = vpack.c.b16 %v4202, %v4200
      %v4231 = vpack.c.b16 %v4203, %v4201
      %v4232 = vpack.c.b16 %v4206, %v4204
      %v4233 = vpack.c.b16 %v4207, %v4205
      %v4234 = vpack.c.b16 %v4210, %v4208
      %v4235 = vpack.c.b16 %v4211, %v4209
      %v4236 = vpack.c.b16 %v4212, %v4212
      %v4237 = vpack.c.b16 %v4213, %v4213
      %v4294 = vunpack.c.l.b16 %v4113
      %v4295 = vunpack.c.h.b16 %v4113
      %v4296 = vunpack.c.l.b16 %v4114
      %v4297 = vunpack.c.h.b16 %v4114
      %v4298 = vunpack.c.l.b16 %v4115
      %v4299 = vunpack.c.h.b16 %v4115
      %v4300 = vunpack.c.l.b16 %v4116
      %v4301 = vunpack.c.h.b16 %v4116
      %v4302 = vunpack.c.l.b16 %v4117
      %v4303 = vunpack.c.h.b16 %v4117
      %v4304 = vunpack.c.l.b16 %v4118
      %v4305 = vunpack.c.h.b16 %v4118
      %v4306 = vunpack.c.l.b16 %v4119
      %v4307 = vunpack.c.h.b16 %v4119
      %v4308 = vunpack.c.l.b16 %v4120
      %v4309 = vunpack.c.h.b16 %v4120
      %v4310 = vunpack.c.l.b16 %v4121
      %v4311 = vunpack.c.h.b16 %v4121
      %v4312 = vunpack.c.l.b16 %v4122
      %v4313 = vunpack.c.h.b16 %v4122
      %v4314 = vunpack.c.l.b16 %v4123
      %v4315 = vunpack.c.h.b16 %v4123
      %v4316 = vunpack.c.l.b16 %v4124
      %v4317 = vunpack.c.h.b16 %v4124
      %v4318 = vunpack.c.l.b16 %v4125
      %v4319 = vunpack.c.h.b16 %v4125
      %v4320 = vunpack.c.l.b16 %v4126
      %v4321 = vunpack.c.h.b16 %v4126
      %v4322 = vunpack.c.l.b16 %v4127
      %v4323 = vunpack.c.h.b16 %v4127
      %v4324 = vunpack.c.l.b16 %v4128
      %v4325 = vunpack.c.h.b16 %v4128
      %v4326 = vunpack.c.l.b16 %v4129
      %v4327 = vunpack.c.h.b16 %v4129
      %v4328 = vunpack.c.l.b16 %v4130
      %v4329 = vunpack.c.h.b16 %v4130
      %v4330 = vunpack.c.l.b16 %v4131
      %v4331 = vunpack.c.h.b16 %v4131
      %v4332 = vunpack.c.l.b16 %v4132
      %v4333 = vunpack.c.h.b16 %v4132
      %v4334 = vunpack.c.l.b16 %v4133
      %v4335 = vunpack.c.h.b16 %v4133
      %v4336 = vunpack.c.l.b16 %v4134
      %v4337 = vunpack.c.h.b16 %v4134
      %v4338 = vunpack.c.l.b16 %v4135
      %v4339 = vunpack.c.h.b16 %v4135
      %v4340 = vunpack.c.l.b16 %v4136
      %v4341 = vunpack.c.h.b16 %v4136
      %v4342 = vunpack.c.l.b16 %v4137
      %v4343 = vunpack.c.h.b16 %v4137
      %v4344 = vunpack.c.l.b16 %v4138
      %v4345 = vunpack.c.h.b16 %v4138
      %v4346 = vunpack.c.l.b16 %v4139
      %v4347 = vunpack.c.h.b16 %v4139
      %v4348 = vunpack.c.l.b16 %v4140
      %v4349 = vunpack.c.h.b16 %v4140
      %v4350 = vunpack.c.l.b16 %v4141
      %v4351 = vunpack.c.h.b16 %v4141
      %v4352 = vunpack.c.l.b16 %v4142
      %v4353 = vunpack.c.h.b16 %v4142
      %v4354 = vunpack.c.l.b16 %v4143
      %v4355 = vunpack.c.h.b16 %v4143
      %v4356 = vunpack.c.l.b16 %v4144
      %v4357 = vunpack.c.h.b16 %v4144
      %v4358 = vpack.c.b16 %v4296, %v4294
      %v4359 = vpack.c.b16 %v4297, %v4295
      %v4360 = vpack.c.b16 %v4300, %v4298
      %v4361 = vpack.c.b16 %v4301, %v4299
      %v4362 = vpack.c.b16 %v4304, %v4302
      %v4363 = vpack.c.b16 %v4305, %v4303
      %v4364 = vpack.c.b16 %v4308, %v4306
      %v4365 = vpack.c.b16 %v4309, %v4307
      %v4366 = vpack.c.b16 %v4312, %v4310
      %v4367 = vpack.c.b16 %v4313, %v4311
      %v4368 = vpack.c.b16 %v4316, %v4314
      %v4369 = vpack.c.b16 %v4317, %v4315
      %v4370 = vpack.c.b16 %v4320, %v4318
      %v4371 = vpack.c.b16 %v4321, %v4319
      %v4372 = vpack.c.b16 %v4324, %v4322
      %v4373 = vpack.c.b16 %v4325, %v4323
      %v4374 = vpack.c.b16 %v4328, %v4326
      %v4375 = vpack.c.b16 %v4329, %v4327
      %v4376 = vpack.c.b16 %v4332, %v4330
      %v4377 = vpack.c.b16 %v4333, %v4331
      %v4378 = vpack.c.b16 %v4336, %v4334
      %v4379 = vpack.c.b16 %v4337, %v4335
      %v4380 = vpack.c.b16 %v4340, %v4338
      %v4381 = vpack.c.b16 %v4341, %v4339
      %v4382 = vpack.c.b16 %v4344, %v4342
      %v4383 = vpack.c.b16 %v4345, %v4343
      %v4384 = vpack.c.b16 %v4348, %v4346
      %v4385 = vpack.c.b16 %v4349, %v4347
      %v4386 = vpack.c.b16 %v4352, %v4350
      %v4387 = vpack.c.b16 %v4353, %v4351
      %v4388 = vpack.c.b16 %v4356, %v4354
      %v4389 = vpack.c.b16 %v4357, %v4355
      %4422 = vmatprep.subr.bf16.mxu0 %v4359
      %4423 = vmatpush1.bf16.msra.mxu0 %v4358
      %4424 = vmatprep.subr.bf16.mxu0 %v4361
      %4425 = vmatpush1.bf16.msra.mxu0 %v4360
      %4426 = vmatprep.subr.bf16.mxu0 %v4363
      %4427 = vmatpush1.bf16.msra.mxu0 %v4362
      %4428 = vmatprep.subr.bf16.mxu0 %v4365
      %4429 = vmatpush1.bf16.msra.mxu0 %v4364
      %4430 = vmatprep.subr.bf16.mxu0 %v4367
      %4431 = vmatpush1.bf16.msra.mxu0 %v4366
      %4432 = vmatprep.subr.bf16.mxu0 %v4369
      %4433 = vmatpush1.bf16.msra.mxu0 %v4368
      %4434 = vmatprep.subr.bf16.mxu0 %v4371
      %4435 = vmatpush1.bf16.msra.mxu0 %v4370
      %4436 = vmatprep.subr.bf16.mxu0 %v4373
      %4437 = vmatpush1.bf16.msra.mxu0 %v4372
      %4438 = vmatprep.subr.bf16.mxu0 %v4375
      %4439 = vmatpush1.bf16.msra.mxu0 %v4374
      %4440 = vmatprep.subr.bf16.mxu0 %v4377
      %4441 = vmatpush1.bf16.msra.mxu0 %v4376
      %4442 = vmatprep.subr.bf16.mxu0 %v4379
      %4443 = vmatpush1.bf16.msra.mxu0 %v4378
      %4444 = vmatprep.subr.bf16.mxu0 %v4381
      %4445 = vmatpush1.bf16.msra.mxu0 %v4380
      %4446 = vmatprep.subr.bf16.mxu0 %v4383
      %4447 = vmatpush1.bf16.msra.mxu0 %v4382
      %4448 = vmatprep.subr.bf16.mxu0 %v4385
      %4449 = vmatpush1.bf16.msra.mxu0 %v4384
      %4450 = vmatprep.subr.bf16.mxu0 %v4387
      %4451 = vmatpush1.bf16.msra.mxu0 %v4386
      %4452 = vmatprep.subr.bf16.mxu0 %v4389
      %4453 = vmatpush1.bf16.msra.mxu0 %v4388
      %4454 = vmatprep.mubr.bf16.mxu0 %v4215
      %4455 = vmatmul.mubr.bf16.gmra.mrb[0].mxu0 %v4214
      %v4456 = vpop.f32.mrb[0].mxu0
      %v4457 = vadd.f32 0.0, %v4456
      %v4458 = vpop.f32.mrb[0].mxu0
      %v4459 = vadd.f32 0.0, %v4458
      %v4460 = vpop.f32.mrb[0].mxu0
      %v4461 = vadd.f32 0.0, %v4460
      %v4462 = vpop.f32.mrb[0].mxu0
      %v4463 = vadd.f32 0.0, %v4462
      %4464 = vmatprep.mubr.bf16.mxu0 %v4217
      %4465 = vmatmul.mubr.bf16.gmra.mrb[0].mxu0 %v4216
      %v4466 = vpop.f32.mrb[0].mxu0
      %v4467 = vadd.f32 0.0, %v4466
      %v4468 = vpop.f32.mrb[0].mxu0
      %v4469 = vadd.f32 0.0, %v4468
      %v4470 = vpop.f32.mrb[0].mxu0
      %v4471 = vadd.f32 0.0, %v4470
      %v4472 = vpop.f32.mrb[0].mxu0
      %v4473 = vadd.f32 0.0, %v4472
      %4474 = vmatprep.mubr.bf16.mxu0 %v4219
      %4475 = vmatmul.mubr.bf16.gmra.mrb[0].mxu0 %v4218
      %v4476 = vpop.f32.mrb[0].mxu0
      %v4477 = vadd.f32 0.0, %v4476
      %v4478 = vpop.f32.mrb[0].mxu0
      %v4479 = vadd.f32 0.0, %v4478
      %v4480 = vpop.f32.mrb[0].mxu0
      %v4481 = vadd.f32 0.0, %v4480
      %v4482 = vpop.f32.mrb[0].mxu0
      %v4483 = vadd.f32 0.0, %v4482
      %4484 = vmatprep.mubr.bf16.mxu0 %v4221
      %4485 = vmatmul.mubr.bf16.gmra.mrb[0].mxu0 %v4220
      %v4486 = vpop.f32.mrb[0].mxu0
      %v4487 = vadd.f32 0.0, %v4486
      %v4488 = vpop.f32.mrb[0].mxu0
      %v4489 = vadd.f32 0.0, %v4488
      %v4490 = vpop.f32.mrb[0].mxu0
      %v4491 = vadd.f32 0.0, %v4490
      %v4492 = vpop.f32.mrb[0].mxu0
      %v4493 = vadd.f32 0.0, %v4492
      %4494 = vmatprep.mubr.bf16.mxu0 %v4223
      %4495 = vmatmul.mubr.bf16.gmra.mrb[0].mxu0 %v4222
      %v4496 = vpop.f32.mrb[0].mxu0
      %v4497 = vadd.f32 0.0, %v4496
      %v4498 = vpop.f32.mrb[0].mxu0
      %v4499 = vadd.f32 0.0, %v4498
      %v4500 = vpop.f32.mrb[0].mxu0
      %v4501 = vadd.f32 0.0, %v4500
      %v4502 = vpop.f32.mrb[0].mxu0
      %v4503 = vadd.f32 0.0, %v4502
      %4504 = vmatprep.mubr.bf16.mxu0 %v4225
      %4505 = vmatmul.mubr.bf16.gmra.mrb[0].mxu0 %v4224
      %v4506 = vpop.f32.mrb[0].mxu0
      %v4507 = vadd.f32 0.0, %v4506
      %v4508 = vpop.f32.mrb[0].mxu0
      %v4509 = vadd.f32 0.0, %v4508
      %v4510 = vpop.f32.mrb[0].mxu0
      %v4511 = vadd.f32 0.0, %v4510
      %v4512 = vpop.f32.mrb[0].mxu0
      %v4513 = vadd.f32 0.0, %v4512
      %4514 = vmatprep.mubr.bf16.mxu0 %v4227
      %4515 = vmatmul.mubr.bf16.gmra.mrb[0].mxu0 %v4226
      %v4516 = vpop.f32.mrb[0].mxu0
      %v4517 = vadd.f32 0.0, %v4516
      %v4518 = vpop.f32.mrb[0].mxu0
      %v4519 = vadd.f32 0.0, %v4518
      %v4520 = vpop.f32.mrb[0].mxu0
      %v4521 = vadd.f32 0.0, %v4520
      %v4522 = vpop.f32.mrb[0].mxu0
      %v4523 = vadd.f32 0.0, %v4522
      %4524 = vmatprep.mubr.bf16.mxu0 %v4229
      %4525 = vmatmul.mubr.bf16.gmra.mrb[0].mxu0 %v4228
      %v4526 = vpop.f32.mrb[0].mxu0
      %v4527 = vadd.f32 0.0, %v4526
      %v4528 = vpop.f32.mrb[0].mxu0
      %v4529 = vadd.f32 0.0, %v4528
      %v4530 = vpop.f32.mrb[0].mxu0
      %v4531 = vadd.f32 0.0, %v4530
      %v4532 = vpop.f32.mrb[0].mxu0
      %v4533 = vadd.f32 0.0, %v4532
      %4534 = vmatprep.mubr.bf16.mxu0 %v4231
      %4535 = vmatmul.mubr.bf16.gmra.mrb[0].mxu0 %v4230
      %v4536 = vpop.f32.mrb[0].mxu0
      %v4537 = vadd.f32 0.0, %v4536
      %v4538 = vpop.f32.mrb[0].mxu0
      %v4539 = vadd.f32 0.0, %v4538
      %v4540 = vpop.f32.mrb[0].mxu0
      %v4541 = vadd.f32 0.0, %v4540
      %v4542 = vpop.f32.mrb[0].mxu0
      %v4543 = vadd.f32 0.0, %v4542
      %4544 = vmatprep.mubr.bf16.mxu0 %v4233
      %4545 = vmatmul.mubr.bf16.gmra.mrb[0].mxu0 %v4232
      %v4546 = vpop.f32.mrb[0].mxu0
      %v4547 = vadd.f32 0.0, %v4546
      %v4548 = vpop.f32.mrb[0].mxu0
      %v4549 = vadd.f32 0.0, %v4548
      %v4550 = vpop.f32.mrb[0].mxu0
      %v4551 = vadd.f32 0.0, %v4550
      %v4552 = vpop.f32.mrb[0].mxu0
      %v4553 = vadd.f32 0.0, %v4552
      %4554 = vmatprep.mubr.bf16.mxu0 %v4235
      %4555 = vmatmul.mubr.bf16.gmra.mrb[0].mxu0 %v4234
      %v4556 = vpop.f32.mrb[0].mxu0
      %v4557 = vadd.f32 0.0, %v4556
      %v4558 = vpop.f32.mrb[0].mxu0
      %v4559 = vadd.f32 0.0, %v4558
      %v4560 = vpop.f32.mrb[0].mxu0
      %v4561 = vadd.f32 0.0, %v4560
      %v4562 = vpop.f32.mrb[0].mxu0
      %v4563 = vadd.f32 0.0, %v4562
      %4564 = vmatprep.mubr.bf16.mxu0 %v4237
      %4565 = vmatmul.mubr.bf16.gmra.mrb[0].mxu0 %v4236
      %v4566 = vpop.f32.mrb[0].mxu0
      %v4567 = vadd.f32 0.0, %v4566
      %v4568 = vpop.f32.mrb[0].mxu0
      %v4569 = vadd.f32 0.0, %v4568
      %v4570 = vpop.f32.mrb[0].mxu0
      %v4571 = vpop.f32.mrb[0].mxu0
      %4572 = vdwg.mxu0
      %v4573 = vadd.f32 %v3973, %v4457
      %v4574 = vadd.f32 %v3975, %v4459
      %v4575 = vadd.f32 %v3977, %v4461
      %v4576 = vadd.f32 %v3979, %v4463
      %v4577 = vadd.f32 %v3983, %v4467
      %v4578 = vadd.f32 %v3985, %v4469
      %v4579 = vadd.f32 %v3987, %v4471
      %v4580 = vadd.f32 %v3989, %v4473
      %v4581 = vadd.f32 %v3993, %v4477
      %v4582 = vadd.f32 %v3995, %v4479
      %v4583 = vadd.f32 %v3997, %v4481
      %v4584 = vadd.f32 %v3999, %v4483
      %v4585 = vadd.f32 %v4003, %v4487
      %v4586 = vadd.f32 %v4005, %v4489
      %v4587 = vadd.f32 %v4007, %v4491
      %v4588 = vadd.f32 %v4009, %v4493
      %v4589 = vadd.f32 %v4013, %v4497
      %v4590 = vadd.f32 %v4015, %v4499
      %v4591 = vadd.f32 %v4017, %v4501
      %v4592 = vadd.f32 %v4019, %v4503
      %v4593 = vadd.f32 %v4023, %v4507
      %v4594 = vadd.f32 %v4025, %v4509
      %v4595 = vadd.f32 %v4027, %v4511
      %v4596 = vadd.f32 %v4029, %v4513
      %v4597 = vadd.f32 %v4033, %v4517
      %v4598 = vadd.f32 %v4035, %v4519
      %v4599 = vadd.f32 %v4037, %v4521
      %v4600 = vadd.f32 %v4039, %v4523
      %v4601 = vadd.f32 %v4043, %v4527
      %v4602 = vadd.f32 %v4045, %v4529
      %v4603 = vadd.f32 %v4047, %v4531
      %v4604 = vadd.f32 %v4049, %v4533
      %v4605 = vadd.f32 %v4053, %v4537
      %v4606 = vadd.f32 %v4055, %v4539
      %v4607 = vadd.f32 %v4057, %v4541
      %v4608 = vadd.f32 %v4059, %v4543
      %v4609 = vadd.f32 %v4063, %v4547
      %v4610 = vadd.f32 %v4065, %v4549
      %v4611 = vadd.f32 %v4067, %v4551
      %v4612 = vadd.f32 %v4069, %v4553
      %v4613 = vadd.f32 %v4073, %v4557
      %v4614 = vadd.f32 %v4075, %v4559
      %v4615 = vadd.f32 %v4077, %v4561
      %v4616 = vadd.f32 %v4079, %v4563
      %v4617 = vadd.f32 %v4083, %v4567
      %v4618 = vadd.f32 %v4085, %v4569
      %v4619 = vld [vmem:[#allocation2 + $0x30] sm:$0xff]
      %v4620 = vld [vmem:[#allocation2 + $0x38] sm:$0xff]
      %v4621 = vld [vmem:[#allocation2 + $0x40] sm:$0xff]
      %v4622 = vld [vmem:[#allocation2 + $0x48] sm:$0xff]
      %v4623 = vld [vmem:[#allocation2 + $0x50] sm:$0xff]
      %v4624 = vld [vmem:[#allocation2 + $0x58] sm:$0xff]
      %v4625 = vld [vmem:[#allocation2 + $0x60] sm:$0xff]
      %v4626 = vld [vmem:[#allocation2 + $0x68] sm:$0xff]
      %v4627 = vld [vmem:[#allocation2 + $0x70] sm:$0xff]
      %v4628 = vld [vmem:[#allocation2 + $0x78] sm:$0xff]
      %v4629 = vld [vmem:[#allocation2 + $0x80] sm:$0xff]
      %v4630 = vld [vmem:[#allocation2 + $0x88] sm:$0xff]
      %v4631 = vld [vmem:[#allocation2 + $0x90] sm:$0xff]
      %v4632 = vld [vmem:[#allocation2 + $0x98] sm:$0xff]
      %v4633 = vld [vmem:[#allocation2 + $0xa0] sm:$0xff]
      %v4634 = vld [vmem:[#allocation2 + $0xa8] sm:$0xff]
      %v4635 = vld [vmem:[#allocation2 + $0xb0] sm:$0xff]
      %v4636 = vld [vmem:[#allocation2 + $0xb8] sm:$0xff]
      %v4637 = vld [vmem:[#allocation2 + $0xc0] sm:$0xff]
      %v4638 = vld [vmem:[#allocation2 + $0xc8] sm:$0xff]
      %v4639 = vld [vmem:[#allocation2 + $0xd0] sm:$0xff]
      %v4640 = vld [vmem:[#allocation2 + $0xd8] sm:$0xff]
      %v4641 = vld [vmem:[#allocation2 + $0xe0] sm:$0xff]
      %s4642 = scalar_lea.vmem %s3, 768
      %v4643 = vld [vmem:[%s4642] sm:$0xff]
      %v4644 = vld [vmem:[%s4642 + $0x8] sm:$0xff]
      %v4645 = vld [vmem:[%s4642 + $0x10] sm:$0xff]
      %v4646 = vld [vmem:[%s4642 + $0x18] sm:$0xff]
      %v4647 = vld [vmem:[%s4642 + $0x20] sm:$0xff]
      %v4648 = vld [vmem:[%s4642 + $0x28] sm:$0xff]
      %v4649 = vld [vmem:[%s4642 + $0x30] sm:$0xff]
      %v4650 = vld [vmem:[%s4642 + $0x38] sm:$0xff]
      %v4651 = vld [vmem:[%s4642 + $0x40] sm:$0xff]
      %v4652 = vld [vmem:[%s4642 + $0x48] sm:$0xff]
      %v4653 = vld [vmem:[%s4642 + $0x50] sm:$0xff]
      %v4654 = vld [vmem:[%s4642 + $0x58] sm:$0xff]
      %v4655 = vld [vmem:[%s4642 + $0x60] sm:$0xff]
      %v4656 = vld [vmem:[%s4642 + $0x68] sm:$0xff]
      %v4657 = vld [vmem:[%s4642 + $0x70] sm:$0xff]
      %v4658 = vld [vmem:[%s4642 + $0x78] sm:$0xff]
      %v4659 = vld [vmem:[%s4642 + $0x80] sm:$0xff]
      %v4660 = vld [vmem:[%s4642 + $0x88] sm:$0xff]
      %v4661 = vld [vmem:[%s4642 + $0x90] sm:$0xff]
      %v4662 = vld [vmem:[%s4642 + $0x98] sm:$0xff]
      %v4663 = vld [vmem:[%s4642 + $0xa0] sm:$0xff]
      %v4664 = vld [vmem:[%s4642 + $0xa8] sm:$0xff]
      %v4665 = vld [vmem:[%s4642 + $0xb0] sm:$0xff]
      %v4666 = vld [vmem:[%s4642 + $0xb8] sm:$0xff]
      %v4667 = vld [vmem:[%s4642 + $0xc0] sm:$0xff]
      %v4668 = vld [vmem:[%s4642 + $0xc8] sm:$0xff]
      %v4669 = vld [vmem:[%s4642 + $0xd0] sm:$0xff]
      %v4670 = vld [vmem:[%s4642 + $0xd8] sm:$0xff]
      %v4671 = vld [vmem:[%s4642 + $0xe0] sm:$0xff]
      %v4672 = vld [vmem:[%s4642 + $0xe8] sm:$0xff]
      %v4673 = vld [vmem:[%s4642 + $0xf0] sm:$0xff]
      %v4674 = vld [vmem:[%s4642 + $0xf8] sm:$0xff]
      %v4698 = vunpack.c.l.b16 %v4619
      %v4699 = vunpack.c.h.b16 %v4619
      %v4700 = vunpack.c.l.b16 %v4620
      %v4701 = vunpack.c.h.b16 %v4620
      %v4702 = vunpack.c.l.b16 %v4621
      %v4703 = vunpack.c.h.b16 %v4621
      %v4704 = vunpack.c.l.b16 %v4622
      %v4705 = vunpack.c.h.b16 %v4622
      %v4706 = vunpack.c.l.b16 %v4623
      %v4707 = vunpack.c.h.b16 %v4623
      %v4708 = vunpack.c.l.b16 %v4624
      %v4709 = vunpack.c.h.b16 %v4624
      %v4710 = vunpack.c.l.b16 %v4625
      %v4711 = vunpack.c.h.b16 %v4625
      %v4712 = vunpack.c.l.b16 %v4626
      %v4713 = vunpack.c.h.b16 %v4626
      %v4714 = vunpack.c.l.b16 %v4627
      %v4715 = vunpack.c.h.b16 %v4627
      %v4716 = vunpack.c.l.b16 %v4628
      %v4717 = vunpack.c.h.b16 %v4628
      %v4718 = vunpack.c.l.b16 %v4629
      %v4719 = vunpack.c.h.b16 %v4629
      %v4720 = vunpack.c.l.b16 %v4630
      %v4721 = vunpack.c.h.b16 %v4630
      %v4722 = vunpack.c.l.b16 %v4631
      %v4723 = vunpack.c.h.b16 %v4631
      %v4724 = vunpack.c.l.b16 %v4632
      %v4725 = vunpack.c.h.b16 %v4632
      %v4726 = vunpack.c.l.b16 %v4633
      %v4727 = vunpack.c.h.b16 %v4633
      %v4728 = vunpack.c.l.b16 %v4634
      %v4729 = vunpack.c.h.b16 %v4634
      %v4730 = vunpack.c.l.b16 %v4635
      %v4731 = vunpack.c.h.b16 %v4635
      %v4732 = vunpack.c.l.b16 %v4636
      %v4733 = vunpack.c.h.b16 %v4636
      %v4734 = vunpack.c.l.b16 %v4637
      %v4735 = vunpack.c.h.b16 %v4637
      %v4736 = vunpack.c.l.b16 %v4638
      %v4737 = vunpack.c.h.b16 %v4638
      %v4738 = vunpack.c.l.b16 %v4639
      %v4739 = vunpack.c.h.b16 %v4639
      %v4740 = vunpack.c.l.b16 %v4640
      %v4741 = vunpack.c.h.b16 %v4640
      %v4742 = vunpack.c.l.b16 %v4641
      %v4743 = vunpack.c.h.b16 %v4641
      %v4744 = vpack.c.b16 %v4700, %v4698
      %v4745 = vpack.c.b16 %v4701, %v4699
      %v4746 = vpack.c.b16 %v4704, %v4702
      %v4747 = vpack.c.b16 %v4705, %v4703
      %v4748 = vpack.c.b16 %v4708, %v4706
      %v4749 = vpack.c.b16 %v4709, %v4707
      %v4750 = vpack.c.b16 %v4712, %v4710
      %v4751 = vpack.c.b16 %v4713, %v4711
      %v4752 = vpack.c.b16 %v4716, %v4714
      %v4753 = vpack.c.b16 %v4717, %v4715
      %v4754 = vpack.c.b16 %v4720, %v4718
      %v4755 = vpack.c.b16 %v4721, %v4719
      %v4756 = vpack.c.b16 %v4724, %v4722
      %v4757 = vpack.c.b16 %v4725, %v4723
      %v4758 = vpack.c.b16 %v4728, %v4726
      %v4759 = vpack.c.b16 %v4729, %v4727
      %v4760 = vpack.c.b16 %v4732, %v4730
      %v4761 = vpack.c.b16 %v4733, %v4731
      %v4762 = vpack.c.b16 %v4736, %v4734
      %v4763 = vpack.c.b16 %v4737, %v4735
      %v4764 = vpack.c.b16 %v4740, %v4738
      %v4765 = vpack.c.b16 %v4741, %v4739
      %v4766 = vpack.c.b16 %v4742, %v4742
      %v4767 = vpack.c.b16 %v4743, %v4743
      %v4824 = vunpack.c.l.b16 %v4643
      %v4825 = vunpack.c.h.b16 %v4643
      %v4826 = vunpack.c.l.b16 %v4644
      %v4827 = vunpack.c.h.b16 %v4644
      %v4828 = vunpack.c.l.b16 %v4645
      %v4829 = vunpack.c.h.b16 %v4645
      %v4830 = vunpack.c.l.b16 %v4646
      %v4831 = vunpack.c.h.b16 %v4646
      %v4832 = vunpack.c.l.b16 %v4647
      %v4833 = vunpack.c.h.b16 %v4647
      %v4834 = vunpack.c.l.b16 %v4648
      %v4835 = vunpack.c.h.b16 %v4648
      %v4836 = vunpack.c.l.b16 %v4649
      %v4837 = vunpack.c.h.b16 %v4649
      %v4838 = vunpack.c.l.b16 %v4650
      %v4839 = vunpack.c.h.b16 %v4650
      %v4840 = vunpack.c.l.b16 %v4651
      %v4841 = vunpack.c.h.b16 %v4651
      %v4842 = vunpack.c.l.b16 %v4652
      %v4843 = vunpack.c.h.b16 %v4652
      %v4844 = vunpack.c.l.b16 %v4653
      %v4845 = vunpack.c.h.b16 %v4653
      %v4846 = vunpack.c.l.b16 %v4654
      %v4847 = vunpack.c.h.b16 %v4654
      %v4848 = vunpack.c.l.b16 %v4655
      %v4849 = vunpack.c.h.b16 %v4655
      %v4850 = vunpack.c.l.b16 %v4656
      %v4851 = vunpack.c.h.b16 %v4656
      %v4852 = vunpack.c.l.b16 %v4657
      %v4853 = vunpack.c.h.b16 %v4657
      %v4854 = vunpack.c.l.b16 %v4658
      %v4855 = vunpack.c.h.b16 %v4658
      %v4856 = vunpack.c.l.b16 %v4659
      %v4857 = vunpack.c.h.b16 %v4659
      %v4858 = vunpack.c.l.b16 %v4660
      %v4859 = vunpack.c.h.b16 %v4660
      %v4860 = vunpack.c.l.b16 %v4661
      %v4861 = vunpack.c.h.b16 %v4661
      %v4862 = vunpack.c.l.b16 %v4662
      %v4863 = vunpack.c.h.b16 %v4662
      %v4864 = vunpack.c.l.b16 %v4663
      %v4865 = vunpack.c.h.b16 %v4663
      %v4866 = vunpack.c.l.b16 %v4664
      %v4867 = vunpack.c.h.b16 %v4664
      %v4868 = vunpack.c.l.b16 %v4665
      %v4869 = vunpack.c.h.b16 %v4665
      %v4870 = vunpack.c.l.b16 %v4666
      %v4871 = vunpack.c.h.b16 %v4666
      %v4872 = vunpack.c.l.b16 %v4667
      %v4873 = vunpack.c.h.b16 %v4667
      %v4874 = vunpack.c.l.b16 %v4668
      %v4875 = vunpack.c.h.b16 %v4668
      %v4876 = vunpack.c.l.b16 %v4669
      %v4877 = vunpack.c.h.b16 %v4669
      %v4878 = vunpack.c.l.b16 %v4670
      %v4879 = vunpack.c.h.b16 %v4670
      %v4880 = vunpack.c.l.b16 %v4671
      %v4881 = vunpack.c.h.b16 %v4671
      %v4882 = vunpack.c.l.b16 %v4672
      %v4883 = vunpack.c.h.b16 %v4672
      %v4884 = vunpack.c.l.b16 %v4673
      %v4885 = vunpack.c.h.b16 %v4673
      %v4886 = vunpack.c.l.b16 %v4674
      %v4887 = vunpack.c.h.b16 %v4674
      %v4888 = vpack.c.b16 %v4826, %v4824
      %v4889 = vpack.c.b16 %v4827, %v4825
      %v4890 = vpack.c.b16 %v4830, %v4828
      %v4891 = vpack.c.b16 %v4831, %v4829
      %v4892 = vpack.c.b16 %v4834, %v4832
      %v4893 = vpack.c.b16 %v4835, %v4833
      %v4894 = vpack.c.b16 %v4838, %v4836
      %v4895 = vpack.c.b16 %v4839, %v4837
      %v4896 = vpack.c.b16 %v4842, %v4840
      %v4897 = vpack.c.b16 %v4843, %v4841
      %v4898 = vpack.c.b16 %v4846, %v4844
      %v4899 = vpack.c.b16 %v4847, %v4845
      %v4900 = vpack.c.b16 %v4850, %v4848
      %v4901 = vpack.c.b16 %v4851, %v4849
      %v4902 = vpack.c.b16 %v4854, %v4852
      %v4903 = vpack.c.b16 %v4855, %v4853
      %v4904 = vpack.c.b16 %v4858, %v4856
      %v4905 = vpack.c.b16 %v4859, %v4857
      %v4906 = vpack.c.b16 %v4862, %v4860
      %v4907 = vpack.c.b16 %v4863, %v4861
      %v4908 = vpack.c.b16 %v4866, %v4864
      %v4909 = vpack.c.b16 %v4867, %v4865
      %v4910 = vpack.c.b16 %v4870, %v4868
      %v4911 = vpack.c.b16 %v4871, %v4869
      %v4912 = vpack.c.b16 %v4874, %v4872
      %v4913 = vpack.c.b16 %v4875, %v4873
      %v4914 = vpack.c.b16 %v4878, %v4876
      %v4915 = vpack.c.b16 %v4879, %v4877
      %v4916 = vpack.c.b16 %v4882, %v4880
      %v4917 = vpack.c.b16 %v4883, %v4881
      %v4918 = vpack.c.b16 %v4886, %v4884
      %v4919 = vpack.c.b16 %v4887, %v4885
      %4952 = vmatprep.subr.bf16.mxu0 %v4889
      %4953 = vmatpush1.bf16.msra.mxu0 %v4888
      %4954 = vmatprep.subr.bf16.mxu0 %v4891
      %4955 = vmatpush1.bf16.msra.mxu0 %v4890
      %4956 = vmatprep.subr.bf16.mxu0 %v4893
      %4957 = vmatpush1.bf16.msra.mxu0 %v4892
      %4958 = vmatprep.subr.bf16.mxu0 %v4895
      %4959 = vmatpush1.bf16.msra.mxu0 %v4894
      %4960 = vmatprep.subr.bf16.mxu0 %v4897
      %4961 = vmatpush1.bf16.msra.mxu0 %v4896
      %4962 = vmatprep.subr.bf16.mxu0 %v4899
      %4963 = vmatpush1.bf16.msra.mxu0 %v4898
      %4964 = vmatprep.subr.bf16.mxu0 %v4901
      %4965 = vmatpush1.bf16.msra.mxu0 %v4900
      %4966 = vmatprep.subr.bf16.mxu0 %v4903
      %4967 = vmatpush1.bf16.msra.mxu0 %v4902
      %4968 = vmatprep.subr.bf16.mxu0 %v4905
      %4969 = vmatpush1.bf16.msra.mxu0 %v4904
      %4970 = vmatprep.subr.bf16.mxu0 %v4907
      %4971 = vmatpush1.bf16.msra.mxu0 %v4906
      %4972 = vmatprep.subr.bf16.mxu0 %v4909
      %4973 = vmatpush1.bf16.msra.mxu0 %v4908
      %4974 = vmatprep.subr.bf16.mxu0 %v4911
      %4975 = vmatpush1.bf16.msra.mxu0 %v4910
      %4976 = vmatprep.subr.bf16.mxu0 %v4913
      %4977 = vmatpush1.bf16.msra.mxu0 %v4912
      %4978 = vmatprep.subr.bf16.mxu0 %v4915
      %4979 = vmatpush1.bf16.msra.mxu0 %v4914
      %4980 = vmatprep.subr.bf16.mxu0 %v4917
      %4981 = vmatpush1.bf16.msra.mxu0 %v4916
      %4982 = vmatprep.subr.bf16.mxu0 %v4919
      %4983 = vmatpush1.bf16.msra.mxu0 %v4918
      %4984 = vmatprep.mubr.bf16.mxu0 %v4745
      %4985 = vmatmul.mubr.bf16.gmra.mrb[0].mxu0 %v4744
      %v4986 = vpop.f32.mrb[0].mxu0
      %v4987 = vadd.f32 0.0, %v4986
      %v4988 = vpop.f32.mrb[0].mxu0
      %v4989 = vadd.f32 0.0, %v4988
      %v4990 = vpop.f32.mrb[0].mxu0
      %v4991 = vadd.f32 0.0, %v4990
      %v4992 = vpop.f32.mrb[0].mxu0
      %v4993 = vadd.f32 0.0, %v4992
      %4994 = vmatprep.mubr.bf16.mxu0 %v4747
      %4995 = vmatmul.mubr.bf16.gmra.mrb[0].mxu0 %v4746
      %v4996 = vpop.f32.mrb[0].mxu0
      %v4997 = vadd.f32 0.0, %v4996
      %v4998 = vpop.f32.mrb[0].mxu0
      %v4999 = vadd.f32 0.0, %v4998
      %v5000 = vpop.f32.mrb[0].mxu0
      %v5001 = vadd.f32 0.0, %v5000
      %v5002 = vpop.f32.mrb[0].mxu0
      %v5003 = vadd.f32 0.0, %v5002
      %5004 = vmatprep.mubr.bf16.mxu0 %v4749
      %5005 = vmatmul.mubr.bf16.gmra.mrb[0].mxu0 %v4748
      %v5006 = vpop.f32.mrb[0].mxu0
      %v5007 = vadd.f32 0.0, %v5006
      %v5008 = vpop.f32.mrb[0].mxu0
      %v5009 = vadd.f32 0.0, %v5008
      %v5010 = vpop.f32.mrb[0].mxu0
      %v5011 = vadd.f32 0.0, %v5010
      %v5012 = vpop.f32.mrb[0].mxu0
      %v5013 = vadd.f32 0.0, %v5012
      %5014 = vmatprep.mubr.bf16.mxu0 %v4751
      %5015 = vmatmul.mubr.bf16.gmra.mrb[0].mxu0 %v4750
      %v5016 = vpop.f32.mrb[0].mxu0
      %v5017 = vadd.f32 0.0, %v5016
      %v5018 = vpop.f32.mrb[0].mxu0
      %v5019 = vadd.f32 0.0, %v5018
      %v5020 = vpop.f32.mrb[0].mxu0
      %v5021 = vadd.f32 0.0, %v5020
      %v5022 = vpop.f32.mrb[0].mxu0
      %v5023 = vadd.f32 0.0, %v5022
      %5024 = vmatprep.mubr.bf16.mxu0 %v4753
      %5025 = vmatmul.mubr.bf16.gmra.mrb[0].mxu0 %v4752
      %v5026 = vpop.f32.mrb[0].mxu0
      %v5027 = vadd.f32 0.0, %v5026
      %v5028 = vpop.f32.mrb[0].mxu0
      %v5029 = vadd.f32 0.0, %v5028
      %v5030 = vpop.f32.mrb[0].mxu0
      %v5031 = vadd.f32 0.0, %v5030
      %v5032 = vpop.f32.mrb[0].mxu0
      %v5033 = vadd.f32 0.0, %v5032
      %5034 = vmatprep.mubr.bf16.mxu0 %v4755
      %5035 = vmatmul.mubr.bf16.gmra.mrb[0].mxu0 %v4754
      %v5036 = vpop.f32.mrb[0].mxu0
      %v5037 = vadd.f32 0.0, %v5036
      %v5038 = vpop.f32.mrb[0].mxu0
      %v5039 = vadd.f32 0.0, %v5038
      %v5040 = vpop.f32.mrb[0].mxu0
      %v5041 = vadd.f32 0.0, %v5040
      %v5042 = vpop.f32.mrb[0].mxu0
      %v5043 = vadd.f32 0.0, %v5042
      %5044 = vmatprep.mubr.bf16.mxu0 %v4757
      %5045 = vmatmul.mubr.bf16.gmra.mrb[0].mxu0 %v4756
      %v5046 = vpop.f32.mrb[0].mxu0
      %v5047 = vadd.f32 0.0, %v5046
      %v5048 = vpop.f32.mrb[0].mxu0
      %v5049 = vadd.f32 0.0, %v5048
      %v5050 = vpop.f32.mrb[0].mxu0
      %v5051 = vadd.f32 0.0, %v5050
      %v5052 = vpop.f32.mrb[0].mxu0
      %v5053 = vadd.f32 0.0, %v5052
      %5054 = vmatprep.mubr.bf16.mxu0 %v4759
      %5055 = vmatmul.mubr.bf16.gmra.mrb[0].mxu0 %v4758
      %v5056 = vpop.f32.mrb[0].mxu0
      %v5057 = vadd.f32 0.0, %v5056
      %v5058 = vpop.f32.mrb[0].mxu0
      %v5059 = vadd.f32 0.0, %v5058
      %v5060 = vpop.f32.mrb[0].mxu0
      %v5061 = vadd.f32 0.0, %v5060
      %v5062 = vpop.f32.mrb[0].mxu0
      %v5063 = vadd.f32 0.0, %v5062
      %5064 = vmatprep.mubr.bf16.mxu0 %v4761
      %5065 = vmatmul.mubr.bf16.gmra.mrb[0].mxu0 %v4760
      %v5066 = vpop.f32.mrb[0].mxu0
      %v5067 = vadd.f32 0.0, %v5066
      %v5068 = vpop.f32.mrb[0].mxu0
      %v5069 = vadd.f32 0.0, %v5068
      %v5070 = vpop.f32.mrb[0].mxu0
      %v5071 = vadd.f32 0.0, %v5070
      %v5072 = vpop.f32.mrb[0].mxu0
      %v5073 = vadd.f32 0.0, %v5072
      %5074 = vmatprep.mubr.bf16.mxu0 %v4763
      %5075 = vmatmul.mubr.bf16.gmra.mrb[0].mxu0 %v4762
      %v5076 = vpop.f32.mrb[0].mxu0
      %v5077 = vadd.f32 0.0, %v5076
      %v5078 = vpop.f32.mrb[0].mxu0
      %v5079 = vadd.f32 0.0, %v5078
      %v5080 = vpop.f32.mrb[0].mxu0
      %v5081 = vadd.f32 0.0, %v5080
      %v5082 = vpop.f32.mrb[0].mxu0
      %v5083 = vadd.f32 0.0, %v5082
      %5084 = vmatprep.mubr.bf16.mxu0 %v4765
      %5085 = vmatmul.mubr.bf16.gmra.mrb[0].mxu0 %v4764
      %v5086 = vpop.f32.mrb[0].mxu0
      %v5087 = vadd.f32 0.0, %v5086
      %v5088 = vpop.f32.mrb[0].mxu0
      %v5089 = vadd.f32 0.0, %v5088
      %v5090 = vpop.f32.mrb[0].mxu0
      %v5091 = vadd.f32 0.0, %v5090
      %v5092 = vpop.f32.mrb[0].mxu0
      %v5093 = vadd.f32 0.0, %v5092
      %5094 = vmatprep.mubr.bf16.mxu0 %v4767
      %5095 = vmatmul.mubr.bf16.gmra.mrb[0].mxu0 %v4766
      %v5096 = vpop.f32.mrb[0].mxu0
      %v5097 = vadd.f32 0.0, %v5096
      %v5098 = vpop.f32.mrb[0].mxu0
      %v5099 = vadd.f32 0.0, %v5098
      %v5100 = vpop.f32.mrb[0].mxu0
      %v5101 = vpop.f32.mrb[0].mxu0
      %5102 = vdwg.mxu0
      %v5103 = vadd.f32 %v4573, %v4987
      %v5104 = vadd.f32 %v4574, %v4989
      %v5105 = vadd.f32 %v4575, %v4991
      %v5106 = vadd.f32 %v4576, %v4993
      %v5107 = vadd.f32 %v4577, %v4997
      %v5108 = vadd.f32 %v4578, %v4999
      %v5109 = vadd.f32 %v4579, %v5001
      %v5110 = vadd.f32 %v4580, %v5003
      %v5111 = vadd.f32 %v4581, %v5007
      %v5112 = vadd.f32 %v4582, %v5009
      %v5113 = vadd.f32 %v4583, %v5011
      %v5114 = vadd.f32 %v4584, %v5013
      %v5115 = vadd.f32 %v4585, %v5017
      %v5116 = vadd.f32 %v4586, %v5019
      %v5117 = vadd.f32 %v4587, %v5021
      %v5118 = vadd.f32 %v4588, %v5023
      %v5119 = vadd.f32 %v4589, %v5027
      %v5120 = vadd.f32 %v4590, %v5029
      %v5121 = vadd.f32 %v4591, %v5031
      %v5122 = vadd.f32 %v4592, %v5033
      %v5123 = vadd.f32 %v4593, %v5037
      %v5124 = vadd.f32 %v4594, %v5039
      %v5125 = vadd.f32 %v4595, %v5041
      %v5126 = vadd.f32 %v4596, %v5043
      %v5127 = vadd.f32 %v4597, %v5047
      %v5128 = vadd.f32 %v4598, %v5049
      %v5129 = vadd.f32 %v4599, %v5051
      %v5130 = vadd.f32 %v4600, %v5053
      %v5131 = vadd.f32 %v4601, %v5057
      %v5132 = vadd.f32 %v4602, %v5059
      %v5133 = vadd.f32 %v4603, %v5061
      %v5134 = vadd.f32 %v4604, %v5063
      %v5135 = vadd.f32 %v4605, %v5067
      %v5136 = vadd.f32 %v4606, %v5069
      %v5137 = vadd.f32 %v4607, %v5071
      %v5138 = vadd.f32 %v4608, %v5073
      %v5139 = vadd.f32 %v4609, %v5077
      %v5140 = vadd.f32 %v4610, %v5079
      %v5141 = vadd.f32 %v4611, %v5081
      %v5142 = vadd.f32 %v4612, %v5083
      %v5143 = vadd.f32 %v4613, %v5087
      %v5144 = vadd.f32 %v4614, %v5089
      %v5145 = vadd.f32 %v4615, %v5091
      %v5146 = vadd.f32 %v4616, %v5093
      %v5147 = vadd.f32 %v4617, %v5097
      %v5148 = vadd.f32 %v4618, %v5099
      %v5149 = vld [vmem:[#allocation2 + $0x40] sm:$0xff]
      %v5150 = vld [vmem:[#allocation2 + $0x48] sm:$0xff]
      %v5151 = vld [vmem:[#allocation2 + $0x50] sm:$0xff]
      %v5152 = vld [vmem:[#allocation2 + $0x58] sm:$0xff]
      %v5153 = vld [vmem:[#allocation2 + $0x60] sm:$0xff]
      %v5154 = vld [vmem:[#allocation2 + $0x68] sm:$0xff]
      %v5155 = vld [vmem:[#allocation2 + $0x70] sm:$0xff]
      %v5156 = vld [vmem:[#allocation2 + $0x78] sm:$0xff]
      %v5157 = vld [vmem:[#allocation2 + $0x80] sm:$0xff]
      %v5158 = vld [vmem:[#allocation2 + $0x88] sm:$0xff]
      %v5159 = vld [vmem:[#allocation2 + $0x90] sm:$0xff]
      %v5160 = vld [vmem:[#allocation2 + $0x98] sm:$0xff]
      %v5161 = vld [vmem:[#allocation2 + $0xa0] sm:$0xff]
      %v5162 = vld [vmem:[#allocation2 + $0xa8] sm:$0xff]
      %v5163 = vld [vmem:[#allocation2 + $0xb0] sm:$0xff]
      %v5164 = vld [vmem:[#allocation2 + $0xb8] sm:$0xff]
      %v5165 = vld [vmem:[#allocation2 + $0xc0] sm:$0xff]
      %v5166 = vld [vmem:[#allocation2 + $0xc8] sm:$0xff]
      %v5167 = vld [vmem:[#allocation2 + $0xd0] sm:$0xff]
      %v5168 = vld [vmem:[#allocation2 + $0xd8] sm:$0xff]
      %v5169 = vld [vmem:[#allocation2 + $0xe0] sm:$0xff]
      %v5170 = vld [vmem:[#allocation2 + $0xe8] sm:$0xff]
      %v5171 = vld [vmem:[#allocation2 + $0xf0] sm:$0xff]
      %s5172 = scalar_lea.vmem %s3, 1024
      %v5173 = vld [vmem:[%s5172] sm:$0xff]
      %v5174 = vld [vmem:[%s5172 + $0x8] sm:$0xff]
      %v5175 = vld [vmem:[%s5172 + $0x10] sm:$0xff]
      %v5176 = vld [vmem:[%s5172 + $0x18] sm:$0xff]
      %v5177 = vld [vmem:[%s5172 + $0x20] sm:$0xff]
      %v5178 = vld [vmem:[%s5172 + $0x28] sm:$0xff]
      %v5179 = vld [vmem:[%s5172 + $0x30] sm:$0xff]
      %v5180 = vld [vmem:[%s5172 + $0x38] sm:$0xff]
      %v5181 = vld [vmem:[%s5172 + $0x40] sm:$0xff]
      %v5182 = vld [vmem:[%s5172 + $0x48] sm:$0xff]
      %v5183 = vld [vmem:[%s5172 + $0x50] sm:$0xff]
      %v5184 = vld [vmem:[%s5172 + $0x58] sm:$0xff]
      %v5185 = vld [vmem:[%s5172 + $0x60] sm:$0xff]
      %v5186 = vld [vmem:[%s5172 + $0x68] sm:$0xff]
      %v5187 = vld [vmem:[%s5172 + $0x70] sm:$0xff]
      %v5188 = vld [vmem:[%s5172 + $0x78] sm:$0xff]
      %v5189 = vld [vmem:[%s5172 + $0x80] sm:$0xff]
      %v5190 = vld [vmem:[%s5172 + $0x88] sm:$0xff]
      %v5191 = vld [vmem:[%s5172 + $0x90] sm:$0xff]
      %v5192 = vld [vmem:[%s5172 + $0x98] sm:$0xff]
      %v5193 = vld [vmem:[%s5172 + $0xa0] sm:$0xff]
      %v5194 = vld [vmem:[%s5172 + $0xa8] sm:$0xff]
      %v5195 = vld [vmem:[%s5172 + $0xb0] sm:$0xff]
      %v5196 = vld [vmem:[%s5172 + $0xb8] sm:$0xff]
      %v5197 = vld [vmem:[%s5172 + $0xc0] sm:$0xff]
      %v5198 = vld [vmem:[%s5172 + $0xc8] sm:$0xff]
      %v5199 = vld [vmem:[%s5172 + $0xd0] sm:$0xff]
      %v5200 = vld [vmem:[%s5172 + $0xd8] sm:$0xff]
      %v5201 = vld [vmem:[%s5172 + $0xe0] sm:$0xff]
      %v5202 = vld [vmem:[%s5172 + $0xe8] sm:$0xff]
      %v5203 = vld [vmem:[%s5172 + $0xf0] sm:$0xff]
      %v5204 = vld [vmem:[%s5172 + $0xf8] sm:$0xff]
      %v5228 = vunpack.c.l.b16 %v5149
      %v5229 = vunpack.c.h.b16 %v5149
      %v5230 = vunpack.c.l.b16 %v5150
      %v5231 = vunpack.c.h.b16 %v5150
      %v5232 = vunpack.c.l.b16 %v5151
      %v5233 = vunpack.c.h.b16 %v5151
      %v5234 = vunpack.c.l.b16 %v5152
      %v5235 = vunpack.c.h.b16 %v5152
      %v5236 = vunpack.c.l.b16 %v5153
      %v5237 = vunpack.c.h.b16 %v5153
      %v5238 = vunpack.c.l.b16 %v5154
      %v5239 = vunpack.c.h.b16 %v5154
      %v5240 = vunpack.c.l.b16 %v5155
      %v5241 = vunpack.c.h.b16 %v5155
      %v5242 = vunpack.c.l.b16 %v5156
      %v5243 = vunpack.c.h.b16 %v5156
      %v5244 = vunpack.c.l.b16 %v5157
      %v5245 = vunpack.c.h.b16 %v5157
      %v5246 = vunpack.c.l.b16 %v5158
      %v5247 = vunpack.c.h.b16 %v5158
      %v5248 = vunpack.c.l.b16 %v5159
      %v5249 = vunpack.c.h.b16 %v5159
      %v5250 = vunpack.c.l.b16 %v5160
      %v5251 = vunpack.c.h.b16 %v5160
      %v5252 = vunpack.c.l.b16 %v5161
      %v5253 = vunpack.c.h.b16 %v5161
      %v5254 = vunpack.c.l.b16 %v5162
      %v5255 = vunpack.c.h.b16 %v5162
      %v5256 = vunpack.c.l.b16 %v5163
      %v5257 = vunpack.c.h.b16 %v5163
      %v5258 = vunpack.c.l.b16 %v5164
      %v5259 = vunpack.c.h.b16 %v5164
      %v5260 = vunpack.c.l.b16 %v5165
      %v5261 = vunpack.c.h.b16 %v5165
      %v5262 = vunpack.c.l.b16 %v5166
      %v5263 = vunpack.c.h.b16 %v5166
      %v5264 = vunpack.c.l.b16 %v5167
      %v5265 = vunpack.c.h.b16 %v5167
      %v5266 = vunpack.c.l.b16 %v5168
      %v5267 = vunpack.c.h.b16 %v5168
      %v5268 = vunpack.c.l.b16 %v5169
      %v5269 = vunpack.c.h.b16 %v5169
      %v5270 = vunpack.c.l.b16 %v5170
      %v5271 = vunpack.c.h.b16 %v5170
      %v5272 = vunpack.c.l.b16 %v5171
      %v5273 = vunpack.c.h.b16 %v5171
      %v5274 = vpack.c.b16 %v5230, %v5228
      %v5275 = vpack.c.b16 %v5231, %v5229
      %v5276 = vpack.c.b16 %v5234, %v5232
      %v5277 = vpack.c.b16 %v5235, %v5233
      %v5278 = vpack.c.b16 %v5238, %v5236
      %v5279 = vpack.c.b16 %v5239, %v5237
      %v5280 = vpack.c.b16 %v5242, %v5240
      %v5281 = vpack.c.b16 %v5243, %v5241
      %v5282 = vpack.c.b16 %v5246, %v5244
      %v5283 = vpack.c.b16 %v5247, %v5245
      %v5284 = vpack.c.b16 %v5250, %v5248
      %v5285 = vpack.c.b16 %v5251, %v5249
      %v5286 = vpack.c.b16 %v5254, %v5252
      %v5287 = vpack.c.b16 %v5255, %v5253
      %v5288 = vpack.c.b16 %v5258, %v5256
      %v5289 = vpack.c.b16 %v5259, %v5257
      %v5290 = vpack.c.b16 %v5262, %v5260
      %v5291 = vpack.c.b16 %v5263, %v5261
      %v5292 = vpack.c.b16 %v5266, %v5264
      %v5293 = vpack.c.b16 %v5267, %v5265
      %v5294 = vpack.c.b16 %v5270, %v5268
      %v5295 = vpack.c.b16 %v5271, %v5269
      %v5296 = vpack.c.b16 %v5272, %v5272
      %v5297 = vpack.c.b16 %v5273, %v5273
      %v5354 = vunpack.c.l.b16 %v5173
      %v5355 = vunpack.c.h.b16 %v5173
      %v5356 = vunpack.c.l.b16 %v5174
      %v5357 = vunpack.c.h.b16 %v5174
      %v5358 = vunpack.c.l.b16 %v5175
      %v5359 = vunpack.c.h.b16 %v5175
      %v5360 = vunpack.c.l.b16 %v5176
      %v5361 = vunpack.c.h.b16 %v5176
      %v5362 = vunpack.c.l.b16 %v5177
      %v5363 = vunpack.c.h.b16 %v5177
      %v5364 = vunpack.c.l.b16 %v5178
      %v5365 = vunpack.c.h.b16 %v5178
      %v5366 = vunpack.c.l.b16 %v5179
      %v5367 = vunpack.c.h.b16 %v5179
      %v5368 = vunpack.c.l.b16 %v5180
      %v5369 = vunpack.c.h.b16 %v5180
      %v5370 = vunpack.c.l.b16 %v5181
      %v5371 = vunpack.c.h.b16 %v5181
      %v5372 = vunpack.c.l.b16 %v5182
      %v5373 = vunpack.c.h.b16 %v5182
      %v5374 = vunpack.c.l.b16 %v5183
      %v5375 = vunpack.c.h.b16 %v5183
      %v5376 = vunpack.c.l.b16 %v5184
      %v5377 = vunpack.c.h.b16 %v5184
      %v5378 = vunpack.c.l.b16 %v5185
      %v5379 = vunpack.c.h.b16 %v5185
      %v5380 = vunpack.c.l.b16 %v5186
      %v5381 = vunpack.c.h.b16 %v5186
      %v5382 = vunpack.c.l.b16 %v5187
      %v5383 = vunpack.c.h.b16 %v5187
      %v5384 = vunpack.c.l.b16 %v5188
      %v5385 = vunpack.c.h.b16 %v5188
      %v5386 = vunpack.c.l.b16 %v5189
      %v5387 = vunpack.c.h.b16 %v5189
      %v5388 = vunpack.c.l.b16 %v5190
      %v5389 = vunpack.c.h.b16 %v5190
      %v5390 = vunpack.c.l.b16 %v5191
      %v5391 = vunpack.c.h.b16 %v5191
      %v5392 = vunpack.c.l.b16 %v5192
      %v5393 = vunpack.c.h.b16 %v5192
      %v5394 = vunpack.c.l.b16 %v5193
      %v5395 = vunpack.c.h.b16 %v5193
      %v5396 = vunpack.c.l.b16 %v5194
      %v5397 = vunpack.c.h.b16 %v5194
      %v5398 = vunpack.c.l.b16 %v5195
      %v5399 = vunpack.c.h.b16 %v5195
      %v5400 = vunpack.c.l.b16 %v5196
      %v5401 = vunpack.c.h.b16 %v5196
      %v5402 = vunpack.c.l.b16 %v5197
      %v5403 = vunpack.c.h.b16 %v5197
      %v5404 = vunpack.c.l.b16 %v5198
      %v5405 = vunpack.c.h.b16 %v5198
      %v5406 = vunpack.c.l.b16 %v5199
      %v5407 = vunpack.c.h.b16 %v5199
      %v5408 = vunpack.c.l.b16 %v5200
      %v5409 = vunpack.c.h.b16 %v5200
      %v5410 = vunpack.c.l.b16 %v5201
      %v5411 = vunpack.c.h.b16 %v5201
      %v5412 = vunpack.c.l.b16 %v5202
      %v5413 = vunpack.c.h.b16 %v5202
      %v5414 = vunpack.c.l.b16 %v5203
      %v5415 = vunpack.c.h.b16 %v5203
      %v5416 = vunpack.c.l.b16 %v5204
      %v5417 = vunpack.c.h.b16 %v5204
      %v5418 = vpack.c.b16 %v5356, %v5354
      %v5419 = vpack.c.b16 %v5357, %v5355
      %v5420 = vpack.c.b16 %v5360, %v5358
      %v5421 = vpack.c.b16 %v5361, %v5359
      %v5422 = vpack.c.b16 %v5364, %v5362
      %v5423 = vpack.c.b16 %v5365, %v5363
      %v5424 = vpack.c.b16 %v5368, %v5366
      %v5425 = vpack.c.b16 %v5369, %v5367
      %v5426 = vpack.c.b16 %v5372, %v5370
      %v5427 = vpack.c.b16 %v5373, %v5371
      %v5428 = vpack.c.b16 %v5376, %v5374
      %v5429 = vpack.c.b16 %v5377, %v5375
      %v5430 = vpack.c.b16 %v5380, %v5378
      %v5431 = vpack.c.b16 %v5381, %v5379
      %v5432 = vpack.c.b16 %v5384, %v5382
      %v5433 = vpack.c.b16 %v5385, %v5383
      %v5434 = vpack.c.b16 %v5388, %v5386
      %v5435 = vpack.c.b16 %v5389, %v5387
      %v5436 = vpack.c.b16 %v5392, %v5390
      %v5437 = vpack.c.b16 %v5393, %v5391
      %v5438 = vpack.c.b16 %v5396, %v5394
      %v5439 = vpack.c.b16 %v5397, %v5395
      %v5440 = vpack.c.b16 %v5400, %v5398
      %v5441 = vpack.c.b16 %v5401, %v5399
      %v5442 = vpack.c.b16 %v5404, %v5402
      %v5443 = vpack.c.b16 %v5405, %v5403
      %v5444 = vpack.c.b16 %v5408, %v5406
      %v5445 = vpack.c.b16 %v5409, %v5407
      %v5446 = vpack.c.b16 %v5412, %v5410
      %v5447 = vpack.c.b16 %v5413, %v5411
      %v5448 = vpack.c.b16 %v5416, %v5414
      %v5449 = vpack.c.b16 %v5417, %v5415
      %5482 = vmatprep.subr.bf16.mxu0 %v5419
      %5483 = vmatpush1.bf16.msra.mxu0 %v5418
      %5484 = vmatprep.subr.bf16.mxu0 %v5421
      %5485 = vmatpush1.bf16.msra.mxu0 %v5420
      %5486 = vmatprep.subr.bf16.mxu0 %v5423
      %5487 = vmatpush1.bf16.msra.mxu0 %v5422
      %5488 = vmatprep.subr.bf16.mxu0 %v5425
      %5489 = vmatpush1.bf16.msra.mxu0 %v5424
      %5490 = vmatprep.subr.bf16.mxu0 %v5427
      %5491 = vmatpush1.bf16.msra.mxu0 %v5426
      %5492 = vmatprep.subr.bf16.mxu0 %v5429
      %5493 = vmatpush1.bf16.msra.mxu0 %v5428
      %5494 = vmatprep.subr.bf16.mxu0 %v5431
      %5495 = vmatpush1.bf16.msra.mxu0 %v5430
      %5496 = vmatprep.subr.bf16.mxu0 %v5433
      %5497 = vmatpush1.bf16.msra.mxu0 %v5432
      %5498 = vmatprep.subr.bf16.mxu0 %v5435
      %5499 = vmatpush1.bf16.msra.mxu0 %v5434
      %5500 = vmatprep.subr.bf16.mxu0 %v5437
      %5501 = vmatpush1.bf16.msra.mxu0 %v5436
      %5502 = vmatprep.subr.bf16.mxu0 %v5439
      %5503 = vmatpush1.bf16.msra.mxu0 %v5438
      %5504 = vmatprep.subr.bf16.mxu0 %v5441
      %5505 = vmatpush1.bf16.msra.mxu0 %v5440
      %5506 = vmatprep.subr.bf16.mxu0 %v5443
      %5507 = vmatpush1.bf16.msra.mxu0 %v5442
      %5508 = vmatprep.subr.bf16.mxu0 %v5445
      %5509 = vmatpush1.bf16.msra.mxu0 %v5444
      %5510 = vmatprep.subr.bf16.mxu0 %v5447
      %5511 = vmatpush1.bf16.msra.mxu0 %v5446
      %5512 = vmatprep.subr.bf16.mxu0 %v5449
      %5513 = vmatpush1.bf16.msra.mxu0 %v5448
      %5514 = vmatprep.mubr.bf16.mxu0 %v5275
      %5515 = vmatmul.mubr.bf16.gmra.mrb[0].mxu0 %v5274
      %v5516 = vpop.f32.mrb[0].mxu0
      %v5517 = vadd.f32 0.0, %v5516
      %v5518 = vpop.f32.mrb[0].mxu0
      %v5519 = vadd.f32 0.0, %v5518
      %v5520 = vpop.f32.mrb[0].mxu0
      %v5521 = vadd.f32 0.0, %v5520
      %v5522 = vpop.f32.mrb[0].mxu0
      %v5523 = vadd.f32 0.0, %v5522
      %5524 = vmatprep.mubr.bf16.mxu0 %v5277
      %5525 = vmatmul.mubr.bf16.gmra.mrb[0].mxu0 %v5276
      %v5526 = vpop.f32.mrb[0].mxu0
      %v5527 = vadd.f32 0.0, %v5526
      %v5528 = vpop.f32.mrb[0].mxu0
      %v5529 = vadd.f32 0.0, %v5528
      %v5530 = vpop.f32.mrb[0].mxu0
      %v5531 = vadd.f32 0.0, %v5530
      %v5532 = vpop.f32.mrb[0].mxu0
      %v5533 = vadd.f32 0.0, %v5532
      %5534 = vmatprep.mubr.bf16.mxu0 %v5279
      %5535 = vmatmul.mubr.bf16.gmra.mrb[0].mxu0 %v5278
      %v5536 = vpop.f32.mrb[0].mxu0
      %v5537 = vadd.f32 0.0, %v5536
      %v5538 = vpop.f32.mrb[0].mxu0
      %v5539 = vadd.f32 0.0, %v5538
      %v5540 = vpop.f32.mrb[0].mxu0
      %v5541 = vadd.f32 0.0, %v5540
      %v5542 = vpop.f32.mrb[0].mxu0
      %v5543 = vadd.f32 0.0, %v5542
      %5544 = vmatprep.mubr.bf16.mxu0 %v5281
      %5545 = vmatmul.mubr.bf16.gmra.mrb[0].mxu0 %v5280
      %v5546 = vpop.f32.mrb[0].mxu0
      %v5547 = vadd.f32 0.0, %v5546
      %v5548 = vpop.f32.mrb[0].mxu0
      %v5549 = vadd.f32 0.0, %v5548
      %v5550 = vpop.f32.mrb[0].mxu0
      %v5551 = vadd.f32 0.0, %v5550
      %v5552 = vpop.f32.mrb[0].mxu0
      %v5553 = vadd.f32 0.0, %v5552
      %5554 = vmatprep.mubr.bf16.mxu0 %v5283
      %5555 = vmatmul.mubr.bf16.gmra.mrb[0].mxu0 %v5282
      %v5556 = vpop.f32.mrb[0].mxu0
      %v5557 = vadd.f32 0.0, %v5556
      %v5558 = vpop.f32.mrb[0].mxu0
      %v5559 = vadd.f32 0.0, %v5558
      %v5560 = vpop.f32.mrb[0].mxu0
      %v5561 = vadd.f32 0.0, %v5560
      %v5562 = vpop.f32.mrb[0].mxu0
      %v5563 = vadd.f32 0.0, %v5562
      %5564 = vmatprep.mubr.bf16.mxu0 %v5285
      %5565 = vmatmul.mubr.bf16.gmra.mrb[0].mxu0 %v5284
      %v5566 = vpop.f32.mrb[0].mxu0
      %v5567 = vadd.f32 0.0, %v5566
      %v5568 = vpop.f32.mrb[0].mxu0
      %v5569 = vadd.f32 0.0, %v5568
      %v5570 = vpop.f32.mrb[0].mxu0
      %v5571 = vadd.f32 0.0, %v5570
      %v5572 = vpop.f32.mrb[0].mxu0
      %v5573 = vadd.f32 0.0, %v5572
      %5574 = vmatprep.mubr.bf16.mxu0 %v5287
      %5575 = vmatmul.mubr.bf16.gmra.mrb[0].mxu0 %v5286
      %v5576 = vpop.f32.mrb[0].mxu0
      %v5577 = vadd.f32 0.0, %v5576
      %v5578 = vpop.f32.mrb[0].mxu0
      %v5579 = vadd.f32 0.0, %v5578
      %v5580 = vpop.f32.mrb[0].mxu0
      %v5581 = vadd.f32 0.0, %v5580
      %v5582 = vpop.f32.mrb[0].mxu0
      %v5583 = vadd.f32 0.0, %v5582
      %5584 = vmatprep.mubr.bf16.mxu0 %v5289
      %5585 = vmatmul.mubr.bf16.gmra.mrb[0].mxu0 %v5288
      %v5586 = vpop.f32.mrb[0].mxu0
      %v5587 = vadd.f32 0.0, %v5586
      %v5588 = vpop.f32.mrb[0].mxu0
      %v5589 = vadd.f32 0.0, %v5588
      %v5590 = vpop.f32.mrb[0].mxu0
      %v5591 = vadd.f32 0.0, %v5590
      %v5592 = vpop.f32.mrb[0].mxu0
      %v5593 = vadd.f32 0.0, %v5592
      %5594 = vmatprep.mubr.bf16.mxu0 %v5291
      %5595 = vmatmul.mubr.bf16.gmra.mrb[0].mxu0 %v5290
      %v5596 = vpop.f32.mrb[0].mxu0
      %v5597 = vadd.f32 0.0, %v5596
      %v5598 = vpop.f32.mrb[0].mxu0
      %v5599 = vadd.f32 0.0, %v5598
      %v5600 = vpop.f32.mrb[0].mxu0
      %v5601 = vadd.f32 0.0, %v5600
      %v5602 = vpop.f32.mrb[0].mxu0
      %v5603 = vadd.f32 0.0, %v5602
      %5604 = vmatprep.mubr.bf16.mxu0 %v5293
      %5605 = vmatmul.mubr.bf16.gmra.mrb[0].mxu0 %v5292
      %v5606 = vpop.f32.mrb[0].mxu0
      %v5607 = vadd.f32 0.0, %v5606
      %v5608 = vpop.f32.mrb[0].mxu0
      %v5609 = vadd.f32 0.0, %v5608
      %v5610 = vpop.f32.mrb[0].mxu0
      %v5611 = vadd.f32 0.0, %v5610
      %v5612 = vpop.f32.mrb[0].mxu0
      %v5613 = vadd.f32 0.0, %v5612
      %5614 = vmatprep.mubr.bf16.mxu0 %v5295
      %5615 = vmatmul.mubr.bf16.gmra.mrb[0].mxu0 %v5294
      %v5616 = vpop.f32.mrb[0].mxu0
      %v5617 = vadd.f32 0.0, %v5616
      %v5618 = vpop.f32.mrb[0].mxu0
      %v5619 = vadd.f32 0.0, %v5618
      %v5620 = vpop.f32.mrb[0].mxu0
      %v5621 = vadd.f32 0.0, %v5620
      %v5622 = vpop.f32.mrb[0].mxu0
      %v5623 = vadd.f32 0.0, %v5622
      %5624 = vmatprep.mubr.bf16.mxu0 %v5297
      %5625 = vmatmul.mubr.bf16.gmra.mrb[0].mxu0 %v5296
      %v5626 = vpop.f32.mrb[0].mxu0
      %v5627 = vadd.f32 0.0, %v5626
      %v5628 = vpop.f32.mrb[0].mxu0
      %v5629 = vadd.f32 0.0, %v5628
      %v5630 = vpop.f32.mrb[0].mxu0
      %v5631 = vpop.f32.mrb[0].mxu0
      %5632 = vdwg.mxu0
      %v5633 = vadd.f32 %v5103, %v5517
      %v5634 = vadd.f32 %v5104, %v5519
      %v5635 = vadd.f32 %v5105, %v5521
      %v5636 = vadd.f32 %v5106, %v5523
      %v5637 = vadd.f32 %v5107, %v5527
      %v5638 = vadd.f32 %v5108, %v5529
      %v5639 = vadd.f32 %v5109, %v5531
      %v5640 = vadd.f32 %v5110, %v5533
      %v5641 = vadd.f32 %v5111, %v5537
      %v5642 = vadd.f32 %v5112, %v5539
      %v5643 = vadd.f32 %v5113, %v5541
      %v5644 = vadd.f32 %v5114, %v5543
      %v5645 = vadd.f32 %v5115, %v5547
      %v5646 = vadd.f32 %v5116, %v5549
      %v5647 = vadd.f32 %v5117, %v5551
      %v5648 = vadd.f32 %v5118, %v5553
      %v5649 = vadd.f32 %v5119, %v5557
      %v5650 = vadd.f32 %v5120, %v5559
      %v5651 = vadd.f32 %v5121, %v5561
      %v5652 = vadd.f32 %v5122, %v5563
      %v5653 = vadd.f32 %v5123, %v5567
      %v5654 = vadd.f32 %v5124, %v5569
      %v5655 = vadd.f32 %v5125, %v5571
      %v5656 = vadd.f32 %v5126, %v5573
      %v5657 = vadd.f32 %v5127, %v5577
      %v5658 = vadd.f32 %v5128, %v5579
      %v5659 = vadd.f32 %v5129, %v5581
      %v5660 = vadd.f32 %v5130, %v5583
      %v5661 = vadd.f32 %v5131, %v5587
      %v5662 = vadd.f32 %v5132, %v5589
      %v5663 = vadd.f32 %v5133, %v5591
      %v5664 = vadd.f32 %v5134, %v5593
      %v5665 = vadd.f32 %v5135, %v5597
      %v5666 = vadd.f32 %v5136, %v5599
      %v5667 = vadd.f32 %v5137, %v5601
      %v5668 = vadd.f32 %v5138, %v5603
      %v5669 = vadd.f32 %v5139, %v5607
      %v5670 = vadd.f32 %v5140, %v5609
      %v5671 = vadd.f32 %v5141, %v5611
      %v5672 = vadd.f32 %v5142, %v5613
      %v5673 = vadd.f32 %v5143, %v5617
      %v5674 = vadd.f32 %v5144, %v5619
      %v5675 = vadd.f32 %v5145, %v5621
      %v5676 = vadd.f32 %v5146, %v5623
      %v5677 = vadd.f32 %v5147, %v5627
      %v5678 = vadd.f32 %v5148, %v5629
      %v5679 = vld [vmem:[%s4] sm:$0x3]
      %v5681 = vlaneseq
      %v5682 = vshrl.u32 %v5681, 7
      %v5683 = vsub.s32 0, %v5682
      %v5684 = vrot.slane %v5679, %v5683
      %v5685 = vlaneseq
      %v5686 = vshrl.u32 %v5685, 7
      %v5687 = vsub.s32 1, %v5686
      %v5688 = vrot.slane %v5679, %v5687
      %v5691 = vadd.f32 %v5633, %v5684
      %v5692 = vadd.f32 %v5634, %v5688
      %v5693 = vadd.f32 %v5635, %v5684
      %v5694 = vadd.f32 %v5636, %v5688
      %v5695 = vadd.f32 %v5637, %v5684
      %v5696 = vadd.f32 %v5638, %v5688
      %v5697 = vadd.f32 %v5639, %v5684
      %v5698 = vadd.f32 %v5640, %v5688
      %v5699 = vadd.f32 %v5641, %v5684
      %v5700 = vadd.f32 %v5642, %v5688
      %v5701 = vadd.f32 %v5643, %v5684
      %v5702 = vadd.f32 %v5644, %v5688
      %v5703 = vadd.f32 %v5645, %v5684
      %v5704 = vadd.f32 %v5646, %v5688
      %v5705 = vadd.f32 %v5647, %v5684
      %v5706 = vadd.f32 %v5648, %v5688
      %v5707 = vadd.f32 %v5649, %v5684
      %v5708 = vadd.f32 %v5650, %v5688
      %v5709 = vadd.f32 %v5651, %v5684
      %v5710 = vadd.f32 %v5652, %v5688
      %v5711 = vadd.f32 %v5653, %v5684
      %v5712 = vadd.f32 %v5654, %v5688
      %v5713 = vadd.f32 %v5655, %v5684
      %v5714 = vadd.f32 %v5656, %v5688
      %v5715 = vadd.f32 %v5657, %v5684
      %v5716 = vadd.f32 %v5658, %v5688
      %v5717 = vadd.f32 %v5659, %v5684
      %v5718 = vadd.f32 %v5660, %v5688
      %v5719 = vadd.f32 %v5661, %v5684
      %v5720 = vadd.f32 %v5662, %v5688
      %v5721 = vadd.f32 %v5663, %v5684
      %v5722 = vadd.f32 %v5664, %v5688
      %v5723 = vadd.f32 %v5665, %v5684
      %v5724 = vadd.f32 %v5666, %v5688
      %v5725 = vadd.f32 %v5667, %v5684
      %v5726 = vadd.f32 %v5668, %v5688
      %v5727 = vadd.f32 %v5669, %v5684
      %v5728 = vadd.f32 %v5670, %v5688
      %v5729 = vadd.f32 %v5671, %v5684
      %v5730 = vadd.f32 %v5672, %v5688
      %v5731 = vadd.f32 %v5673, %v5684
      %v5732 = vadd.f32 %v5674, %v5688
      %v5733 = vadd.f32 %v5675, %v5684
      %v5734 = vadd.f32 %v5676, %v5688
      %v5735 = vadd.f32 %v5677, %v5684
      %v5736 = vadd.f32 %v5678, %v5688
      %v5737 = vmax.f32 %v5691, %v5695
      %v5738 = vmax.f32 %v5692, %v5696
      %v5739 = vmax.f32 %v5693, %v5697
      %v5740 = vmax.f32 %v5694, %v5698
      %v5741 = vmax.f32 %v5695, %v5699
      %v5742 = vmax.f32 %v5696, %v5700
      %v5743 = vmax.f32 %v5697, %v5701
      %v5744 = vmax.f32 %v5698, %v5702
      %v5745 = vmax.f32 %v5699, %v5703
      %v5746 = vmax.f32 %v5700, %v5704
      %v5747 = vmax.f32 %v5701, %v5705
      %v5748 = vmax.f32 %v5702, %v5706
      %v5749 = vmax.f32 %v5703, %v5707
      %v5750 = vmax.f32 %v5704, %v5708
      %v5751 = vmax.f32 %v5705, %v5709
      %v5752 = vmax.f32 %v5706, %v5710
      %v5753 = vmax.f32 %v5707, %v5711
      %v5754 = vmax.f32 %v5708, %v5712
      %v5755 = vmax.f32 %v5709, %v5713
      %v5756 = vmax.f32 %v5710, %v5714
      %v5757 = vmax.f32 %v5711, %v5715
      %v5758 = vmax.f32 %v5712, %v5716
      %v5759 = vmax.f32 %v5713, %v5717
      %v5760 = vmax.f32 %v5714, %v5718
      %v5761 = vmax.f32 %v5715, %v5719
      %v5762 = vmax.f32 %v5716, %v5720
      %v5763 = vmax.f32 %v5717, %v5721
      %v5764 = vmax.f32 %v5718, %v5722
      %v5765 = vmax.f32 %v5719, %v5723
      %v5766 = vmax.f32 %v5720, %v5724
      %v5767 = vmax.f32 %v5721, %v5725
      %v5768 = vmax.f32 %v5722, %v5726
      %v5769 = vmax.f32 %v5723, %v5727
      %v5770 = vmax.f32 %v5724, %v5728
      %v5771 = vmax.f32 %v5725, %v5729
      %v5772 = vmax.f32 %v5726, %v5730
      %v5773 = vmax.f32 %v5727, %v5731
      %v5774 = vmax.f32 %v5728, %v5732
      %v5775 = vmax.f32 %v5729, %v5733
      %v5776 = vmax.f32 %v5730, %v5734
      %v5777 = vmax.f32 %v5731, %v5735
      %v5778 = vmax.f32 %v5732, %v5736
      %5779 = vrot.lane.b32.xlu0 %v5737, 112
      %v5780 = vpop.permute.xlu0 %5779
      %5781 = vrot.lane.b32.xlu0 %v5739, 112
      %v5782 = vpop.permute.xlu0 %5781
      %5783 = vrot.lane.b32.xlu0 %v5741, 112
      %v5784 = vpop.permute.xlu0 %5783
      %5785 = vrot.lane.b32.xlu0 %v5743, 112
      %v5786 = vpop.permute.xlu0 %5785
      %5787 = vrot.lane.b32.xlu0 %v5745, 112
      %v5788 = vpop.permute.xlu0 %5787
      %5789 = vrot.lane.b32.xlu0 %v5747, 112
      %v5790 = vpop.permute.xlu0 %5789
      %5791 = vrot.lane.b32.xlu0 %v5749, 112
      %v5792 = vpop.permute.xlu0 %5791
      %5793 = vrot.lane.b32.xlu0 %v5751, 112
      %v5794 = vpop.permute.xlu0 %5793
      %5795 = vrot.lane.b32.xlu0 %v5753, 112
      %v5796 = vpop.permute.xlu0 %5795
      %5797 = vrot.lane.b32.xlu0 %v5755, 112
      %v5798 = vpop.permute.xlu0 %5797
      %5799 = vrot.lane.b32.xlu0 %v5757, 112
      %v5800 = vpop.permute.xlu0 %5799
      %5801 = vrot.lane.b32.xlu0 %v5759, 112
      %v5802 = vpop.permute.xlu0 %5801
      %5803 = vrot.lane.b32.xlu0 %v5761, 112
      %v5804 = vpop.permute.xlu0 %5803
      %5805 = vrot.lane.b32.xlu0 %v5763, 112
      %v5806 = vpop.permute.xlu0 %5805
      %5807 = vrot.lane.b32.xlu0 %v5765, 112
      %v5808 = vpop.permute.xlu0 %5807
      %5809 = vrot.lane.b32.xlu0 %v5767, 112
      %v5810 = vpop.permute.xlu0 %5809
      %5811 = vrot.lane.b32.xlu0 %v5769, 112
      %v5812 = vpop.permute.xlu0 %5811
      %5813 = vrot.lane.b32.xlu0 %v5771, 112
      %v5814 = vpop.permute.xlu0 %5813
      %5815 = vrot.lane.b32.xlu0 %v5773, 112
      %v5816 = vpop.permute.xlu0 %5815
      %5817 = vrot.lane.b32.xlu0 %v5775, 112
      %v5818 = vpop.permute.xlu0 %5817
      %5819 = vrot.lane.b32.xlu0 %v5777, 112
      %v5820 = vpop.permute.xlu0 %5819
      %5821 = vrot.lane.b32.xlu0 %v5738, 112
      %v5822 = vpop.permute.xlu0 %5821
      %5823 = vrot.lane.b32.xlu0 %v5740, 112
      %v5824 = vpop.permute.xlu0 %5823
      %5825 = vrot.lane.b32.xlu0 %v5742, 112
      %v5826 = vpop.permute.xlu0 %5825
      %5827 = vrot.lane.b32.xlu0 %v5744, 112
      %v5828 = vpop.permute.xlu0 %5827
      %5829 = vrot.lane.b32.xlu0 %v5746, 112
      %v5830 = vpop.permute.xlu0 %5829
      %5831 = vrot.lane.b32.xlu0 %v5748, 112
      %v5832 = vpop.permute.xlu0 %5831
      %5833 = vrot.lane.b32.xlu0 %v5750, 112
      %v5834 = vpop.permute.xlu0 %5833
      %5835 = vrot.lane.b32.xlu0 %v5752, 112
      %v5836 = vpop.permute.xlu0 %5835
      %5837 = vrot.lane.b32.xlu0 %v5754, 112
      %v5838 = vpop.permute.xlu0 %5837
      %5839 = vrot.lane.b32.xlu0 %v5756, 112
      %v5840 = vpop.permute.xlu0 %5839
      %5841 = vrot.lane.b32.xlu0 %v5758, 112
      %v5842 = vpop.permute.xlu0 %5841
      %5843 = vrot.lane.b32.xlu0 %v5760, 112
      %v5844 = vpop.permute.xlu0 %5843
      %5845 = vrot.lane.b32.xlu0 %v5762, 112
      %v5846 = vpop.permute.xlu0 %5845
      %5847 = vrot.lane.b32.xlu0 %v5764, 112
      %v5848 = vpop.permute.xlu0 %5847
      %5849 = vrot.lane.b32.xlu0 %v5766, 112
      %v5850 = vpop.permute.xlu0 %5849
      %5851 = vrot.lane.b32.xlu0 %v5768, 112
      %v5852 = vpop.permute.xlu0 %5851
      %5853 = vrot.lane.b32.xlu0 %v5770, 112
      %v5854 = vpop.permute.xlu0 %5853
      %5855 = vrot.lane.b32.xlu0 %v5772, 112
      %v5856 = vpop.permute.xlu0 %5855
      %5857 = vrot.lane.b32.xlu0 %v5774, 112
      %v5858 = vpop.permute.xlu0 %5857
      %5859 = vrot.lane.b32.xlu0 %v5776, 112
      %v5860 = vpop.permute.xlu0 %5859
      %5861 = vrot.lane.b32.xlu0 %v5778, 112
      %v5862 = vpop.permute.xlu0 %5861
      %vm5863 = vcmp.lt.s32.totalorder %v2839, 112
      %v5864 = vsel %vm5863, %v5780, %v5822
      %v5865 = vsel %vm5863, %v5782, %v5824
      %v5866 = vsel %vm5863, %v5784, %v5826
      %v5867 = vsel %vm5863, %v5786, %v5828
      %v5868 = vsel %vm5863, %v5788, %v5830
      %v5869 = vsel %vm5863, %v5790, %v5832
      %v5870 = vsel %vm5863, %v5792, %v5834
      %v5871 = vsel %vm5863, %v5794, %v5836
      %v5872 = vsel %vm5863, %v5796, %v5838
      %v5873 = vsel %vm5863, %v5798, %v5840
      %v5874 = vsel %vm5863, %v5800, %v5842
      %v5875 = vsel %vm5863, %v5802, %v5844
      %v5876 = vsel %vm5863, %v5804, %v5846
      %v5877 = vsel %vm5863, %v5806, %v5848
      %v5878 = vsel %vm5863, %v5808, %v5850
      %v5879 = vsel %vm5863, %v5810, %v5852
      %v5880 = vsel %vm5863, %v5812, %v5854
      %v5881 = vsel %vm5863, %v5814, %v5856
      %v5882 = vsel %vm5863, %v5816, %v5858
      %v5883 = vsel %vm5863, %v5818, %v5860
      %v5884 = vsel %vm5863, %v5820, %v5862
      %v5885 = vsel %vm5863, %v5822, %v5780
      %v5886 = vsel %vm5863, %v5824, %v5782
      %v5887 = vsel %vm5863, %v5826, %v5784
      %v5888 = vsel %vm5863, %v5828, %v5786
      %v5889 = vsel %vm5863, %v5830, %v5788
      %v5890 = vsel %vm5863, %v5832, %v5790
      %v5891 = vsel %vm5863, %v5834, %v5792
      %v5892 = vsel %vm5863, %v5836, %v5794
      %v5893 = vsel %vm5863, %v5838, %v5796
      %v5894 = vsel %vm5863, %v5840, %v5798
      %v5895 = vsel %vm5863, %v5842, %v5800
      %v5896 = vsel %vm5863, %v5844, %v5802
      %v5897 = vsel %vm5863, %v5846, %v5804
      %v5898 = vsel %vm5863, %v5848, %v5806
      %v5899 = vsel %vm5863, %v5850, %v5808
      %v5900 = vsel %vm5863, %v5852, %v5810
      %v5901 = vsel %vm5863, %v5854, %v5812
      %v5902 = vsel %vm5863, %v5856, %v5814
      %v5903 = vsel %vm5863, %v5858, %v5816
      %v5904 = vsel %vm5863, %v5860, %v5818
      %v5905 = vsel %vm5863, %v5862, %v5820
      %v5906 = vmax.f32 %v5737, %v5864
      %v5907 = vmax.f32 %v5738, %v5885
      %v5908 = vmax.f32 %v5739, %v5865
      %v5909 = vmax.f32 %v5740, %v5886
      %v5910 = vmax.f32 %v5741, %v5866
      %v5911 = vmax.f32 %v5742, %v5887
      %v5912 = vmax.f32 %v5743, %v5867
      %v5913 = vmax.f32 %v5744, %v5888
      %v5914 = vmax.f32 %v5745, %v5868
      %v5915 = vmax.f32 %v5746, %v5889
      %v5916 = vmax.f32 %v5747, %v5869
      %v5917 = vmax.f32 %v5748, %v5890
      %v5918 = vmax.f32 %v5749, %v5870
      %v5919 = vmax.f32 %v5750, %v5891
      %v5920 = vmax.f32 %v5751, %v5871
      %v5921 = vmax.f32 %v5752, %v5892
      %v5922 = vmax.f32 %v5753, %v5872
      %v5923 = vmax.f32 %v5754, %v5893
      %v5924 = vmax.f32 %v5755, %v5873
      %v5925 = vmax.f32 %v5756, %v5894
      %v5926 = vmax.f32 %v5757, %v5874
      %v5927 = vmax.f32 %v5758, %v5895
      %v5928 = vmax.f32 %v5759, %v5875
      %v5929 = vmax.f32 %v5760, %v5896
      %v5930 = vmax.f32 %v5761, %v5876
      %v5931 = vmax.f32 %v5762, %v5897
      %v5932 = vmax.f32 %v5763, %v5877
      %v5933 = vmax.f32 %v5764, %v5898
      %v5934 = vmax.f32 %v5765, %v5878
      %v5935 = vmax.f32 %v5766, %v5899
      %v5936 = vmax.f32 %v5767, %v5879
      %v5937 = vmax.f32 %v5768, %v5900
      %v5938 = vmax.f32 %v5769, %v5880
      %v5939 = vmax.f32 %v5770, %v5901
      %v5940 = vmax.f32 %v5771, %v5881
      %v5941 = vmax.f32 %v5772, %v5902
      %v5942 = vmax.f32 %v5773, %v5882
      %v5943 = vmax.f32 %v5774, %v5903
      %v5944 = vmax.f32 %v5775, %v5883
      %v5945 = vmax.f32 %v5776, %v5904
      %v5946 = vmax.f32 %v5777, %v5884
      %v5947 = vmax.f32 %v5778, %v5905
      %v5948 = vmax.f32 %v5906, 0.0
      %v5949 = vmax.f32 %v5907, 0.0
      %v5950 = vmax.f32 %v5908, 0.0
      %v5951 = vmax.f32 %v5909, 0.0
      %v5952 = vmax.f32 %v5910, 0.0
      %v5953 = vmax.f32 %v5911, 0.0
      %v5954 = vmax.f32 %v5912, 0.0
      %v5955 = vmax.f32 %v5913, 0.0
      %v5956 = vmax.f32 %v5914, 0.0
      %v5957 = vmax.f32 %v5915, 0.0
      %v5958 = vmax.f32 %v5916, 0.0
      %v5959 = vmax.f32 %v5917, 0.0
      %v5960 = vmax.f32 %v5918, 0.0
      %v5961 = vmax.f32 %v5919, 0.0
      %v5962 = vmax.f32 %v5920, 0.0
      %v5963 = vmax.f32 %v5921, 0.0
      %v5964 = vmax.f32 %v5922, 0.0
      %v5965 = vmax.f32 %v5923, 0.0
      %v5966 = vmax.f32 %v5924, 0.0
      %v5967 = vmax.f32 %v5925, 0.0
      %v5968 = vmax.f32 %v5926, 0.0
      %v5969 = vmax.f32 %v5927, 0.0
      %v5970 = vmax.f32 %v5928, 0.0
      %v5971 = vmax.f32 %v5929, 0.0
      %v5972 = vmax.f32 %v5930, 0.0
      %v5973 = vmax.f32 %v5931, 0.0
      %v5974 = vmax.f32 %v5932, 0.0
      %v5975 = vmax.f32 %v5933, 0.0
      %v5976 = vmax.f32 %v5934, 0.0
      %v5977 = vmax.f32 %v5935, 0.0
      %v5978 = vmax.f32 %v5936, 0.0
      %v5979 = vmax.f32 %v5937, 0.0
      %v5980 = vmax.f32 %v5938, 0.0
      %v5981 = vmax.f32 %v5939, 0.0
      %v5982 = vmax.f32 %v5940, 0.0
      %v5983 = vmax.f32 %v5941, 0.0
      %v5984 = vmax.f32 %v5942, 0.0
      %v5985 = vmax.f32 %v5943, 0.0
      %v5986 = vmax.f32 %v5944, 0.0
      %v5987 = vmax.f32 %v5945, 0.0
      %v5988 = vmax.f32 %v5946, 0.0
      %v5989 = vmax.f32 %v5947, 0.0
      %v5990 = vpack.c.bf16 %v5950, %v5948
      %v5991 = vpack.c.bf16 %v5951, %v5949
      %v5992 = vpack.c.bf16 %v5954, %v5952
      %v5993 = vpack.c.bf16 %v5955, %v5953
      %v5994 = vpack.c.bf16 %v5958, %v5956
      %v5995 = vpack.c.bf16 %v5959, %v5957
      %v5996 = vpack.c.bf16 %v5962, %v5960
      %v5997 = vpack.c.bf16 %v5963, %v5961
      %v5998 = vpack.c.bf16 %v5966, %v5964
      %v5999 = vpack.c.bf16 %v5967, %v5965
      %v6000 = vpack.c.bf16 %v5970, %v5968
      %v6001 = vpack.c.bf16 %v5971, %v5969
      %v6002 = vpack.c.bf16 %v5974, %v5972
      %v6003 = vpack.c.bf16 %v5975, %v5973
      %v6004 = vpack.c.bf16 %v5978, %v5976
      %v6005 = vpack.c.bf16 %v5979, %v5977
      %v6006 = vpack.c.bf16 %v5982, %v5980
      %v6007 = vpack.c.bf16 %v5983, %v5981
      %v6008 = vpack.c.bf16 %v5986, %v5984
      %v6009 = vpack.c.bf16 %v5987, %v5985
      %v6010 = vpack.c.bf16 %v5988, %v5988
      %v6011 = vpack.c.bf16 %v5989, %v5989
      %v6034 = vunpack.c.l.b16 %v5990
      %v6035 = vunpack.c.l.b16 %v5991
      %v6036 = vunpack.c.h.b16 %v5990
      %v6037 = vunpack.c.h.b16 %v5991
      %v6038 = vunpack.c.l.b16 %v5992
      %v6039 = vunpack.c.l.b16 %v5993
      %v6040 = vunpack.c.h.b16 %v5992
      %v6041 = vunpack.c.h.b16 %v5993
      %v6042 = vunpack.c.l.b16 %v5994
      %v6043 = vunpack.c.l.b16 %v5995
      %v6044 = vunpack.c.h.b16 %v5994
      %v6045 = vunpack.c.h.b16 %v5995
      %v6046 = vunpack.c.l.b16 %v5996
      %v6047 = vunpack.c.l.b16 %v5997
      %v6048 = vunpack.c.h.b16 %v5996
      %v6049 = vunpack.c.h.b16 %v5997
      %v6050 = vunpack.c.l.b16 %v5998
      %v6051 = vunpack.c.l.b16 %v5999
      %v6052 = vunpack.c.h.b16 %v5998
      %v6053 = vunpack.c.h.b16 %v5999
      %v6054 = vunpack.c.l.b16 %v6000
      %v6055 = vunpack.c.l.b16 %v6001
      %v6056 = vunpack.c.h.b16 %v6000
      %v6057 = vunpack.c.h.b16 %v6001
      %v6058 = vunpack.c.l.b16 %v6002
      %v6059 = vunpack.c.l.b16 %v6003
      %v6060 = vunpack.c.h.b16 %v6002
      %v6061 = vunpack.c.h.b16 %v6003
      %v6062 = vunpack.c.l.b16 %v6004
      %v6063 = vunpack.c.l.b16 %v6005
      %v6064 = vunpack.c.h.b16 %v6004
      %v6065 = vunpack.c.h.b16 %v6005
      %v6066 = vunpack.c.l.b16 %v6006
      %v6067 = vunpack.c.l.b16 %v6007
      %v6068 = vunpack.c.h.b16 %v6006
      %v6069 = vunpack.c.h.b16 %v6007
      %v6070 = vunpack.c.l.b16 %v6008
      %v6071 = vunpack.c.l.b16 %v6009
      %v6072 = vunpack.c.h.b16 %v6008
      %v6073 = vunpack.c.h.b16 %v6009
      %v6074 = vunpack.c.l.b16 %v6010
      %v6075 = vunpack.c.l.b16 %v6011
      %v6076 = vpack.c.b16 %v6035, %v6034
      %v6077 = vpack.c.b16 %v6037, %v6036
      %v6078 = vpack.c.b16 %v6039, %v6038
      %v6079 = vpack.c.b16 %v6041, %v6040
      %v6080 = vpack.c.b16 %v6043, %v6042
      %v6081 = vpack.c.b16 %v6045, %v6044
      %v6082 = vpack.c.b16 %v6047, %v6046
      %v6083 = vpack.c.b16 %v6049, %v6048
      %v6084 = vpack.c.b16 %v6051, %v6050
      %v6085 = vpack.c.b16 %v6053, %v6052
      %v6086 = vpack.c.b16 %v6055, %v6054
      %v6087 = vpack.c.b16 %v6057, %v6056
      %v6088 = vpack.c.b16 %v6059, %v6058
      %v6089 = vpack.c.b16 %v6061, %v6060
      %v6090 = vpack.c.b16 %v6063, %v6062
      %v6091 = vpack.c.b16 %v6065, %v6064
      %v6092 = vpack.c.b16 %v6067, %v6066
      %v6093 = vpack.c.b16 %v6069, %v6068
      %v6094 = vpack.c.b16 %v6071, %v6070
      %v6095 = vpack.c.b16 %v6073, %v6072
      %v6096 = vpack.c.b16 %v6075, %v6074
      %6118 = vst [vmem:[#allocation3] sm:$0xff] %v6076
      %6119 = vst [vmem:[#allocation3 + $0x8] sm:$0xff] %v6077
      %6120 = vst [vmem:[#allocation3 + $0x10] sm:$0xff] %v6078
      %6121 = vst [vmem:[#allocation3 + $0x18] sm:$0xff] %v6079
      %6122 = vst [vmem:[#allocation3 + $0x20] sm:$0xff] %v6080
      %6123 = vst [vmem:[#allocation3 + $0x28] sm:$0xff] %v6081
      %6124 = vst [vmem:[#allocation3 + $0x30] sm:$0xff] %v6082
      %6125 = vst [vmem:[#allocation3 + $0x38] sm:$0xff] %v6083
      %6126 = vst [vmem:[#allocation3 + $0x40] sm:$0xff] %v6084
      %6127 = vst [vmem:[#allocation3 + $0x48] sm:$0xff] %v6085
      %6128 = vst [vmem:[#allocation3 + $0x50] sm:$0xff] %v6086
      %6129 = vst [vmem:[#allocation3 + $0x58] sm:$0xff] %v6087
      %6130 = vst [vmem:[#allocation3 + $0x60] sm:$0xff] %v6088
      %6131 = vst [vmem:[#allocation3 + $0x68] sm:$0xff] %v6089
      %6132 = vst [vmem:[#allocation3 + $0x70] sm:$0xff] %v6090
      %6133 = vst [vmem:[#allocation3 + $0x78] sm:$0xff] %v6091
      %6134 = vst [vmem:[#allocation3 + $0x80] sm:$0xff] %v6092
      %6135 = vst [vmem:[#allocation3 + $0x88] sm:$0xff] %v6093
      %6136 = vst [vmem:[#allocation3 + $0x90] sm:$0xff] %v6094
      %6137 = vst [vmem:[#allocation3 + $0x98] sm:$0xff] %v6095
      %6138 = vst [vmem:[#allocation3 + $0xa0] sm:$0xff] %v6096
      %v6139 = vld [vmem:[#allocation3] sm:$0xff]
      %v6140 = vld [vmem:[#allocation3 + $0x20] sm:$0xff]
      %v6141 = vld [vmem:[#allocation3 + $0x40] sm:$0xff]
      %v6142 = vld [vmem:[#allocation3 + $0x60] sm:$0xff]
      %v6143 = vld [vmem:[#allocation3 + $0x80] sm:$0xff]
      %v6144 = vld [vmem:[#allocation3 + $0xa0] sm:$0xff]
      %v6145 = vld [vmem:[%s5] sm:$0xff]
      %v6146 = vld [vmem:[%s5 + $0x8] sm:$0xff]
      %v6147 = vld [vmem:[%s5 + $0x10] sm:$0xff]
      %v6148 = vld [vmem:[%s5 + $0x18] sm:$0xff]
      %v6149 = vld [vmem:[%s5 + $0x20] sm:$0xff]
      %v6150 = vld [vmem:[%s5 + $0x28] sm:$0xff]
      %v6151 = vld [vmem:[%s5 + $0x30] sm:$0xff]
      %v6152 = vld [vmem:[%s5 + $0x38] sm:$0xff]
      %v6153 = vld [vmem:[%s5 + $0x40] sm:$0xff]
      %v6154 = vld [vmem:[%s5 + $0x48] sm:$0xff]
      %v6155 = vld [vmem:[%s5 + $0x50] sm:$0xff]
      %v6156 = vld [vmem:[%s5 + $0x58] sm:$0xff]
      %v6157 = vld [vmem:[%s5 + $0x60] sm:$0xff]
      %v6158 = vld [vmem:[%s5 + $0x68] sm:$0xff]
      %v6159 = vld [vmem:[%s5 + $0x70] sm:$0xff]
      %v6160 = vld [vmem:[%s5 + $0x78] sm:$0xff]
      %v6161 = vld [vmem:[%s5 + $0x80] sm:$0xff]
      %v6162 = vld [vmem:[%s5 + $0x88] sm:$0xff]
      %v6163 = vld [vmem:[%s5 + $0x90] sm:$0xff]
      %v6164 = vld [vmem:[%s5 + $0x98] sm:$0xff]
      %v6165 = vld [vmem:[%s5 + $0xa0] sm:$0xff]
      %v6166 = vld [vmem:[%s5 + $0xa8] sm:$0xff]
      %v6167 = vld [vmem:[%s5 + $0xb0] sm:$0xff]
      %v6168 = vld [vmem:[%s5 + $0xb8] sm:$0xff]
      %v6169 = vld [vmem:[%s5 + $0xc0] sm:$0xff]
      %v6170 = vld [vmem:[%s5 + $0xc8] sm:$0xff]
      %v6171 = vld [vmem:[%s5 + $0xd0] sm:$0xff]
      %v6172 = vld [vmem:[%s5 + $0xd8] sm:$0xff]
      %v6173 = vld [vmem:[%s5 + $0xe0] sm:$0xff]
      %v6174 = vld [vmem:[%s5 + $0xe8] sm:$0xff]
      %v6175 = vld [vmem:[%s5 + $0xf0] sm:$0xff]
      %v6176 = vld [vmem:[%s5 + $0xf8] sm:$0xff]
      %s6177 = scalar_lea.vmem %s5, 256
      %v6178 = vld [vmem:[%s6177] sm:$0xff]
      %v6179 = vld [vmem:[%s6177 + $0x8] sm:$0xff]
      %v6180 = vld [vmem:[%s6177 + $0x10] sm:$0xff]
      %v6181 = vld [vmem:[%s6177 + $0x18] sm:$0xff]
      %v6182 = vld [vmem:[%s6177 + $0x20] sm:$0xff]
      %v6183 = vld [vmem:[%s6177 + $0x28] sm:$0xff]
      %v6184 = vld [vmem:[%s6177 + $0x30] sm:$0xff]
      %v6185 = vld [vmem:[%s6177 + $0x38] sm:$0xff]
      %v6186 = vld [vmem:[%s6177 + $0x40] sm:$0xff]
      %v6187 = vld [vmem:[%s6177 + $0x48] sm:$0xff]
      %v6188 = vld [vmem:[%s6177 + $0x50] sm:$0xff]
      %v6189 = vld [vmem:[%s6177 + $0x58] sm:$0xff]
      %v6190 = vld [vmem:[%s6177 + $0x60] sm:$0xff]
      %v6191 = vld [vmem:[%s6177 + $0x68] sm:$0xff]
      %v6192 = vld [vmem:[%s6177 + $0x70] sm:$0xff]
      %v6193 = vld [vmem:[%s6177 + $0x78] sm:$0xff]
      %v6194 = vld [vmem:[%s6177 + $0x80] sm:$0xff]
      %v6195 = vld [vmem:[%s6177 + $0x88] sm:$0xff]
      %v6196 = vld [vmem:[%s6177 + $0x90] sm:$0xff]
      %v6197 = vld [vmem:[%s6177 + $0x98] sm:$0xff]
      %v6198 = vld [vmem:[%s6177 + $0xa0] sm:$0xff]
      %v6199 = vld [vmem:[%s6177 + $0xa8] sm:$0xff]
      %v6200 = vld [vmem:[%s6177 + $0xb0] sm:$0xff]
      %v6201 = vld [vmem:[%s6177 + $0xb8] sm:$0xff]
      %v6202 = vld [vmem:[%s6177 + $0xc0] sm:$0xff]
      %v6203 = vld [vmem:[%s6177 + $0xc8] sm:$0xff]
      %v6204 = vld [vmem:[%s6177 + $0xd0] sm:$0xff]
      %v6205 = vld [vmem:[%s6177 + $0xd8] sm:$0xff]
      %v6206 = vld [vmem:[%s6177 + $0xe0] sm:$0xff]
      %v6207 = vld [vmem:[%s6177 + $0xe8] sm:$0xff]
      %v6208 = vld [vmem:[%s6177 + $0xf0] sm:$0xff]
      %v6209 = vld [vmem:[%s6177 + $0xf8] sm:$0xff]
      %v6211 = vunpack.c.l.b16 %v6140
      %v6212 = vunpack.c.h.b16 %v6140
      %v6213 = vpack.c.b16 %v6211, %v6211
      %v6214 = vpack.c.b16 %v6212, %v6212
      %v6249 = vunpack.c.l.b16 %v6178
      %v6250 = vunpack.c.h.b16 %v6178
      %v6251 = vunpack.c.l.b16 %v6179
      %v6252 = vunpack.c.h.b16 %v6179
      %v6253 = vunpack.c.l.b16 %v6180
      %v6254 = vunpack.c.h.b16 %v6180
      %v6255 = vunpack.c.l.b16 %v6181
      %v6256 = vunpack.c.h.b16 %v6181
      %v6257 = vunpack.c.l.b16 %v6182
      %v6258 = vunpack.c.h.b16 %v6182
      %v6259 = vunpack.c.l.b16 %v6183
      %v6260 = vunpack.c.h.b16 %v6183
      %v6261 = vunpack.c.l.b16 %v6184
      %v6262 = vunpack.c.h.b16 %v6184
      %v6263 = vunpack.c.l.b16 %v6185
      %v6264 = vunpack.c.h.b16 %v6185
      %v6265 = vunpack.c.l.b16 %v6186
      %v6266 = vunpack.c.h.b16 %v6186
      %v6267 = vunpack.c.l.b16 %v6187
      %v6268 = vunpack.c.h.b16 %v6187
      %v6269 = vunpack.c.l.b16 %v6188
      %v6270 = vunpack.c.h.b16 %v6188
      %v6271 = vunpack.c.l.b16 %v6189
      %v6272 = vunpack.c.h.b16 %v6189
      %v6273 = vunpack.c.l.b16 %v6190
      %v6274 = vunpack.c.h.b16 %v6190
      %v6275 = vunpack.c.l.b16 %v6191
      %v6276 = vunpack.c.h.b16 %v6191
      %v6277 = vunpack.c.l.b16 %v6192
      %v6278 = vunpack.c.h.b16 %v6192
      %v6279 = vunpack.c.l.b16 %v6193
      %v6280 = vunpack.c.h.b16 %v6193
      %v6281 = vunpack.c.l.b16 %v6194
      %v6282 = vunpack.c.h.b16 %v6194
      %v6283 = vunpack.c.l.b16 %v6195
      %v6284 = vunpack.c.h.b16 %v6195
      %v6285 = vunpack.c.l.b16 %v6196
      %v6286 = vunpack.c.h.b16 %v6196
      %v6287 = vunpack.c.l.b16 %v6197
      %v6288 = vunpack.c.h.b16 %v6197
      %v6289 = vunpack.c.l.b16 %v6198
      %v6290 = vunpack.c.h.b16 %v6198
      %v6291 = vunpack.c.l.b16 %v6199
      %v6292 = vunpack.c.h.b16 %v6199
      %v6293 = vunpack.c.l.b16 %v6200
      %v6294 = vunpack.c.h.b16 %v6200
      %v6295 = vunpack.c.l.b16 %v6201
      %v6296 = vunpack.c.h.b16 %v6201
      %v6297 = vunpack.c.l.b16 %v6202
      %v6298 = vunpack.c.h.b16 %v6202
      %v6299 = vunpack.c.l.b16 %v6203
      %v6300 = vunpack.c.h.b16 %v6203
      %v6301 = vunpack.c.l.b16 %v6204
      %v6302 = vunpack.c.h.b16 %v6204
      %v6303 = vunpack.c.l.b16 %v6205
      %v6304 = vunpack.c.h.b16 %v6205
      %v6305 = vunpack.c.l.b16 %v6206
      %v6306 = vunpack.c.h.b16 %v6206
      %v6307 = vunpack.c.l.b16 %v6207
      %v6308 = vunpack.c.h.b16 %v6207
      %v6309 = vunpack.c.l.b16 %v6208
      %v6310 = vunpack.c.h.b16 %v6208
      %v6311 = vunpack.c.l.b16 %v6209
      %v6312 = vunpack.c.h.b16 %v6209
      %v6313 = vpack.c.b16 %v6251, %v6249
      %v6314 = vpack.c.b16 %v6252, %v6250
      %v6315 = vpack.c.b16 %v6255, %v6253
      %v6316 = vpack.c.b16 %v6256, %v6254
      %v6317 = vpack.c.b16 %v6259, %v6257
      %v6318 = vpack.c.b16 %v6260, %v6258
      %v6319 = vpack.c.b16 %v6263, %v6261
      %v6320 = vpack.c.b16 %v6264, %v6262
      %v6321 = vpack.c.b16 %v6267, %v6265
      %v6322 = vpack.c.b16 %v6268, %v6266
      %v6323 = vpack.c.b16 %v6271, %v6269
      %v6324 = vpack.c.b16 %v6272, %v6270
      %v6325 = vpack.c.b16 %v6275, %v6273
      %v6326 = vpack.c.b16 %v6276, %v6274
      %v6327 = vpack.c.b16 %v6279, %v6277
      %v6328 = vpack.c.b16 %v6280, %v6278
      %v6329 = vpack.c.b16 %v6283, %v6281
      %v6330 = vpack.c.b16 %v6284, %v6282
      %v6331 = vpack.c.b16 %v6287, %v6285
      %v6332 = vpack.c.b16 %v6288, %v6286
      %v6333 = vpack.c.b16 %v6291, %v6289
      %v6334 = vpack.c.b16 %v6292, %v6290
      %v6335 = vpack.c.b16 %v6295, %v6293
      %v6336 = vpack.c.b16 %v6296, %v6294
      %v6337 = vpack.c.b16 %v6299, %v6297
      %v6338 = vpack.c.b16 %v6300, %v6298
      %v6339 = vpack.c.b16 %v6303, %v6301
      %v6340 = vpack.c.b16 %v6304, %v6302
      %v6341 = vpack.c.b16 %v6307, %v6305
      %v6342 = vpack.c.b16 %v6308, %v6306
      %v6343 = vpack.c.b16 %v6311, %v6309
      %v6344 = vpack.c.b16 %v6312, %v6310
      %6377 = vmatprep.subr.bf16.mxu0 %v6314
      %6378 = vmatpush1.bf16.msra.mxu0 %v6313
      %6379 = vmatprep.subr.bf16.mxu0 %v6316
      %6380 = vmatpush1.bf16.msra.mxu0 %v6315
      %6381 = vmatprep.subr.bf16.mxu0 %v6318
      %6382 = vmatpush1.bf16.msra.mxu0 %v6317
      %6383 = vmatprep.subr.bf16.mxu0 %v6320
      %6384 = vmatpush1.bf16.msra.mxu0 %v6319
      %6385 = vmatprep.subr.bf16.mxu0 %v6322
      %6386 = vmatpush1.bf16.msra.mxu0 %v6321
      %6387 = vmatprep.subr.bf16.mxu0 %v6324
      %6388 = vmatpush1.bf16.msra.mxu0 %v6323
      %6389 = vmatprep.subr.bf16.mxu0 %v6326
      %6390 = vmatpush1.bf16.msra.mxu0 %v6325
      %6391 = vmatprep.subr.bf16.mxu0 %v6328
      %6392 = vmatpush1.bf16.msra.mxu0 %v6327
      %6393 = vmatprep.subr.bf16.mxu0 %v6330
      %6394 = vmatpush1.bf16.msra.mxu0 %v6329
      %6395 = vmatprep.subr.bf16.mxu0 %v6332
      %6396 = vmatpush1.bf16.msra.mxu0 %v6331
      %6397 = vmatprep.subr.bf16.mxu0 %v6334
      %6398 = vmatpush1.bf16.msra.mxu0 %v6333
      %6399 = vmatprep.subr.bf16.mxu0 %v6336
      %6400 = vmatpush1.bf16.msra.mxu0 %v6335
      %6401 = vmatprep.subr.bf16.mxu0 %v6338
      %6402 = vmatpush1.bf16.msra.mxu0 %v6337
      %6403 = vmatprep.subr.bf16.mxu0 %v6340
      %6404 = vmatpush1.bf16.msra.mxu0 %v6339
      %6405 = vmatprep.subr.bf16.mxu0 %v6342
      %6406 = vmatpush1.bf16.msra.mxu0 %v6341
      %6407 = vmatprep.subr.bf16.mxu0 %v6344
      %6408 = vmatpush1.bf16.msra.mxu0 %v6343
      %6409 = vmatprep.mubr.bf16.mxu0 %v6214
      %6410 = vmatmul.mubr.bf16.gmra.mrb[0].mxu0 %v6213
      %v6411 = vpop.f32.mrb[0].mxu0
      %v6412 = vadd.f32 0.0, %v6411
      %v6413 = vpop.f32.mrb[0].mxu0
      %v6414 = vadd.f32 0.0, %v6413
      %v6415 = vpop.f32.mrb[0].mxu0
      %v6416 = vpop.f32.mrb[0].mxu0
      %6417 = vdwg.mxu0
      %v6419 = vunpack.c.l.b16 %v6139
      %v6420 = vunpack.c.h.b16 %v6139
      %v6421 = vpack.c.b16 %v6419, %v6419
      %v6422 = vpack.c.b16 %v6420, %v6420
      %v6457 = vunpack.c.l.b16 %v6145
      %v6458 = vunpack.c.h.b16 %v6145
      %v6459 = vunpack.c.l.b16 %v6146
      %v6460 = vunpack.c.h.b16 %v6146
      %v6461 = vunpack.c.l.b16 %v6147
      %v6462 = vunpack.c.h.b16 %v6147
      %v6463 = vunpack.c.l.b16 %v6148
      %v6464 = vunpack.c.h.b16 %v6148
      %v6465 = vunpack.c.l.b16 %v6149
      %v6466 = vunpack.c.h.b16 %v6149
      %v6467 = vunpack.c.l.b16 %v6150
      %v6468 = vunpack.c.h.b16 %v6150
      %v6469 = vunpack.c.l.b16 %v6151
      %v6470 = vunpack.c.h.b16 %v6151
      %v6471 = vunpack.c.l.b16 %v6152
      %v6472 = vunpack.c.h.b16 %v6152
      %v6473 = vunpack.c.l.b16 %v6153
      %v6474 = vunpack.c.h.b16 %v6153
      %v6475 = vunpack.c.l.b16 %v6154
      %v6476 = vunpack.c.h.b16 %v6154
      %v6477 = vunpack.c.l.b16 %v6155
      %v6478 = vunpack.c.h.b16 %v6155
      %v6479 = vunpack.c.l.b16 %v6156
      %v6480 = vunpack.c.h.b16 %v6156
      %v6481 = vunpack.c.l.b16 %v6157
      %v6482 = vunpack.c.h.b16 %v6157
      %v6483 = vunpack.c.l.b16 %v6158
      %v6484 = vunpack.c.h.b16 %v6158
      %v6485 = vunpack.c.l.b16 %v6159
      %v6486 = vunpack.c.h.b16 %v6159
      %v6487 = vunpack.c.l.b16 %v6160
      %v6488 = vunpack.c.h.b16 %v6160
      %v6489 = vunpack.c.l.b16 %v6161
      %v6490 = vunpack.c.h.b16 %v6161
      %v6491 = vunpack.c.l.b16 %v6162
      %v6492 = vunpack.c.h.b16 %v6162
      %v6493 = vunpack.c.l.b16 %v6163
      %v6494 = vunpack.c.h.b16 %v6163
      %v6495 = vunpack.c.l.b16 %v6164
      %v6496 = vunpack.c.h.b16 %v6164
      %v6497 = vunpack.c.l.b16 %v6165
      %v6498 = vunpack.c.h.b16 %v6165
      %v6499 = vunpack.c.l.b16 %v6166
      %v6500 = vunpack.c.h.b16 %v6166
      %v6501 = vunpack.c.l.b16 %v6167
      %v6502 = vunpack.c.h.b16 %v6167
      %v6503 = vunpack.c.l.b16 %v6168
      %v6504 = vunpack.c.h.b16 %v6168
      %v6505 = vunpack.c.l.b16 %v6169
      %v6506 = vunpack.c.h.b16 %v6169
      %v6507 = vunpack.c.l.b16 %v6170
      %v6508 = vunpack.c.h.b16 %v6170
      %v6509 = vunpack.c.l.b16 %v6171
      %v6510 = vunpack.c.h.b16 %v6171
      %v6511 = vunpack.c.l.b16 %v6172
      %v6512 = vunpack.c.h.b16 %v6172
      %v6513 = vunpack.c.l.b16 %v6173
      %v6514 = vunpack.c.h.b16 %v6173
      %v6515 = vunpack.c.l.b16 %v6174
      %v6516 = vunpack.c.h.b16 %v6174
      %v6517 = vunpack.c.l.b16 %v6175
      %v6518 = vunpack.c.h.b16 %v6175
      %v6519 = vunpack.c.l.b16 %v6176
      %v6520 = vunpack.c.h.b16 %v6176
      %v6521 = vpack.c.b16 %v6459, %v6457
      %v6522 = vpack.c.b16 %v6460, %v6458
      %v6523 = vpack.c.b16 %v6463, %v6461
      %v6524 = vpack.c.b16 %v6464, %v6462
      %v6525 = vpack.c.b16 %v6467, %v6465
      %v6526 = vpack.c.b16 %v6468, %v6466
      %v6527 = vpack.c.b16 %v6471, %v6469
      %v6528 = vpack.c.b16 %v6472, %v6470
      %v6529 = vpack.c.b16 %v6475, %v6473
      %v6530 = vpack.c.b16 %v6476, %v6474
      %v6531 = vpack.c.b16 %v6479, %v6477
      %v6532 = vpack.c.b16 %v6480, %v6478
      %v6533 = vpack.c.b16 %v6483, %v6481
      %v6534 = vpack.c.b16 %v6484, %v6482
      %v6535 = vpack.c.b16 %v6487, %v6485
      %v6536 = vpack.c.b16 %v6488, %v6486
      %v6537 = vpack.c.b16 %v6491, %v6489
      %v6538 = vpack.c.b16 %v6492, %v6490
      %v6539 = vpack.c.b16 %v6495, %v6493
      %v6540 = vpack.c.b16 %v6496, %v6494
      %v6541 = vpack.c.b16 %v6499, %v6497
      %v6542 = vpack.c.b16 %v6500, %v6498
      %v6543 = vpack.c.b16 %v6503, %v6501
      %v6544 = vpack.c.b16 %v6504, %v6502
      %v6545 = vpack.c.b16 %v6507, %v6505
      %v6546 = vpack.c.b16 %v6508, %v6506
      %v6547 = vpack.c.b16 %v6511, %v6509
      %v6548 = vpack.c.b16 %v6512, %v6510
      %v6549 = vpack.c.b16 %v6515, %v6513
      %v6550 = vpack.c.b16 %v6516, %v6514
      %v6551 = vpack.c.b16 %v6519, %v6517
      %v6552 = vpack.c.b16 %v6520, %v6518
      %6585 = vmatprep.subr.bf16.mxu0 %v6522
      %6586 = vmatpush1.bf16.msra.mxu0 %v6521
      %6587 = vmatprep.subr.bf16.mxu0 %v6524
      %6588 = vmatpush1.bf16.msra.mxu0 %v6523
      %6589 = vmatprep.subr.bf16.mxu0 %v6526
      %6590 = vmatpush1.bf16.msra.mxu0 %v6525
      %6591 = vmatprep.subr.bf16.mxu0 %v6528
      %6592 = vmatpush1.bf16.msra.mxu0 %v6527
      %6593 = vmatprep.subr.bf16.mxu0 %v6530
      %6594 = vmatpush1.bf16.msra.mxu0 %v6529
      %6595 = vmatprep.subr.bf16.mxu0 %v6532
      %6596 = vmatpush1.bf16.msra.mxu0 %v6531
      %6597 = vmatprep.subr.bf16.mxu0 %v6534
      %6598 = vmatpush1.bf16.msra.mxu0 %v6533
      %6599 = vmatprep.subr.bf16.mxu0 %v6536
      %6600 = vmatpush1.bf16.msra.mxu0 %v6535
      %6601 = vmatprep.subr.bf16.mxu0 %v6538
      %6602 = vmatpush1.bf16.msra.mxu0 %v6537
      %6603 = vmatprep.subr.bf16.mxu0 %v6540
      %6604 = vmatpush1.bf16.msra.mxu0 %v6539
      %6605 = vmatprep.subr.bf16.mxu0 %v6542
      %6606 = vmatpush1.bf16.msra.mxu0 %v6541
      %6607 = vmatprep.subr.bf16.mxu0 %v6544
      %6608 = vmatpush1.bf16.msra.mxu0 %v6543
      %6609 = vmatprep.subr.bf16.mxu0 %v6546
      %6610 = vmatpush1.bf16.msra.mxu0 %v6545
      %6611 = vmatprep.subr.bf16.mxu0 %v6548
      %6612 = vmatpush1.bf16.msra.mxu0 %v6547
      %6613 = vmatprep.subr.bf16.mxu0 %v6550
      %6614 = vmatpush1.bf16.msra.mxu0 %v6549
      %6615 = vmatprep.subr.bf16.mxu0 %v6552
      %6616 = vmatpush1.bf16.msra.mxu0 %v6551
      %6617 = vmatprep.mubr.bf16.mxu0 %v6422
      %6618 = vmatmul.mubr.bf16.gmra.mrb[0].mxu0 %v6421
      %v6619 = vpop.f32.mrb[0].mxu0
      %v6620 = vadd.f32 %v6412, %v6619
      %v6621 = vpop.f32.mrb[0].mxu0
      %v6622 = vadd.f32 %v6414, %v6621
      %v6623 = vpop.f32.mrb[0].mxu0
      %v6624 = vpop.f32.mrb[0].mxu0
      %6625 = vdwg.mxu0
      %s6626 = scalar_lea.vmem %s5, 512
      %v6627 = vld [vmem:[%s6626] sm:$0xff]
      %v6628 = vld [vmem:[%s6626 + $0x8] sm:$0xff]
      %v6629 = vld [vmem:[%s6626 + $0x10] sm:$0xff]
      %v6630 = vld [vmem:[%s6626 + $0x18] sm:$0xff]
      %v6631 = vld [vmem:[%s6626 + $0x20] sm:$0xff]
      %v6632 = vld [vmem:[%s6626 + $0x28] sm:$0xff]
      %v6633 = vld [vmem:[%s6626 + $0x30] sm:$0xff]
      %v6634 = vld [vmem:[%s6626 + $0x38] sm:$0xff]
      %v6635 = vld [vmem:[%s6626 + $0x40] sm:$0xff]
      %v6636 = vld [vmem:[%s6626 + $0x48] sm:$0xff]
      %v6637 = vld [vmem:[%s6626 + $0x50] sm:$0xff]
      %v6638 = vld [vmem:[%s6626 + $0x58] sm:$0xff]
      %v6639 = vld [vmem:[%s6626 + $0x60] sm:$0xff]
      %v6640 = vld [vmem:[%s6626 + $0x68] sm:$0xff]
      %v6641 = vld [vmem:[%s6626 + $0x70] sm:$0xff]
      %v6642 = vld [vmem:[%s6626 + $0x78] sm:$0xff]
      %v6643 = vld [vmem:[%s6626 + $0x80] sm:$0xff]
      %v6644 = vld [vmem:[%s6626 + $0x88] sm:$0xff]
      %v6645 = vld [vmem:[%s6626 + $0x90] sm:$0xff]
      %v6646 = vld [vmem:[%s6626 + $0x98] sm:$0xff]
      %v6647 = vld [vmem:[%s6626 + $0xa0] sm:$0xff]
      %v6648 = vld [vmem:[%s6626 + $0xa8] sm:$0xff]
      %v6649 = vld [vmem:[%s6626 + $0xb0] sm:$0xff]
      %v6650 = vld [vmem:[%s6626 + $0xb8] sm:$0xff]
      %v6651 = vld [vmem:[%s6626 + $0xc0] sm:$0xff]
      %v6652 = vld [vmem:[%s6626 + $0xc8] sm:$0xff]
      %v6653 = vld [vmem:[%s6626 + $0xd0] sm:$0xff]
      %v6654 = vld [vmem:[%s6626 + $0xd8] sm:$0xff]
      %v6655 = vld [vmem:[%s6626 + $0xe0] sm:$0xff]
      %v6656 = vld [vmem:[%s6626 + $0xe8] sm:$0xff]
      %v6657 = vld [vmem:[%s6626 + $0xf0] sm:$0xff]
      %v6658 = vld [vmem:[%s6626 + $0xf8] sm:$0xff]
      %v6660 = vunpack.c.l.b16 %v6141
      %v6661 = vunpack.c.h.b16 %v6141
      %v6662 = vpack.c.b16 %v6660, %v6660
      %v6663 = vpack.c.b16 %v6661, %v6661
      %v6698 = vunpack.c.l.b16 %v6627
      %v6699 = vunpack.c.h.b16 %v6627
      %v6700 = vunpack.c.l.b16 %v6628
      %v6701 = vunpack.c.h.b16 %v6628
      %v6702 = vunpack.c.l.b16 %v6629
      %v6703 = vunpack.c.h.b16 %v6629
      %v6704 = vunpack.c.l.b16 %v6630
      %v6705 = vunpack.c.h.b16 %v6630
      %v6706 = vunpack.c.l.b16 %v6631
      %v6707 = vunpack.c.h.b16 %v6631
      %v6708 = vunpack.c.l.b16 %v6632
      %v6709 = vunpack.c.h.b16 %v6632
      %v6710 = vunpack.c.l.b16 %v6633
      %v6711 = vunpack.c.h.b16 %v6633
      %v6712 = vunpack.c.l.b16 %v6634
      %v6713 = vunpack.c.h.b16 %v6634
      %v6714 = vunpack.c.l.b16 %v6635
      %v6715 = vunpack.c.h.b16 %v6635
      %v6716 = vunpack.c.l.b16 %v6636
      %v6717 = vunpack.c.h.b16 %v6636
      %v6718 = vunpack.c.l.b16 %v6637
      %v6719 = vunpack.c.h.b16 %v6637
      %v6720 = vunpack.c.l.b16 %v6638
      %v6721 = vunpack.c.h.b16 %v6638
      %v6722 = vunpack.c.l.b16 %v6639
      %v6723 = vunpack.c.h.b16 %v6639
      %v6724 = vunpack.c.l.b16 %v6640
      %v6725 = vunpack.c.h.b16 %v6640
      %v6726 = vunpack.c.l.b16 %v6641
      %v6727 = vunpack.c.h.b16 %v6641
      %v6728 = vunpack.c.l.b16 %v6642
      %v6729 = vunpack.c.h.b16 %v6642
      %v6730 = vunpack.c.l.b16 %v6643
      %v6731 = vunpack.c.h.b16 %v6643
      %v6732 = vunpack.c.l.b16 %v6644
      %v6733 = vunpack.c.h.b16 %v6644
      %v6734 = vunpack.c.l.b16 %v6645
      %v6735 = vunpack.c.h.b16 %v6645
      %v6736 = vunpack.c.l.b16 %v6646
      %v6737 = vunpack.c.h.b16 %v6646
      %v6738 = vunpack.c.l.b16 %v6647
      %v6739 = vunpack.c.h.b16 %v6647
      %v6740 = vunpack.c.l.b16 %v6648
      %v6741 = vunpack.c.h.b16 %v6648
      %v6742 = vunpack.c.l.b16 %v6649
      %v6743 = vunpack.c.h.b16 %v6649
      %v6744 = vunpack.c.l.b16 %v6650
      %v6745 = vunpack.c.h.b16 %v6650
      %v6746 = vunpack.c.l.b16 %v6651
      %v6747 = vunpack.c.h.b16 %v6651
      %v6748 = vunpack.c.l.b16 %v6652
      %v6749 = vunpack.c.h.b16 %v6652
      %v6750 = vunpack.c.l.b16 %v6653
      %v6751 = vunpack.c.h.b16 %v6653
      %v6752 = vunpack.c.l.b16 %v6654
      %v6753 = vunpack.c.h.b16 %v6654
      %v6754 = vunpack.c.l.b16 %v6655
      %v6755 = vunpack.c.h.b16 %v6655
      %v6756 = vunpack.c.l.b16 %v6656
      %v6757 = vunpack.c.h.b16 %v6656
      %v6758 = vunpack.c.l.b16 %v6657
      %v6759 = vunpack.c.h.b16 %v6657
      %v6760 = vunpack.c.l.b16 %v6658
      %v6761 = vunpack.c.h.b16 %v6658
      %v6762 = vpack.c.b16 %v6700, %v6698
      %v6763 = vpack.c.b16 %v6701, %v6699
      %v6764 = vpack.c.b16 %v6704, %v6702
      %v6765 = vpack.c.b16 %v6705, %v6703
      %v6766 = vpack.c.b16 %v6708, %v6706
      %v6767 = vpack.c.b16 %v6709, %v6707
      %v6768 = vpack.c.b16 %v6712, %v6710
      %v6769 = vpack.c.b16 %v6713, %v6711
      %v6770 = vpack.c.b16 %v6716, %v6714
      %v6771 = vpack.c.b16 %v6717, %v6715
      %v6772 = vpack.c.b16 %v6720, %v6718
      %v6773 = vpack.c.b16 %v6721, %v6719
      %v6774 = vpack.c.b16 %v6724, %v6722
      %v6775 = vpack.c.b16 %v6725, %v6723
      %v6776 = vpack.c.b16 %v6728, %v6726
      %v6777 = vpack.c.b16 %v6729, %v6727
      %v6778 = vpack.c.b16 %v6732, %v6730
      %v6779 = vpack.c.b16 %v6733, %v6731
      %v6780 = vpack.c.b16 %v6736, %v6734
      %v6781 = vpack.c.b16 %v6737, %v6735
      %v6782 = vpack.c.b16 %v6740, %v6738
      %v6783 = vpack.c.b16 %v6741, %v6739
      %v6784 = vpack.c.b16 %v6744, %v6742
      %v6785 = vpack.c.b16 %v6745, %v6743
      %v6786 = vpack.c.b16 %v6748, %v6746
      %v6787 = vpack.c.b16 %v6749, %v6747
      %v6788 = vpack.c.b16 %v6752, %v6750
      %v6789 = vpack.c.b16 %v6753, %v6751
      %v6790 = vpack.c.b16 %v6756, %v6754
      %v6791 = vpack.c.b16 %v6757, %v6755
      %v6792 = vpack.c.b16 %v6760, %v6758
      %v6793 = vpack.c.b16 %v6761, %v6759
      %6826 = vmatprep.subr.bf16.mxu0 %v6763
      %6827 = vmatpush1.bf16.msra.mxu0 %v6762
      %6828 = vmatprep.subr.bf16.mxu0 %v6765
      %6829 = vmatpush1.bf16.msra.mxu0 %v6764
      %6830 = vmatprep.subr.bf16.mxu0 %v6767
      %6831 = vmatpush1.bf16.msra.mxu0 %v6766
      %6832 = vmatprep.subr.bf16.mxu0 %v6769
      %6833 = vmatpush1.bf16.msra.mxu0 %v6768
      %6834 = vmatprep.subr.bf16.mxu0 %v6771
      %6835 = vmatpush1.bf16.msra.mxu0 %v6770
      %6836 = vmatprep.subr.bf16.mxu0 %v6773
      %6837 = vmatpush1.bf16.msra.mxu0 %v6772
      %6838 = vmatprep.subr.bf16.mxu0 %v6775
      %6839 = vmatpush1.bf16.msra.mxu0 %v6774
      %6840 = vmatprep.subr.bf16.mxu0 %v6777
      %6841 = vmatpush1.bf16.msra.mxu0 %v6776
      %6842 = vmatprep.subr.bf16.mxu0 %v6779
      %6843 = vmatpush1.bf16.msra.mxu0 %v6778
      %6844 = vmatprep.subr.bf16.mxu0 %v6781
      %6845 = vmatpush1.bf16.msra.mxu0 %v6780
      %6846 = vmatprep.subr.bf16.mxu0 %v6783
      %6847 = vmatpush1.bf16.msra.mxu0 %v6782
      %6848 = vmatprep.subr.bf16.mxu0 %v6785
      %6849 = vmatpush1.bf16.msra.mxu0 %v6784
      %6850 = vmatprep.subr.bf16.mxu0 %v6787
      %6851 = vmatpush1.bf16.msra.mxu0 %v6786
      %6852 = vmatprep.subr.bf16.mxu0 %v6789
      %6853 = vmatpush1.bf16.msra.mxu0 %v6788
      %6854 = vmatprep.subr.bf16.mxu0 %v6791
      %6855 = vmatpush1.bf16.msra.mxu0 %v6790
      %6856 = vmatprep.subr.bf16.mxu0 %v6793
      %6857 = vmatpush1.bf16.msra.mxu0 %v6792
      %6858 = vmatprep.mubr.bf16.mxu0 %v6663
      %6859 = vmatmul.mubr.bf16.gmra.mrb[0].mxu0 %v6662
      %v6860 = vpop.f32.mrb[0].mxu0
      %v6861 = vadd.f32 0.0, %v6860
      %v6862 = vpop.f32.mrb[0].mxu0
      %v6863 = vadd.f32 0.0, %v6862
      %v6864 = vpop.f32.mrb[0].mxu0
      %v6865 = vpop.f32.mrb[0].mxu0
      %6866 = vdwg.mxu0
      %v6867 = vadd.f32 %v6620, %v6861
      %v6868 = vadd.f32 %v6622, %v6863
      %s6869 = scalar_lea.vmem %s5, 768
      %v6870 = vld [vmem:[%s6869] sm:$0xff]
      %v6871 = vld [vmem:[%s6869 + $0x8] sm:$0xff]
      %v6872 = vld [vmem:[%s6869 + $0x10] sm:$0xff]
      %v6873 = vld [vmem:[%s6869 + $0x18] sm:$0xff]
      %v6874 = vld [vmem:[%s6869 + $0x20] sm:$0xff]
      %v6875 = vld [vmem:[%s6869 + $0x28] sm:$0xff]
      %v6876 = vld [vmem:[%s6869 + $0x30] sm:$0xff]
      %v6877 = vld [vmem:[%s6869 + $0x38] sm:$0xff]
      %v6878 = vld [vmem:[%s6869 + $0x40] sm:$0xff]
      %v6879 = vld [vmem:[%s6869 + $0x48] sm:$0xff]
      %v6880 = vld [vmem:[%s6869 + $0x50] sm:$0xff]
      %v6881 = vld [vmem:[%s6869 + $0x58] sm:$0xff]
      %v6882 = vld [vmem:[%s6869 + $0x60] sm:$0xff]
      %v6883 = vld [vmem:[%s6869 + $0x68] sm:$0xff]
      %v6884 = vld [vmem:[%s6869 + $0x70] sm:$0xff]
      %v6885 = vld [vmem:[%s6869 + $0x78] sm:$0xff]
      %v6886 = vld [vmem:[%s6869 + $0x80] sm:$0xff]
      %v6887 = vld [vmem:[%s6869 + $0x88] sm:$0xff]
      %v6888 = vld [vmem:[%s6869 + $0x90] sm:$0xff]
      %v6889 = vld [vmem:[%s6869 + $0x98] sm:$0xff]
      %v6890 = vld [vmem:[%s6869 + $0xa0] sm:$0xff]
      %v6891 = vld [vmem:[%s6869 + $0xa8] sm:$0xff]
      %v6892 = vld [vmem:[%s6869 + $0xb0] sm:$0xff]
      %v6893 = vld [vmem:[%s6869 + $0xb8] sm:$0xff]
      %v6894 = vld [vmem:[%s6869 + $0xc0] sm:$0xff]
      %v6895 = vld [vmem:[%s6869 + $0xc8] sm:$0xff]
      %v6896 = vld [vmem:[%s6869 + $0xd0] sm:$0xff]
      %v6897 = vld [vmem:[%s6869 + $0xd8] sm:$0xff]
      %v6898 = vld [vmem:[%s6869 + $0xe0] sm:$0xff]
      %v6899 = vld [vmem:[%s6869 + $0xe8] sm:$0xff]
      %v6900 = vld [vmem:[%s6869 + $0xf0] sm:$0xff]
      %v6901 = vld [vmem:[%s6869 + $0xf8] sm:$0xff]
      %v6903 = vunpack.c.l.b16 %v6142
      %v6904 = vunpack.c.h.b16 %v6142
      %v6905 = vpack.c.b16 %v6903, %v6903
      %v6906 = vpack.c.b16 %v6904, %v6904
      %v6941 = vunpack.c.l.b16 %v6870
      %v6942 = vunpack.c.h.b16 %v6870
      %v6943 = vunpack.c.l.b16 %v6871
      %v6944 = vunpack.c.h.b16 %v6871
      %v6945 = vunpack.c.l.b16 %v6872
      %v6946 = vunpack.c.h.b16 %v6872
      %v6947 = vunpack.c.l.b16 %v6873
      %v6948 = vunpack.c.h.b16 %v6873
      %v6949 = vunpack.c.l.b16 %v6874
      %v6950 = vunpack.c.h.b16 %v6874
      %v6951 = vunpack.c.l.b16 %v6875
      %v6952 = vunpack.c.h.b16 %v6875
      %v6953 = vunpack.c.l.b16 %v6876
      %v6954 = vunpack.c.h.b16 %v6876
      %v6955 = vunpack.c.l.b16 %v6877
      %v6956 = vunpack.c.h.b16 %v6877
      %v6957 = vunpack.c.l.b16 %v6878
      %v6958 = vunpack.c.h.b16 %v6878
      %v6959 = vunpack.c.l.b16 %v6879
      %v6960 = vunpack.c.h.b16 %v6879
      %v6961 = vunpack.c.l.b16 %v6880
      %v6962 = vunpack.c.h.b16 %v6880
      %v6963 = vunpack.c.l.b16 %v6881
      %v6964 = vunpack.c.h.b16 %v6881
      %v6965 = vunpack.c.l.b16 %v6882
      %v6966 = vunpack.c.h.b16 %v6882
      %v6967 = vunpack.c.l.b16 %v6883
      %v6968 = vunpack.c.h.b16 %v6883
      %v6969 = vunpack.c.l.b16 %v6884
      %v6970 = vunpack.c.h.b16 %v6884
      %v6971 = vunpack.c.l.b16 %v6885
      %v6972 = vunpack.c.h.b16 %v6885
      %v6973 = vunpack.c.l.b16 %v6886
      %v6974 = vunpack.c.h.b16 %v6886
      %v6975 = vunpack.c.l.b16 %v6887
      %v6976 = vunpack.c.h.b16 %v6887
      %v6977 = vunpack.c.l.b16 %v6888
      %v6978 = vunpack.c.h.b16 %v6888
      %v6979 = vunpack.c.l.b16 %v6889
      %v6980 = vunpack.c.h.b16 %v6889
      %v6981 = vunpack.c.l.b16 %v6890
      %v6982 = vunpack.c.h.b16 %v6890
      %v6983 = vunpack.c.l.b16 %v6891
      %v6984 = vunpack.c.h.b16 %v6891
      %v6985 = vunpack.c.l.b16 %v6892
      %v6986 = vunpack.c.h.b16 %v6892
      %v6987 = vunpack.c.l.b16 %v6893
      %v6988 = vunpack.c.h.b16 %v6893
      %v6989 = vunpack.c.l.b16 %v6894
      %v6990 = vunpack.c.h.b16 %v6894
      %v6991 = vunpack.c.l.b16 %v6895
      %v6992 = vunpack.c.h.b16 %v6895
      %v6993 = vunpack.c.l.b16 %v6896
      %v6994 = vunpack.c.h.b16 %v6896
      %v6995 = vunpack.c.l.b16 %v6897
      %v6996 = vunpack.c.h.b16 %v6897
      %v6997 = vunpack.c.l.b16 %v6898
      %v6998 = vunpack.c.h.b16 %v6898
      %v6999 = vunpack.c.l.b16 %v6899
      %v7000 = vunpack.c.h.b16 %v6899
      %v7001 = vunpack.c.l.b16 %v6900
      %v7002 = vunpack.c.h.b16 %v6900
      %v7003 = vunpack.c.l.b16 %v6901
      %v7004 = vunpack.c.h.b16 %v6901
      %v7005 = vpack.c.b16 %v6943, %v6941
      %v7006 = vpack.c.b16 %v6944, %v6942
      %v7007 = vpack.c.b16 %v6947, %v6945
      %v7008 = vpack.c.b16 %v6948, %v6946
      %v7009 = vpack.c.b16 %v6951, %v6949
      %v7010 = vpack.c.b16 %v6952, %v6950
      %v7011 = vpack.c.b16 %v6955, %v6953
      %v7012 = vpack.c.b16 %v6956, %v6954
      %v7013 = vpack.c.b16 %v6959, %v6957
      %v7014 = vpack.c.b16 %v6960, %v6958
      %v7015 = vpack.c.b16 %v6963, %v6961
      %v7016 = vpack.c.b16 %v6964, %v6962
      %v7017 = vpack.c.b16 %v6967, %v6965
      %v7018 = vpack.c.b16 %v6968, %v6966
      %v7019 = vpack.c.b16 %v6971, %v6969
      %v7020 = vpack.c.b16 %v6972, %v6970
      %v7021 = vpack.c.b16 %v6975, %v6973
      %v7022 = vpack.c.b16 %v6976, %v6974
      %v7023 = vpack.c.b16 %v6979, %v6977
      %v7024 = vpack.c.b16 %v6980, %v6978
      %v7025 = vpack.c.b16 %v6983, %v6981
      %v7026 = vpack.c.b16 %v6984, %v6982
      %v7027 = vpack.c.b16 %v6987, %v6985
      %v7028 = vpack.c.b16 %v6988, %v6986
      %v7029 = vpack.c.b16 %v6991, %v6989
      %v7030 = vpack.c.b16 %v6992, %v6990
      %v7031 = vpack.c.b16 %v6995, %v6993
      %v7032 = vpack.c.b16 %v6996, %v6994
      %v7033 = vpack.c.b16 %v6999, %v6997
      %v7034 = vpack.c.b16 %v7000, %v6998
      %v7035 = vpack.c.b16 %v7003, %v7001
      %v7036 = vpack.c.b16 %v7004, %v7002
      %7069 = vmatprep.subr.bf16.mxu0 %v7006
      %7070 = vmatpush1.bf16.msra.mxu0 %v7005
      %7071 = vmatprep.subr.bf16.mxu0 %v7008
      %7072 = vmatpush1.bf16.msra.mxu0 %v7007
      %7073 = vmatprep.subr.bf16.mxu0 %v7010
      %7074 = vmatpush1.bf16.msra.mxu0 %v7009
      %7075 = vmatprep.subr.bf16.mxu0 %v7012
      %7076 = vmatpush1.bf16.msra.mxu0 %v7011
      %7077 = vmatprep.subr.bf16.mxu0 %v7014
      %7078 = vmatpush1.bf16.msra.mxu0 %v7013
      %7079 = vmatprep.subr.bf16.mxu0 %v7016
      %7080 = vmatpush1.bf16.msra.mxu0 %v7015
      %7081 = vmatprep.subr.bf16.mxu0 %v7018
      %7082 = vmatpush1.bf16.msra.mxu0 %v7017
      %7083 = vmatprep.subr.bf16.mxu0 %v7020
      %7084 = vmatpush1.bf16.msra.mxu0 %v7019
      %7085 = vmatprep.subr.bf16.mxu0 %v7022
      %7086 = vmatpush1.bf16.msra.mxu0 %v7021
      %7087 = vmatprep.subr.bf16.mxu0 %v7024
      %7088 = vmatpush1.bf16.msra.mxu0 %v7023
      %7089 = vmatprep.subr.bf16.mxu0 %v7026
      %7090 = vmatpush1.bf16.msra.mxu0 %v7025
      %7091 = vmatprep.subr.bf16.mxu0 %v7028
      %7092 = vmatpush1.bf16.msra.mxu0 %v7027
      %7093 = vmatprep.subr.bf16.mxu0 %v7030
      %7094 = vmatpush1.bf16.msra.mxu0 %v7029
      %7095 = vmatprep.subr.bf16.mxu0 %v7032
      %7096 = vmatpush1.bf16.msra.mxu0 %v7031
      %7097 = vmatprep.subr.bf16.mxu0 %v7034
      %7098 = vmatpush1.bf16.msra.mxu0 %v7033
      %7099 = vmatprep.subr.bf16.mxu0 %v7036
      %7100 = vmatpush1.bf16.msra.mxu0 %v7035
      %7101 = vmatprep.mubr.bf16.mxu0 %v6906
      %7102 = vmatmul.mubr.bf16.gmra.mrb[0].mxu0 %v6905
      %v7103 = vpop.f32.mrb[0].mxu0
      %v7104 = vadd.f32 0.0, %v7103
      %v7105 = vpop.f32.mrb[0].mxu0
      %v7106 = vadd.f32 0.0, %v7105
      %v7107 = vpop.f32.mrb[0].mxu0
      %v7108 = vpop.f32.mrb[0].mxu0
      %7109 = vdwg.mxu0
      %v7110 = vadd.f32 %v6867, %v7104
      %v7111 = vadd.f32 %v6868, %v7106
      %s7112 = scalar_lea.vmem %s5, 1024
      %v7113 = vld [vmem:[%s7112] sm:$0xff]
      %v7114 = vld [vmem:[%s7112 + $0x8] sm:$0xff]
      %v7115 = vld [vmem:[%s7112 + $0x10] sm:$0xff]
      %v7116 = vld [vmem:[%s7112 + $0x18] sm:$0xff]
      %v7117 = vld [vmem:[%s7112 + $0x20] sm:$0xff]
      %v7118 = vld [vmem:[%s7112 + $0x28] sm:$0xff]
      %v7119 = vld [vmem:[%s7112 + $0x30] sm:$0xff]
      %v7120 = vld [vmem:[%s7112 + $0x38] sm:$0xff]
      %v7121 = vld [vmem:[%s7112 + $0x40] sm:$0xff]
      %v7122 = vld [vmem:[%s7112 + $0x48] sm:$0xff]
      %v7123 = vld [vmem:[%s7112 + $0x50] sm:$0xff]
      %v7124 = vld [vmem:[%s7112 + $0x58] sm:$0xff]
      %v7125 = vld [vmem:[%s7112 + $0x60] sm:$0xff]
      %v7126 = vld [vmem:[%s7112 + $0x68] sm:$0xff]
      %v7127 = vld [vmem:[%s7112 + $0x70] sm:$0xff]
      %v7128 = vld [vmem:[%s7112 + $0x78] sm:$0xff]
      %v7129 = vld [vmem:[%s7112 + $0x80] sm:$0xff]
      %v7130 = vld [vmem:[%s7112 + $0x88] sm:$0xff]
      %v7131 = vld [vmem:[%s7112 + $0x90] sm:$0xff]
      %v7132 = vld [vmem:[%s7112 + $0x98] sm:$0xff]
      %v7133 = vld [vmem:[%s7112 + $0xa0] sm:$0xff]
      %v7134 = vld [vmem:[%s7112 + $0xa8] sm:$0xff]
      %v7135 = vld [vmem:[%s7112 + $0xb0] sm:$0xff]
      %v7136 = vld [vmem:[%s7112 + $0xb8] sm:$0xff]
      %v7137 = vld [vmem:[%s7112 + $0xc0] sm:$0xff]
      %v7138 = vld [vmem:[%s7112 + $0xc8] sm:$0xff]
      %v7139 = vld [vmem:[%s7112 + $0xd0] sm:$0xff]
      %v7140 = vld [vmem:[%s7112 + $0xd8] sm:$0xff]
      %v7141 = vld [vmem:[%s7112 + $0xe0] sm:$0xff]
      %v7142 = vld [vmem:[%s7112 + $0xe8] sm:$0xff]
      %v7143 = vld [vmem:[%s7112 + $0xf0] sm:$0xff]
      %v7144 = vld [vmem:[%s7112 + $0xf8] sm:$0xff]
      %v7146 = vunpack.c.l.b16 %v6143
      %v7147 = vunpack.c.h.b16 %v6143
      %v7148 = vpack.c.b16 %v7146, %v7146
      %v7149 = vpack.c.b16 %v7147, %v7147
      %v7184 = vunpack.c.l.b16 %v7113
      %v7185 = vunpack.c.h.b16 %v7113
      %v7186 = vunpack.c.l.b16 %v7114
      %v7187 = vunpack.c.h.b16 %v7114
      %v7188 = vunpack.c.l.b16 %v7115
      %v7189 = vunpack.c.h.b16 %v7115
      %v7190 = vunpack.c.l.b16 %v7116
      %v7191 = vunpack.c.h.b16 %v7116
      %v7192 = vunpack.c.l.b16 %v7117
      %v7193 = vunpack.c.h.b16 %v7117
      %v7194 = vunpack.c.l.b16 %v7118
      %v7195 = vunpack.c.h.b16 %v7118
      %v7196 = vunpack.c.l.b16 %v7119
      %v7197 = vunpack.c.h.b16 %v7119
      %v7198 = vunpack.c.l.b16 %v7120
      %v7199 = vunpack.c.h.b16 %v7120
      %v7200 = vunpack.c.l.b16 %v7121
      %v7201 = vunpack.c.h.b16 %v7121
      %v7202 = vunpack.c.l.b16 %v7122
      %v7203 = vunpack.c.h.b16 %v7122
      %v7204 = vunpack.c.l.b16 %v7123
      %v7205 = vunpack.c.h.b16 %v7123
      %v7206 = vunpack.c.l.b16 %v7124
      %v7207 = vunpack.c.h.b16 %v7124
      %v7208 = vunpack.c.l.b16 %v7125
      %v7209 = vunpack.c.h.b16 %v7125
      %v7210 = vunpack.c.l.b16 %v7126
      %v7211 = vunpack.c.h.b16 %v7126
      %v7212 = vunpack.c.l.b16 %v7127
      %v7213 = vunpack.c.h.b16 %v7127
      %v7214 = vunpack.c.l.b16 %v7128
      %v7215 = vunpack.c.h.b16 %v7128
      %v7216 = vunpack.c.l.b16 %v7129
      %v7217 = vunpack.c.h.b16 %v7129
      %v7218 = vunpack.c.l.b16 %v7130
      %v7219 = vunpack.c.h.b16 %v7130
      %v7220 = vunpack.c.l.b16 %v7131
      %v7221 = vunpack.c.h.b16 %v7131
      %v7222 = vunpack.c.l.b16 %v7132
      %v7223 = vunpack.c.h.b16 %v7132
      %v7224 = vunpack.c.l.b16 %v7133
      %v7225 = vunpack.c.h.b16 %v7133
      %v7226 = vunpack.c.l.b16 %v7134
      %v7227 = vunpack.c.h.b16 %v7134
      %v7228 = vunpack.c.l.b16 %v7135
      %v7229 = vunpack.c.h.b16 %v7135
      %v7230 = vunpack.c.l.b16 %v7136
      %v7231 = vunpack.c.h.b16 %v7136
      %v7232 = vunpack.c.l.b16 %v7137
      %v7233 = vunpack.c.h.b16 %v7137
      %v7234 = vunpack.c.l.b16 %v7138
      %v7235 = vunpack.c.h.b16 %v7138
      %v7236 = vunpack.c.l.b16 %v7139
      %v7237 = vunpack.c.h.b16 %v7139
      %v7238 = vunpack.c.l.b16 %v7140
      %v7239 = vunpack.c.h.b16 %v7140
      %v7240 = vunpack.c.l.b16 %v7141
      %v7241 = vunpack.c.h.b16 %v7141
      %v7242 = vunpack.c.l.b16 %v7142
      %v7243 = vunpack.c.h.b16 %v7142
      %v7244 = vunpack.c.l.b16 %v7143
      %v7245 = vunpack.c.h.b16 %v7143
      %v7246 = vunpack.c.l.b16 %v7144
      %v7247 = vunpack.c.h.b16 %v7144
      %v7248 = vpack.c.b16 %v7186, %v7184
      %v7249 = vpack.c.b16 %v7187, %v7185
      %v7250 = vpack.c.b16 %v7190, %v7188
      %v7251 = vpack.c.b16 %v7191, %v7189
      %v7252 = vpack.c.b16 %v7194, %v7192
      %v7253 = vpack.c.b16 %v7195, %v7193
      %v7254 = vpack.c.b16 %v7198, %v7196
      %v7255 = vpack.c.b16 %v7199, %v7197
      %v7256 = vpack.c.b16 %v7202, %v7200
      %v7257 = vpack.c.b16 %v7203, %v7201
      %v7258 = vpack.c.b16 %v7206, %v7204
      %v7259 = vpack.c.b16 %v7207, %v7205
      %v7260 = vpack.c.b16 %v7210, %v7208
      %v7261 = vpack.c.b16 %v7211, %v7209
      %v7262 = vpack.c.b16 %v7214, %v7212
      %v7263 = vpack.c.b16 %v7215, %v7213
      %v7264 = vpack.c.b16 %v7218, %v7216
      %v7265 = vpack.c.b16 %v7219, %v7217
      %v7266 = vpack.c.b16 %v7222, %v7220
      %v7267 = vpack.c.b16 %v7223, %v7221
      %v7268 = vpack.c.b16 %v7226, %v7224
      %v7269 = vpack.c.b16 %v7227, %v7225
      %v7270 = vpack.c.b16 %v7230, %v7228
      %v7271 = vpack.c.b16 %v7231, %v7229
      %v7272 = vpack.c.b16 %v7234, %v7232
      %v7273 = vpack.c.b16 %v7235, %v7233
      %v7274 = vpack.c.b16 %v7238, %v7236
      %v7275 = vpack.c.b16 %v7239, %v7237
      %v7276 = vpack.c.b16 %v7242, %v7240
      %v7277 = vpack.c.b16 %v7243, %v7241
      %v7278 = vpack.c.b16 %v7246, %v7244
      %v7279 = vpack.c.b16 %v7247, %v7245
      %7312 = vmatprep.subr.bf16.mxu0 %v7249
      %7313 = vmatpush1.bf16.msra.mxu0 %v7248
      %7314 = vmatprep.subr.bf16.mxu0 %v7251
      %7315 = vmatpush1.bf16.msra.mxu0 %v7250
      %7316 = vmatprep.subr.bf16.mxu0 %v7253
      %7317 = vmatpush1.bf16.msra.mxu0 %v7252
      %7318 = vmatprep.subr.bf16.mxu0 %v7255
      %7319 = vmatpush1.bf16.msra.mxu0 %v7254
      %7320 = vmatprep.subr.bf16.mxu0 %v7257
      %7321 = vmatpush1.bf16.msra.mxu0 %v7256
      %7322 = vmatprep.subr.bf16.mxu0 %v7259
      %7323 = vmatpush1.bf16.msra.mxu0 %v7258
      %7324 = vmatprep.subr.bf16.mxu0 %v7261
      %7325 = vmatpush1.bf16.msra.mxu0 %v7260
      %7326 = vmatprep.subr.bf16.mxu0 %v7263
      %7327 = vmatpush1.bf16.msra.mxu0 %v7262
      %7328 = vmatprep.subr.bf16.mxu0 %v7265
      %7329 = vmatpush1.bf16.msra.mxu0 %v7264
      %7330 = vmatprep.subr.bf16.mxu0 %v7267
      %7331 = vmatpush1.bf16.msra.mxu0 %v7266
      %7332 = vmatprep.subr.bf16.mxu0 %v7269
      %7333 = vmatpush1.bf16.msra.mxu0 %v7268
      %7334 = vmatprep.subr.bf16.mxu0 %v7271
      %7335 = vmatpush1.bf16.msra.mxu0 %v7270
      %7336 = vmatprep.subr.bf16.mxu0 %v7273
      %7337 = vmatpush1.bf16.msra.mxu0 %v7272
      %7338 = vmatprep.subr.bf16.mxu0 %v7275
      %7339 = vmatpush1.bf16.msra.mxu0 %v7274
      %7340 = vmatprep.subr.bf16.mxu0 %v7277
      %7341 = vmatpush1.bf16.msra.mxu0 %v7276
      %7342 = vmatprep.subr.bf16.mxu0 %v7279
      %7343 = vmatpush1.bf16.msra.mxu0 %v7278
      %7344 = vmatprep.mubr.bf16.mxu0 %v7149
      %7345 = vmatmul.mubr.bf16.gmra.mrb[0].mxu0 %v7148
      %v7346 = vpop.f32.mrb[0].mxu0
      %v7347 = vadd.f32 0.0, %v7346
      %v7348 = vpop.f32.mrb[0].mxu0
      %v7349 = vadd.f32 0.0, %v7348
      %v7350 = vpop.f32.mrb[0].mxu0
      %v7351 = vpop.f32.mrb[0].mxu0
      %7352 = vdwg.mxu0
      %v7353 = vadd.f32 %v7110, %v7347
      %v7354 = vadd.f32 %v7111, %v7349
      %v7355 = vld [vmem:[%s6] sm:$0x3]
      %v7357 = vlaneseq
      %v7358 = vshrl.u32 %v7357, 7
      %v7359 = vsub.s32 0, %v7358
      %v7360 = vrot.slane %v7355, %v7359
      %v7361 = vlaneseq
      %v7362 = vshrl.u32 %v7361, 7
      %v7363 = vsub.s32 1, %v7362
      %v7364 = vrot.slane %v7355, %v7363
      %v7367 = vadd.f32 %v7353, %v7360
      %v7368 = vadd.f32 %v7354, %v7364
      %v7369 = vpack.c.bf16 %v7367, %v7367
      %v7370 = vpack.c.bf16 %v7368, %v7368
      %7371 = vmatprep.subr.bf16.mxu0 %v6314
      %7372 = vmatpush1.bf16.msra.mxu0 %v6313
      %7373 = vmatprep.subr.bf16.mxu0 %v6316
      %7374 = vmatpush1.bf16.msra.mxu0 %v6315
      %7375 = vmatprep.subr.bf16.mxu0 %v6318
      %7376 = vmatpush1.bf16.msra.mxu0 %v6317
      %7377 = vmatprep.subr.bf16.mxu0 %v6320
      %7378 = vmatpush1.bf16.msra.mxu0 %v6319
      %7379 = vmatprep.subr.bf16.mxu0 %v6322
      %7380 = vmatpush1.bf16.msra.mxu0 %v6321
      %7381 = vmatprep.subr.bf16.mxu0 %v6324
      %7382 = vmatpush1.bf16.msra.mxu0 %v6323
      %7383 = vmatprep.subr.bf16.mxu0 %v6326
      %7384 = vmatpush1.bf16.msra.mxu0 %v6325
      %7385 = vmatprep.subr.bf16.mxu0 %v6328
      %7386 = vmatpush1.bf16.msra.mxu0 %v6327
      %7387 = vmatprep.subr.bf16.mxu0 %v6330
      %7388 = vmatpush1.bf16.msra.mxu0 %v6329
      %7389 = vmatprep.subr.bf16.mxu0 %v6332
      %7390 = vmatpush1.bf16.msra.mxu0 %v6331
      %7391 = vmatprep.subr.bf16.mxu0 %v6334
      %7392 = vmatpush1.bf16.msra.mxu0 %v6333
      %7393 = vmatprep.subr.bf16.mxu0 %v6336
      %7394 = vmatpush1.bf16.msra.mxu0 %v6335
      %7395 = vmatprep.subr.bf16.mxu0 %v6338
      %7396 = vmatpush1.bf16.msra.mxu0 %v6337
      %7397 = vmatprep.subr.bf16.mxu0 %v6340
      %7398 = vmatpush1.bf16.msra.mxu0 %v6339
      %7399 = vmatprep.subr.bf16.mxu0 %v6342
      %7400 = vmatpush1.bf16.msra.mxu0 %v6341
      %7401 = vmatprep.subr.bf16.mxu0 %v6344
      %7402 = vmatpush1.bf16.msra.mxu0 %v6343
      %7403 = vmatprep.mubr.bf16.mxu0 %v6663
      %7404 = vmatmul.mubr.bf16.gmra.mrb[0].mxu0 %v6662
      %v7405 = vpop.f32.mrb[0].mxu0
      %v7406 = vadd.f32 0.0, %v7405
      %v7407 = vpop.f32.mrb[0].mxu0
      %v7408 = vadd.f32 0.0, %v7407
      %v7409 = vpop.f32.mrb[0].mxu0
      %v7410 = vpop.f32.mrb[0].mxu0
      %7411 = vdwg.mxu0
      %7412 = vmatprep.subr.bf16.mxu0 %v6522
      %7413 = vmatpush1.bf16.msra.mxu0 %v6521
      %7414 = vmatprep.subr.bf16.mxu0 %v6524
      %7415 = vmatpush1.bf16.msra.mxu0 %v6523
      %7416 = vmatprep.subr.bf16.mxu0 %v6526
      %7417 = vmatpush1.bf16.msra.mxu0 %v6525
      %7418 = vmatprep.subr.bf16.mxu0 %v6528
      %7419 = vmatpush1.bf16.msra.mxu0 %v6527
      %7420 = vmatprep.subr.bf16.mxu0 %v6530
      %7421 = vmatpush1.bf16.msra.mxu0 %v6529
      %7422 = vmatprep.subr.bf16.mxu0 %v6532
      %7423 = vmatpush1.bf16.msra.mxu0 %v6531
      %7424 = vmatprep.subr.bf16.mxu0 %v6534
      %7425 = vmatpush1.bf16.msra.mxu0 %v6533
      %7426 = vmatprep.subr.bf16.mxu0 %v6536
      %7427 = vmatpush1.bf16.msra.mxu0 %v6535
      %7428 = vmatprep.subr.bf16.mxu0 %v6538
      %7429 = vmatpush1.bf16.msra.mxu0 %v6537
      %7430 = vmatprep.subr.bf16.mxu0 %v6540
      %7431 = vmatpush1.bf16.msra.mxu0 %v6539
      %7432 = vmatprep.subr.bf16.mxu0 %v6542
      %7433 = vmatpush1.bf16.msra.mxu0 %v6541
      %7434 = vmatprep.subr.bf16.mxu0 %v6544
      %7435 = vmatpush1.bf16.msra.mxu0 %v6543
      %7436 = vmatprep.subr.bf16.mxu0 %v6546
      %7437 = vmatpush1.bf16.msra.mxu0 %v6545
      %7438 = vmatprep.subr.bf16.mxu0 %v6548
      %7439 = vmatpush1.bf16.msra.mxu0 %v6547
      %7440 = vmatprep.subr.bf16.mxu0 %v6550
      %7441 = vmatpush1.bf16.msra.mxu0 %v6549
      %7442 = vmatprep.subr.bf16.mxu0 %v6552
      %7443 = vmatpush1.bf16.msra.mxu0 %v6551
      %7444 = vmatprep.mubr.bf16.mxu0 %v6214
      %7445 = vmatmul.mubr.bf16.gmra.mrb[0].mxu0 %v6213
      %v7446 = vpop.f32.mrb[0].mxu0
      %v7447 = vadd.f32 %v7406, %v7446
      %v7448 = vpop.f32.mrb[0].mxu0
      %v7449 = vadd.f32 %v7408, %v7448
      %v7450 = vpop.f32.mrb[0].mxu0
      %v7451 = vpop.f32.mrb[0].mxu0
      %7452 = vdwg.mxu0
      %7453 = vmatprep.subr.bf16.mxu0 %v6763
      %7454 = vmatpush1.bf16.msra.mxu0 %v6762
      %7455 = vmatprep.subr.bf16.mxu0 %v6765
      %7456 = vmatpush1.bf16.msra.mxu0 %v6764
      %7457 = vmatprep.subr.bf16.mxu0 %v6767
      %7458 = vmatpush1.bf16.msra.mxu0 %v6766
      %7459 = vmatprep.subr.bf16.mxu0 %v6769
      %7460 = vmatpush1.bf16.msra.mxu0 %v6768
      %7461 = vmatprep.subr.bf16.mxu0 %v6771
      %7462 = vmatpush1.bf16.msra.mxu0 %v6770
      %7463 = vmatprep.subr.bf16.mxu0 %v6773
      %7464 = vmatpush1.bf16.msra.mxu0 %v6772
      %7465 = vmatprep.subr.bf16.mxu0 %v6775
      %7466 = vmatpush1.bf16.msra.mxu0 %v6774
      %7467 = vmatprep.subr.bf16.mxu0 %v6777
      %7468 = vmatpush1.bf16.msra.mxu0 %v6776
      %7469 = vmatprep.subr.bf16.mxu0 %v6779
      %7470 = vmatpush1.bf16.msra.mxu0 %v6778
      %7471 = vmatprep.subr.bf16.mxu0 %v6781
      %7472 = vmatpush1.bf16.msra.mxu0 %v6780
      %7473 = vmatprep.subr.bf16.mxu0 %v6783
      %7474 = vmatpush1.bf16.msra.mxu0 %v6782
      %7475 = vmatprep.subr.bf16.mxu0 %v6785
      %7476 = vmatpush1.bf16.msra.mxu0 %v6784
      %7477 = vmatprep.subr.bf16.mxu0 %v6787
      %7478 = vmatpush1.bf16.msra.mxu0 %v6786
      %7479 = vmatprep.subr.bf16.mxu0 %v6789
      %7480 = vmatpush1.bf16.msra.mxu0 %v6788
      %7481 = vmatprep.subr.bf16.mxu0 %v6791
      %7482 = vmatpush1.bf16.msra.mxu0 %v6790
      %7483 = vmatprep.subr.bf16.mxu0 %v6793
      %7484 = vmatpush1.bf16.msra.mxu0 %v6792
      %7485 = vmatprep.mubr.bf16.mxu0 %v6906
      %7486 = vmatmul.mubr.bf16.gmra.mrb[0].mxu0 %v6905
      %v7487 = vpop.f32.mrb[0].mxu0
      %v7488 = vadd.f32 0.0, %v7487
      %v7489 = vpop.f32.mrb[0].mxu0
      %v7490 = vadd.f32 0.0, %v7489
      %v7491 = vpop.f32.mrb[0].mxu0
      %v7492 = vpop.f32.mrb[0].mxu0
      %7493 = vdwg.mxu0
      %v7494 = vadd.f32 %v7447, %v7488
      %v7495 = vadd.f32 %v7449, %v7490
      %7496 = vmatprep.subr.bf16.mxu0 %v7006
      %7497 = vmatpush1.bf16.msra.mxu0 %v7005
      %7498 = vmatprep.subr.bf16.mxu0 %v7008
      %7499 = vmatpush1.bf16.msra.mxu0 %v7007
      %7500 = vmatprep.subr.bf16.mxu0 %v7010
      %7501 = vmatpush1.bf16.msra.mxu0 %v7009
      %7502 = vmatprep.subr.bf16.mxu0 %v7012
      %7503 = vmatpush1.bf16.msra.mxu0 %v7011
      %7504 = vmatprep.subr.bf16.mxu0 %v7014
      %7505 = vmatpush1.bf16.msra.mxu0 %v7013
      %7506 = vmatprep.subr.bf16.mxu0 %v7016
      %7507 = vmatpush1.bf16.msra.mxu0 %v7015
      %7508 = vmatprep.subr.bf16.mxu0 %v7018
      %7509 = vmatpush1.bf16.msra.mxu0 %v7017
      %7510 = vmatprep.subr.bf16.mxu0 %v7020
      %7511 = vmatpush1.bf16.msra.mxu0 %v7019
      %7512 = vmatprep.subr.bf16.mxu0 %v7022
      %7513 = vmatpush1.bf16.msra.mxu0 %v7021
      %7514 = vmatprep.subr.bf16.mxu0 %v7024
      %7515 = vmatpush1.bf16.msra.mxu0 %v7023
      %7516 = vmatprep.subr.bf16.mxu0 %v7026
      %7517 = vmatpush1.bf16.msra.mxu0 %v7025
      %7518 = vmatprep.subr.bf16.mxu0 %v7028
      %7519 = vmatpush1.bf16.msra.mxu0 %v7027
      %7520 = vmatprep.subr.bf16.mxu0 %v7030
      %7521 = vmatpush1.bf16.msra.mxu0 %v7029
      %7522 = vmatprep.subr.bf16.mxu0 %v7032
      %7523 = vmatpush1.bf16.msra.mxu0 %v7031
      %7524 = vmatprep.subr.bf16.mxu0 %v7034
      %7525 = vmatpush1.bf16.msra.mxu0 %v7033
      %7526 = vmatprep.subr.bf16.mxu0 %v7036
      %7527 = vmatpush1.bf16.msra.mxu0 %v7035
      %7528 = vmatprep.mubr.bf16.mxu0 %v7149
      %7529 = vmatmul.mubr.bf16.gmra.mrb[0].mxu0 %v7148
      %v7530 = vpop.f32.mrb[0].mxu0
      %v7531 = vadd.f32 0.0, %v7530
      %v7532 = vpop.f32.mrb[0].mxu0
      %v7533 = vadd.f32 0.0, %v7532
      %v7534 = vpop.f32.mrb[0].mxu0
      %v7535 = vpop.f32.mrb[0].mxu0
      %7536 = vdwg.mxu0
      %v7537 = vadd.f32 %v7494, %v7531
      %v7538 = vadd.f32 %v7495, %v7533
      %v7540 = vunpack.c.l.b16 %v6144
      %v7541 = vunpack.c.h.b16 %v6144
      %v7542 = vpack.c.b16 %v7540, %v7540
      %v7543 = vpack.c.b16 %v7541, %v7541
      %7546 = vmatprep.subr.bf16.mxu0 %v7249
      %7547 = vmatpush1.bf16.msra.mxu0 %v7248
      %7548 = vmatprep.subr.bf16.mxu0 %v7251
      %7549 = vmatpush1.bf16.msra.mxu0 %v7250
      %7550 = vmatprep.subr.bf16.mxu0 %v7253
      %7551 = vmatpush1.bf16.msra.mxu0 %v7252
      %7552 = vmatprep.subr.bf16.mxu0 %v7255
      %7553 = vmatpush1.bf16.msra.mxu0 %v7254
      %7554 = vmatprep.subr.bf16.mxu0 %v7257
      %7555 = vmatpush1.bf16.msra.mxu0 %v7256
      %7556 = vmatprep.subr.bf16.mxu0 %v7259
      %7557 = vmatpush1.bf16.msra.mxu0 %v7258
      %7558 = vmatprep.subr.bf16.mxu0 %v7261
      %7559 = vmatpush1.bf16.msra.mxu0 %v7260
      %7560 = vmatprep.subr.bf16.mxu0 %v7263
      %7561 = vmatpush1.bf16.msra.mxu0 %v7262
      %7562 = vmatprep.subr.bf16.mxu0 %v7265
      %7563 = vmatpush1.bf16.msra.mxu0 %v7264
      %7564 = vmatprep.subr.bf16.mxu0 %v7267
      %7565 = vmatpush1.bf16.msra.mxu0 %v7266
      %7566 = vmatprep.subr.bf16.mxu0 %v7269
      %7567 = vmatpush1.bf16.msra.mxu0 %v7268
      %7568 = vmatprep.subr.bf16.mxu0 %v7271
      %7569 = vmatpush1.bf16.msra.mxu0 %v7270
      %7570 = vmatprep.subr.bf16.mxu0 %v7273
      %7571 = vmatpush1.bf16.msra.mxu0 %v7272
      %7572 = vmatprep.subr.bf16.mxu0 %v7275
      %7573 = vmatpush1.bf16.msra.mxu0 %v7274
      %7574 = vmatprep.subr.bf16.mxu0 %v7277
      %7575 = vmatpush1.bf16.msra.mxu0 %v7276
      %7576 = vmatprep.subr.bf16.mxu0 %v7279
      %7577 = vmatpush1.bf16.msra.mxu0 %v7278
      %7578 = vmatprep.mubr.bf16.mxu0 %v7543
      %7579 = vmatmul.mubr.bf16.gmra.mrb[0].mxu0 %v7542
      %v7580 = vpop.f32.mrb[0].mxu0
      %v7581 = vadd.f32 0.0, %v7580
      %v7582 = vpop.f32.mrb[0].mxu0
      %v7583 = vadd.f32 0.0, %v7582
      %v7584 = vpop.f32.mrb[0].mxu0
      %v7585 = vpop.f32.mrb[0].mxu0
      %7586 = vdwg.mxu0
      %v7587 = vadd.f32 %v7537, %v7581
      %v7588 = vadd.f32 %v7538, %v7583
      %v7589 = vadd.f32 %v7587, %v7360
      %v7590 = vadd.f32 %v7588, %v7364
      %v7591 = vpack.c.bf16 %v7589, %v7589
      %v7592 = vpack.c.bf16 %v7590, %v7590
      %v7593 = vld [vmem:[%s7] sm:$0xf]
      %v7594 = vld [vmem:[%s7 + $0x4] sm:$0xf]
      %v7595 = vld [vmem:[%s7 + $0x8] sm:$0xf]
      %v7596 = vld [vmem:[%s7 + $0xc] sm:$0xf]
      %v7597 = vld [vmem:[%s7 + $0x10] sm:$0xf]
      %v7598 = vld [vmem:[%s7 + $0x14] sm:$0xf]
      %v7599 = vld [vmem:[%s7 + $0x18] sm:$0xf]
      %v7600 = vld [vmem:[%s7 + $0x1c] sm:$0xf]
      %v7601 = vld [vmem:[%s7 + $0x20] sm:$0xf]
      %v7602 = vld [vmem:[%s7 + $0x24] sm:$0xf]
      %v7603 = vld [vmem:[%s7 + $0x28] sm:$0xf]
      %v7604 = vld [vmem:[%s7 + $0x2c] sm:$0xf]
      %v7605 = vld [vmem:[%s7 + $0x30] sm:$0xf]
      %v7606 = vld [vmem:[%s7 + $0x34] sm:$0xf]
      %v7607 = vld [vmem:[%s7 + $0x38] sm:$0xf]
      %v7608 = vld [vmem:[%s7 + $0x3c] sm:$0xf]
      %v7609 = vld [vmem:[%s7 + $0x40] sm:$0xf]
      %v7610 = vld [vmem:[%s7 + $0x44] sm:$0xf]
      %v7611 = vld [vmem:[%s7 + $0x48] sm:$0xf]
      %v7612 = vld [vmem:[%s7 + $0x4c] sm:$0xf]
      %v7613 = vld [vmem:[%s7 + $0x50] sm:$0xf]
      %v7614 = vld [vmem:[%s7 + $0x54] sm:$0xf]
      %v7615 = vld [vmem:[%s7 + $0x58] sm:$0xf]
      %v7616 = vld [vmem:[%s7 + $0x5c] sm:$0xf]
      %v7617 = vld [vmem:[%s7 + $0x60] sm:$0xf]
      %v7618 = vld [vmem:[%s7 + $0x64] sm:$0xf]
      %v7619 = vld [vmem:[%s7 + $0x68] sm:$0xf]
      %v7620 = vld [vmem:[%s7 + $0x6c] sm:$0xf]
      %v7621 = vld [vmem:[%s7 + $0x70] sm:$0xf]
      %v7622 = vld [vmem:[%s7 + $0x74] sm:$0xf]
      %v7623 = vld [vmem:[%s7 + $0x78] sm:$0xf]
      %v7624 = vld [vmem:[%s7 + $0x7c] sm:$0xf]
      %s7625 = scalar_lea.vmem %s7, 128
      %v7626 = vld [vmem:[%s7625] sm:$0xf]
      %v7627 = vld [vmem:[%s7625 + $0x4] sm:$0xf]
      %v7628 = vld [vmem:[%s7625 + $0x8] sm:$0xf]
      %v7629 = vld [vmem:[%s7625 + $0xc] sm:$0xf]
      %v7630 = vld [vmem:[%s7625 + $0x10] sm:$0xf]
      %v7631 = vld [vmem:[%s7625 + $0x14] sm:$0xf]
      %v7632 = vld [vmem:[%s7625 + $0x18] sm:$0xf]
      %v7633 = vld [vmem:[%s7625 + $0x1c] sm:$0xf]
      %v7634 = vld [vmem:[%s7625 + $0x20] sm:$0xf]
      %v7635 = vld [vmem:[%s7625 + $0x24] sm:$0xf]
      %v7636 = vld [vmem:[%s7625 + $0x28] sm:$0xf]
      %v7637 = vld [vmem:[%s7625 + $0x2c] sm:$0xf]
      %v7638 = vld [vmem:[%s7625 + $0x30] sm:$0xf]
      %v7639 = vld [vmem:[%s7625 + $0x34] sm:$0xf]
      %v7640 = vld [vmem:[%s7625 + $0x38] sm:$0xf]
      %v7641 = vld [vmem:[%s7625 + $0x3c] sm:$0xf]
      %v7642 = vld [vmem:[%s7625 + $0x40] sm:$0xf]
      %v7643 = vld [vmem:[%s7625 + $0x44] sm:$0xf]
      %v7644 = vld [vmem:[%s7625 + $0x48] sm:$0xf]
      %v7645 = vld [vmem:[%s7625 + $0x4c] sm:$0xf]
      %v7646 = vld [vmem:[%s7625 + $0x50] sm:$0xf]
      %v7647 = vld [vmem:[%s7625 + $0x54] sm:$0xf]
      %v7648 = vld [vmem:[%s7625 + $0x58] sm:$0xf]
      %v7649 = vld [vmem:[%s7625 + $0x5c] sm:$0xf]
      %v7650 = vld [vmem:[%s7625 + $0x60] sm:$0xf]
      %v7651 = vld [vmem:[%s7625 + $0x64] sm:$0xf]
      %v7652 = vld [vmem:[%s7625 + $0x68] sm:$0xf]
      %v7653 = vld [vmem:[%s7625 + $0x6c] sm:$0xf]
      %v7654 = vld [vmem:[%s7625 + $0x70] sm:$0xf]
      %v7655 = vld [vmem:[%s7625 + $0x74] sm:$0xf]
      %v7656 = vld [vmem:[%s7625 + $0x78] sm:$0xf]
      %v7657 = vld [vmem:[%s7625 + $0x7c] sm:$0xf]
      %v7690 = vunpack.c.l.b16 %v7626
      %v7691 = vunpack.c.l.b16 %v7627
      %v7692 = vunpack.c.l.b16 %v7628
      %v7693 = vunpack.c.l.b16 %v7629
      %v7694 = vunpack.c.l.b16 %v7630
      %v7695 = vunpack.c.l.b16 %v7631
      %v7696 = vunpack.c.l.b16 %v7632
      %v7697 = vunpack.c.l.b16 %v7633
      %v7698 = vunpack.c.l.b16 %v7634
      %v7699 = vunpack.c.l.b16 %v7635
      %v7700 = vunpack.c.l.b16 %v7636
      %v7701 = vunpack.c.l.b16 %v7637
      %v7702 = vunpack.c.l.b16 %v7638
      %v7703 = vunpack.c.l.b16 %v7639
      %v7704 = vunpack.c.l.b16 %v7640
      %v7705 = vunpack.c.l.b16 %v7641
      %v7706 = vunpack.c.l.b16 %v7642
      %v7707 = vunpack.c.l.b16 %v7643
      %v7708 = vunpack.c.l.b16 %v7644
      %v7709 = vunpack.c.l.b16 %v7645
      %v7710 = vunpack.c.l.b16 %v7646
      %v7711 = vunpack.c.l.b16 %v7647
      %v7712 = vunpack.c.l.b16 %v7648
      %v7713 = vunpack.c.l.b16 %v7649
      %v7714 = vunpack.c.l.b16 %v7650
      %v7715 = vunpack.c.l.b16 %v7651
      %v7716 = vunpack.c.l.b16 %v7652
      %v7717 = vunpack.c.l.b16 %v7653
      %v7718 = vunpack.c.l.b16 %v7654
      %v7719 = vunpack.c.l.b16 %v7655
      %v7720 = vunpack.c.l.b16 %v7656
      %v7721 = vunpack.c.l.b16 %v7657
      %v7722 = vpack.c.b16 %v7691, %v7690
      %v7723 = vpack.c.b16 %v7693, %v7692
      %v7724 = vpack.c.b16 %v7695, %v7694
      %v7725 = vpack.c.b16 %v7697, %v7696
      %v7726 = vpack.c.b16 %v7699, %v7698
      %v7727 = vpack.c.b16 %v7701, %v7700
      %v7728 = vpack.c.b16 %v7703, %v7702
      %v7729 = vpack.c.b16 %v7705, %v7704
      %v7730 = vpack.c.b16 %v7707, %v7706
      %v7731 = vpack.c.b16 %v7709, %v7708
      %v7732 = vpack.c.b16 %v7711, %v7710
      %v7733 = vpack.c.b16 %v7713, %v7712
      %v7734 = vpack.c.b16 %v7715, %v7714
      %v7735 = vpack.c.b16 %v7717, %v7716
      %v7736 = vpack.c.b16 %v7719, %v7718
      %v7737 = vpack.c.b16 %v7721, %v7720
      %7754 = vmatprep.subr.bf16.mxu0 0
      %7755 = vmatpush1.bf16.msra.mxu0 %v7722
      %7756 = vmatprep.subr.bf16.mxu0 0
      %7757 = vmatpush1.bf16.msra.mxu0 %v7723
      %7758 = vmatprep.subr.bf16.mxu0 0
      %7759 = vmatpush1.bf16.msra.mxu0 %v7724
      %7760 = vmatprep.subr.bf16.mxu0 0
      %7761 = vmatpush1.bf16.msra.mxu0 %v7725
      %7762 = vmatprep.subr.bf16.mxu0 0
      %7763 = vmatpush1.bf16.msra.mxu0 %v7726
      %7764 = vmatprep.subr.bf16.mxu0 0
      %7765 = vmatpush1.bf16.msra.mxu0 %v7727
      %7766 = vmatprep.subr.bf16.mxu0 0
      %7767 = vmatpush1.bf16.msra.mxu0 %v7728
      %7768 = vmatprep.subr.bf16.mxu0 0
      %7769 = vmatpush1.bf16.msra.mxu0 %v7729
      %7770 = vmatprep.subr.bf16.mxu0 0
      %7771 = vmatpush1.bf16.msra.mxu0 %v7730
      %7772 = vmatprep.subr.bf16.mxu0 0
      %7773 = vmatpush1.bf16.msra.mxu0 %v7731
      %7774 = vmatprep.subr.bf16.mxu0 0
      %7775 = vmatpush1.bf16.msra.mxu0 %v7732
      %7776 = vmatprep.subr.bf16.mxu0 0
      %7777 = vmatpush1.bf16.msra.mxu0 %v7733
      %7778 = vmatprep.subr.bf16.mxu0 0
      %7779 = vmatpush1.bf16.msra.mxu0 %v7734
      %7780 = vmatprep.subr.bf16.mxu0 0
      %7781 = vmatpush1.bf16.msra.mxu0 %v7735
      %7782 = vmatprep.subr.bf16.mxu0 0
      %7783 = vmatpush1.bf16.msra.mxu0 %v7736
      %7784 = vmatprep.subr.bf16.mxu0 0
      %7785 = vmatpush1.bf16.msra.mxu0 %v7737
      %7786 = vmatprep.mubr.bf16.mxu0 %v7592
      %7787 = vmatmul.mubr.bf16.gmra.mrb[0].mxu0 %v7591
      %v7788 = vpop.f32.mrb[0].mxu0
      %v7789 = vadd.f32 0.0, %v7788
      %v7790 = vpop.f32.mrb[0].mxu0
      %v7791 = vpop.f32.mrb[0].mxu0
      %v7792 = vpop.f32.mrb[0].mxu0
      %7793 = vdwg.mxu0
      %v7826 = vunpack.c.l.b16 %v7593
      %v7827 = vunpack.c.l.b16 %v7594
      %v7828 = vunpack.c.l.b16 %v7595
      %v7829 = vunpack.c.l.b16 %v7596
      %v7830 = vunpack.c.l.b16 %v7597
      %v7831 = vunpack.c.l.b16 %v7598
      %v7832 = vunpack.c.l.b16 %v7599
      %v7833 = vunpack.c.l.b16 %v7600
      %v7834 = vunpack.c.l.b16 %v7601
      %v7835 = vunpack.c.l.b16 %v7602
      %v7836 = vunpack.c.l.b16 %v7603
      %v7837 = vunpack.c.l.b16 %v7604
      %v7838 = vunpack.c.l.b16 %v7605
      %v7839 = vunpack.c.l.b16 %v7606
      %v7840 = vunpack.c.l.b16 %v7607
      %v7841 = vunpack.c.l.b16 %v7608
      %v7842 = vunpack.c.l.b16 %v7609
      %v7843 = vunpack.c.l.b16 %v7610
      %v7844 = vunpack.c.l.b16 %v7611
      %v7845 = vunpack.c.l.b16 %v7612
      %v7846 = vunpack.c.l.b16 %v7613
      %v7847 = vunpack.c.l.b16 %v7614
      %v7848 = vunpack.c.l.b16 %v7615
      %v7849 = vunpack.c.l.b16 %v7616
      %v7850 = vunpack.c.l.b16 %v7617
      %v7851 = vunpack.c.l.b16 %v7618
      %v7852 = vunpack.c.l.b16 %v7619
      %v7853 = vunpack.c.l.b16 %v7620
      %v7854 = vunpack.c.l.b16 %v7621
      %v7855 = vunpack.c.l.b16 %v7622
      %v7856 = vunpack.c.l.b16 %v7623
      %v7857 = vunpack.c.l.b16 %v7624
      %v7858 = vpack.c.b16 %v7827, %v7826
      %v7859 = vpack.c.b16 %v7829, %v7828
      %v7860 = vpack.c.b16 %v7831, %v7830
      %v7861 = vpack.c.b16 %v7833, %v7832
      %v7862 = vpack.c.b16 %v7835, %v7834
      %v7863 = vpack.c.b16 %v7837, %v7836
      %v7864 = vpack.c.b16 %v7839, %v7838
      %v7865 = vpack.c.b16 %v7841, %v7840
      %v7866 = vpack.c.b16 %v7843, %v7842
      %v7867 = vpack.c.b16 %v7845, %v7844
      %v7868 = vpack.c.b16 %v7847, %v7846
      %v7869 = vpack.c.b16 %v7849, %v7848
      %v7870 = vpack.c.b16 %v7851, %v7850
      %v7871 = vpack.c.b16 %v7853, %v7852
      %v7872 = vpack.c.b16 %v7855, %v7854
      %v7873 = vpack.c.b16 %v7857, %v7856
      %7890 = vmatprep.subr.bf16.mxu0 0
      %7891 = vmatpush1.bf16.msra.mxu0 %v7858
      %7892 = vmatprep.subr.bf16.mxu0 0
      %7893 = vmatpush1.bf16.msra.mxu0 %v7859
      %7894 = vmatprep.subr.bf16.mxu0 0
      %7895 = vmatpush1.bf16.msra.mxu0 %v7860
      %7896 = vmatprep.subr.bf16.mxu0 0
      %7897 = vmatpush1.bf16.msra.mxu0 %v7861
      %7898 = vmatprep.subr.bf16.mxu0 0
      %7899 = vmatpush1.bf16.msra.mxu0 %v7862
      %7900 = vmatprep.subr.bf16.mxu0 0
      %7901 = vmatpush1.bf16.msra.mxu0 %v7863
      %7902 = vmatprep.subr.bf16.mxu0 0
      %7903 = vmatpush1.bf16.msra.mxu0 %v7864
      %7904 = vmatprep.subr.bf16.mxu0 0
      %7905 = vmatpush1.bf16.msra.mxu0 %v7865
      %7906 = vmatprep.subr.bf16.mxu0 0
      %7907 = vmatpush1.bf16.msra.mxu0 %v7866
      %7908 = vmatprep.subr.bf16.mxu0 0
      %7909 = vmatpush1.bf16.msra.mxu0 %v7867
      %7910 = vmatprep.subr.bf16.mxu0 0
      %7911 = vmatpush1.bf16.msra.mxu0 %v7868
      %7912 = vmatprep.subr.bf16.mxu0 0
      %7913 = vmatpush1.bf16.msra.mxu0 %v7869
      %7914 = vmatprep.subr.bf16.mxu0 0
      %7915 = vmatpush1.bf16.msra.mxu0 %v7870
      %7916 = vmatprep.subr.bf16.mxu0 0
      %7917 = vmatpush1.bf16.msra.mxu0 %v7871
      %7918 = vmatprep.subr.bf16.mxu0 0
      %7919 = vmatpush1.bf16.msra.mxu0 %v7872
      %7920 = vmatprep.subr.bf16.mxu0 0
      %7921 = vmatpush1.bf16.msra.mxu0 %v7873
      %7922 = vmatprep.mubr.bf16.mxu0 %v7370
      %7923 = vmatmul.mubr.bf16.gmra.mrb[0].mxu0 %v7369
      %v7924 = vpop.f32.mrb[0].mxu0
      %v7925 = vadd.f32 %v7789, %v7924
      %v7926 = vpop.f32.mrb[0].mxu0
      %v7927 = vpop.f32.mrb[0].mxu0
      %v7928 = vpop.f32.mrb[0].mxu0
      %7929 = vdwg.mxu0
      %v7930 = vld [vmem:[%s8] sm:$0x1]
      %v7932 = vlaneseq
      %v7933 = vshrl.u32 %v7932, 7
      %v7934 = vsub.s32 0, %v7933
      %v7935 = vrot.slane %v7930, %v7934
      %v7937 = vadd.f32 %v7925, %v7935
      %v7938 = vmax.f32 %v7937, 0.0
      %v7939 = vpack.c.bf16 %v7938, %v7938
      %v7940 = vld [vmem:[%s9] sm:$0xf]
      %v7941 = vld [vmem:[%s9 + $0x4] sm:$0xf]
      %v7942 = vld [vmem:[%s9 + $0x8] sm:$0xf]
      %v7943 = vld [vmem:[%s9 + $0xc] sm:$0xf]
      %v7944 = vld [vmem:[%s9 + $0x10] sm:$0xf]
      %v7945 = vld [vmem:[%s9 + $0x14] sm:$0xf]
      %v7946 = vld [vmem:[%s9 + $0x18] sm:$0xf]
      %v7947 = vld [vmem:[%s9 + $0x1c] sm:$0xf]
      %v7948 = vld [vmem:[%s9 + $0x20] sm:$0xf]
      %v7949 = vld [vmem:[%s9 + $0x24] sm:$0xf]
      %v7950 = vld [vmem:[%s9 + $0x28] sm:$0xf]
      %v7951 = vld [vmem:[%s9 + $0x2c] sm:$0xf]
      %v7952 = vld [vmem:[%s9 + $0x30] sm:$0xf]
      %v7953 = vld [vmem:[%s9 + $0x34] sm:$0xf]
      %v7954 = vld [vmem:[%s9 + $0x38] sm:$0xf]
      %v7955 = vld [vmem:[%s9 + $0x3c] sm:$0xf]
      %v7956 = vld [vmem:[%s10] sm:$0x1]
      %v7958 = vlaneseq
      %v7959 = vshrl.u32 %v7958, 7
      %v7960 = vsub.s32 0, %v7959
      %v7961 = vrot.slane %v7956, %v7960
      %v7979 = vunpack.c.l.b16 %v7940
      %v7980 = vunpack.c.l.b16 %v7941
      %v7981 = vunpack.c.l.b16 %v7942
      %v7982 = vunpack.c.l.b16 %v7943
      %v7983 = vunpack.c.l.b16 %v7944
      %v7984 = vunpack.c.l.b16 %v7945
      %v7985 = vunpack.c.l.b16 %v7946
      %v7986 = vunpack.c.l.b16 %v7947
      %v7987 = vunpack.c.l.b16 %v7948
      %v7988 = vunpack.c.l.b16 %v7949
      %v7989 = vunpack.c.l.b16 %v7950
      %v7990 = vunpack.c.l.b16 %v7951
      %v7991 = vunpack.c.l.b16 %v7952
      %v7992 = vunpack.c.l.b16 %v7953
      %v7993 = vunpack.c.l.b16 %v7954
      %v7994 = vunpack.c.l.b16 %v7955
      %v7995 = vpack.c.b16 %v7980, %v7979
      %v7996 = vpack.c.b16 %v7982, %v7981
      %v7997 = vpack.c.b16 %v7984, %v7983
      %v7998 = vpack.c.b16 %v7986, %v7985
      %v7999 = vpack.c.b16 %v7988, %v7987
      %v8000 = vpack.c.b16 %v7990, %v7989
      %v8001 = vpack.c.b16 %v7992, %v7991
      %v8002 = vpack.c.b16 %v7994, %v7993
      %8011 = vmatprep.subr.bf16.mxu0 0
      %8012 = vmatpush1.bf16.msra.mxu0 %v7995
      %8013 = vmatprep.subr.bf16.mxu0 0
      %8014 = vmatpush1.bf16.msra.mxu0 %v7996
      %8015 = vmatprep.subr.bf16.mxu0 0
      %8016 = vmatpush1.bf16.msra.mxu0 %v7997
      %8017 = vmatprep.subr.bf16.mxu0 0
      %8018 = vmatpush1.bf16.msra.mxu0 %v7998
      %8019 = vmatprep.subr.bf16.mxu0 0
      %8020 = vmatpush1.bf16.msra.mxu0 %v7999
      %8021 = vmatprep.subr.bf16.mxu0 0
      %8022 = vmatpush1.bf16.msra.mxu0 %v8000
      %8023 = vmatprep.subr.bf16.mxu0 0
      %8024 = vmatpush1.bf16.msra.mxu0 %v8001
      %8025 = vmatprep.subr.bf16.mxu0 0
      %8026 = vmatpush1.bf16.msra.mxu0 %v8002
      %8027 = vmatprep.subr.bf16.mxu0 0
      %8028 = vmatpush1.bf16.msra.mxu0 0
      %8029 = vmatprep.subr.bf16.mxu0 0
      %8030 = vmatpush1.bf16.msra.mxu0 0
      %8031 = vmatprep.subr.bf16.mxu0 0
      %8032 = vmatpush1.bf16.msra.mxu0 0
      %8033 = vmatprep.subr.bf16.mxu0 0
      %8034 = vmatpush1.bf16.msra.mxu0 0
      %8035 = vmatprep.subr.bf16.mxu0 0
      %8036 = vmatpush1.bf16.msra.mxu0 0
      %8037 = vmatprep.subr.bf16.mxu0 0
      %8038 = vmatpush1.bf16.msra.mxu0 0
      %8039 = vmatprep.subr.bf16.mxu0 0
      %8040 = vmatpush1.bf16.msra.mxu0 0
      %8041 = vmatprep.subr.bf16.mxu0 0
      %8042 = vmatpush1.bf16.msra.mxu0 0
      %8043 = vmatprep.mubr.bf16.mxu0 0
      %8044 = vmatmul.mubr.bf16.gmra.mrb[0].mxu0 %v7939
      %v8045 = vpop.f32.mrb[0].mxu0
      %v8046 = vadd.f32 %v7961, %v8045
      %v8047 = vpop.f32.mrb[0].mxu0
      %v8048 = vpop.f32.mrb[0].mxu0
      %v8049 = vpop.f32.mrb[0].mxu0
      %8050 = vdwg.mxu0
      %8051 = vst [vmem:[%s386] sm:$0xff] %v8046
      %p8052 = scmp.lt.s32.totalorder %s22, 1
      %s8053 = scalar_select %p8052, %s22, 1
      %s8054 = smul.addr %s8053, 8
      %s8055 = scalar_lea.vmem %s11, %s8054
      // Predicated region
      $region65: #{lenet5_forward.1} parent=63 // pred_check
        %p8056 = pneg %p276
      $region66: #{lenet5_forward.1} parent=63 // pred_check_branch
        %8058 = sbr.rel (%p8056) target = $region68
      $region67: #{lenet5_forward.1} parent=63 // pred_region
        _
      $region68: #{lenet5_forward.1} parent=63 // pred_fallthru
        _
    $region64: #{lenet5_forward.1} parent=5 // pred_fallthru
      _
    %p8059 = scmp.le.s32.totalorder 2, %s17
    // Predicated region
    $region69: #{lenet5_forward.1} parent=5 // pred_check
      %p8060 = pneg %p8059
    $region70: #{lenet5_forward.1} parent=5 // pred_check_branch
      %8062 = sbr.rel (%p8060) target = $region72
    $region71: #{lenet5_forward.1} parent=5 // pred_region
      %s8063 = ssub.s32 %s17, 2
      // Predicated region
      $region73: #{lenet5_forward.1} parent=71 // pred_check
        %p8064 = pneg %p282
      $region74: #{lenet5_forward.1} parent=71 // pred_check_branch
        %8066 = sbr.rel (%p8064) target = $region76
      $region75: #{lenet5_forward.1} parent=71 // pred_region
        %p8067 = scmp.lt.s32.totalorder %s23, 1
        %s8068 = scalar_select %p8067, %s23, 1
        %s8069 = smul.addr %s8068, 8
        %s8070 = scalar_lea.vmem %s11, %s8069
      $region76: #{lenet5_forward.1} parent=71 // pred_fallthru
        _
    $region72: #{lenet5_forward.1} parent=5 // pred_fallthru
      _
  $region6: #{lenet5_forward.1} parent=0 // loop_footer
    %s21 = sadd.s32 1, %s17
  $region7: #{lenet5_forward.1} parent=0 // loop_footer_branch
    %16 = sbr.rel target = $region3
  $region8: #{lenet5_forward.1} parent=0 // loop_exit
    _

</llo_original>
